<compile_context>
chip_gen: v6e
topology: v6e:2x2x1
jax: 0.10.0
libtpu: 0.0.40
codegen_flags: <defaults>
</compile_context>

<pallas_src>
import jax
import jax.numpy as jnp
from jax import lax
from jax.experimental import pallas as pl
from jax.experimental.pallas import tpu as pltpu

LN_EPS = 1e-6
BN_EPS = 1e-5


def _round_up(x, m):
    return (x + m - 1) // m * m


def _hw_budget():
    """Generation-aware tile / VMEM budgets.

    v5e/v6e: 128 MiB VMEM, 1 TensorCore  -> bigger row tiles, 64 MiB limit.
    v7x:      64 MiB VMEM, 2 TensorCores -> smaller tiles, 40 MiB limit,
              grids shaped so both cores get >= 2 steps.
    Unknown chips use the conservative (v7x-safe) budget.
    """
    kind = ""
    try:
        kind = jax.devices()[0].device_kind.lower()
    except Exception:
        pass
    if "v5" in kind:
        return dict(vmem_limit=64 * 1024 * 1024, row_target=512, wide_mxu=False)
    if "v6" in kind:
        return dict(vmem_limit=64 * 1024 * 1024, row_target=512, wide_mxu=True)
    return dict(vmem_limit=40 * 1024 * 1024, row_target=256, wide_mxu=True)


# ----------------------------- Pallas kernels ------------------------------

def _layernorm_kernel(x_ref, g_ref, b_ref, o_ref):
    x = x_ref[...].astype(jnp.float32)
    mean = jnp.mean(x, axis=-1, keepdims=True)
    xc = x - mean
    var = jnp.mean(xc * xc, axis=-1, keepdims=True)
    inv = lax.rsqrt(var + LN_EPS)
    o_ref[...] = (xc * inv * g_ref[...] + b_ref[...]).astype(o_ref.dtype)


def layernorm(x2d, gamma, beta, budget):
    """Row-tiled LayerNorm over the last dim, emitting bf16.

    Falls back to XLA when the problem is lane-sparse / launch-overhead bound
    (per perf review)."""
    R, E = x2d.shape
    if E < 128 or E % 128 != 0 or R < 64:
        mean = jnp.mean(x2d, axis=-1, keepdims=True)
        var = jnp.mean(jnp.square(x2d - mean), axis=-1, keepdims=True)
        y = (x2d - mean) * lax.rsqrt(var + LN_EPS) * gamma + beta
        return y.astype(jnp.bfloat16)

    # Sublane-aligned row tile; keep >= 2 grid steps so a v7x chip can spread
    # the grid over both TensorCores.
    tr = min(budget["row_target"], _round_up(max(R // 2, 8), 8))
    Rp = _round_up(R, tr)
    xp = jnp.pad(x2d, ((0, Rp - R), (0, 0))) if Rp != R else x2d
    out = pl.pallas_call(
        _layernorm_kernel,
        out_shape=jax.ShapeDtypeStruct((Rp, E), jnp.bfloat16),
        grid=(Rp // tr,),
        in_specs=[
            pl.BlockSpec((tr, E), lambda i: (i, 0)),
            pl.BlockSpec((1, E), lambda i: (0, 0)),
            pl.BlockSpec((1, E), lambda i: (0, 0)),
        ],
        out_specs=pl.BlockSpec((tr, E), lambda i: (i, 0)),
        compiler_params=pltpu.CompilerParams(
            dimension_semantics=("parallel",),
            vmem_limit_bytes=budget["vmem_limit"]),
    )(xp, gamma.reshape(1, E).astype(jnp.float32),
      beta.reshape(1, E).astype(jnp.float32))
    return out[:R] if Rp != R else out


def _conv3x3_bn_relu_kernel(x_ref, w_ref, s_ref, o_ref):
    """Fused 3x3 conv (stride 1, pad 1) + BatchNorm(eval) + ReLU, one row band.

    The im2col never touches HBM: the 9 taps are sliced straight out of the
    resident padded image in VMEM and accumulated with 9 MXU matmuls.

    x_ref: (1, Hout+2, Wout+2, Cin)  bf16  full padded image (this batch elem)
    w_ref: (9, Cin, Coutp)           bf16  BN scale folded in
    s_ref: (1, Coutp)                f32   BN shift (+ conv bias) folded in
    o_ref: (1, tr, Wout, Coutp)      bf16  one band of output rows
    """
    _, tr, wout, coutp = o_ref.shape
    cin = x_ref.shape[3]
    r0 = pl.program_id(1) * tr
    acc = jnp.zeros((tr * wout, coutp), jnp.float32)
    for dy in range(3):
        for dx in range(3):
            patch = x_ref[0, pl.ds(r0 + dy, tr), pl.ds(dx, wout), :]
            acc = acc + jnp.dot(patch.reshape(tr * wout, cin),
                                w_ref[dy * 3 + dx],
                                preferred_element_type=jnp.float32)
    y = jnp.maximum(acc + s_ref[...], 0.0)
    o_ref[...] = y.reshape(1, tr, wout, coutp).astype(o_ref.dtype)


def conv3x3_bn_relu(x, p, stride, budget):
    """3x3 conv (pad 1) + BatchNorm(eval, folded) + ReLU.  x: NHWC.

    Stride-1 convs with enough rows and lanes use the fused Pallas kernel and
    emit bf16 with the channel dim zero-padded to a lane-dense multiple (the
    padding channels are exactly zero and are sliced only at the final
    consumer).  Tiny and stride-2 tail convs are routed to XLA."""
    B, H, W, cin_in = x.shape
    _, _, cin_w, cout = p["w"].shape
    scale = p["gamma"] * lax.rsqrt(p["var"] + BN_EPS)
    shift = scale * (p["b"] - p["mean"]) + p["beta"]
    w_folded = p["w"] * scale.reshape(1, 1, 1, cout)
    if cin_in > cin_w:  # input carries zero channel padding from upstream
        w_folded = jnp.pad(w_folded,
                           ((0, 0), (0, 0), (0, cin_in - cin_w), (0, 0)))

    hout = (H + 2 - 3) // stride + 1
    wout = (W + 2 - 3) // stride + 1
    m_rows = B * hout * wout

    use_pallas = (stride == 1 and m_rows >= 256 and cout >= 64
                  and wout % 8 == 0)
    if not use_pallas:
        # TODO(synk): stride-2 down-convs and tiny tails stay on XLA.
        y = lax.conv_general_dilated(
            x.astype(jnp.float32), w_folded,
            window_strides=(stride, stride), padding=((1, 1), (1, 1)),
            dimension_numbers=("NHWC", "HWIO", "NHWC"))
        return jnp.maximum(y + shift.reshape(1, 1, 1, cout), 0.0)

    # Lane-dense output channels: 256 granularity only on 256-wide MXUs
    # (v6e/v7x) and only when Cout can use it; 128 otherwise.
    lane_mult = 256 if (budget["wide_mxu"] and cout >= 256) else 128
    coutp = _round_up(cout, lane_mult)

    wmat = w_folded.reshape(9, cin_in, cout)
    if coutp != cout:
        wmat = jnp.pad(wmat, ((0, 0), (0, 0), (0, coutp - cout)))
    wmat = wmat.astype(jnp.bfloat16)
    sh = jnp.pad(shift, (0, coutp - cout)).astype(jnp.float32).reshape(1, coutp)

    # Single cast+pad pass over the activations (bf16 halo'd image).
    xpad = jnp.pad(x.astype(jnp.bfloat16), ((0, 0), (1, 1), (1, 1), (0, 0)))

    # Row-band tile: flattened rows per step ~ row_target, at least 2 bands so
    # v7x can feed both TensorCores; tr divides Hout so the output needs no
    # row padding / unpad pass.
    max_tr = max(1, min(budget["row_target"] // max(wout, 1),
                        max(hout // 2, 1)))
    tr = 1
    for d in range(1, max_tr + 1):
        if hout % d == 0:
            tr = d

    out = pl.pallas_call(
        _conv3x3_bn_relu_kernel,
        out_shape=jax.ShapeDtypeStruct((B, hout, wout, coutp), jnp.bfloat16),
        grid=(B, hout // tr),
        in_specs=[
            pl.BlockSpec((1, H + 2, W + 2, cin_in), lambda b, r: (b, 0, 0, 0)),
            pl.BlockSpec((9, cin_in, coutp), lambda b, r: (0, 0, 0)),
            pl.BlockSpec((1, coutp), lambda b, r: (0, 0)),
        ],
        out_specs=pl.BlockSpec((1, tr, wout, coutp),
                               lambda b, r: (b, r, 0, 0)),
        compiler_params=pltpu.CompilerParams(
            dimension_semantics=("parallel", "parallel"),
            vmem_limit_bytes=budget["vmem_limit"]),
    )(xpad, wmat, sh)
    return out  # bf16, channels zero-padded to coutp


# ------------------------------ JAX glue -----------------------------------

def _interp_matrix(out_size, in_size):
    # align_corners=True source coordinates (PyTorch semantics).
    if out_size == 1:
        src = jnp.zeros((1,), jnp.float32)
    else:
        src = jnp.arange(out_size, dtype=jnp.float32) * (
            (in_size - 1) / (out_size - 1))
    i0 = jnp.clip(jnp.floor(src).astype(jnp.int32), 0, in_size - 1)
    i1 = jnp.clip(i0 + 1, 0, in_size - 1)
    w1 = src - i0.astype(jnp.float32)
    w0 = 1.0 - w1
    rows = jnp.arange(out_size)
    m = jnp.zeros((out_size, in_size), jnp.float32)
    m = m.at[rows, i0].add(w0)
    m = m.at[rows, i1].add(w1)
    return m


def bilinear_resize_align_corners(x, out_h, out_w):
    """F.interpolate(mode='bilinear', align_corners=True), NHWC, bf16 output.

    Reads the (possibly bf16) input directly, accumulates in f32, and emits
    bf16 so the result feeds straight into the bf16 fused conv kernel."""
    B, H, W, C = x.shape
    Ah = _interp_matrix(out_h, H)
    Aw = _interp_matrix(out_w, W)
    y = jnp.einsum('oh,bhwc->bowc', Ah, x,
                   preferred_element_type=jnp.float32)
    y = jnp.einsum('pw,bowc->bopc', Aw, y,
                   preferred_element_type=jnp.float32)
    return y.astype(jnp.bfloat16)


# --------------------------- model forward pass -----------------------------

def custom_dino_object_det_forward(dino_features, params, cfg):
    budget = _hw_budget()
    B, N, E = dino_features.shape
    Hp = cfg["img_height_dino"] // cfg["patch_size"]
    Wp = cfg["img_width_dino"] // cfg["patch_size"]

    # LayerNorm over the embedding dim (Pallas, bf16 out).
    x = layernorm(dino_features.reshape(B * N, E),
                  params["ln_gamma"], params["ln_beta"], budget)
    # (B, N, E) -> (B, Hp, Wp, E); NHWC here == the PyTorch NCHW permute.
    x = x.reshape(B, Hp, Wp, E)

    nh = cfg["processing_height"] // 8
    nw = cfg["processing_width"] // 8
    x8 = bilinear_resize_align_corners(x, nh, nw)                     # bf16

    feat_8 = conv3x3_bn_relu(x8, params["conv_up_8"], 1, budget)      # bf16
    feat_4_up = bilinear_resize_align_corners(
        feat_8, 2 * feat_8.shape[1], 2 * feat_8.shape[2])             # bf16
    feat_4 = conv3x3_bn_relu(feat_4_up, params["conv_up_4"], 1, budget)
    feat_16 = conv3x3_bn_relu(feat_8, params["conv_down_16"], 2, budget)
    feat_32 = conv3x3_bn_relu(feat_16, params["conv_down_32"], 2, budget)
    feat_64 = conv3x3_bn_relu(feat_32, params["conv_down_64"], 2, budget)

    C = params["conv_up_8"]["w"].shape[-1]

    def to_out(t):  # slice channel padding once, back to f32 NCHW for parity
        return jnp.transpose(t[..., :C].astype(jnp.float32), (0, 3, 1, 2))

    return {"0": to_out(feat_4), "1": to_out(feat_8), "2": to_out(feat_16),
            "3": to_out(feat_32), "pool": to_out(feat_64)}


# -------------------------- pure-f32 XLA reference ---------------------------

def _reference_forward(dino_features, params, cfg):
    def ln(x, g, b):
        m = jnp.mean(x, -1, keepdims=True)
        v = jnp.mean(jnp.square(x - m), -1, keepdims=True)
        return (x - m) * lax.rsqrt(v + LN_EPS) * g + b

    def resize(x, oh, ow):
        Ah = _interp_matrix(oh, x.shape[1])
        Aw = _interp_matrix(ow, x.shape[2])
        y = jnp.einsum('oh,bhwc->bowc', Ah, x)
        return jnp.einsum('pw,bowc->bopc', Aw, y)

    def conv(x, p, s):
        scale = p["gamma"] * lax.rsqrt(p["var"] + BN_EPS)
        shift = scale * (p["b"] - p["mean"]) + p["beta"]
        y = lax.conv_general_dilated(
            x, p["w"] * scale.reshape(1, 1, 1, -1), (s, s),
            ((1, 1), (1, 1)), dimension_numbers=("NHWC", "HWIO", "NHWC"))
        return jnp.maximum(y + shift.reshape(1, 1, 1, -1), 0.0)

    B, N, E = dino_features.shape
    Hp = cfg["img_height_dino"] // cfg["patch_size"]
    Wp = cfg["img_width_dino"] // cfg["patch_size"]
    x = ln(dino_features, params["ln_gamma"], params["ln_beta"])
    x = x.reshape(B, Hp, Wp, E)
    x8 = resize(x, cfg["processing_height"] // 8, cfg["processing_width"] // 8)
    f8 = conv(x8, params["conv_up_8"], 1)
    f4 = conv(resize(f8, 2 * f8.shape[1], 2 * f8.shape[2]),
              params["conv_up_4"], 1)
    f16 = conv(f8, params["conv_down_16"], 2)
    f32_ = conv(f16, params["conv_down_32"], 2)
    f64 = conv(f32_, params["conv_down_64"], 2)
    t = lambda a: jnp.transpose(a, (0, 3, 1, 2))
    return {"0": t(f4), "1": t(f8), "2": t(f16), "3": t(f32_), "pool": t(f64)}


# ---------------------------- parameter init --------------------------------

def init_params(key, embedding_dim, out_channels):
    ks = jax.random.split(key, 6)

    def conv_bn(k, cin, cout):
        k1, k2, k3, k4 = jax.random.split(k, 4)
        w = jax.random.normal(k1, (3, 3, cin, cout), jnp.float32) / jnp.sqrt(
            9.0 * cin)
        b = 0.01 * jax.random.normal(k2, (cout,), jnp.float32)
        return {"w": w, "b": b,
                "gamma": 1.0 + 0.1 * jax.random.normal(k3, (cout,), jnp.float32),
                "beta": 0.05 * jax.random.normal(k4, (cout,), jnp.float32),
                "mean": jnp.zeros((cout,), jnp.float32),
                "var": jnp.ones((cout,), jnp.float32)}

    return {
        "ln_gamma": jnp.ones((embedding_dim,), jnp.float32),
        "ln_beta": jnp.zeros((embedding_dim,), jnp.float32),
        "conv_up_8": conv_bn(ks[0], embedding_dim, out_channels),
        "conv_up_4": conv_bn(ks[1], out_channels, out_channels),
        "conv_down_16": conv_bn(ks[2], out_channels, out_channels),
        "conv_down_32": conv_bn(ks[3], out_channels, out_channels),
        "conv_down_64": conv_bn(ks[4], out_channels, out_channels),
    }


if __name__ == "__main__":
    # Small but Pallas-worthy shapes (the perf review routes truly tiny shapes
    # to XLA): E=128 lanes, Cout=128, 16x16 / 32x32 spatial on the fused convs.
    cfg = dict(embedding_dim=128, out_channels=128,
               img_height_dino=64, img_width_dino=64, patch_size=8,
               processing_height=128, processing_width=128)
    B = 2
    n_patches = (cfg["img_height_dino"] // cfg["patch_size"]) * (
        cfg["img_width_dino"] // cfg["patch_size"])  # 64

    key = jax.random.PRNGKey(0)
    k_in, k_par = jax.random.split(key)
    dino_features = jax.random.normal(
        k_in, (B, n_patches, cfg["embedding_dim"]), jnp.float32)
    params = init_params(k_par, cfg["embedding_dim"], cfg["out_channels"])

    fwd = jax.jit(lambda f, p: custom_dino_object_det_forward(f, p, cfg))
    out = fwd(dino_features, params)
    out = jax.tree_util.tree_map(jax.block_until_ready, out)

    C = cfg["out_channels"]
    expected = {"0": (B, C, 32, 32), "1": (B, C, 16, 16), "2": (B, C, 8, 8),
                "3": (B, C, 4, 4), "pool": (B, C, 2, 2)}
    for name, shape in expected.items():
        assert out[name].shape == shape, (name, out[name].shape, shape)
        assert bool(jnp.all(jnp.isfinite(out[name]))), name

    # Loose numeric cross-check of the bf16 Pallas path vs a pure-f32 XLA
    # reference (bf16 operands => expect ~1% relative error).
    ref = _reference_forward(dino_features, params, cfg)
    for name in expected:
        err = float(jnp.max(jnp.abs(out[name] - ref[name])))
        scale = float(jnp.max(jnp.abs(ref[name]))) + 1e-6
        assert err <= 0.1 * scale + 1e-2, (name, err, scale)

    print("KERNEL_OK")
</pallas_src>

<mosaic_0001>
module attributes {stable_mosaic.version = 11 : i64} {
  func.func private @main(%arg0: i32) attributes {dimension_semantics = [#tpu.dimension_semantics<core_parallel>], iteration_bounds = array<i64: 2>, tpu.core_type = #tpu.core_type<sc_scalar_subcore>, window_params = []} {
    return
  }
}

module attributes {stable_mosaic.version = 11 : i64} {
  func.func private @main(%arg0: i32) attributes {dimension_semantics = [#tpu.dimension_semantics<core_parallel>], iteration_bounds = array<i64: 2>, tpu.core_type = #tpu.core_type<sc_scalar_subcore>, window_params = []} {
    return
  }
}

module attributes {stable_mosaic.version = 11 : i64} {
  func.func @_layernorm_kernel(%arg0: i32, %arg1: memref<64x128xf32, #tpu.memory_space<vmem>>, %arg2: memref<1x128xf32, #tpu.memory_space<vmem>>, %arg3: memref<1x128xf32, #tpu.memory_space<vmem>>, %arg4: memref<64x128xbf16, #tpu.memory_space<vmem>>) attributes {dimension_semantics = [#tpu.dimension_semantics<parallel>], iteration_bounds = array<i64: 2>, scalar_prefetch = 0 : i64, scratch_operands = 0 : i64, tpu.core_type = #tpu.core_type<tc>, window_params = [{transform_indices = @transform_0, window_bounds = array<i64: 64, 128>}, {pipeline_mode = #tpu.pipeline_mode<synchronous>, transform_indices = @transform_1, window_bounds = array<i64: 1, 128>}, {pipeline_mode = #tpu.pipeline_mode<synchronous>, transform_indices = @transform_2, window_bounds = array<i64: 1, 128>}, {transform_indices = @transform_3, window_bounds = array<i64: 64, 128>}]} {
    %c0 = arith.constant 0 : index
    %c0_0 = arith.constant 0 : index
    %0 = vector.load %arg1[%c0, %c0_0] : memref<64x128xf32, #tpu.memory_space<vmem>>, vector<64x128xf32>
    %cst = arith.constant dense<0.000000e+00> : vector<64xf32>
    %1 = vector.multi_reduction <add>, %0, %cst [1] : vector<64x128xf32> to vector<64xf32>
    %2 = vector.shape_cast %1 : vector<64xf32> to vector<64x1xf32>
    %cst_1 = arith.constant 1.280000e+02 : f32
    %3 = vector.broadcast %cst_1 : f32 to vector<64x1xf32>
    %4 = arith.divf %2, %3 : vector<64x1xf32>
    %5 = vector.broadcast %4 : vector<64x1xf32> to vector<64x128xf32>
    %6 = arith.subf %0, %5 : vector<64x128xf32>
    %7 = arith.mulf %6, %6 : vector<64x128xf32>
    %cst_2 = arith.constant dense<0.000000e+00> : vector<64xf32>
    %8 = vector.multi_reduction <add>, %7, %cst_2 [1] : vector<64x128xf32> to vector<64xf32>
    %9 = vector.shape_cast %8 : vector<64xf32> to vector<64x1xf32>
    %cst_3 = arith.constant 1.280000e+02 : f32
    %10 = vector.broadcast %cst_3 : f32 to vector<64x1xf32>
    %11 = arith.divf %9, %10 : vector<64x1xf32>
    %cst_4 = arith.constant 9.99999997E-7 : f32
    %12 = vector.broadcast %cst_4 : f32 to vector<64x1xf32>
    %13 = arith.addf %11, %12 : vector<64x1xf32>
    %14 = math.rsqrt %13 : vector<64x1xf32>
    %15 = vector.broadcast %14 : vector<64x1xf32> to vector<64x128xf32>
    %16 = arith.mulf %6, %15 : vector<64x128xf32>
    %c0_5 = arith.constant 0 : index
    %c0_6 = arith.constant 0 : index
    %17 = vector.load %arg2[%c0_5, %c0_6] : memref<1x128xf32, #tpu.memory_space<vmem>>, vector<1x128xf32>
    %18 = vector.broadcast %17 : vector<1x128xf32> to vector<64x128xf32>
    %19 = arith.mulf %16, %18 : vector<64x128xf32>
    %c0_7 = arith.constant 0 : index
    %c0_8 = arith.constant 0 : index
    %20 = vector.load %arg3[%c0_7, %c0_8] : memref<1x128xf32, #tpu.memory_space<vmem>>, vector<1x128xf32>
    %21 = vector.broadcast %20 : vector<1x128xf32> to vector<64x128xf32>
    %22 = arith.addf %19, %21 : vector<64x128xf32>
    %23 = arith.truncf %22 : vector<64x128xf32> to vector<64x128xbf16>
    %c0_9 = arith.constant 0 : index
    %c0_10 = arith.constant 0 : index
    %24 = vector.load %arg4[%c0_9, %c0_10] : memref<64x128xbf16, #tpu.memory_space<vmem>>, vector<64x128xbf16>
    tpu.vector_store %arg4[%c0_9, %c0_10], %23 {strides = array<i32>} : memref<64x128xbf16, #tpu.memory_space<vmem>>, vector<64x128xbf16>,
    return
  }
  func.func @transform_0(%arg0: i32) -> (i32, i32) {
    %c0_i32 = arith.constant 0 : i32
    %c0_i32_0 = arith.constant 0 : i32
    return %arg0, %c0_i32 : i32, i32
  }
  func.func @transform_1(%arg0: i32) -> (i32, i32) {
    %c0_i32 = arith.constant 0 : i32
    %c0_i32_0 = arith.constant 0 : i32
    %c0_i32_1 = arith.constant 0 : i32
    return %c0_i32, %c0_i32_0 : i32, i32
  }
  func.func @transform_2(%arg0: i32) -> (i32, i32) {
    %c0_i32 = arith.constant 0 : i32
    %c0_i32_0 = arith.constant 0 : i32
    %c0_i32_1 = arith.constant 0 : i32
    return %c0_i32, %c0_i32_0 : i32, i32
  }
  func.func @transform_3(%arg0: i32) -> (i32, i32) {
    %c0_i32 = arith.constant 0 : i32
    %c0_i32_0 = arith.constant 0 : i32
    return %arg0, %c0_i32 : i32, i32
  }
}

module attributes {stable_mosaic.version = 11 : i64} {
  func.func @_conv3x3_bn_relu_kernel(%arg0: i32, %arg1: i32, %arg2: memref<1x18x18x128xbf16, #tpu.memory_space<vmem>>, %arg3: memref<9x128x128xbf16, #tpu.memory_space<vmem>>, %arg4: memref<1x128xf32, #tpu.memory_space<vmem>>, %arg5: memref<1x8x16x128xbf16, #tpu.memory_space<vmem>>) attributes {dimension_semantics = [#tpu.dimension_semantics<parallel>, #tpu.dimension_semantics<parallel>], iteration_bounds = array<i64: 2, 2>, scalar_prefetch = 0 : i64, scratch_operands = 0 : i64, tpu.core_type = #tpu.core_type<tc>, window_params = [{transform_indices = @transform_0, window_bounds = array<i64: 1, 18, 18, 128>}, {pipeline_mode = #tpu.pipeline_mode<synchronous>, transform_indices = @transform_1, window_bounds = array<i64: 9, 128, 128>}, {pipeline_mode = #tpu.pipeline_mode<synchronous>, transform_indices = @transform_2, window_bounds = array<i64: 1, 128>}, {transform_indices = @transform_3, window_bounds = array<i64: 1, 8, 16, 128>}]} {
    %c8_i32 = arith.constant 8 : i32
    %0 = arith.muli %arg1, %c8_i32 : i32
    %cst = arith.constant 0.000000e+00 : f32
    %1 = vector.broadcast %cst : f32 to vector<128x128xf32>
    %c0_i32 = arith.constant 0 : i32
    %2 = arith.addi %0, %c0_i32 : i32
    %c0 = arith.constant 0 : index
    %3 = arith.index_cast %2 : i32 to index
    %c0_0 = arith.constant 0 : index
    %c0_1 = arith.constant 0 : index
    %4 = vector.load %arg2[%c0, %3, %c0_0, %c0_1] : memref<1x18x18x128xbf16, #tpu.memory_space<vmem>>, vector<1x8x16x128xbf16>
    %5 = vector.shape_cast %4 : vector<1x8x16x128xbf16> to vector<8x16x128xbf16>
    %6 = vector.shape_cast %5 : vector<8x16x128xbf16> to vector<128x128xbf16>
    %c0_2 = arith.constant 0 : index
    %c0_3 = arith.constant 0 : index
    %c0_4 = arith.constant 0 : index
    %7 = vector.load %arg3[%c0_2, %c0_3, %c0_4] : memref<9x128x128xbf16, #tpu.memory_space<vmem>>, vector<1x128x128xbf16>
    %8 = vector.shape_cast %7 : vector<1x128x128xbf16> to vector<128x128xbf16>
    %cst_5 = arith.constant dense<0.000000e+00> : vector<128x128xf32>
    %9 = tpu.matmul %6, %8, %cst_5 {dimension_numbers = #tpu.dot_dimension_numbers<[1], [0], [0], [1], [0, 0, 1, 1], [], []>} : vector<128x128xbf16>, vector<128x128xbf16>, vector<128x128xf32> -> vector<128x128xf32>
    %10 = arith.addf %1, %9 : vector<128x128xf32>
    %c0_i32_6 = arith.constant 0 : i32
    %11 = arith.addi %0, %c0_i32_6 : i32
    %c0_7 = arith.constant 0 : index
    %12 = arith.index_cast %11 : i32 to index
    %c1 = arith.constant 1 : index
    %c0_8 = arith.constant 0 : index
    %13 = vector.load %arg2[%c0_7, %12, %c1, %c0_8] : memref<1x18x18x128xbf16, #tpu.memory_space<vmem>>, vector<1x8x16x128xbf16>
    %14 = vector.shape_cast %13 : vector<1x8x16x128xbf16> to vector<8x16x128xbf16>
    %15 = vector.shape_cast %14 : vector<8x16x128xbf16> to vector<128x128xbf16>
    %c1_9 = arith.constant 1 : index
    %c0_10 = arith.constant 0 : index
    %c0_11 = arith.constant 0 : index
    %16 = vector.load %arg3[%c1_9, %c0_10, %c0_11] : memref<9x128x128xbf16, #tpu.memory_space<vmem>>, vector<1x128x128xbf16>
    %17 = vector.shape_cast %16 : vector<1x128x128xbf16> to vector<128x128xbf16>
    %cst_12 = arith.constant dense<0.000000e+00> : vector<128x128xf32>
    %18 = tpu.matmul %15, %17, %cst_12 {dimension_numbers = #tpu.dot_dimension_numbers<[1], [0], [0], [1], [0, 0, 1, 1], [], []>} : vector<128x128xbf16>, vector<128x128xbf16>, vector<128x128xf32> -> vector<128x128xf32>
    %19 = arith.addf %10, %18 : vector<128x128xf32>
    %c0_i32_13 = arith.constant 0 : i32
    %20 = arith.addi %0, %c0_i32_13 : i32
    %c0_14 = arith.constant 0 : index
    %21 = arith.index_cast %20 : i32 to index
    %c2 = arith.constant 2 : index
    %c0_15 = arith.constant 0 : index
    %22 = vector.load %arg2[%c0_14, %21, %c2, %c0_15] : memref<1x18x18x128xbf16, #tpu.memory_space<vmem>>, vector<1x8x16x128xbf16>
    %23 = vector.shape_cast %22 : vector<1x8x16x128xbf16> to vector<8x16x128xbf16>
    %24 = vector.shape_cast %23 : vector<8x16x128xbf16> to vector<128x128xbf16>
    %c2_16 = arith.constant 2 : index
    %c0_17 = arith.constant 0 : index
    %c0_18 = arith.constant 0 : index
    %25 = vector.load %arg3[%c2_16, %c0_17, %c0_18] : memref<9x128x128xbf16, #tpu.memory_space<vmem>>, vector<1x128x128xbf16>
    %26 = vector.shape_cast %25 : vector<1x128x128xbf16> to vector<128x128xbf16>
    %cst_19 = arith.constant dense<0.000000e+00> : vector<128x128xf32>
    %27 = tpu.matmul %24, %26, %cst_19 {dimension_numbers = #tpu.dot_dimension_numbers<[1], [0], [0], [1], [0, 0, 1, 1], [], []>} : vector<128x128xbf16>, vector<128x128xbf16>, vector<128x128xf32> -> vector<128x128xf32>
    %28 = arith.addf %19, %27 : vector<128x128xf32>
    %c1_i32 = arith.constant 1 : i32
    %29 = arith.addi %0, %c1_i32 : i32
    %c0_20 = arith.constant 0 : index
    %30 = arith.index_cast %29 : i32 to index
    %c0_21 = arith.constant 0 : index
    %c0_22 = arith.constant 0 : index
    %31 = vector.load %arg2[%c0_20, %30, %c0_21, %c0_22] : memref<1x18x18x128xbf16, #tpu.memory_space<vmem>>, vector<1x8x16x128xbf16>
    %32 = vector.shape_cast %31 : vector<1x8x16x128xbf16> to vector<8x16x128xbf16>
    %33 = vector.shape_cast %32 : vector<8x16x128xbf16> to vector<128x128xbf16>
    %c3 = arith.constant 3 : index
    %c0_23 = arith.constant 0 : index
    %c0_24 = arith.constant 0 : index
    %34 = vector.load %arg3[%c3, %c0_23, %c0_24] : memref<9x128x128xbf16, #tpu.memory_space<vmem>>, vector<1x128x128xbf16>
    %35 = vector.shape_cast %34 : vector<1x128x128xbf16> to vector<128x128xbf16>
    %cst_25 = arith.constant dense<0.000000e+00> : vector<128x128xf32>
    %36 = tpu.matmul %33, %35, %cst_25 {dimension_numbers = #tpu.dot_dimension_numbers<[1], [0], [0], [1], [0, 0, 1, 1], [], []>} : vector<128x128xbf16>, vector<128x128xbf16>, vector<128x128xf32> -> vector<128x128xf32>
    %37 = arith.addf %28, %36 : vector<128x128xf32>
    %c1_i32_26 = arith.constant 1 : i32
    %38 = arith.addi %0, %c1_i32_26 : i32
    %c0_27 = arith.constant 0 : index
    %39 = arith.index_cast %38 : i32 to index
    %c1_28 = arith.constant 1 : index
    %c0_29 = arith.constant 0 : index
    %40 = vector.load %arg2[%c0_27, %39, %c1_28, %c0_29] : memref<1x18x18x128xbf16, #tpu.memory_space<vmem>>, vector<1x8x16x128xbf16>
    %41 = vector.shape_cast %40 : vector<1x8x16x128xbf16> to vector<8x16x128xbf16>
    %42 = vector.shape_cast %41 : vector<8x16x128xbf16> to vector<128x128xbf16>
    %c4 = arith.constant 4 : index
    %c0_30 = arith.constant 0 : index
    %c0_31 = arith.constant 0 : index
    %43 = vector.load %arg3[%c4, %c0_30, %c0_31] : memref<9x128x128xbf16, #tpu.memory_space<vmem>>, vector<1x128x128xbf16>
    %44 = vector.shape_cast %43 : vector<1x128x128xbf16> to vector<128x128xbf16>
    %cst_32 = arith.constant dense<0.000000e+00> : vector<128x128xf32>
    %45 = tpu.matmul %42, %44, %cst_32 {dimension_numbers = #tpu.dot_dimension_numbers<[1], [0], [0], [1], [0, 0, 1, 1], [], []>} : vector<128x128xbf16>, vector<128x128xbf16>, vector<128x128xf32> -> vector<128x128xf32>
    %46 = arith.addf %37, %45 : vector<128x128xf32>
    %c1_i32_33 = arith.constant 1 : i32
    %47 = arith.addi %0, %c1_i32_33 : i32
    %c0_34 = arith.constant 0 : index
    %48 = arith.index_cast %47 : i32 to index
    %c2_35 = arith.constant 2 : index
    %c0_36 = arith.constant 0 : index
    %49 = vector.load %arg2[%c0_34, %48, %c2_35, %c0_36] : memref<1x18x18x128xbf16, #tpu.memory_space<vmem>>, vector<1x8x16x128xbf16>
    %50 = vector.shape_cast %49 : vector<1x8x16x128xbf16> to vector<8x16x128xbf16>
    %51 = vector.shape_cast %50 : vector<8x16x128xbf16> to vector<128x128xbf16>
    %c5 = arith.constant 5 : index
    %c0_37 = arith.constant 0 : index
    %c0_38 = arith.constant 0 : index
    %52 = vector.load %arg3[%c5, %c0_37, %c0_38] : memref<9x128x128xbf16, #tpu.memory_space<vmem>>, vector<1x128x128xbf16>
    %53 = vector.shape_cast %52 : vector<1x128x128xbf16> to vector<128x128xbf16>
    %cst_39 = arith.constant dense<0.000000e+00> : vector<128x128xf32>
    %54 = tpu.matmul %51, %53, %cst_39 {dimension_numbers = #tpu.dot_dimension_numbers<[1], [0], [0], [1], [0, 0, 1, 1], [], []>} : vector<128x128xbf16>, vector<128x128xbf16>, vector<128x128xf32> -> vector<128x128xf32>
    %55 = arith.addf %46, %54 : vector<128x128xf32>
    %c2_i32 = arith.constant 2 : i32
    %56 = arith.addi %0, %c2_i32 : i32
    %c0_40 = arith.constant 0 : index
    %57 = arith.index_cast %56 : i32 to index
    %c0_41 = arith.constant 0 : index
    %c0_42 = arith.constant 0 : index
    %58 = vector.load %arg2[%c0_40, %57, %c0_41, %c0_42] : memref<1x18x18x128xbf16, #tpu.memory_space<vmem>>, vector<1x8x16x128xbf16>
    %59 = vector.shape_cast %58 : vector<1x8x16x128xbf16> to vector<8x16x128xbf16>
    %60 = vector.shape_cast %59 : vector<8x16x128xbf16> to vector<128x128xbf16>
    %c6 = arith.constant 6 : index
    %c0_43 = arith.constant 0 : index
    %c0_44 = arith.constant 0 : index
    %61 = vector.load %arg3[%c6, %c0_43, %c0_44] : memref<9x128x128xbf16, #tpu.memory_space<vmem>>, vector<1x128x128xbf16>
    %62 = vector.shape_cast %61 : vector<1x128x128xbf16> to vector<128x128xbf16>
    %cst_45 = arith.constant dense<0.000000e+00> : vector<128x128xf32>
    %63 = tpu.matmul %60, %62, %cst_45 {dimension_numbers = #tpu.dot_dimension_numbers<[1], [0], [0], [1], [0, 0, 1, 1], [], []>} : vector<128x128xbf16>, vector<128x128xbf16>, vector<128x128xf32> -> vector<128x128xf32>
    %64 = arith.addf %55, %63 : vector<128x128xf32>
    %c2_i32_46 = arith.constant 2 : i32
    %65 = arith.addi %0, %c2_i32_46 : i32
    %c0_47 = arith.constant 0 : index
    %66 = arith.index_cast %65 : i32 to index
    %c1_48 = arith.constant 1 : index
    %c0_49 = arith.constant 0 : index
    %67 = vector.load %arg2[%c0_47, %66, %c1_48, %c0_49] : memref<1x18x18x128xbf16, #tpu.memory_space<vmem>>, vector<1x8x16x128xbf16>
    %68 = vector.shape_cast %67 : vector<1x8x16x128xbf16> to vector<8x16x128xbf16>
    %69 = vector.shape_cast %68 : vector<8x16x128xbf16> to vector<128x128xbf16>
    %c7 = arith.constant 7 : index
    %c0_50 = arith.constant 0 : index
    %c0_51 = arith.constant 0 : index
    %70 = vector.load %arg3[%c7, %c0_50, %c0_51] : memref<9x128x128xbf16, #tpu.memory_space<vmem>>, vector<1x128x128xbf16>
    %71 = vector.shape_cast %70 : vector<1x128x128xbf16> to vector<128x128xbf16>
    %cst_52 = arith.constant dense<0.000000e+00> : vector<128x128xf32>
    %72 = tpu.matmul %69, %71, %cst_52 {dimension_numbers = #tpu.dot_dimension_numbers<[1], [0], [0], [1], [0, 0, 1, 1], [], []>} : vector<128x128xbf16>, vector<128x128xbf16>, vector<128x128xf32> -> vector<128x128xf32>
    %73 = arith.addf %64, %72 : vector<128x128xf32>
    %c2_i32_53 = arith.constant 2 : i32
    %74 = arith.addi %0, %c2_i32_53 : i32
    %c0_54 = arith.constant 0 : index
    %75 = arith.index_cast %74 : i32 to index
    %c2_55 = arith.constant 2 : index
    %c0_56 = arith.constant 0 : index
    %76 = vector.load %arg2[%c0_54, %75, %c2_55, %c0_56] : memref<1x18x18x128xbf16, #tpu.memory_space<vmem>>, vector<1x8x16x128xbf16>
    %77 = vector.shape_cast %76 : vector<1x8x16x128xbf16> to vector<8x16x128xbf16>
    %78 = vector.shape_cast %77 : vector<8x16x128xbf16> to vector<128x128xbf16>
    %c8 = arith.constant 8 : index
    %c0_57 = arith.constant 0 : index
    %c0_58 = arith.constant 0 : index
    %79 = vector.load %arg3[%c8, %c0_57, %c0_58] : memref<9x128x128xbf16, #tpu.memory_space<vmem>>, vector<1x128x128xbf16>
    %80 = vector.shape_cast %79 : vector<1x128x128xbf16> to vector<128x128xbf16>
    %cst_59 = arith.constant dense<0.000000e+00> : vector<128x128xf32>
    %81 = tpu.matmul %78, %80, %cst_59 {dimension_numbers = #tpu.dot_dimension_numbers<[1], [0], [0], [1], [0, 0, 1, 1], [], []>} : vector<128x128xbf16>, vector<128x128xbf16>, vector<128x128xf32> -> vector<128x128xf32>
    %82 = arith.addf %73, %81 : vector<128x128xf32>
    %c0_60 = arith.constant 0 : index
    %c0_61 = arith.constant 0 : index
    %83 = vector.load %arg4[%c0_60, %c0_61] : memref<1x128xf32, #tpu.memory_space<vmem>>, vector<1x128xf32>
    %84 = vector.broadcast %83 : vector<1x128xf32> to vector<128x128xf32>
    %85 = arith.addf %82, %84 : vector<128x128xf32>
    %cst_62 = arith.constant 0.000000e+00 : f32
    %86 = vector.broadcast %cst_62 : f32 to vector<128x128xf32>
    %87 = arith.maximumf %85, %86 : vector<128x128xf32>
    %88 = vector.shape_cast %87 : vector<128x128xf32> to vector<1x8x16x128xf32>
    %89 = arith.truncf %88 : vector<1x8x16x128xf32> to vector<1x8x16x128xbf16>
    %c0_63 = arith.constant 0 : index
    %c0_64 = arith.constant 0 : index
    %c0_65 = arith.constant 0 : index
    %c0_66 = arith.constant 0 : index
    %90 = vector.load %arg5[%c0_63, %c0_64, %c0_65, %c0_66] : memref<1x8x16x128xbf16, #tpu.memory_space<vmem>>, vector<1x8x16x128xbf16>
    tpu.vector_store %arg5[%c0_63, %c0_64, %c0_65, %c0_66], %89 {strides = array<i32>} : memref<1x8x16x128xbf16, #tpu.memory_space<vmem>>, vector<1x8x16x128xbf16>,
    return
  }
  func.func @transform_0(%arg0: i32, %arg1: i32) -> (i32, i32, i32, i32) {
    %c0_i32 = arith.constant 0 : i32
    %c0_i32_0 = arith.constant 0 : i32
    %c0_i32_1 = arith.constant 0 : i32
    %c0_i32_2 = arith.constant 0 : i32
    return %arg0, %c0_i32, %c0_i32_0, %c0_i32_1 : i32, i32, i32, i32
  }
  func.func @transform_1(%arg0: i32, %arg1: i32) -> (i32, i32, i32) {
    %c0_i32 = arith.constant 0 : i32
    %c0_i32_0 = arith.constant 0 : i32
    %c0_i32_1 = arith.constant 0 : i32
    %c0_i32_2 = arith.constant 0 : i32
    return %c0_i32, %c0_i32_0, %c0_i32_1 : i32, i32, i32
  }
  func.func @transform_2(%arg0: i32, %arg1: i32) -> (i32, i32) {
    %c0_i32 = arith.constant 0 : i32
    %c0_i32_0 = arith.constant 0 : i32
    %c0_i32_1 = arith.constant 0 : i32
    return %c0_i32, %c0_i32_0 : i32, i32
  }
  func.func @transform_3(%arg0: i32, %arg1: i32) -> (i32, i32, i32, i32) {
    %c0_i32 = arith.constant 0 : i32
    %c0_i32_0 = arith.constant 0 : i32
    %c0_i32_1 = arith.constant 0 : i32
    return %arg0, %arg1, %c0_i32, %c0_i32_0 : i32, i32, i32, i32
  }
}

module attributes {stable_mosaic.version = 11 : i64} {
  func.func @_conv3x3_bn_relu_kernel(%arg0: i32, %arg1: i32, %arg2: memref<1x34x34x128xbf16, #tpu.memory_space<vmem>>, %arg3: memref<9x128x128xbf16, #tpu.memory_space<vmem>>, %arg4: memref<1x128xf32, #tpu.memory_space<vmem>>, %arg5: memref<1x8x32x128xbf16, #tpu.memory_space<vmem>>) attributes {dimension_semantics = [#tpu.dimension_semantics<parallel>, #tpu.dimension_semantics<parallel>], iteration_bounds = array<i64: 2, 4>, scalar_prefetch = 0 : i64, scratch_operands = 0 : i64, tpu.core_type = #tpu.core_type<tc>, window_params = [{transform_indices = @transform_0, window_bounds = array<i64: 1, 34, 34, 128>}, {pipeline_mode = #tpu.pipeline_mode<synchronous>, transform_indices = @transform_1, window_bounds = array<i64: 9, 128, 128>}, {pipeline_mode = #tpu.pipeline_mode<synchronous>, transform_indices = @transform_2, window_bounds = array<i64: 1, 128>}, {transform_indices = @transform_3, window_bounds = array<i64: 1, 8, 32, 128>}]} {
    %c8_i32 = arith.constant 8 : i32
    %0 = arith.muli %arg1, %c8_i32 : i32
    %cst = arith.constant 0.000000e+00 : f32
    %1 = vector.broadcast %cst : f32 to vector<256x128xf32>
    %c0_i32 = arith.constant 0 : i32
    %2 = arith.addi %0, %c0_i32 : i32
    %c0 = arith.constant 0 : index
    %3 = arith.index_cast %2 : i32 to index
    %c0_0 = arith.constant 0 : index
    %c0_1 = arith.constant 0 : index
    %4 = vector.load %arg2[%c0, %3, %c0_0, %c0_1] : memref<1x34x34x128xbf16, #tpu.memory_space<vmem>>, vector<1x8x32x128xbf16>
    %5 = vector.shape_cast %4 : vector<1x8x32x128xbf16> to vector<8x32x128xbf16>
    %6 = vector.shape_cast %5 : vector<8x32x128xbf16> to vector<256x128xbf16>
    %c0_2 = arith.constant 0 : index
    %c0_3 = arith.constant 0 : index
    %c0_4 = arith.constant 0 : index
    %7 = vector.load %arg3[%c0_2, %c0_3, %c0_4] : memref<9x128x128xbf16, #tpu.memory_space<vmem>>, vector<1x128x128xbf16>
    %8 = vector.shape_cast %7 : vector<1x128x128xbf16> to vector<128x128xbf16>
    %cst_5 = arith.constant dense<0.000000e+00> : vector<256x128xf32>
    %9 = tpu.matmul %6, %8, %cst_5 {dimension_numbers = #tpu.dot_dimension_numbers<[1], [0], [0], [1], [0, 0, 1, 1], [], []>} : vector<256x128xbf16>, vector<128x128xbf16>, vector<256x128xf32> -> vector<256x128xf32>
    %10 = arith.addf %1, %9 : vector<256x128xf32>
    %c0_i32_6 = arith.constant 0 : i32
    %11 = arith.addi %0, %c0_i32_6 : i32
    %c0_7 = arith.constant 0 : index
    %12 = arith.index_cast %11 : i32 to index
    %c1 = arith.constant 1 : index
    %c0_8 = arith.constant 0 : index
    %13 = vector.load %arg2[%c0_7, %12, %c1, %c0_8] : memref<1x34x34x128xbf16, #tpu.memory_space<vmem>>, vector<1x8x32x128xbf16>
    %14 = vector.shape_cast %13 : vector<1x8x32x128xbf16> to vector<8x32x128xbf16>
    %15 = vector.shape_cast %14 : vector<8x32x128xbf16> to vector<256x128xbf16>
    %c1_9 = arith.constant 1 : index
    %c0_10 = arith.constant 0 : index
    %c0_11 = arith.constant 0 : index
    %16 = vector.load %arg3[%c1_9, %c0_10, %c0_11] : memref<9x128x128xbf16, #tpu.memory_space<vmem>>, vector<1x128x128xbf16>
    %17 = vector.shape_cast %16 : vector<1x128x128xbf16> to vector<128x128xbf16>
    %cst_12 = arith.constant dense<0.000000e+00> : vector<256x128xf32>
    %18 = tpu.matmul %15, %17, %cst_12 {dimension_numbers = #tpu.dot_dimension_numbers<[1], [0], [0], [1], [0, 0, 1, 1], [], []>} : vector<256x128xbf16>, vector<128x128xbf16>, vector<256x128xf32> -> vector<256x128xf32>
    %19 = arith.addf %10, %18 : vector<256x128xf32>
    %c0_i32_13 = arith.constant 0 : i32
    %20 = arith.addi %0, %c0_i32_13 : i32
    %c0_14 = arith.constant 0 : index
    %21 = arith.index_cast %20 : i32 to index
    %c2 = arith.constant 2 : index
    %c0_15 = arith.constant 0 : index
    %22 = vector.load %arg2[%c0_14, %21, %c2, %c0_15] : memref<1x34x34x128xbf16, #tpu.memory_space<vmem>>, vector<1x8x32x128xbf16>
    %23 = vector.shape_cast %22 : vector<1x8x32x128xbf16> to vector<8x32x128xbf16>
    %24 = vector.shape_cast %23 : vector<8x32x128xbf16> to vector<256x128xbf16>
    %c2_16 = arith.constant 2 : index
    %c0_17 = arith.constant 0 : index
    %c0_18 = arith.constant 0 : index
    %25 = vector.load %arg3[%c2_16, %c0_17, %c0_18] : memref<9x128x128xbf16, #tpu.memory_space<vmem>>, vector<1x128x128xbf16>
    %26 = vector.shape_cast %25 : vector<1x128x128xbf16> to vector<128x128xbf16>
    %cst_19 = arith.constant dense<0.000000e+00> : vector<256x128xf32>
    %27 = tpu.matmul %24, %26, %cst_19 {dimension_numbers = #tpu.dot_dimension_numbers<[1], [0], [0], [1], [0, 0, 1, 1], [], []>} : vector<256x128xbf16>, vector<128x128xbf16>, vector<256x128xf32> -> vector<256x128xf32>
    %28 = arith.addf %19, %27 : vector<256x128xf32>
    %c1_i32 = arith.constant 1 : i32
    %29 = arith.addi %0, %c1_i32 : i32
    %c0_20 = arith.constant 0 : index
    %30 = arith.index_cast %29 : i32 to index
    %c0_21 = arith.constant 0 : index
    %c0_22 = arith.constant 0 : index
    %31 = vector.load %arg2[%c0_20, %30, %c0_21, %c0_22] : memref<1x34x34x128xbf16, #tpu.memory_space<vmem>>, vector<1x8x32x128xbf16>
    %32 = vector.shape_cast %31 : vector<1x8x32x128xbf16> to vector<8x32x128xbf16>
    %33 = vector.shape_cast %32 : vector<8x32x128xbf16> to vector<256x128xbf16>
    %c3 = arith.constant 3 : index
    %c0_23 = arith.constant 0 : index
    %c0_24 = arith.constant 0 : index
    %34 = vector.load %arg3[%c3, %c0_23, %c0_24] : memref<9x128x128xbf16, #tpu.memory_space<vmem>>, vector<1x128x128xbf16>
    %35 = vector.shape_cast %34 : vector<1x128x128xbf16> to vector<128x128xbf16>
    %cst_25 = arith.constant dense<0.000000e+00> : vector<256x128xf32>
    %36 = tpu.matmul %33, %35, %cst_25 {dimension_numbers = #tpu.dot_dimension_numbers<[1], [0], [0], [1], [0, 0, 1, 1], [], []>} : vector<256x128xbf16>, vector<128x128xbf16>, vector<256x128xf32> -> vector<256x128xf32>
    %37 = arith.addf %28, %36 : vector<256x128xf32>
    %c1_i32_26 = arith.constant 1 : i32
    %38 = arith.addi %0, %c1_i32_26 : i32
    %c0_27 = arith.constant 0 : index
    %39 = arith.index_cast %38 : i32 to index
    %c1_28 = arith.constant 1 : index
    %c0_29 = arith.constant 0 : index
    %40 = vector.load %arg2[%c0_27, %39, %c1_28, %c0_29] : memref<1x34x34x128xbf16, #tpu.memory_space<vmem>>, vector<1x8x32x128xbf16>
    %41 = vector.shape_cast %40 : vector<1x8x32x128xbf16> to vector<8x32x128xbf16>
    %42 = vector.shape_cast %41 : vector<8x32x128xbf16> to vector<256x128xbf16>
    %c4 = arith.constant 4 : index
    %c0_30 = arith.constant 0 : index
    %c0_31 = arith.constant 0 : index
    %43 = vector.load %arg3[%c4, %c0_30, %c0_31] : memref<9x128x128xbf16, #tpu.memory_space<vmem>>, vector<1x128x128xbf16>
    %44 = vector.shape_cast %43 : vector<1x128x128xbf16> to vector<128x128xbf16>
    %cst_32 = arith.constant dense<0.000000e+00> : vector<256x128xf32>
    %45 = tpu.matmul %42, %44, %cst_32 {dimension_numbers = #tpu.dot_dimension_numbers<[1], [0], [0], [1], [0, 0, 1, 1], [], []>} : vector<256x128xbf16>, vector<128x128xbf16>, vector<256x128xf32> -> vector<256x128xf32>
    %46 = arith.addf %37, %45 : vector<256x128xf32>
    %c1_i32_33 = arith.constant 1 : i32
    %47 = arith.addi %0, %c1_i32_33 : i32
    %c0_34 = arith.constant 0 : index
    %48 = arith.index_cast %47 : i32 to index
    %c2_35 = arith.constant 2 : index
    %c0_36 = arith.constant 0 : index
    %49 = vector.load %arg2[%c0_34, %48, %c2_35, %c0_36] : memref<1x34x34x128xbf16, #tpu.memory_space<vmem>>, vector<1x8x32x128xbf16>
    %50 = vector.shape_cast %49 : vector<1x8x32x128xbf16> to vector<8x32x128xbf16>
    %51 = vector.shape_cast %50 : vector<8x32x128xbf16> to vector<256x128xbf16>
    %c5 = arith.constant 5 : index
    %c0_37 = arith.constant 0 : index
    %c0_38 = arith.constant 0 : index
    %52 = vector.load %arg3[%c5, %c0_37, %c0_38] : memref<9x128x128xbf16, #tpu.memory_space<vmem>>, vector<1x128x128xbf16>
    %53 = vector.shape_cast %52 : vector<1x128x128xbf16> to vector<128x128xbf16>
    %cst_39 = arith.constant dense<0.000000e+00> : vector<256x128xf32>
    %54 = tpu.matmul %51, %53, %cst_39 {dimension_numbers = #tpu.dot_dimension_numbers<[1], [0], [0], [1], [0, 0, 1, 1], [], []>} : vector<256x128xbf16>, vector<128x128xbf16>, vector<256x128xf32> -> vector<256x128xf32>
    %55 = arith.addf %46, %54 : vector<256x128xf32>
    %c2_i32 = arith.constant 2 : i32
    %56 = arith.addi %0, %c2_i32 : i32
    %c0_40 = arith.constant 0 : index
    %57 = arith.index_cast %56 : i32 to index
    %c0_41 = arith.constant 0 : index
    %c0_42 = arith.constant 0 : index
    %58 = vector.load %arg2[%c0_40, %57, %c0_41, %c0_42] : memref<1x34x34x128xbf16, #tpu.memory_space<vmem>>, vector<1x8x32x128xbf16>
    %59 = vector.shape_cast %58 : vector<1x8x32x128xbf16> to vector<8x32x128xbf16>
    %60 = vector.shape_cast %59 : vector<8x32x128xbf16> to vector<256x128xbf16>
    %c6 = arith.constant 6 : index
    %c0_43 = arith.constant 0 : index
    %c0_44 = arith.constant 0 : index
    %61 = vector.load %arg3[%c6, %c0_43, %c0_44] : memref<9x128x128xbf16, #tpu.memory_space<vmem>>, vector<1x128x128xbf16>
    %62 = vector.shape_cast %61 : vector<1x128x128xbf16> to vector<128x128xbf16>
    %cst_45 = arith.constant dense<0.000000e+00> : vector<256x128xf32>
    %63 = tpu.matmul %60, %62, %cst_45 {dimension_numbers = #tpu.dot_dimension_numbers<[1], [0], [0], [1], [0, 0, 1, 1], [], []>} : vector<256x128xbf16>, vector<128x128xbf16>, vector<256x128xf32> -> vector<256x128xf32>
    %64 = arith.addf %55, %63 : vector<256x128xf32>
    %c2_i32_46 = arith.constant 2 : i32
    %65 = arith.addi %0, %c2_i32_46 : i32
    %c0_47 = arith.constant 0 : index
    %66 = arith.index_cast %65 : i32 to index
    %c1_48 = arith.constant 1 : index
    %c0_49 = arith.constant 0 : index
    %67 = vector.load %arg2[%c0_47, %66, %c1_48, %c0_49] : memref<1x34x34x128xbf16, #tpu.memory_space<vmem>>, vector<1x8x32x128xbf16>
    %68 = vector.shape_cast %67 : vector<1x8x32x128xbf16> to vector<8x32x128xbf16>
    %69 = vector.shape_cast %68 : vector<8x32x128xbf16> to vector<256x128xbf16>
    %c7 = arith.constant 7 : index
    %c0_50 = arith.constant 0 : index
    %c0_51 = arith.constant 0 : index
    %70 = vector.load %arg3[%c7, %c0_50, %c0_51] : memref<9x128x128xbf16, #tpu.memory_space<vmem>>, vector<1x128x128xbf16>
    %71 = vector.shape_cast %70 : vector<1x128x128xbf16> to vector<128x128xbf16>
    %cst_52 = arith.constant dense<0.000000e+00> : vector<256x128xf32>
    %72 = tpu.matmul %69, %71, %cst_52 {dimension_numbers = #tpu.dot_dimension_numbers<[1], [0], [0], [1], [0, 0, 1, 1], [], []>} : vector<256x128xbf16>, vector<128x128xbf16>, vector<256x128xf32> -> vector<256x128xf32>
    %73 = arith.addf %64, %72 : vector<256x128xf32>
    %c2_i32_53 = arith.constant 2 : i32
    %74 = arith.addi %0, %c2_i32_53 : i32
    %c0_54 = arith.constant 0 : index
    %75 = arith.index_cast %74 : i32 to index
    %c2_55 = arith.constant 2 : index
    %c0_56 = arith.constant 0 : index
    %76 = vector.load %arg2[%c0_54, %75, %c2_55, %c0_56] : memref<1x34x34x128xbf16, #tpu.memory_space<vmem>>, vector<1x8x32x128xbf16>
    %77 = vector.shape_cast %76 : vector<1x8x32x128xbf16> to vector<8x32x128xbf16>
    %78 = vector.shape_cast %77 : vector<8x32x128xbf16> to vector<256x128xbf16>
    %c8 = arith.constant 8 : index
    %c0_57 = arith.constant 0 : index
    %c0_58 = arith.constant 0 : index
    %79 = vector.load %arg3[%c8, %c0_57, %c0_58] : memref<9x128x128xbf16, #tpu.memory_space<vmem>>, vector<1x128x128xbf16>
    %80 = vector.shape_cast %79 : vector<1x128x128xbf16> to vector<128x128xbf16>
    %cst_59 = arith.constant dense<0.000000e+00> : vector<256x128xf32>
    %81 = tpu.matmul %78, %80, %cst_59 {dimension_numbers = #tpu.dot_dimension_numbers<[1], [0], [0], [1], [0, 0, 1, 1], [], []>} : vector<256x128xbf16>, vector<128x128xbf16>, vector<256x128xf32> -> vector<256x128xf32>
    %82 = arith.addf %73, %81 : vector<256x128xf32>
    %c0_60 = arith.constant 0 : index
    %c0_61 = arith.constant 0 : index
    %83 = vector.load %arg4[%c0_60, %c0_61] : memref<1x128xf32, #tpu.memory_space<vmem>>, vector<1x128xf32>
    %84 = vector.broadcast %83 : vector<1x128xf32> to vector<256x128xf32>
    %85 = arith.addf %82, %84 : vector<256x128xf32>
    %cst_62 = arith.constant 0.000000e+00 : f32
    %86 = vector.broadcast %cst_62 : f32 to vector<256x128xf32>
    %87 = arith.maximumf %85, %86 : vector<256x128xf32>
    %88 = vector.shape_cast %87 : vector<256x128xf32> to vector<1x8x32x128xf32>
    %89 = arith.truncf %88 : vector<1x8x32x128xf32> to vector<1x8x32x128xbf16>
    %c0_63 = arith.constant 0 : index
    %c0_64 = arith.constant 0 : index
    %c0_65 = arith.constant 0 : index
    %c0_66 = arith.constant 0 : index
    %90 = vector.load %arg5[%c0_63, %c0_64, %c0_65, %c0_66] : memref<1x8x32x128xbf16, #tpu.memory_space<vmem>>, vector<1x8x32x128xbf16>
    tpu.vector_store %arg5[%c0_63, %c0_64, %c0_65, %c0_66], %89 {strides = array<i32>} : memref<1x8x32x128xbf16, #tpu.memory_space<vmem>>, vector<1x8x32x128xbf16>,
    return
  }
  func.func @transform_0(%arg0: i32, %arg1: i32) -> (i32, i32, i32, i32) {
    %c0_i32 = arith.constant 0 : i32
    %c0_i32_0 = arith.constant 0 : i32
    %c0_i32_1 = arith.constant 0 : i32
    %c0_i32_2 = arith.constant 0 : i32
    return %arg0, %c0_i32, %c0_i32_0, %c0_i32_1 : i32, i32, i32, i32
  }
  func.func @transform_1(%arg0: i32, %arg1: i32) -> (i32, i32, i32) {
    %c0_i32 = arith.constant 0 : i32
    %c0_i32_0 = arith.constant 0 : i32
    %c0_i32_1 = arith.constant 0 : i32
    %c0_i32_2 = arith.constant 0 : i32
    return %c0_i32, %c0_i32_0, %c0_i32_1 : i32, i32, i32
  }
  func.func @transform_2(%arg0: i32, %arg1: i32) -> (i32, i32) {
    %c0_i32 = arith.constant 0 : i32
    %c0_i32_0 = arith.constant 0 : i32
    %c0_i32_1 = arith.constant 0 : i32
    return %c0_i32, %c0_i32_0 : i32, i32
  }
  func.func @transform_3(%arg0: i32, %arg1: i32) -> (i32, i32, i32, i32) {
    %c0_i32 = arith.constant 0 : i32
    %c0_i32_0 = arith.constant 0 : i32
    %c0_i32_1 = arith.constant 0 : i32
    return %arg0, %arg1, %c0_i32, %c0_i32_0 : i32, i32, i32, i32
  }
}

</mosaic_0001>

<llo_original>
// kernel: _lambda_.3
$region0: #{_lambda_.3}
  #allocation0 [shape = 'u32[]', space=smem, size = 0x4, offset = 0x4, fixed_abs, tag = 'smem constant byte address 0x4 - core index']
  #allocation1 [shape = 'u32[144,128]{1,0:T(1,128)}', space=vmem, size = 0x12000, scoped, tag = 'internal scratch']
  %s0 = inlined_call_operand.vmem [shape: f32[128,128], index: 0, kind: input, shape index: {}]
  %s1 = inlined_call_operand.vmem [shape: f32[1,128], index: 1, kind: input, shape index: {}]
  %s2 = inlined_call_operand.vmem [shape: f32[1,128], index: 2, kind: input, shape index: {}]
  %s3 = inlined_call_operand.vmem [shape: bf16[128,128], index: 3, kind: output, shape index: {}]
  %s4 = sld [smem:[#allocation0]]
  $region45: #{_lambda_.3} parent=0
    _
  %s6 = ssub.s32 1, %s4
  %s7 = scalar_select 0, %s6, %s4
  loop: start=0, step=1, limit=4
  $region2: #{_lambda_.3} parent=0 // loop_pre_header
    _
  $region3: #{_lambda_.3} parent=0 // loop_header
    %s9 = sphi 0, %s13
    %p10 = scmp.ge.s32.totalorder %s9, 4
    %s19 = sphi 0, %s21
    %s22 = sphi 0, %s19
    %s23 = sphi 0, %s22
    %s39 = sphi 0, %s23
    %s43 = sphi 0, %s43
    %s45 = sphi 0, %s43
    %s46 = sphi 0, %s45
    %s60 = sphi 0, %s46
    %s64 = sphi 0, %s64
    %s66 = sphi 0, %s64
    %s67 = sphi 0, %s66
    %s81 = sphi 0, %s67
    %s87 = sphi 0, %s89
    %s90 = sphi 0, %s87
    %s91 = sphi 0, %s90
    %s107 = sphi 0, %s91
  $region4: #{_lambda_.3} parent=0 // loop_header_branch
    %12 = sbr.rel (%p10) target = $region8
  $region5: #{_lambda_.3} parent=0 // loop_body
    %s14 = ssub.s32 %s9, 1
    %s15 = ssub.s32 %s9, 2
    %s16 = sadd.s32 %s9, 1
    %s17 = ssub.s32 %s9, %s16
    %p18 = scmp.eq.s32.totalorder %s17, 0
    %s20 = sadd.s32 %s19, 1
    %s21 = scalar_select %p18, %s19, %s20
    %p24 = pneg %p18
    %p25 = scmp.eq.s32.totalorder %s9, 1
    %p26 = por %p24, %p25
    %p27 = scmp.ne.s32.totalorder %s19, %s22
    %p28 = scmp.eq.s32.totalorder %s9, 0
    %p29 = por %p27, %p28
    %p30 = scmp.ne.s32.totalorder %s19, %s22
    %p31 = scmp.eq.s32.totalorder %s14, 1
    %p32 = por %p30, %p31
    %p33 = scmp.ne.s32.totalorder %s22, %s23
    %p34 = scmp.eq.s32.totalorder %s14, 0
    %p35 = por %p33, %p34
    %p36 = scmp.ne.s32.totalorder %s22, %s23
    %p37 = scmp.eq.s32.totalorder %s15, 1
    %p38 = por %p36, %p37
    %p40 = scmp.ne.s32.totalorder %s23, %s39
    %p41 = scmp.eq.s32.totalorder %s15, 0
    %p42 = por %p40, %p41
    %s44 = sadd.s32 %s43, 1
    %p47 = scmp.eq.s32.totalorder %s9, 1
    %p48 = scmp.ne.s32.totalorder %s43, %s45
    %p49 = scmp.eq.s32.totalorder %s9, 0
    %p50 = por %p48, %p49
    %p51 = scmp.ne.s32.totalorder %s43, %s45
    %p52 = scmp.eq.s32.totalorder %s14, 1
    %p53 = por %p51, %p52
    %p54 = scmp.ne.s32.totalorder %s45, %s46
    %p55 = scmp.eq.s32.totalorder %s14, 0
    %p56 = por %p54, %p55
    %p57 = scmp.ne.s32.totalorder %s45, %s46
    %p58 = scmp.eq.s32.totalorder %s15, 1
    %p59 = por %p57, %p58
    %p61 = scmp.ne.s32.totalorder %s46, %s60
    %p62 = scmp.eq.s32.totalorder %s15, 0
    %p63 = por %p61, %p62
    %s65 = sadd.s32 %s64, 1
    %p68 = scmp.eq.s32.totalorder %s9, 1
    %p69 = scmp.ne.s32.totalorder %s64, %s66
    %p70 = scmp.eq.s32.totalorder %s9, 0
    %p71 = por %p69, %p70
    %p72 = scmp.ne.s32.totalorder %s64, %s66
    %p73 = scmp.eq.s32.totalorder %s14, 1
    %p74 = por %p72, %p73
    %p75 = scmp.ne.s32.totalorder %s66, %s67
    %p76 = scmp.eq.s32.totalorder %s14, 0
    %p77 = por %p75, %p76
    %p78 = scmp.ne.s32.totalorder %s66, %s67
    %p79 = scmp.eq.s32.totalorder %s15, 1
    %p80 = por %p78, %p79
    %p82 = scmp.ne.s32.totalorder %s67, %s81
    %p83 = scmp.eq.s32.totalorder %s15, 0
    %p84 = por %p82, %p83
    %s85 = ssub.s32 %s9, %s16
    %p86 = scmp.eq.s32.totalorder %s85, 0
    %s88 = sadd.s32 %s87, 1
    %s89 = scalar_select %p86, %s87, %s88
    %p92 = pneg %p86
    %p93 = scmp.eq.s32.totalorder %s9, 1
    %p94 = por %p92, %p93
    %p95 = scmp.ne.s32.totalorder %s87, %s90
    %p96 = scmp.eq.s32.totalorder %s9, 0
    %p97 = por %p95, %p96
    %p98 = scmp.ne.s32.totalorder %s87, %s90
    %p99 = scmp.eq.s32.totalorder %s14, 1
    %p100 = por %p98, %p99
    %p101 = scmp.ne.s32.totalorder %s90, %s91
    %p102 = scmp.eq.s32.totalorder %s14, 0
    %p103 = por %p101, %p102
    %p104 = scmp.ne.s32.totalorder %s90, %s91
    %p105 = scmp.eq.s32.totalorder %s15, 1
    %p106 = por %p104, %p105
    %p108 = scmp.ne.s32.totalorder %s91, %s107
    %p109 = scmp.eq.s32.totalorder %s15, 0
    %p110 = por %p108, %p109
    %p111 = scmp.le.s32.totalorder 1, %s9
    %p112 = scmp.lt.s32.totalorder %s9, 3
    %p113 = pnand %p111, %p112
    %p114 = pneg %p113
    // Predicated region
    $region9: #{_lambda_.3} parent=5 // pred_check
      _
    $region10: #{_lambda_.3} parent=5 // pred_check_branch
      %116 = sbr.rel (%p113) target = $region12
    $region11: #{_lambda_.3} parent=5 // pred_region
      %s117 = ssub.s32 %s9, 1
      // Predicated region
      $region13: #{_lambda_.3} parent=11 // pred_check
        %p118 = pneg %p56
      $region14: #{_lambda_.3} parent=11 // pred_check_branch
        %120 = sbr.rel (%p118) target = $region16
      $region15: #{_lambda_.3} parent=11 // pred_region
        _
      $region16: #{_lambda_.3} parent=11 // pred_fallthru
        _
      // Predicated region
      $region17: #{_lambda_.3} parent=11 // pred_check
        %p121 = pneg %p77
      $region18: #{_lambda_.3} parent=11 // pred_check_branch
        %123 = sbr.rel (%p121) target = $region20
      $region19: #{_lambda_.3} parent=11 // pred_region
        _
      $region20: #{_lambda_.3} parent=11 // pred_fallthru
        _
    $region12: #{_lambda_.3} parent=5 // pred_fallthru
      _
    %p124 = scmp.lt.s32.totalorder %s9, 2
    // Predicated region
    $region21: #{_lambda_.3} parent=5 // pred_check
      %p125 = pneg %p124
    $region22: #{_lambda_.3} parent=5 // pred_check_branch
      %127 = sbr.rel (%p125) target = $region24
    $region23: #{_lambda_.3} parent=5 // pred_region
      // Predicated region
      $region25: #{_lambda_.3} parent=23 // pred_check
        %p128 = pneg %p29
      $region26: #{_lambda_.3} parent=23 // pred_check_branch
        %130 = sbr.rel (%p128) target = $region28
      $region27: #{_lambda_.3} parent=23 // pred_region
        %s131 = smul.u32 8, %s9
        %p132 = scmp.lt.s32.totalorder %s131, 15
        %s133 = scalar_select %p132, %s131, 15
        %s134 = smul.addr %s133, 8
        %s135 = scalar_lea.vmem %s0, %s134
        %s136 = smul.u32 8, %s9
      $region28: #{_lambda_.3} parent=23 // pred_fallthru
        _
    $region24: #{_lambda_.3} parent=5 // pred_fallthru
      _
    %p137 = scmp.le.s32.totalorder 1, %s9
    %p138 = scmp.lt.s32.totalorder %s9, 3
    %p139 = pnand %p137, %p138
    %p140 = pneg %p139
    // Predicated region
    $region29: #{_lambda_.3} parent=5 // pred_check
      _
    $region30: #{_lambda_.3} parent=5 // pred_check_branch
      %142 = sbr.rel (%p139) target = $region32
    $region31: #{_lambda_.3} parent=5 // pred_region
      %s143 = ssub.s32 %s9, 1
      %s144 = smul.u32 8, %s14
      %p145 = scmp.lt.s32.totalorder %s144, 15
      %s146 = scalar_select %p145, %s144, 15
      %s147 = smul.addr %s146, 8
      %s148 = scalar_lea.vmem %s0, %s147
      %p149 = pneg %p35
      %p150 = pneg %p32
      %p151 = pneg %p56
      %p152 = pneg %p53
      %p153 = pneg %p77
      %p154 = pneg %p74
      %p155 = pneg %p103
      %p156 = pneg %p100
      %s157 = smul.u32 8, %s14
      %p158 = scmp.lt.s32.totalorder %s157, 15
      %s159 = scalar_select %p158, %s157, 15
      %s160 = smul.addr %s159, 4
      %s161 = scalar_lea.vmem %s3, %s160
      %s162 = smul.u32 8, %s14
      %p163 = scmp.lt.s32.totalorder %s162, 15
      %s164 = scalar_select %p163, %s162, 15
      %s165 = smul.addr %s164, 8
      %s166 = scalar_lea.vmem %s0, %s165
      %s167 = smul.u32 8, %s14
      %s168 = smul.u32 8, %s14
      %p169 = scmp.lt.s32.totalorder %s168, 15
      %s170 = scalar_select %p169, %s168, 15
      %s171 = smul.addr %s170, 4
      %s172 = scalar_lea.vmem %s3, %s171
      %s173 = smul.u32 8, %s14
      %v174 = vld [vmem:[%s166] sm:$0xff]
      %v175 = vld [vmem:[%s166 + $0x8] sm:$0xff]
      %v176 = vld [vmem:[%s166 + $0x10] sm:$0xff]
      %v177 = vld [vmem:[%s166 + $0x18] sm:$0xff]
      %v178 = vld [vmem:[%s166 + $0x20] sm:$0xff]
      %v179 = vld [vmem:[%s166 + $0x28] sm:$0xff]
      %v180 = vld [vmem:[%s166 + $0x30] sm:$0xff]
      %v181 = vld [vmem:[%s166 + $0x38] sm:$0xff]
      %182 = vadd.xlane.f32.xlu0 %v174
      %v183 = vpop.xlane.xlu0 %182
      %184 = vadd.xlane.f32.xlu0 %v175
      %v185 = vpop.xlane.xlu0 %184
      %186 = vadd.xlane.f32.xlu0 %v176
      %v187 = vpop.xlane.xlu0 %186
      %188 = vadd.xlane.f32.xlu0 %v177
      %v189 = vpop.xlane.xlu0 %188
      %190 = vadd.xlane.f32.xlu0 %v178
      %v191 = vpop.xlane.xlu0 %190
      %192 = vadd.xlane.f32.xlu0 %v179
      %v193 = vpop.xlane.xlu0 %192
      %194 = vadd.xlane.f32.xlu0 %v180
      %v195 = vpop.xlane.xlu0 %194
      %196 = vadd.xlane.f32.xlu0 %v181
      %v197 = vpop.xlane.xlu0 %196
      %v198 = vrcp.pop 128.0
      %v199 = vmul.f32 %v183, %v198
      %v200 = vmul.f32 %v185, %v198
      %v201 = vmul.f32 %v187, %v198
      %v202 = vmul.f32 %v189, %v198
      %v203 = vmul.f32 %v191, %v198
      %v204 = vmul.f32 %v193, %v198
      %v205 = vmul.f32 %v195, %v198
      %v206 = vmul.f32 %v197, %v198
      %v207 = vsub.f32 %v174, %v199
      %v208 = vsub.f32 %v175, %v200
      %v209 = vsub.f32 %v176, %v201
      %v210 = vsub.f32 %v177, %v202
      %v211 = vsub.f32 %v178, %v203
      %v212 = vsub.f32 %v179, %v204
      %v213 = vsub.f32 %v180, %v205
      %v214 = vsub.f32 %v181, %v206
      %v215 = vmul.f32 %v207, %v207
      %v216 = vmul.f32 %v208, %v208
      %v217 = vmul.f32 %v209, %v209
      %v218 = vmul.f32 %v210, %v210
      %v219 = vmul.f32 %v211, %v211
      %v220 = vmul.f32 %v212, %v212
      %v221 = vmul.f32 %v213, %v213
      %v222 = vmul.f32 %v214, %v214
      %223 = vadd.xlane.f32.xlu0 %v215
      %v224 = vpop.xlane.xlu0 %223
      %225 = vadd.xlane.f32.xlu0 %v216
      %v226 = vpop.xlane.xlu0 %225
      %227 = vadd.xlane.f32.xlu0 %v217
      %v228 = vpop.xlane.xlu0 %227
      %229 = vadd.xlane.f32.xlu0 %v218
      %v230 = vpop.xlane.xlu0 %229
      %231 = vadd.xlane.f32.xlu0 %v219
      %v232 = vpop.xlane.xlu0 %231
      %233 = vadd.xlane.f32.xlu0 %v220
      %v234 = vpop.xlane.xlu0 %233
      %235 = vadd.xlane.f32.xlu0 %v221
      %v236 = vpop.xlane.xlu0 %235
      %237 = vadd.xlane.f32.xlu0 %v222
      %v238 = vpop.xlane.xlu0 %237
      %v239 = vmul.f32 %v224, %v198
      %v240 = vmul.f32 %v226, %v198
      %v241 = vmul.f32 %v228, %v198
      %v242 = vmul.f32 %v230, %v198
      %v243 = vmul.f32 %v232, %v198
      %v244 = vmul.f32 %v234, %v198
      %v245 = vmul.f32 %v236, %v198
      %v246 = vmul.f32 %v238, %v198
      %v247 = vadd.f32 %v239, 1e-06
      %v248 = vadd.f32 %v240, 1e-06
      %v249 = vadd.f32 %v241, 1e-06
      %v250 = vadd.f32 %v242, 1e-06
      %v251 = vadd.f32 %v243, 1e-06
      %v252 = vadd.f32 %v244, 1e-06
      %v253 = vadd.f32 %v245, 1e-06
      %v254 = vadd.f32 %v246, 1e-06
      %v255 = vrsqrt.pop %v247
      %v256 = vrsqrt.pop %v248
      %v257 = vrsqrt.pop %v249
      %v258 = vrsqrt.pop %v250
      %v259 = vrsqrt.pop %v251
      %v260 = vrsqrt.pop %v252
      %v261 = vrsqrt.pop %v253
      %v262 = vrsqrt.pop %v254
      %v263 = vmul.f32 %v207, %v255
      %v264 = vmul.f32 %v208, %v256
      %v265 = vmul.f32 %v209, %v257
      %v266 = vmul.f32 %v210, %v258
      %v267 = vmul.f32 %v211, %v259
      %v268 = vmul.f32 %v212, %v260
      %v269 = vmul.f32 %v213, %v261
      %v270 = vmul.f32 %v214, %v262
      %v271 = vld [vmem:[%s1] sm:$0x1]
      %v273 = vlaneseq
      %v274 = vshrl.u32 %v273, 7
      %v275 = vsub.s32 0, %v274
      %v276 = vrot.slane %v271, %v275
      %v278 = vmul.f32 %v263, %v276
      %v279 = vmul.f32 %v264, %v276
      %v280 = vmul.f32 %v265, %v276
      %v281 = vmul.f32 %v266, %v276
      %v282 = vmul.f32 %v267, %v276
      %v283 = vmul.f32 %v268, %v276
      %v284 = vmul.f32 %v269, %v276
      %v285 = vmul.f32 %v270, %v276
      %v286 = vld [vmem:[%s2] sm:$0x1]
      %v288 = vlaneseq
      %v289 = vshrl.u32 %v288, 7
      %v290 = vsub.s32 0, %v289
      %v291 = vrot.slane %v286, %v290
      %v293 = vadd.f32 %v278, %v291
      %v294 = vadd.f32 %v279, %v291
      %v295 = vadd.f32 %v280, %v291
      %v296 = vadd.f32 %v281, %v291
      %v297 = vadd.f32 %v282, %v291
      %v298 = vadd.f32 %v283, %v291
      %v299 = vadd.f32 %v284, %v291
      %v300 = vadd.f32 %v285, %v291
      %v301 = vpack.c.bf16 %v294, %v293
      %v302 = vpack.c.bf16 %v296, %v295
      %v303 = vpack.c.bf16 %v298, %v297
      %v304 = vpack.c.bf16 %v300, %v299
      %v309 = vunpack.c.l.b16 %v301
      %v310 = vunpack.c.h.b16 %v301
      %v311 = vunpack.c.l.b16 %v302
      %v312 = vunpack.c.h.b16 %v302
      %v313 = vunpack.c.l.b16 %v303
      %v314 = vunpack.c.h.b16 %v303
      %v315 = vunpack.c.l.b16 %v304
      %v316 = vunpack.c.h.b16 %v304
      %v317 = vpack.c.b16 %v309, %v309
      %v318 = vpack.c.b16 %v310, %v310
      %v319 = vpack.c.b16 %v311, %v311
      %v320 = vpack.c.b16 %v312, %v312
      %v321 = vpack.c.b16 %v313, %v313
      %v322 = vpack.c.b16 %v314, %v314
      %v323 = vpack.c.b16 %v315, %v315
      %v324 = vpack.c.b16 %v316, %v316
      %333 = vst [vmem:[%s172] sm:$0xf] %v317
      %334 = vst [vmem:[%s172 + $0x4] sm:$0xf] %v318
      %335 = vst [vmem:[%s172 + $0x8] sm:$0xf] %v319
      %336 = vst [vmem:[%s172 + $0xc] sm:$0xf] %v320
      %337 = vst [vmem:[%s172 + $0x10] sm:$0xf] %v321
      %338 = vst [vmem:[%s172 + $0x14] sm:$0xf] %v322
      %339 = vst [vmem:[%s172 + $0x18] sm:$0xf] %v323
      %340 = vst [vmem:[%s172 + $0x1c] sm:$0xf] %v324
      %s341 = smul.u32 8, %s14
      %p342 = scmp.lt.s32.totalorder %s341, 15
      %s343 = scalar_select %p342, %s341, 15
      %s344 = smul.addr %s343, 4
      %s345 = scalar_lea.vmem %s3, %s344
      // Predicated region
      $region33: #{_lambda_.3} parent=31 // pred_check
        %p346 = pneg %p100
      $region34: #{_lambda_.3} parent=31 // pred_check_branch
        %348 = sbr.rel (%p346) target = $region36
      $region35: #{_lambda_.3} parent=31 // pred_region
        %s349 = smul.u32 8, %s14
      $region36: #{_lambda_.3} parent=31 // pred_fallthru
        _
    $region32: #{_lambda_.3} parent=5 // pred_fallthru
      _
    %p350 = scmp.le.s32.totalorder 2, %s9
    // Predicated region
    $region37: #{_lambda_.3} parent=5 // pred_check
      %p351 = pneg %p350
    $region38: #{_lambda_.3} parent=5 // pred_check_branch
      %353 = sbr.rel (%p351) target = $region40
    $region39: #{_lambda_.3} parent=5 // pred_region
      %s354 = ssub.s32 %s9, 2
      // Predicated region
      $region41: #{_lambda_.3} parent=39 // pred_check
        %p355 = pneg %p106
      $region42: #{_lambda_.3} parent=39 // pred_check_branch
        %357 = sbr.rel (%p355) target = $region44
      $region43: #{_lambda_.3} parent=39 // pred_region
        %s358 = smul.u32 8, %s15
        %p359 = scmp.lt.s32.totalorder %s358, 15
        %s360 = scalar_select %p359, %s358, 15
        %s361 = smul.addr %s360, 4
        %s362 = scalar_lea.vmem %s3, %s361
      $region44: #{_lambda_.3} parent=39 // pred_fallthru
        _
    $region40: #{_lambda_.3} parent=5 // pred_fallthru
      _
  $region6: #{_lambda_.3} parent=0 // loop_footer
    %s13 = sadd.s32 1, %s9
  $region7: #{_lambda_.3} parent=0 // loop_footer_branch
    %8 = sbr.rel target = $region3
  $region8: #{_lambda_.3} parent=0 // loop_exit
    _

// kernel: _lambda_.4
$region0: #{_lambda_.4}
  #allocation0 [shape = 'u32[]', space=smem, size = 0x4, offset = 0x4, fixed_abs, tag = 'smem constant byte address 0x4 - core index']
  #allocation1 [shape = 'u32[144,128]{1,0:T(1,128)}', space=vmem, size = 0x12000, scoped, tag = 'internal scratch']
  %s0 = inlined_call_operand.vmem [shape: bf16[2,18,18,128], index: 0, kind: input, shape index: {}]
  %s1 = inlined_call_operand.vmem [shape: bf16[9,128,128], index: 1, kind: input, shape index: {}]
  %s2 = inlined_call_operand.vmem [shape: f32[1,128], index: 2, kind: input, shape index: {}]
  %s3 = inlined_call_operand.vmem [shape: bf16[2,16,16,128], index: 3, kind: output, shape index: {}]
  %s4 = sld [smem:[#allocation0]]
  $region45: #{_lambda_.4} parent=0
    _
  %s6 = ssub.s32 1, %s4
  %s7 = scalar_select 0, %s6, %s4
  loop: start=0, step=1, limit=6
  $region2: #{_lambda_.4} parent=0 // loop_pre_header
    _
  $region3: #{_lambda_.4} parent=0 // loop_header
    %s9 = sphi 0, %s13
    %p10 = scmp.ge.s32.totalorder %s9, 6
    %s16 = sphi 0, %s28
    %s17 = sphi 0, %s24
    %s18 = sphi 0, %s16
    %s19 = sphi 0, %s17
    %s20 = sphi 0, %s18
    %s21 = sphi 0, %s19
    %s31 = sphi 0, %s33
    %s34 = sphi 0, %s31
    %s35 = sphi 0, %s34
    %s51 = sphi 0, %s35
    %s55 = sphi 0, %s55
    %s57 = sphi 0, %s55
    %s58 = sphi 0, %s57
    %s72 = sphi 0, %s58
    %s76 = sphi 0, %s76
    %s78 = sphi 0, %s76
    %s79 = sphi 0, %s78
    %s93 = sphi 0, %s79
    %s101 = sphi 0, %s103
    %s104 = sphi 0, %s101
    %s105 = sphi 0, %s104
    %s121 = sphi 0, %s105
  $region4: #{_lambda_.4} parent=0 // loop_header_branch
    %12 = sbr.rel (%p10) target = $region8
  $region5: #{_lambda_.4} parent=0 // loop_body
    %s14 = ssub.s32 %s9, 1
    %s15 = ssub.s32 %s9, 2
    %s22 = sadd.s32 1, %s17
    %p23 = scmp.ge.s32.totalorder %s22, 2
    %s24 = scalar_select %p23, 0, %s22
    %s25 = sadd.s32 1, %s16
    %s26 = scalar_select %p23, %s25, %s16
    %p27 = scmp.ge.s32.totalorder %s26, 2
    %s28 = scalar_select %p27, 0, %s26
    %s29 = ssub.s32 %s16, %s28
    %p30 = scmp.eq.s32.totalorder %s29, 0
    %s32 = sadd.s32 %s31, 1
    %s33 = scalar_select %p30, %s31, %s32
    %p36 = pneg %p30
    %p37 = scmp.eq.s32.totalorder %s9, 3
    %p38 = por %p36, %p37
    %p39 = scmp.ne.s32.totalorder %s31, %s34
    %p40 = scmp.eq.s32.totalorder %s9, 0
    %p41 = por %p39, %p40
    %p42 = scmp.ne.s32.totalorder %s31, %s34
    %p43 = scmp.eq.s32.totalorder %s14, 3
    %p44 = por %p42, %p43
    %p45 = scmp.ne.s32.totalorder %s34, %s35
    %p46 = scmp.eq.s32.totalorder %s14, 0
    %p47 = por %p45, %p46
    %p48 = scmp.ne.s32.totalorder %s34, %s35
    %p49 = scmp.eq.s32.totalorder %s15, 3
    %p50 = por %p48, %p49
    %p52 = scmp.ne.s32.totalorder %s35, %s51
    %p53 = scmp.eq.s32.totalorder %s15, 0
    %p54 = por %p52, %p53
    %s56 = sadd.s32 %s55, 1
    %p59 = scmp.eq.s32.totalorder %s9, 3
    %p60 = scmp.ne.s32.totalorder %s55, %s57
    %p61 = scmp.eq.s32.totalorder %s9, 0
    %p62 = por %p60, %p61
    %p63 = scmp.ne.s32.totalorder %s55, %s57
    %p64 = scmp.eq.s32.totalorder %s14, 3
    %p65 = por %p63, %p64
    %p66 = scmp.ne.s32.totalorder %s57, %s58
    %p67 = scmp.eq.s32.totalorder %s14, 0
    %p68 = por %p66, %p67
    %p69 = scmp.ne.s32.totalorder %s57, %s58
    %p70 = scmp.eq.s32.totalorder %s15, 3
    %p71 = por %p69, %p70
    %p73 = scmp.ne.s32.totalorder %s58, %s72
    %p74 = scmp.eq.s32.totalorder %s15, 0
    %p75 = por %p73, %p74
    %s77 = sadd.s32 %s76, 1
    %p80 = scmp.eq.s32.totalorder %s9, 3
    %p81 = scmp.ne.s32.totalorder %s76, %s78
    %p82 = scmp.eq.s32.totalorder %s9, 0
    %p83 = por %p81, %p82
    %p84 = scmp.ne.s32.totalorder %s76, %s78
    %p85 = scmp.eq.s32.totalorder %s14, 3
    %p86 = por %p84, %p85
    %p87 = scmp.ne.s32.totalorder %s78, %s79
    %p88 = scmp.eq.s32.totalorder %s14, 0
    %p89 = por %p87, %p88
    %p90 = scmp.ne.s32.totalorder %s78, %s79
    %p91 = scmp.eq.s32.totalorder %s15, 3
    %p92 = por %p90, %p91
    %p94 = scmp.ne.s32.totalorder %s79, %s93
    %p95 = scmp.eq.s32.totalorder %s15, 0
    %p96 = por %p94, %p95
    %s97 = ssub.s32 %s16, %s28
    %s98 = ssub.s32 %s17, %s24
    %s99 = sor.u32 %s97, %s98
    %p100 = scmp.eq.s32.totalorder %s99, 0
    %s102 = sadd.s32 %s101, 1
    %s103 = scalar_select %p100, %s101, %s102
    %p106 = pneg %p100
    %p107 = scmp.eq.s32.totalorder %s9, 3
    %p108 = por %p106, %p107
    %p109 = scmp.ne.s32.totalorder %s101, %s104
    %p110 = scmp.eq.s32.totalorder %s9, 0
    %p111 = por %p109, %p110
    %p112 = scmp.ne.s32.totalorder %s101, %s104
    %p113 = scmp.eq.s32.totalorder %s14, 3
    %p114 = por %p112, %p113
    %p115 = scmp.ne.s32.totalorder %s104, %s105
    %p116 = scmp.eq.s32.totalorder %s14, 0
    %p117 = por %p115, %p116
    %p118 = scmp.ne.s32.totalorder %s104, %s105
    %p119 = scmp.eq.s32.totalorder %s15, 3
    %p120 = por %p118, %p119
    %p122 = scmp.ne.s32.totalorder %s105, %s121
    %p123 = scmp.eq.s32.totalorder %s15, 0
    %p124 = por %p122, %p123
    %p125 = scmp.le.s32.totalorder 1, %s9
    %p126 = scmp.lt.s32.totalorder %s9, 5
    %p127 = pnand %p125, %p126
    %p128 = pneg %p127
    // Predicated region
    $region9: #{_lambda_.4} parent=5 // pred_check
      _
    $region10: #{_lambda_.4} parent=5 // pred_check_branch
      %130 = sbr.rel (%p127) target = $region12
    $region11: #{_lambda_.4} parent=5 // pred_region
      %s131 = ssub.s32 %s9, 1
      // Predicated region
      $region13: #{_lambda_.4} parent=11 // pred_check
        %p132 = pneg %p68
      $region14: #{_lambda_.4} parent=11 // pred_check_branch
        %134 = sbr.rel (%p132) target = $region16
      $region15: #{_lambda_.4} parent=11 // pred_region
        _
      $region16: #{_lambda_.4} parent=11 // pred_fallthru
        _
      // Predicated region
      $region17: #{_lambda_.4} parent=11 // pred_check
        %p135 = pneg %p89
      $region18: #{_lambda_.4} parent=11 // pred_check_branch
        %137 = sbr.rel (%p135) target = $region20
      $region19: #{_lambda_.4} parent=11 // pred_region
        _
      $region20: #{_lambda_.4} parent=11 // pred_fallthru
        _
    $region12: #{_lambda_.4} parent=5 // pred_fallthru
      _
    %p138 = scmp.lt.s32.totalorder %s9, 4
    // Predicated region
    $region21: #{_lambda_.4} parent=5 // pred_check
      %p139 = pneg %p138
    $region22: #{_lambda_.4} parent=5 // pred_check_branch
      %141 = sbr.rel (%p139) target = $region24
    $region23: #{_lambda_.4} parent=5 // pred_region
      // Predicated region
      $region25: #{_lambda_.4} parent=23 // pred_check
        %p142 = pneg %p41
      $region26: #{_lambda_.4} parent=23 // pred_check_branch
        %144 = sbr.rel (%p142) target = $region28
      $region27: #{_lambda_.4} parent=23 // pred_region
        %p145 = scmp.lt.s32.totalorder %s16, 1
        %s146 = scalar_select %p145, %s16, 1
        %s147 = smul.addr %s146, 54
        %s148 = smul.addr %s147, 4
        %s149 = scalar_lea.vmem %s0, %s148
      $region28: #{_lambda_.4} parent=23 // pred_fallthru
        _
    $region24: #{_lambda_.4} parent=5 // pred_fallthru
      _
    %p150 = scmp.le.s32.totalorder 1, %s9
    %p151 = scmp.lt.s32.totalorder %s9, 5
    %p152 = pnand %p150, %p151
    %p153 = pneg %p152
    // Predicated region
    $region29: #{_lambda_.4} parent=5 // pred_check
      _
    $region30: #{_lambda_.4} parent=5 // pred_check_branch
      %155 = sbr.rel (%p152) target = $region32
    $region31: #{_lambda_.4} parent=5 // pred_region
      %s156 = ssub.s32 %s9, 1
      %p157 = scmp.lt.s32.totalorder %s18, 1
      %s158 = scalar_select %p157, %s18, 1
      %s159 = smul.addr %s158, 54
      %s160 = smul.addr %s159, 4
      %s161 = scalar_lea.vmem %s0, %s160
      %p162 = pneg %p47
      %p163 = pneg %p44
      %p164 = pneg %p68
      %p165 = pneg %p65
      %p166 = pneg %p89
      %p167 = pneg %p86
      %p168 = pneg %p117
      %p169 = pneg %p114
      %s170 = smul.u32 8, %s19
      %p171 = scmp.lt.s32.totalorder %s18, 1
      %s172 = scalar_select %p171, %s18, 1
      %p173 = scmp.lt.s32.totalorder %s170, 15
      %s174 = scalar_select %p173, %s170, 15
      %s175 = smul.addr %s174, 2
      %s176 = smul.addr %s172, 32
      %s177 = sadd.s32 %s175, %s176
      %s178 = smul.addr %s177, 4
      %s179 = scalar_lea.vmem %s3, %s178
      %p180 = scmp.lt.s32.totalorder %s18, 1
      %s181 = scalar_select %p180, %s18, 1
      %s182 = smul.addr %s181, 54
      %s183 = smul.addr %s182, 4
      %s184 = scalar_lea.vmem %s0, %s183
      %s185 = smul.u32 8, %s19
      %p186 = scmp.lt.s32.totalorder %s18, 1
      %s187 = scalar_select %p186, %s18, 1
      %p188 = scmp.lt.s32.totalorder %s185, 15
      %s189 = scalar_select %p188, %s185, 15
      %s190 = smul.addr %s189, 2
      %s191 = smul.addr %s187, 32
      %s192 = sadd.s32 %s190, %s191
      %s193 = smul.addr %s192, 4
      %s194 = scalar_lea.vmem %s3, %s193
      %s195 = smul.u32 8, %s19
      %s197 = smul.u32 %s19, 8
      %s198 = smul.u32 %s197, 3
      %s199 = smul.addr %s198, 4
      %s200 = scalar_lea.vmem %s184, %s199
      %v201 = vld [vmem:[%s200] sm:$0xf]
      %v202 = vld [vmem:[%s200 + $0x4] sm:$0xf]
      %v203 = vld [vmem:[%s200 + $0xc] sm:$0xf]
      %v204 = vld [vmem:[%s200 + $0x10] sm:$0xf]
      %v205 = vld [vmem:[%s200 + $0x18] sm:$0xf]
      %v206 = vld [vmem:[%s200 + $0x1c] sm:$0xf]
      %v207 = vld [vmem:[%s200 + $0x24] sm:$0xf]
      %v208 = vld [vmem:[%s200 + $0x28] sm:$0xf]
      %v209 = vld [vmem:[%s200 + $0x30] sm:$0xf]
      %v210 = vld [vmem:[%s200 + $0x34] sm:$0xf]
      %v211 = vld [vmem:[%s200 + $0x3c] sm:$0xf]
      %v212 = vld [vmem:[%s200 + $0x40] sm:$0xf]
      %v213 = vld [vmem:[%s200 + $0x48] sm:$0xf]
      %v214 = vld [vmem:[%s200 + $0x4c] sm:$0xf]
      %v215 = vld [vmem:[%s200 + $0x54] sm:$0xf]
      %v216 = vld [vmem:[%s200 + $0x58] sm:$0xf]
      %v217 = vld [vmem:[%s1] sm:$0xf]
      %v218 = vld [vmem:[%s1 + $0x4] sm:$0xf]
      %v219 = vld [vmem:[%s1 + $0x8] sm:$0xf]
      %v220 = vld [vmem:[%s1 + $0xc] sm:$0xf]
      %v221 = vld [vmem:[%s1 + $0x10] sm:$0xf]
      %v222 = vld [vmem:[%s1 + $0x14] sm:$0xf]
      %v223 = vld [vmem:[%s1 + $0x18] sm:$0xf]
      %v224 = vld [vmem:[%s1 + $0x1c] sm:$0xf]
      %v225 = vld [vmem:[%s1 + $0x20] sm:$0xf]
      %v226 = vld [vmem:[%s1 + $0x24] sm:$0xf]
      %v227 = vld [vmem:[%s1 + $0x28] sm:$0xf]
      %v228 = vld [vmem:[%s1 + $0x2c] sm:$0xf]
      %v229 = vld [vmem:[%s1 + $0x30] sm:$0xf]
      %v230 = vld [vmem:[%s1 + $0x34] sm:$0xf]
      %v231 = vld [vmem:[%s1 + $0x38] sm:$0xf]
      %v232 = vld [vmem:[%s1 + $0x3c] sm:$0xf]
      %v233 = vld [vmem:[%s200 + $0x8] sm:$0x1]
      %v234 = vld [vmem:[%s200 + $0x14] sm:$0x1]
      %v235 = vld [vmem:[%s200 + $0x20] sm:$0x1]
      %v236 = vld [vmem:[%s200 + $0x2c] sm:$0x1]
      %v237 = vld [vmem:[%s200 + $0x38] sm:$0x1]
      %v238 = vld [vmem:[%s200 + $0x44] sm:$0x1]
      %v239 = vld [vmem:[%s200 + $0x50] sm:$0x1]
      %v240 = vld [vmem:[%s200 + $0x5c] sm:$0x1]
      %vm241 = vsmask.f32 3328
      %vm242 = vsmask.f32 7440
      %vm243 = vmor %vm241, %vm242
      %v245 = vshrl.u32 %v201, 16
      %v247 = vrot.slane %v245, 4
      %v248 = vshll.u32 %v201, 16
      %v250 = vrot.slane %v248, 5
      %v251 = vor.u32 %v247, %v250
      %v252 = vrot.slane %v251, 4
      %v254 = vshll.u32 %v202, 16
      %v256 = vrot.slane %v254, 5
      %v257 = vsel %vm243, %v252, %v256
      %v258 = vshrl.u32 %v202, 16
      %v260 = vrot.slane %v258, 4
      %v261 = vor.u32 %v260, %v256
      %v262 = vrot.slane %v261, 4
      %v264 = vshll.u32 %v233, 16
      %v266 = vrot.slane %v264, 5
      %v267 = vsel %vm243, %v262, %v266
      %v269 = vshrl.u32 %v203, 16
      %v271 = vrot.slane %v269, 4
      %v272 = vshll.u32 %v203, 16
      %v274 = vrot.slane %v272, 5
      %v275 = vor.u32 %v271, %v274
      %v276 = vrot.slane %v275, 4
      %v278 = vshll.u32 %v204, 16
      %v280 = vrot.slane %v278, 5
      %v281 = vsel %vm243, %v276, %v280
      %v282 = vshrl.u32 %v204, 16
      %v284 = vrot.slane %v282, 4
      %v285 = vor.u32 %v284, %v280
      %v286 = vrot.slane %v285, 4
      %v288 = vshll.u32 %v234, 16
      %v290 = vrot.slane %v288, 5
      %v291 = vsel %vm243, %v286, %v290
      %v293 = vshrl.u32 %v205, 16
      %v295 = vrot.slane %v293, 4
      %v296 = vshll.u32 %v205, 16
      %v298 = vrot.slane %v296, 5
      %v299 = vor.u32 %v295, %v298
      %v300 = vrot.slane %v299, 4
      %v302 = vshll.u32 %v206, 16
      %v304 = vrot.slane %v302, 5
      %v305 = vsel %vm243, %v300, %v304
      %v306 = vshrl.u32 %v206, 16
      %v308 = vrot.slane %v306, 4
      %v309 = vor.u32 %v308, %v304
      %v310 = vrot.slane %v309, 4
      %v312 = vshll.u32 %v235, 16
      %v314 = vrot.slane %v312, 5
      %v315 = vsel %vm243, %v310, %v314
      %v317 = vshrl.u32 %v207, 16
      %v319 = vrot.slane %v317, 4
      %v320 = vshll.u32 %v207, 16
      %v322 = vrot.slane %v320, 5
      %v323 = vor.u32 %v319, %v322
      %v324 = vrot.slane %v323, 4
      %v326 = vshll.u32 %v208, 16
      %v328 = vrot.slane %v326, 5
      %v329 = vsel %vm243, %v324, %v328
      %v330 = vshrl.u32 %v208, 16
      %v332 = vrot.slane %v330, 4
      %v333 = vor.u32 %v332, %v328
      %v334 = vrot.slane %v333, 4
      %v336 = vshll.u32 %v236, 16
      %v338 = vrot.slane %v336, 5
      %v339 = vsel %vm243, %v334, %v338
      %v341 = vshrl.u32 %v209, 16
      %v343 = vrot.slane %v341, 4
      %v344 = vshll.u32 %v209, 16
      %v346 = vrot.slane %v344, 5
      %v347 = vor.u32 %v343, %v346
      %v348 = vrot.slane %v347, 4
      %v350 = vshll.u32 %v210, 16
      %v352 = vrot.slane %v350, 5
      %v353 = vsel %vm243, %v348, %v352
      %v354 = vshrl.u32 %v210, 16
      %v356 = vrot.slane %v354, 4
      %v357 = vor.u32 %v356, %v352
      %v358 = vrot.slane %v357, 4
      %v360 = vshll.u32 %v237, 16
      %v362 = vrot.slane %v360, 5
      %v363 = vsel %vm243, %v358, %v362
      %v365 = vshrl.u32 %v211, 16
      %v367 = vrot.slane %v365, 4
      %v368 = vshll.u32 %v211, 16
      %v370 = vrot.slane %v368, 5
      %v371 = vor.u32 %v367, %v370
      %v372 = vrot.slane %v371, 4
      %v374 = vshll.u32 %v212, 16
      %v376 = vrot.slane %v374, 5
      %v377 = vsel %vm243, %v372, %v376
      %v378 = vshrl.u32 %v212, 16
      %v380 = vrot.slane %v378, 4
      %v381 = vor.u32 %v380, %v376
      %v382 = vrot.slane %v381, 4
      %v384 = vshll.u32 %v238, 16
      %v386 = vrot.slane %v384, 5
      %v387 = vsel %vm243, %v382, %v386
      %v389 = vshrl.u32 %v213, 16
      %v391 = vrot.slane %v389, 4
      %v392 = vshll.u32 %v213, 16
      %v394 = vrot.slane %v392, 5
      %v395 = vor.u32 %v391, %v394
      %v396 = vrot.slane %v395, 4
      %v398 = vshll.u32 %v214, 16
      %v400 = vrot.slane %v398, 5
      %v401 = vsel %vm243, %v396, %v400
      %v402 = vshrl.u32 %v214, 16
      %v404 = vrot.slane %v402, 4
      %v405 = vor.u32 %v404, %v400
      %v406 = vrot.slane %v405, 4
      %v408 = vshll.u32 %v239, 16
      %v410 = vrot.slane %v408, 5
      %v411 = vsel %vm243, %v406, %v410
      %v413 = vshrl.u32 %v215, 16
      %v415 = vrot.slane %v413, 4
      %v416 = vshll.u32 %v215, 16
      %v418 = vrot.slane %v416, 5
      %v419 = vor.u32 %v415, %v418
      %v420 = vrot.slane %v419, 4
      %v422 = vshll.u32 %v216, 16
      %v424 = vrot.slane %v422, 5
      %v425 = vsel %vm243, %v420, %v424
      %v426 = vshrl.u32 %v216, 16
      %v428 = vrot.slane %v426, 4
      %v429 = vor.u32 %v428, %v424
      %v430 = vrot.slane %v429, 4
      %v432 = vshll.u32 %v240, 16
      %v434 = vrot.slane %v432, 5
      %v435 = vsel %vm243, %v430, %v434
      %s436 = scalar_lea.vmem %s1, 64
      %v437 = vld [vmem:[%s436] sm:$0xf]
      %v438 = vld [vmem:[%s436 + $0x4] sm:$0xf]
      %v439 = vld [vmem:[%s436 + $0x8] sm:$0xf]
      %v440 = vld [vmem:[%s436 + $0xc] sm:$0xf]
      %v441 = vld [vmem:[%s436 + $0x10] sm:$0xf]
      %v442 = vld [vmem:[%s436 + $0x14] sm:$0xf]
      %v443 = vld [vmem:[%s436 + $0x18] sm:$0xf]
      %v444 = vld [vmem:[%s436 + $0x1c] sm:$0xf]
      %v445 = vld [vmem:[%s436 + $0x20] sm:$0xf]
      %v446 = vld [vmem:[%s436 + $0x24] sm:$0xf]
      %v447 = vld [vmem:[%s436 + $0x28] sm:$0xf]
      %v448 = vld [vmem:[%s436 + $0x2c] sm:$0xf]
      %v449 = vld [vmem:[%s436 + $0x30] sm:$0xf]
      %v450 = vld [vmem:[%s436 + $0x34] sm:$0xf]
      %v451 = vld [vmem:[%s436 + $0x38] sm:$0xf]
      %v452 = vld [vmem:[%s436 + $0x3c] sm:$0xf]
      %v453 = vunpack.c.l.b16 %v257
      %v454 = vunpack.c.l.b16 %v267
      %v455 = vunpack.c.l.b16 %v281
      %v456 = vunpack.c.l.b16 %v291
      %v457 = vunpack.c.l.b16 %v305
      %v458 = vunpack.c.l.b16 %v315
      %v459 = vunpack.c.l.b16 %v329
      %v460 = vunpack.c.l.b16 %v339
      %v461 = vunpack.c.l.b16 %v353
      %v462 = vunpack.c.l.b16 %v363
      %v463 = vunpack.c.l.b16 %v377
      %v464 = vunpack.c.l.b16 %v387
      %v465 = vunpack.c.l.b16 %v401
      %v466 = vunpack.c.l.b16 %v411
      %v467 = vunpack.c.l.b16 %v425
      %v468 = vunpack.c.l.b16 %v435
      %v469 = vpack.c.b16 %v454, %v453
      %v470 = vpack.c.b16 %v456, %v455
      %v471 = vpack.c.b16 %v458, %v457
      %v472 = vpack.c.b16 %v460, %v459
      %v473 = vpack.c.b16 %v462, %v461
      %v474 = vpack.c.b16 %v464, %v463
      %v475 = vpack.c.b16 %v466, %v465
      %v476 = vpack.c.b16 %v468, %v467
      %v501 = vunpack.c.l.b16 %v437
      %v502 = vunpack.c.l.b16 %v438
      %v503 = vunpack.c.l.b16 %v439
      %v504 = vunpack.c.l.b16 %v440
      %v505 = vunpack.c.l.b16 %v441
      %v506 = vunpack.c.l.b16 %v442
      %v507 = vunpack.c.l.b16 %v443
      %v508 = vunpack.c.l.b16 %v444
      %v509 = vunpack.c.l.b16 %v445
      %v510 = vunpack.c.l.b16 %v446
      %v511 = vunpack.c.l.b16 %v447
      %v512 = vunpack.c.l.b16 %v448
      %v513 = vunpack.c.l.b16 %v449
      %v514 = vunpack.c.l.b16 %v450
      %v515 = vunpack.c.l.b16 %v451
      %v516 = vunpack.c.l.b16 %v452
      %v517 = vpack.c.b16 %v502, %v501
      %v518 = vpack.c.b16 %v504, %v503
      %v519 = vpack.c.b16 %v506, %v505
      %v520 = vpack.c.b16 %v508, %v507
      %v521 = vpack.c.b16 %v510, %v509
      %v522 = vpack.c.b16 %v512, %v511
      %v523 = vpack.c.b16 %v514, %v513
      %v524 = vpack.c.b16 %v516, %v515
      %533 = vmatprep.subr.bf16.mxu0 0
      %534 = vmatpush1.bf16.msra.mxu0 %v524
      %535 = vmatprep.subr.bf16.mxu0 0
      %536 = vmatpush1.bf16.msra.mxu0 %v523
      %537 = vmatprep.subr.bf16.mxu0 0
      %538 = vmatpush1.bf16.msra.mxu0 %v522
      %539 = vmatprep.subr.bf16.mxu0 0
      %540 = vmatpush1.bf16.msra.mxu0 %v521
      %541 = vmatprep.subr.bf16.mxu0 0
      %542 = vmatpush1.bf16.msra.mxu0 %v520
      %543 = vmatprep.subr.bf16.mxu0 0
      %544 = vmatpush1.bf16.msra.mxu0 %v519
      %545 = vmatprep.subr.bf16.mxu0 0
      %546 = vmatpush1.bf16.msra.mxu0 %v518
      %547 = vmatprep.subr.bf16.mxu0 0
      %548 = vmatpush1.bf16.msra.mxu0 %v517
      %549 = vmatprep.subr.bf16.mxu0 0
      %550 = vmatpush2.bf16.msra.mxu0 0
      %551 = vmatprep.subr.bf16.mxu0 0
      %552 = vmatpush2.bf16.msra.mxu0 0
      %553 = vmatprep.subr.bf16.mxu0 0
      %554 = vmatpush2.bf16.msra.mxu0 0
      %555 = vmatprep.subr.bf16.mxu0 0
      %556 = vmatpush2.bf16.msra.mxu0 0
      %557 = vmatprep.subr.bf16.mxu0 0
      %558 = vmatpush2.bf16.msra.mxu0 0
      %559 = vmatprep.subr.bf16.mxu0 0
      %560 = vmatpush2.bf16.msra.mxu0 0
      %561 = vmatprep.subr.bf16.mxu0 0
      %562 = vmatpush2.bf16.msra.mxu0 0
      %563 = vmatprep.subr.bf16.mxu0 0
      %564 = vmatpush2.bf16.msra.mxu0 0
      %565 = vmatprep.mubr.bf16.mxu0 0
      %566 = vmatmul.mubr.bf16.gmra.mxu0 %v469
      %v567 = vpop.f32.mrf.mxu0
      %v568 = vadd.f32 0.0, %v567
      %v569 = vpop.f32.mrf.mxu0
      %v570 = vpop.f32.mrf.mxu0
      %v571 = vadd.f32 0.0, %v570
      %v572 = vpop.f32.mrf.mxu0
      %573 = vmatprep.mubr.bf16.mxu0 0
      %574 = vmatmul.mubr.bf16.gmra.mxu0 %v470
      %v575 = vpop.f32.mrf.mxu0
      %v576 = vadd.f32 0.0, %v575
      %v577 = vpop.f32.mrf.mxu0
      %v578 = vpop.f32.mrf.mxu0
      %v579 = vadd.f32 0.0, %v578
      %v580 = vpop.f32.mrf.mxu0
      %581 = vmatprep.mubr.bf16.mxu0 0
      %582 = vmatmul.mubr.bf16.gmra.mxu0 %v471
      %v583 = vpop.f32.mrf.mxu0
      %v584 = vadd.f32 0.0, %v583
      %v585 = vpop.f32.mrf.mxu0
      %v586 = vpop.f32.mrf.mxu0
      %v587 = vadd.f32 0.0, %v586
      %v588 = vpop.f32.mrf.mxu0
      %589 = vmatprep.mubr.bf16.mxu0 0
      %590 = vmatmul.mubr.bf16.gmra.mxu0 %v472
      %v591 = vpop.f32.mrf.mxu0
      %v592 = vadd.f32 0.0, %v591
      %v593 = vpop.f32.mrf.mxu0
      %v594 = vpop.f32.mrf.mxu0
      %v595 = vadd.f32 0.0, %v594
      %v596 = vpop.f32.mrf.mxu0
      %597 = vmatprep.mubr.bf16.mxu0 0
      %598 = vmatmul.mubr.bf16.gmra.mxu0 %v473
      %v599 = vpop.f32.mrf.mxu0
      %v600 = vadd.f32 0.0, %v599
      %v601 = vpop.f32.mrf.mxu0
      %v602 = vpop.f32.mrf.mxu0
      %v603 = vadd.f32 0.0, %v602
      %v604 = vpop.f32.mrf.mxu0
      %605 = vmatprep.mubr.bf16.mxu0 0
      %606 = vmatmul.mubr.bf16.gmra.mxu0 %v474
      %v607 = vpop.f32.mrf.mxu0
      %v608 = vadd.f32 0.0, %v607
      %v609 = vpop.f32.mrf.mxu0
      %v610 = vpop.f32.mrf.mxu0
      %v611 = vadd.f32 0.0, %v610
      %v612 = vpop.f32.mrf.mxu0
      %613 = vmatprep.mubr.bf16.mxu0 0
      %614 = vmatmul.mubr.bf16.gmra.mxu0 %v475
      %v615 = vpop.f32.mrf.mxu0
      %v616 = vadd.f32 0.0, %v615
      %v617 = vpop.f32.mrf.mxu0
      %v618 = vpop.f32.mrf.mxu0
      %v619 = vadd.f32 0.0, %v618
      %v620 = vpop.f32.mrf.mxu0
      %621 = vmatprep.mubr.bf16.mxu0 0
      %622 = vmatmul.mubr.bf16.gmra.mxu0 %v476
      %v623 = vpop.f32.mrf.mxu0
      %v624 = vadd.f32 0.0, %v623
      %v625 = vpop.f32.mrf.mxu0
      %v626 = vpop.f32.mrf.mxu0
      %v627 = vadd.f32 0.0, %v626
      %v628 = vpop.f32.mrf.mxu0
      %629 = vdwg.mxu0
      %v646 = vunpack.c.l.b16 %v201
      %v647 = vunpack.c.l.b16 %v202
      %v648 = vunpack.c.l.b16 %v203
      %v649 = vunpack.c.l.b16 %v204
      %v650 = vunpack.c.l.b16 %v205
      %v651 = vunpack.c.l.b16 %v206
      %v652 = vunpack.c.l.b16 %v207
      %v653 = vunpack.c.l.b16 %v208
      %v654 = vunpack.c.l.b16 %v209
      %v655 = vunpack.c.l.b16 %v210
      %v656 = vunpack.c.l.b16 %v211
      %v657 = vunpack.c.l.b16 %v212
      %v658 = vunpack.c.l.b16 %v213
      %v659 = vunpack.c.l.b16 %v214
      %v660 = vunpack.c.l.b16 %v215
      %v661 = vunpack.c.l.b16 %v216
      %v662 = vpack.c.b16 %v647, %v646
      %v663 = vpack.c.b16 %v649, %v648
      %v664 = vpack.c.b16 %v651, %v650
      %v665 = vpack.c.b16 %v653, %v652
      %v666 = vpack.c.b16 %v655, %v654
      %v667 = vpack.c.b16 %v657, %v656
      %v668 = vpack.c.b16 %v659, %v658
      %v669 = vpack.c.b16 %v661, %v660
      %v694 = vunpack.c.l.b16 %v217
      %v695 = vunpack.c.l.b16 %v218
      %v696 = vunpack.c.l.b16 %v219
      %v697 = vunpack.c.l.b16 %v220
      %v698 = vunpack.c.l.b16 %v221
      %v699 = vunpack.c.l.b16 %v222
      %v700 = vunpack.c.l.b16 %v223
      %v701 = vunpack.c.l.b16 %v224
      %v702 = vunpack.c.l.b16 %v225
      %v703 = vunpack.c.l.b16 %v226
      %v704 = vunpack.c.l.b16 %v227
      %v705 = vunpack.c.l.b16 %v228
      %v706 = vunpack.c.l.b16 %v229
      %v707 = vunpack.c.l.b16 %v230
      %v708 = vunpack.c.l.b16 %v231
      %v709 = vunpack.c.l.b16 %v232
      %v710 = vpack.c.b16 %v695, %v694
      %v711 = vpack.c.b16 %v697, %v696
      %v712 = vpack.c.b16 %v699, %v698
      %v713 = vpack.c.b16 %v701, %v700
      %v714 = vpack.c.b16 %v703, %v702
      %v715 = vpack.c.b16 %v705, %v704
      %v716 = vpack.c.b16 %v707, %v706
      %v717 = vpack.c.b16 %v709, %v708
      %726 = vmatprep.subr.bf16.mxu0 0
      %727 = vmatpush1.bf16.msra.mxu0 %v717
      %728 = vmatprep.subr.bf16.mxu0 0
      %729 = vmatpush1.bf16.msra.mxu0 %v716
      %730 = vmatprep.subr.bf16.mxu0 0
      %731 = vmatpush1.bf16.msra.mxu0 %v715
      %732 = vmatprep.subr.bf16.mxu0 0
      %733 = vmatpush1.bf16.msra.mxu0 %v714
      %734 = vmatprep.subr.bf16.mxu0 0
      %735 = vmatpush1.bf16.msra.mxu0 %v713
      %736 = vmatprep.subr.bf16.mxu0 0
      %737 = vmatpush1.bf16.msra.mxu0 %v712
      %738 = vmatprep.subr.bf16.mxu0 0
      %739 = vmatpush1.bf16.msra.mxu0 %v711
      %740 = vmatprep.subr.bf16.mxu0 0
      %741 = vmatpush1.bf16.msra.mxu0 %v710
      %742 = vmatprep.subr.bf16.mxu0 0
      %743 = vmatpush2.bf16.msra.mxu0 0
      %744 = vmatprep.subr.bf16.mxu0 0
      %745 = vmatpush2.bf16.msra.mxu0 0
      %746 = vmatprep.subr.bf16.mxu0 0
      %747 = vmatpush2.bf16.msra.mxu0 0
      %748 = vmatprep.subr.bf16.mxu0 0
      %749 = vmatpush2.bf16.msra.mxu0 0
      %750 = vmatprep.subr.bf16.mxu0 0
      %751 = vmatpush2.bf16.msra.mxu0 0
      %752 = vmatprep.subr.bf16.mxu0 0
      %753 = vmatpush2.bf16.msra.mxu0 0
      %754 = vmatprep.subr.bf16.mxu0 0
      %755 = vmatpush2.bf16.msra.mxu0 0
      %756 = vmatprep.subr.bf16.mxu0 0
      %757 = vmatpush2.bf16.msra.mxu0 0
      %758 = vmatprep.mubr.bf16.mxu0 0
      %759 = vmatmul.mubr.bf16.gmra.mxu0 %v662
      %v760 = vpop.f32.mrf.mxu0
      %v761 = vadd.f32 %v568, %v760
      %v762 = vpop.f32.mrf.mxu0
      %v763 = vpop.f32.mrf.mxu0
      %v764 = vadd.f32 %v571, %v763
      %v765 = vpop.f32.mrf.mxu0
      %766 = vmatprep.mubr.bf16.mxu0 0
      %767 = vmatmul.mubr.bf16.gmra.mxu0 %v663
      %v768 = vpop.f32.mrf.mxu0
      %v769 = vadd.f32 %v576, %v768
      %v770 = vpop.f32.mrf.mxu0
      %v771 = vpop.f32.mrf.mxu0
      %v772 = vadd.f32 %v579, %v771
      %v773 = vpop.f32.mrf.mxu0
      %774 = vmatprep.mubr.bf16.mxu0 0
      %775 = vmatmul.mubr.bf16.gmra.mxu0 %v664
      %v776 = vpop.f32.mrf.mxu0
      %v777 = vadd.f32 %v584, %v776
      %v778 = vpop.f32.mrf.mxu0
      %v779 = vpop.f32.mrf.mxu0
      %v780 = vadd.f32 %v587, %v779
      %v781 = vpop.f32.mrf.mxu0
      %782 = vmatprep.mubr.bf16.mxu0 0
      %783 = vmatmul.mubr.bf16.gmra.mxu0 %v665
      %v784 = vpop.f32.mrf.mxu0
      %v785 = vadd.f32 %v592, %v784
      %v786 = vpop.f32.mrf.mxu0
      %v787 = vpop.f32.mrf.mxu0
      %v788 = vadd.f32 %v595, %v787
      %v789 = vpop.f32.mrf.mxu0
      %790 = vmatprep.mubr.bf16.mxu0 0
      %791 = vmatmul.mubr.bf16.gmra.mxu0 %v666
      %v792 = vpop.f32.mrf.mxu0
      %v793 = vadd.f32 %v600, %v792
      %v794 = vpop.f32.mrf.mxu0
      %v795 = vpop.f32.mrf.mxu0
      %v796 = vadd.f32 %v603, %v795
      %v797 = vpop.f32.mrf.mxu0
      %798 = vmatprep.mubr.bf16.mxu0 0
      %799 = vmatmul.mubr.bf16.gmra.mxu0 %v667
      %v800 = vpop.f32.mrf.mxu0
      %v801 = vadd.f32 %v608, %v800
      %v802 = vpop.f32.mrf.mxu0
      %v803 = vpop.f32.mrf.mxu0
      %v804 = vadd.f32 %v611, %v803
      %v805 = vpop.f32.mrf.mxu0
      %806 = vmatprep.mubr.bf16.mxu0 0
      %807 = vmatmul.mubr.bf16.gmra.mxu0 %v668
      %v808 = vpop.f32.mrf.mxu0
      %v809 = vadd.f32 %v616, %v808
      %v810 = vpop.f32.mrf.mxu0
      %v811 = vpop.f32.mrf.mxu0
      %v812 = vadd.f32 %v619, %v811
      %v813 = vpop.f32.mrf.mxu0
      %814 = vmatprep.mubr.bf16.mxu0 0
      %815 = vmatmul.mubr.bf16.gmra.mxu0 %v669
      %v816 = vpop.f32.mrf.mxu0
      %v817 = vadd.f32 %v624, %v816
      %v818 = vpop.f32.mrf.mxu0
      %v819 = vpop.f32.mrf.mxu0
      %v820 = vadd.f32 %v627, %v819
      %v821 = vpop.f32.mrf.mxu0
      %822 = vdwg.mxu0
      %v823 = vld [vmem:[%s200] sm:$0xe]
      %v824 = vld [vmem:[%s200 + $0xc] sm:$0xe]
      %v825 = vld [vmem:[%s200 + $0x18] sm:$0xe]
      %v826 = vld [vmem:[%s200 + $0x24] sm:$0xe]
      %v827 = vld [vmem:[%s200 + $0x30] sm:$0xe]
      %v828 = vld [vmem:[%s200 + $0x3c] sm:$0xe]
      %v829 = vld [vmem:[%s200 + $0x48] sm:$0xe]
      %v830 = vld [vmem:[%s200 + $0x54] sm:$0xe]
      %vm847 = vcmask 1042432
      %vm848 = vcmask 1046532
      %vm849 = vmor %vm847, %vm848
      %v850 = vrot.slane %v823, 5
      %v851 = vrot.slane %v850, 4
      %v852 = vrot.slane %v202, 5
      %v853 = vsel %vm849, %v851, %v852
      %v854 = vrot.slane %v852, 4
      %v855 = vrot.slane %v233, 5
      %v856 = vsel %vm849, %v854, %v855
      %v857 = vrot.slane %v824, 5
      %v858 = vrot.slane %v857, 4
      %v859 = vrot.slane %v204, 5
      %v860 = vsel %vm849, %v858, %v859
      %v861 = vrot.slane %v859, 4
      %v862 = vrot.slane %v234, 5
      %v863 = vsel %vm849, %v861, %v862
      %v864 = vrot.slane %v825, 5
      %v865 = vrot.slane %v864, 4
      %v866 = vrot.slane %v206, 5
      %v867 = vsel %vm849, %v865, %v866
      %v868 = vrot.slane %v866, 4
      %v869 = vrot.slane %v235, 5
      %v870 = vsel %vm849, %v868, %v869
      %v871 = vrot.slane %v826, 5
      %v872 = vrot.slane %v871, 4
      %v873 = vrot.slane %v208, 5
      %v874 = vsel %vm849, %v872, %v873
      %v875 = vrot.slane %v873, 4
      %v876 = vrot.slane %v236, 5
      %v877 = vsel %vm849, %v875, %v876
      %v878 = vrot.slane %v827, 5
      %v879 = vrot.slane %v878, 4
      %v880 = vrot.slane %v210, 5
      %v881 = vsel %vm849, %v879, %v880
      %v882 = vrot.slane %v880, 4
      %v883 = vrot.slane %v237, 5
      %v884 = vsel %vm849, %v882, %v883
      %v885 = vrot.slane %v828, 5
      %v886 = vrot.slane %v885, 4
      %v887 = vrot.slane %v212, 5
      %v888 = vsel %vm849, %v886, %v887
      %v889 = vrot.slane %v887, 4
      %v890 = vrot.slane %v238, 5
      %v891 = vsel %vm849, %v889, %v890
      %v892 = vrot.slane %v829, 5
      %v893 = vrot.slane %v892, 4
      %v894 = vrot.slane %v214, 5
      %v895 = vsel %vm849, %v893, %v894
      %v896 = vrot.slane %v894, 4
      %v897 = vrot.slane %v239, 5
      %v898 = vsel %vm849, %v896, %v897
      %v899 = vrot.slane %v830, 5
      %v900 = vrot.slane %v899, 4
      %v901 = vrot.slane %v216, 5
      %v902 = vsel %vm849, %v900, %v901
      %v903 = vrot.slane %v901, 4
      %v904 = vrot.slane %v240, 5
      %v905 = vsel %vm849, %v903, %v904
      %s906 = scalar_lea.vmem %s1, 128
      %v907 = vld [vmem:[%s906] sm:$0xf]
      %v908 = vld [vmem:[%s906 + $0x4] sm:$0xf]
      %v909 = vld [vmem:[%s906 + $0x8] sm:$0xf]
      %v910 = vld [vmem:[%s906 + $0xc] sm:$0xf]
      %v911 = vld [vmem:[%s906 + $0x10] sm:$0xf]
      %v912 = vld [vmem:[%s906 + $0x14] sm:$0xf]
      %v913 = vld [vmem:[%s906 + $0x18] sm:$0xf]
      %v914 = vld [vmem:[%s906 + $0x1c] sm:$0xf]
      %v915 = vld [vmem:[%s906 + $0x20] sm:$0xf]
      %v916 = vld [vmem:[%s906 + $0x24] sm:$0xf]
      %v917 = vld [vmem:[%s906 + $0x28] sm:$0xf]
      %v918 = vld [vmem:[%s906 + $0x2c] sm:$0xf]
      %v919 = vld [vmem:[%s906 + $0x30] sm:$0xf]
      %v920 = vld [vmem:[%s906 + $0x34] sm:$0xf]
      %v921 = vld [vmem:[%s906 + $0x38] sm:$0xf]
      %v922 = vld [vmem:[%s906 + $0x3c] sm:$0xf]
      %v923 = vunpack.c.l.b16 %v853
      %v924 = vunpack.c.l.b16 %v856
      %v925 = vunpack.c.l.b16 %v860
      %v926 = vunpack.c.l.b16 %v863
      %v927 = vunpack.c.l.b16 %v867
      %v928 = vunpack.c.l.b16 %v870
      %v929 = vunpack.c.l.b16 %v874
      %v930 = vunpack.c.l.b16 %v877
      %v931 = vunpack.c.l.b16 %v881
      %v932 = vunpack.c.l.b16 %v884
      %v933 = vunpack.c.l.b16 %v888
      %v934 = vunpack.c.l.b16 %v891
      %v935 = vunpack.c.l.b16 %v895
      %v936 = vunpack.c.l.b16 %v898
      %v937 = vunpack.c.l.b16 %v902
      %v938 = vunpack.c.l.b16 %v905
      %v939 = vpack.c.b16 %v924, %v923
      %v940 = vpack.c.b16 %v926, %v925
      %v941 = vpack.c.b16 %v928, %v927
      %v942 = vpack.c.b16 %v930, %v929
      %v943 = vpack.c.b16 %v932, %v931
      %v944 = vpack.c.b16 %v934, %v933
      %v945 = vpack.c.b16 %v936, %v935
      %v946 = vpack.c.b16 %v938, %v937
      %v971 = vunpack.c.l.b16 %v907
      %v972 = vunpack.c.l.b16 %v908
      %v973 = vunpack.c.l.b16 %v909
      %v974 = vunpack.c.l.b16 %v910
      %v975 = vunpack.c.l.b16 %v911
      %v976 = vunpack.c.l.b16 %v912
      %v977 = vunpack.c.l.b16 %v913
      %v978 = vunpack.c.l.b16 %v914
      %v979 = vunpack.c.l.b16 %v915
      %v980 = vunpack.c.l.b16 %v916
      %v981 = vunpack.c.l.b16 %v917
      %v982 = vunpack.c.l.b16 %v918
      %v983 = vunpack.c.l.b16 %v919
      %v984 = vunpack.c.l.b16 %v920
      %v985 = vunpack.c.l.b16 %v921
      %v986 = vunpack.c.l.b16 %v922
      %v987 = vpack.c.b16 %v972, %v971
      %v988 = vpack.c.b16 %v974, %v973
      %v989 = vpack.c.b16 %v976, %v975
      %v990 = vpack.c.b16 %v978, %v977
      %v991 = vpack.c.b16 %v980, %v979
      %v992 = vpack.c.b16 %v982, %v981
      %v993 = vpack.c.b16 %v984, %v983
      %v994 = vpack.c.b16 %v986, %v985
      %1003 = vmatprep.subr.bf16.mxu0 0
      %1004 = vmatpush1.bf16.msra.mxu0 %v994
      %1005 = vmatprep.subr.bf16.mxu0 0
      %1006 = vmatpush1.bf16.msra.mxu0 %v993
      %1007 = vmatprep.subr.bf16.mxu0 0
      %1008 = vmatpush1.bf16.msra.mxu0 %v992
      %1009 = vmatprep.subr.bf16.mxu0 0
      %1010 = vmatpush1.bf16.msra.mxu0 %v991
      %1011 = vmatprep.subr.bf16.mxu0 0
      %1012 = vmatpush1.bf16.msra.mxu0 %v990
      %1013 = vmatprep.subr.bf16.mxu0 0
      %1014 = vmatpush1.bf16.msra.mxu0 %v989
      %1015 = vmatprep.subr.bf16.mxu0 0
      %1016 = vmatpush1.bf16.msra.mxu0 %v988
      %1017 = vmatprep.subr.bf16.mxu0 0
      %1018 = vmatpush1.bf16.msra.mxu0 %v987
      %1019 = vmatprep.subr.bf16.mxu0 0
      %1020 = vmatpush2.bf16.msra.mxu0 0
      %1021 = vmatprep.subr.bf16.mxu0 0
      %1022 = vmatpush2.bf16.msra.mxu0 0
      %1023 = vmatprep.subr.bf16.mxu0 0
      %1024 = vmatpush2.bf16.msra.mxu0 0
      %1025 = vmatprep.subr.bf16.mxu0 0
      %1026 = vmatpush2.bf16.msra.mxu0 0
      %1027 = vmatprep.subr.bf16.mxu0 0
      %1028 = vmatpush2.bf16.msra.mxu0 0
      %1029 = vmatprep.subr.bf16.mxu0 0
      %1030 = vmatpush2.bf16.msra.mxu0 0
      %1031 = vmatprep.subr.bf16.mxu0 0
      %1032 = vmatpush2.bf16.msra.mxu0 0
      %1033 = vmatprep.subr.bf16.mxu0 0
      %1034 = vmatpush2.bf16.msra.mxu0 0
      %1035 = vmatprep.mubr.bf16.mxu0 0
      %1036 = vmatmul.mubr.bf16.gmra.mxu0 %v939
      %v1037 = vpop.f32.mrf.mxu0
      %v1038 = vadd.f32 0.0, %v1037
      %v1039 = vpop.f32.mrf.mxu0
      %v1040 = vpop.f32.mrf.mxu0
      %v1041 = vadd.f32 0.0, %v1040
      %v1042 = vpop.f32.mrf.mxu0
      %1043 = vmatprep.mubr.bf16.mxu0 0
      %1044 = vmatmul.mubr.bf16.gmra.mxu0 %v940
      %v1045 = vpop.f32.mrf.mxu0
      %v1046 = vadd.f32 0.0, %v1045
      %v1047 = vpop.f32.mrf.mxu0
      %v1048 = vpop.f32.mrf.mxu0
      %v1049 = vadd.f32 0.0, %v1048
      %v1050 = vpop.f32.mrf.mxu0
      %1051 = vmatprep.mubr.bf16.mxu0 0
      %1052 = vmatmul.mubr.bf16.gmra.mxu0 %v941
      %v1053 = vpop.f32.mrf.mxu0
      %v1054 = vadd.f32 0.0, %v1053
      %v1055 = vpop.f32.mrf.mxu0
      %v1056 = vpop.f32.mrf.mxu0
      %v1057 = vadd.f32 0.0, %v1056
      %v1058 = vpop.f32.mrf.mxu0
      %1059 = vmatprep.mubr.bf16.mxu0 0
      %1060 = vmatmul.mubr.bf16.gmra.mxu0 %v942
      %v1061 = vpop.f32.mrf.mxu0
      %v1062 = vadd.f32 0.0, %v1061
      %v1063 = vpop.f32.mrf.mxu0
      %v1064 = vpop.f32.mrf.mxu0
      %v1065 = vadd.f32 0.0, %v1064
      %v1066 = vpop.f32.mrf.mxu0
      %1067 = vmatprep.mubr.bf16.mxu0 0
      %1068 = vmatmul.mubr.bf16.gmra.mxu0 %v943
      %v1069 = vpop.f32.mrf.mxu0
      %v1070 = vadd.f32 0.0, %v1069
      %v1071 = vpop.f32.mrf.mxu0
      %v1072 = vpop.f32.mrf.mxu0
      %v1073 = vadd.f32 0.0, %v1072
      %v1074 = vpop.f32.mrf.mxu0
      %1075 = vmatprep.mubr.bf16.mxu0 0
      %1076 = vmatmul.mubr.bf16.gmra.mxu0 %v944
      %v1077 = vpop.f32.mrf.mxu0
      %v1078 = vadd.f32 0.0, %v1077
      %v1079 = vpop.f32.mrf.mxu0
      %v1080 = vpop.f32.mrf.mxu0
      %v1081 = vadd.f32 0.0, %v1080
      %v1082 = vpop.f32.mrf.mxu0
      %1083 = vmatprep.mubr.bf16.mxu0 0
      %1084 = vmatmul.mubr.bf16.gmra.mxu0 %v945
      %v1085 = vpop.f32.mrf.mxu0
      %v1086 = vadd.f32 0.0, %v1085
      %v1087 = vpop.f32.mrf.mxu0
      %v1088 = vpop.f32.mrf.mxu0
      %v1089 = vadd.f32 0.0, %v1088
      %v1090 = vpop.f32.mrf.mxu0
      %1091 = vmatprep.mubr.bf16.mxu0 0
      %1092 = vmatmul.mubr.bf16.gmra.mxu0 %v946
      %v1093 = vpop.f32.mrf.mxu0
      %v1094 = vadd.f32 0.0, %v1093
      %v1095 = vpop.f32.mrf.mxu0
      %v1096 = vpop.f32.mrf.mxu0
      %v1097 = vadd.f32 0.0, %v1096
      %v1098 = vpop.f32.mrf.mxu0
      %1099 = vdwg.mxu0
      %v1100 = vadd.f32 %v761, %v1038
      %v1101 = vadd.f32 %v764, %v1041
      %v1102 = vadd.f32 %v769, %v1046
      %v1103 = vadd.f32 %v772, %v1049
      %v1104 = vadd.f32 %v777, %v1054
      %v1105 = vadd.f32 %v780, %v1057
      %v1106 = vadd.f32 %v785, %v1062
      %v1107 = vadd.f32 %v788, %v1065
      %v1108 = vadd.f32 %v793, %v1070
      %v1109 = vadd.f32 %v796, %v1073
      %v1110 = vadd.f32 %v801, %v1078
      %v1111 = vadd.f32 %v804, %v1081
      %v1112 = vadd.f32 %v809, %v1086
      %v1113 = vadd.f32 %v812, %v1089
      %v1114 = vadd.f32 %v817, %v1094
      %v1115 = vadd.f32 %v820, %v1097
      %s1116 = sadd.s32 %s197, 1
      %s1117 = smul.u32 %s1116, 3
      %s1118 = smul.addr %s1117, 4
      %s1119 = scalar_lea.vmem %s184, %s1118
      %v1120 = vld [vmem:[%s1119] sm:$0xf]
      %v1121 = vld [vmem:[%s1119 + $0x4] sm:$0xf]
      %v1122 = vld [vmem:[%s1119 + $0xc] sm:$0xf]
      %v1123 = vld [vmem:[%s1119 + $0x10] sm:$0xf]
      %v1124 = vld [vmem:[%s1119 + $0x18] sm:$0xf]
      %v1125 = vld [vmem:[%s1119 + $0x1c] sm:$0xf]
      %v1126 = vld [vmem:[%s1119 + $0x24] sm:$0xf]
      %v1127 = vld [vmem:[%s1119 + $0x28] sm:$0xf]
      %v1128 = vld [vmem:[%s1119 + $0x30] sm:$0xf]
      %v1129 = vld [vmem:[%s1119 + $0x34] sm:$0xf]
      %v1130 = vld [vmem:[%s1119 + $0x3c] sm:$0xf]
      %v1131 = vld [vmem:[%s1119 + $0x40] sm:$0xf]
      %v1132 = vld [vmem:[%s1119 + $0x48] sm:$0xf]
      %v1133 = vld [vmem:[%s1119 + $0x4c] sm:$0xf]
      %v1134 = vld [vmem:[%s1119 + $0x54] sm:$0xf]
      %v1135 = vld [vmem:[%s1119 + $0x58] sm:$0xf]
      %s1136 = scalar_lea.vmem %s1, 192
      %v1137 = vld [vmem:[%s1136] sm:$0xf]
      %v1138 = vld [vmem:[%s1136 + $0x4] sm:$0xf]
      %v1139 = vld [vmem:[%s1136 + $0x8] sm:$0xf]
      %v1140 = vld [vmem:[%s1136 + $0xc] sm:$0xf]
      %v1141 = vld [vmem:[%s1136 + $0x10] sm:$0xf]
      %v1142 = vld [vmem:[%s1136 + $0x14] sm:$0xf]
      %v1143 = vld [vmem:[%s1136 + $0x18] sm:$0xf]
      %v1144 = vld [vmem:[%s1136 + $0x1c] sm:$0xf]
      %v1145 = vld [vmem:[%s1136 + $0x20] sm:$0xf]
      %v1146 = vld [vmem:[%s1136 + $0x24] sm:$0xf]
      %v1147 = vld [vmem:[%s1136 + $0x28] sm:$0xf]
      %v1148 = vld [vmem:[%s1136 + $0x2c] sm:$0xf]
      %v1149 = vld [vmem:[%s1136 + $0x30] sm:$0xf]
      %v1150 = vld [vmem:[%s1136 + $0x34] sm:$0xf]
      %v1151 = vld [vmem:[%s1136 + $0x38] sm:$0xf]
      %v1152 = vld [vmem:[%s1136 + $0x3c] sm:$0xf]
      %v1169 = vunpack.c.l.b16 %v1120
      %v1170 = vunpack.c.l.b16 %v1121
      %v1171 = vunpack.c.l.b16 %v1122
      %v1172 = vunpack.c.l.b16 %v1123
      %v1173 = vunpack.c.l.b16 %v1124
      %v1174 = vunpack.c.l.b16 %v1125
      %v1175 = vunpack.c.l.b16 %v1126
      %v1176 = vunpack.c.l.b16 %v1127
      %v1177 = vunpack.c.l.b16 %v1128
      %v1178 = vunpack.c.l.b16 %v1129
      %v1179 = vunpack.c.l.b16 %v1130
      %v1180 = vunpack.c.l.b16 %v1131
      %v1181 = vunpack.c.l.b16 %v1132
      %v1182 = vunpack.c.l.b16 %v1133
      %v1183 = vunpack.c.l.b16 %v1134
      %v1184 = vunpack.c.l.b16 %v1135
      %v1185 = vpack.c.b16 %v1170, %v1169
      %v1186 = vpack.c.b16 %v1172, %v1171
      %v1187 = vpack.c.b16 %v1174, %v1173
      %v1188 = vpack.c.b16 %v1176, %v1175
      %v1189 = vpack.c.b16 %v1178, %v1177
      %v1190 = vpack.c.b16 %v1180, %v1179
      %v1191 = vpack.c.b16 %v1182, %v1181
      %v1192 = vpack.c.b16 %v1184, %v1183
      %v1217 = vunpack.c.l.b16 %v1137
      %v1218 = vunpack.c.l.b16 %v1138
      %v1219 = vunpack.c.l.b16 %v1139
      %v1220 = vunpack.c.l.b16 %v1140
      %v1221 = vunpack.c.l.b16 %v1141
      %v1222 = vunpack.c.l.b16 %v1142
      %v1223 = vunpack.c.l.b16 %v1143
      %v1224 = vunpack.c.l.b16 %v1144
      %v1225 = vunpack.c.l.b16 %v1145
      %v1226 = vunpack.c.l.b16 %v1146
      %v1227 = vunpack.c.l.b16 %v1147
      %v1228 = vunpack.c.l.b16 %v1148
      %v1229 = vunpack.c.l.b16 %v1149
      %v1230 = vunpack.c.l.b16 %v1150
      %v1231 = vunpack.c.l.b16 %v1151
      %v1232 = vunpack.c.l.b16 %v1152
      %v1233 = vpack.c.b16 %v1218, %v1217
      %v1234 = vpack.c.b16 %v1220, %v1219
      %v1235 = vpack.c.b16 %v1222, %v1221
      %v1236 = vpack.c.b16 %v1224, %v1223
      %v1237 = vpack.c.b16 %v1226, %v1225
      %v1238 = vpack.c.b16 %v1228, %v1227
      %v1239 = vpack.c.b16 %v1230, %v1229
      %v1240 = vpack.c.b16 %v1232, %v1231
      %1249 = vmatprep.subr.bf16.mxu0 0
      %1250 = vmatpush1.bf16.msra.mxu0 %v1240
      %1251 = vmatprep.subr.bf16.mxu0 0
      %1252 = vmatpush1.bf16.msra.mxu0 %v1239
      %1253 = vmatprep.subr.bf16.mxu0 0
      %1254 = vmatpush1.bf16.msra.mxu0 %v1238
      %1255 = vmatprep.subr.bf16.mxu0 0
      %1256 = vmatpush1.bf16.msra.mxu0 %v1237
      %1257 = vmatprep.subr.bf16.mxu0 0
      %1258 = vmatpush1.bf16.msra.mxu0 %v1236
      %1259 = vmatprep.subr.bf16.mxu0 0
      %1260 = vmatpush1.bf16.msra.mxu0 %v1235
      %1261 = vmatprep.subr.bf16.mxu0 0
      %1262 = vmatpush1.bf16.msra.mxu0 %v1234
      %1263 = vmatprep.subr.bf16.mxu0 0
      %1264 = vmatpush1.bf16.msra.mxu0 %v1233
      %1265 = vmatprep.subr.bf16.mxu0 0
      %1266 = vmatpush2.bf16.msra.mxu0 0
      %1267 = vmatprep.subr.bf16.mxu0 0
      %1268 = vmatpush2.bf16.msra.mxu0 0
      %1269 = vmatprep.subr.bf16.mxu0 0
      %1270 = vmatpush2.bf16.msra.mxu0 0
      %1271 = vmatprep.subr.bf16.mxu0 0
      %1272 = vmatpush2.bf16.msra.mxu0 0
      %1273 = vmatprep.subr.bf16.mxu0 0
      %1274 = vmatpush2.bf16.msra.mxu0 0
      %1275 = vmatprep.subr.bf16.mxu0 0
      %1276 = vmatpush2.bf16.msra.mxu0 0
      %1277 = vmatprep.subr.bf16.mxu0 0
      %1278 = vmatpush2.bf16.msra.mxu0 0
      %1279 = vmatprep.subr.bf16.mxu0 0
      %1280 = vmatpush2.bf16.msra.mxu0 0
      %1281 = vmatprep.mubr.bf16.mxu0 0
      %1282 = vmatmul.mubr.bf16.gmra.mxu0 %v1185
      %v1283 = vpop.f32.mrf.mxu0
      %v1284 = vadd.f32 0.0, %v1283
      %v1285 = vpop.f32.mrf.mxu0
      %v1286 = vpop.f32.mrf.mxu0
      %v1287 = vadd.f32 0.0, %v1286
      %v1288 = vpop.f32.mrf.mxu0
      %1289 = vmatprep.mubr.bf16.mxu0 0
      %1290 = vmatmul.mubr.bf16.gmra.mxu0 %v1186
      %v1291 = vpop.f32.mrf.mxu0
      %v1292 = vadd.f32 0.0, %v1291
      %v1293 = vpop.f32.mrf.mxu0
      %v1294 = vpop.f32.mrf.mxu0
      %v1295 = vadd.f32 0.0, %v1294
      %v1296 = vpop.f32.mrf.mxu0
      %1297 = vmatprep.mubr.bf16.mxu0 0
      %1298 = vmatmul.mubr.bf16.gmra.mxu0 %v1187
      %v1299 = vpop.f32.mrf.mxu0
      %v1300 = vadd.f32 0.0, %v1299
      %v1301 = vpop.f32.mrf.mxu0
      %v1302 = vpop.f32.mrf.mxu0
      %v1303 = vadd.f32 0.0, %v1302
      %v1304 = vpop.f32.mrf.mxu0
      %1305 = vmatprep.mubr.bf16.mxu0 0
      %1306 = vmatmul.mubr.bf16.gmra.mxu0 %v1188
      %v1307 = vpop.f32.mrf.mxu0
      %v1308 = vadd.f32 0.0, %v1307
      %v1309 = vpop.f32.mrf.mxu0
      %v1310 = vpop.f32.mrf.mxu0
      %v1311 = vadd.f32 0.0, %v1310
      %v1312 = vpop.f32.mrf.mxu0
      %1313 = vmatprep.mubr.bf16.mxu0 0
      %1314 = vmatmul.mubr.bf16.gmra.mxu0 %v1189
      %v1315 = vpop.f32.mrf.mxu0
      %v1316 = vadd.f32 0.0, %v1315
      %v1317 = vpop.f32.mrf.mxu0
      %v1318 = vpop.f32.mrf.mxu0
      %v1319 = vadd.f32 0.0, %v1318
      %v1320 = vpop.f32.mrf.mxu0
      %1321 = vmatprep.mubr.bf16.mxu0 0
      %1322 = vmatmul.mubr.bf16.gmra.mxu0 %v1190
      %v1323 = vpop.f32.mrf.mxu0
      %v1324 = vadd.f32 0.0, %v1323
      %v1325 = vpop.f32.mrf.mxu0
      %v1326 = vpop.f32.mrf.mxu0
      %v1327 = vadd.f32 0.0, %v1326
      %v1328 = vpop.f32.mrf.mxu0
      %1329 = vmatprep.mubr.bf16.mxu0 0
      %1330 = vmatmul.mubr.bf16.gmra.mxu0 %v1191
      %v1331 = vpop.f32.mrf.mxu0
      %v1332 = vadd.f32 0.0, %v1331
      %v1333 = vpop.f32.mrf.mxu0
      %v1334 = vpop.f32.mrf.mxu0
      %v1335 = vadd.f32 0.0, %v1334
      %v1336 = vpop.f32.mrf.mxu0
      %1337 = vmatprep.mubr.bf16.mxu0 0
      %1338 = vmatmul.mubr.bf16.gmra.mxu0 %v1192
      %v1339 = vpop.f32.mrf.mxu0
      %v1340 = vadd.f32 0.0, %v1339
      %v1341 = vpop.f32.mrf.mxu0
      %v1342 = vpop.f32.mrf.mxu0
      %v1343 = vadd.f32 0.0, %v1342
      %v1344 = vpop.f32.mrf.mxu0
      %1345 = vdwg.mxu0
      %v1346 = vadd.f32 %v1100, %v1284
      %v1347 = vadd.f32 %v1101, %v1287
      %v1348 = vadd.f32 %v1102, %v1292
      %v1349 = vadd.f32 %v1103, %v1295
      %v1350 = vadd.f32 %v1104, %v1300
      %v1351 = vadd.f32 %v1105, %v1303
      %v1352 = vadd.f32 %v1106, %v1308
      %v1353 = vadd.f32 %v1107, %v1311
      %v1354 = vadd.f32 %v1108, %v1316
      %v1355 = vadd.f32 %v1109, %v1319
      %v1356 = vadd.f32 %v1110, %v1324
      %v1357 = vadd.f32 %v1111, %v1327
      %v1358 = vadd.f32 %v1112, %v1332
      %v1359 = vadd.f32 %v1113, %v1335
      %v1360 = vadd.f32 %v1114, %v1340
      %v1361 = vadd.f32 %v1115, %v1343
      %v1362 = vld [vmem:[%s1119] sm:$0xf]
      %v1363 = vld [vmem:[%s1119 + $0x4] sm:$0xf]
      %v1364 = vld [vmem:[%s1119 + $0x8] sm:$0x1]
      %v1365 = vld [vmem:[%s1119 + $0xc] sm:$0xf]
      %v1366 = vld [vmem:[%s1119 + $0x10] sm:$0xf]
      %v1367 = vld [vmem:[%s1119 + $0x14] sm:$0x1]
      %v1368 = vld [vmem:[%s1119 + $0x18] sm:$0xf]
      %v1369 = vld [vmem:[%s1119 + $0x1c] sm:$0xf]
      %v1370 = vld [vmem:[%s1119 + $0x20] sm:$0x1]
      %v1371 = vld [vmem:[%s1119 + $0x24] sm:$0xf]
      %v1372 = vld [vmem:[%s1119 + $0x28] sm:$0xf]
      %v1373 = vld [vmem:[%s1119 + $0x2c] sm:$0x1]
      %v1374 = vld [vmem:[%s1119 + $0x30] sm:$0xf]
      %v1375 = vld [vmem:[%s1119 + $0x34] sm:$0xf]
      %v1376 = vld [vmem:[%s1119 + $0x38] sm:$0x1]
      %v1377 = vld [vmem:[%s1119 + $0x3c] sm:$0xf]
      %v1378 = vld [vmem:[%s1119 + $0x40] sm:$0xf]
      %v1379 = vld [vmem:[%s1119 + $0x44] sm:$0x1]
      %v1380 = vld [vmem:[%s1119 + $0x48] sm:$0xf]
      %v1381 = vld [vmem:[%s1119 + $0x4c] sm:$0xf]
      %v1382 = vld [vmem:[%s1119 + $0x50] sm:$0x1]
      %v1383 = vld [vmem:[%s1119 + $0x54] sm:$0xf]
      %v1384 = vld [vmem:[%s1119 + $0x58] sm:$0xf]
      %v1385 = vld [vmem:[%s1119 + $0x5c] sm:$0x1]
      %v1387 = vshrl.u32 %v1362, 16
      %v1389 = vrot.slane %v1387, 4
      %v1390 = vshll.u32 %v1362, 16
      %v1392 = vrot.slane %v1390, 5
      %v1393 = vor.u32 %v1389, %v1392
      %v1394 = vrot.slane %v1393, 4
      %v1396 = vshll.u32 %v1363, 16
      %v1398 = vrot.slane %v1396, 5
      %v1399 = vsel %vm243, %v1394, %v1398
      %v1400 = vshrl.u32 %v1363, 16
      %v1402 = vrot.slane %v1400, 4
      %v1403 = vor.u32 %v1402, %v1398
      %v1404 = vrot.slane %v1403, 4
      %v1406 = vshll.u32 %v1364, 16
      %v1408 = vrot.slane %v1406, 5
      %v1409 = vsel %vm243, %v1404, %v1408
      %v1411 = vshrl.u32 %v1365, 16
      %v1413 = vrot.slane %v1411, 4
      %v1414 = vshll.u32 %v1365, 16
      %v1416 = vrot.slane %v1414, 5
      %v1417 = vor.u32 %v1413, %v1416
      %v1418 = vrot.slane %v1417, 4
      %v1420 = vshll.u32 %v1366, 16
      %v1422 = vrot.slane %v1420, 5
      %v1423 = vsel %vm243, %v1418, %v1422
      %v1424 = vshrl.u32 %v1366, 16
      %v1426 = vrot.slane %v1424, 4
      %v1427 = vor.u32 %v1426, %v1422
      %v1428 = vrot.slane %v1427, 4
      %v1430 = vshll.u32 %v1367, 16
      %v1432 = vrot.slane %v1430, 5
      %v1433 = vsel %vm243, %v1428, %v1432
      %v1435 = vshrl.u32 %v1368, 16
      %v1437 = vrot.slane %v1435, 4
      %v1438 = vshll.u32 %v1368, 16
      %v1440 = vrot.slane %v1438, 5
      %v1441 = vor.u32 %v1437, %v1440
      %v1442 = vrot.slane %v1441, 4
      %v1444 = vshll.u32 %v1369, 16
      %v1446 = vrot.slane %v1444, 5
      %v1447 = vsel %vm243, %v1442, %v1446
      %v1448 = vshrl.u32 %v1369, 16
      %v1450 = vrot.slane %v1448, 4
      %v1451 = vor.u32 %v1450, %v1446
      %v1452 = vrot.slane %v1451, 4
      %v1454 = vshll.u32 %v1370, 16
      %v1456 = vrot.slane %v1454, 5
      %v1457 = vsel %vm243, %v1452, %v1456
      %v1459 = vshrl.u32 %v1371, 16
      %v1461 = vrot.slane %v1459, 4
      %v1462 = vshll.u32 %v1371, 16
      %v1464 = vrot.slane %v1462, 5
      %v1465 = vor.u32 %v1461, %v1464
      %v1466 = vrot.slane %v1465, 4
      %v1468 = vshll.u32 %v1372, 16
      %v1470 = vrot.slane %v1468, 5
      %v1471 = vsel %vm243, %v1466, %v1470
      %v1472 = vshrl.u32 %v1372, 16
      %v1474 = vrot.slane %v1472, 4
      %v1475 = vor.u32 %v1474, %v1470
      %v1476 = vrot.slane %v1475, 4
      %v1478 = vshll.u32 %v1373, 16
      %v1480 = vrot.slane %v1478, 5
      %v1481 = vsel %vm243, %v1476, %v1480
      %v1483 = vshrl.u32 %v1374, 16
      %v1485 = vrot.slane %v1483, 4
      %v1486 = vshll.u32 %v1374, 16
      %v1488 = vrot.slane %v1486, 5
      %v1489 = vor.u32 %v1485, %v1488
      %v1490 = vrot.slane %v1489, 4
      %v1492 = vshll.u32 %v1375, 16
      %v1494 = vrot.slane %v1492, 5
      %v1495 = vsel %vm243, %v1490, %v1494
      %v1496 = vshrl.u32 %v1375, 16
      %v1498 = vrot.slane %v1496, 4
      %v1499 = vor.u32 %v1498, %v1494
      %v1500 = vrot.slane %v1499, 4
      %v1502 = vshll.u32 %v1376, 16
      %v1504 = vrot.slane %v1502, 5
      %v1505 = vsel %vm243, %v1500, %v1504
      %v1507 = vshrl.u32 %v1377, 16
      %v1509 = vrot.slane %v1507, 4
      %v1510 = vshll.u32 %v1377, 16
      %v1512 = vrot.slane %v1510, 5
      %v1513 = vor.u32 %v1509, %v1512
      %v1514 = vrot.slane %v1513, 4
      %v1516 = vshll.u32 %v1378, 16
      %v1518 = vrot.slane %v1516, 5
      %v1519 = vsel %vm243, %v1514, %v1518
      %v1520 = vshrl.u32 %v1378, 16
      %v1522 = vrot.slane %v1520, 4
      %v1523 = vor.u32 %v1522, %v1518
      %v1524 = vrot.slane %v1523, 4
      %v1526 = vshll.u32 %v1379, 16
      %v1528 = vrot.slane %v1526, 5
      %v1529 = vsel %vm243, %v1524, %v1528
      %v1531 = vshrl.u32 %v1380, 16
      %v1533 = vrot.slane %v1531, 4
      %v1534 = vshll.u32 %v1380, 16
      %v1536 = vrot.slane %v1534, 5
      %v1537 = vor.u32 %v1533, %v1536
      %v1538 = vrot.slane %v1537, 4
      %v1540 = vshll.u32 %v1381, 16
      %v1542 = vrot.slane %v1540, 5
      %v1543 = vsel %vm243, %v1538, %v1542
      %v1544 = vshrl.u32 %v1381, 16
      %v1546 = vrot.slane %v1544, 4
      %v1547 = vor.u32 %v1546, %v1542
      %v1548 = vrot.slane %v1547, 4
      %v1550 = vshll.u32 %v1382, 16
      %v1552 = vrot.slane %v1550, 5
      %v1553 = vsel %vm243, %v1548, %v1552
      %v1555 = vshrl.u32 %v1383, 16
      %v1557 = vrot.slane %v1555, 4
      %v1558 = vshll.u32 %v1383, 16
      %v1560 = vrot.slane %v1558, 5
      %v1561 = vor.u32 %v1557, %v1560
      %v1562 = vrot.slane %v1561, 4
      %v1564 = vshll.u32 %v1384, 16
      %v1566 = vrot.slane %v1564, 5
      %v1567 = vsel %vm243, %v1562, %v1566
      %v1568 = vshrl.u32 %v1384, 16
      %v1570 = vrot.slane %v1568, 4
      %v1571 = vor.u32 %v1570, %v1566
      %v1572 = vrot.slane %v1571, 4
      %v1574 = vshll.u32 %v1385, 16
      %v1576 = vrot.slane %v1574, 5
      %v1577 = vsel %vm243, %v1572, %v1576
      %s1578 = scalar_lea.vmem %s1, 256
      %v1579 = vld [vmem:[%s1578] sm:$0xf]
      %v1580 = vld [vmem:[%s1578 + $0x4] sm:$0xf]
      %v1581 = vld [vmem:[%s1578 + $0x8] sm:$0xf]
      %v1582 = vld [vmem:[%s1578 + $0xc] sm:$0xf]
      %v1583 = vld [vmem:[%s1578 + $0x10] sm:$0xf]
      %v1584 = vld [vmem:[%s1578 + $0x14] sm:$0xf]
      %v1585 = vld [vmem:[%s1578 + $0x18] sm:$0xf]
      %v1586 = vld [vmem:[%s1578 + $0x1c] sm:$0xf]
      %v1587 = vld [vmem:[%s1578 + $0x20] sm:$0xf]
      %v1588 = vld [vmem:[%s1578 + $0x24] sm:$0xf]
      %v1589 = vld [vmem:[%s1578 + $0x28] sm:$0xf]
      %v1590 = vld [vmem:[%s1578 + $0x2c] sm:$0xf]
      %v1591 = vld [vmem:[%s1578 + $0x30] sm:$0xf]
      %v1592 = vld [vmem:[%s1578 + $0x34] sm:$0xf]
      %v1593 = vld [vmem:[%s1578 + $0x38] sm:$0xf]
      %v1594 = vld [vmem:[%s1578 + $0x3c] sm:$0xf]
      %v1595 = vunpack.c.l.b16 %v1399
      %v1596 = vunpack.c.l.b16 %v1409
      %v1597 = vunpack.c.l.b16 %v1423
      %v1598 = vunpack.c.l.b16 %v1433
      %v1599 = vunpack.c.l.b16 %v1447
      %v1600 = vunpack.c.l.b16 %v1457
      %v1601 = vunpack.c.l.b16 %v1471
      %v1602 = vunpack.c.l.b16 %v1481
      %v1603 = vunpack.c.l.b16 %v1495
      %v1604 = vunpack.c.l.b16 %v1505
      %v1605 = vunpack.c.l.b16 %v1519
      %v1606 = vunpack.c.l.b16 %v1529
      %v1607 = vunpack.c.l.b16 %v1543
      %v1608 = vunpack.c.l.b16 %v1553
      %v1609 = vunpack.c.l.b16 %v1567
      %v1610 = vunpack.c.l.b16 %v1577
      %v1611 = vpack.c.b16 %v1596, %v1595
      %v1612 = vpack.c.b16 %v1598, %v1597
      %v1613 = vpack.c.b16 %v1600, %v1599
      %v1614 = vpack.c.b16 %v1602, %v1601
      %v1615 = vpack.c.b16 %v1604, %v1603
      %v1616 = vpack.c.b16 %v1606, %v1605
      %v1617 = vpack.c.b16 %v1608, %v1607
      %v1618 = vpack.c.b16 %v1610, %v1609
      %v1643 = vunpack.c.l.b16 %v1579
      %v1644 = vunpack.c.l.b16 %v1580
      %v1645 = vunpack.c.l.b16 %v1581
      %v1646 = vunpack.c.l.b16 %v1582
      %v1647 = vunpack.c.l.b16 %v1583
      %v1648 = vunpack.c.l.b16 %v1584
      %v1649 = vunpack.c.l.b16 %v1585
      %v1650 = vunpack.c.l.b16 %v1586
      %v1651 = vunpack.c.l.b16 %v1587
      %v1652 = vunpack.c.l.b16 %v1588
      %v1653 = vunpack.c.l.b16 %v1589
      %v1654 = vunpack.c.l.b16 %v1590
      %v1655 = vunpack.c.l.b16 %v1591
      %v1656 = vunpack.c.l.b16 %v1592
      %v1657 = vunpack.c.l.b16 %v1593
      %v1658 = vunpack.c.l.b16 %v1594
      %v1659 = vpack.c.b16 %v1644, %v1643
      %v1660 = vpack.c.b16 %v1646, %v1645
      %v1661 = vpack.c.b16 %v1648, %v1647
      %v1662 = vpack.c.b16 %v1650, %v1649
      %v1663 = vpack.c.b16 %v1652, %v1651
      %v1664 = vpack.c.b16 %v1654, %v1653
      %v1665 = vpack.c.b16 %v1656, %v1655
      %v1666 = vpack.c.b16 %v1658, %v1657
      %1675 = vmatprep.subr.bf16.mxu0 0
      %1676 = vmatpush1.bf16.msra.mxu0 %v1666
      %1677 = vmatprep.subr.bf16.mxu0 0
      %1678 = vmatpush1.bf16.msra.mxu0 %v1665
      %1679 = vmatprep.subr.bf16.mxu0 0
      %1680 = vmatpush1.bf16.msra.mxu0 %v1664
      %1681 = vmatprep.subr.bf16.mxu0 0
      %1682 = vmatpush1.bf16.msra.mxu0 %v1663
      %1683 = vmatprep.subr.bf16.mxu0 0
      %1684 = vmatpush1.bf16.msra.mxu0 %v1662
      %1685 = vmatprep.subr.bf16.mxu0 0
      %1686 = vmatpush1.bf16.msra.mxu0 %v1661
      %1687 = vmatprep.subr.bf16.mxu0 0
      %1688 = vmatpush1.bf16.msra.mxu0 %v1660
      %1689 = vmatprep.subr.bf16.mxu0 0
      %1690 = vmatpush1.bf16.msra.mxu0 %v1659
      %1691 = vmatprep.subr.bf16.mxu0 0
      %1692 = vmatpush2.bf16.msra.mxu0 0
      %1693 = vmatprep.subr.bf16.mxu0 0
      %1694 = vmatpush2.bf16.msra.mxu0 0
      %1695 = vmatprep.subr.bf16.mxu0 0
      %1696 = vmatpush2.bf16.msra.mxu0 0
      %1697 = vmatprep.subr.bf16.mxu0 0
      %1698 = vmatpush2.bf16.msra.mxu0 0
      %1699 = vmatprep.subr.bf16.mxu0 0
      %1700 = vmatpush2.bf16.msra.mxu0 0
      %1701 = vmatprep.subr.bf16.mxu0 0
      %1702 = vmatpush2.bf16.msra.mxu0 0
      %1703 = vmatprep.subr.bf16.mxu0 0
      %1704 = vmatpush2.bf16.msra.mxu0 0
      %1705 = vmatprep.subr.bf16.mxu0 0
      %1706 = vmatpush2.bf16.msra.mxu0 0
      %1707 = vmatprep.mubr.bf16.mxu0 0
      %1708 = vmatmul.mubr.bf16.gmra.mxu0 %v1611
      %v1709 = vpop.f32.mrf.mxu0
      %v1710 = vadd.f32 0.0, %v1709
      %v1711 = vpop.f32.mrf.mxu0
      %v1712 = vpop.f32.mrf.mxu0
      %v1713 = vadd.f32 0.0, %v1712
      %v1714 = vpop.f32.mrf.mxu0
      %1715 = vmatprep.mubr.bf16.mxu0 0
      %1716 = vmatmul.mubr.bf16.gmra.mxu0 %v1612
      %v1717 = vpop.f32.mrf.mxu0
      %v1718 = vadd.f32 0.0, %v1717
      %v1719 = vpop.f32.mrf.mxu0
      %v1720 = vpop.f32.mrf.mxu0
      %v1721 = vadd.f32 0.0, %v1720
      %v1722 = vpop.f32.mrf.mxu0
      %1723 = vmatprep.mubr.bf16.mxu0 0
      %1724 = vmatmul.mubr.bf16.gmra.mxu0 %v1613
      %v1725 = vpop.f32.mrf.mxu0
      %v1726 = vadd.f32 0.0, %v1725
      %v1727 = vpop.f32.mrf.mxu0
      %v1728 = vpop.f32.mrf.mxu0
      %v1729 = vadd.f32 0.0, %v1728
      %v1730 = vpop.f32.mrf.mxu0
      %1731 = vmatprep.mubr.bf16.mxu0 0
      %1732 = vmatmul.mubr.bf16.gmra.mxu0 %v1614
      %v1733 = vpop.f32.mrf.mxu0
      %v1734 = vadd.f32 0.0, %v1733
      %v1735 = vpop.f32.mrf.mxu0
      %v1736 = vpop.f32.mrf.mxu0
      %v1737 = vadd.f32 0.0, %v1736
      %v1738 = vpop.f32.mrf.mxu0
      %1739 = vmatprep.mubr.bf16.mxu0 0
      %1740 = vmatmul.mubr.bf16.gmra.mxu0 %v1615
      %v1741 = vpop.f32.mrf.mxu0
      %v1742 = vadd.f32 0.0, %v1741
      %v1743 = vpop.f32.mrf.mxu0
      %v1744 = vpop.f32.mrf.mxu0
      %v1745 = vadd.f32 0.0, %v1744
      %v1746 = vpop.f32.mrf.mxu0
      %1747 = vmatprep.mubr.bf16.mxu0 0
      %1748 = vmatmul.mubr.bf16.gmra.mxu0 %v1616
      %v1749 = vpop.f32.mrf.mxu0
      %v1750 = vadd.f32 0.0, %v1749
      %v1751 = vpop.f32.mrf.mxu0
      %v1752 = vpop.f32.mrf.mxu0
      %v1753 = vadd.f32 0.0, %v1752
      %v1754 = vpop.f32.mrf.mxu0
      %1755 = vmatprep.mubr.bf16.mxu0 0
      %1756 = vmatmul.mubr.bf16.gmra.mxu0 %v1617
      %v1757 = vpop.f32.mrf.mxu0
      %v1758 = vadd.f32 0.0, %v1757
      %v1759 = vpop.f32.mrf.mxu0
      %v1760 = vpop.f32.mrf.mxu0
      %v1761 = vadd.f32 0.0, %v1760
      %v1762 = vpop.f32.mrf.mxu0
      %1763 = vmatprep.mubr.bf16.mxu0 0
      %1764 = vmatmul.mubr.bf16.gmra.mxu0 %v1618
      %v1765 = vpop.f32.mrf.mxu0
      %v1766 = vadd.f32 0.0, %v1765
      %v1767 = vpop.f32.mrf.mxu0
      %v1768 = vpop.f32.mrf.mxu0
      %v1769 = vadd.f32 0.0, %v1768
      %v1770 = vpop.f32.mrf.mxu0
      %1771 = vdwg.mxu0
      %v1772 = vadd.f32 %v1346, %v1710
      %v1773 = vadd.f32 %v1347, %v1713
      %v1774 = vadd.f32 %v1348, %v1718
      %v1775 = vadd.f32 %v1349, %v1721
      %v1776 = vadd.f32 %v1350, %v1726
      %v1777 = vadd.f32 %v1351, %v1729
      %v1778 = vadd.f32 %v1352, %v1734
      %v1779 = vadd.f32 %v1353, %v1737
      %v1780 = vadd.f32 %v1354, %v1742
      %v1781 = vadd.f32 %v1355, %v1745
      %v1782 = vadd.f32 %v1356, %v1750
      %v1783 = vadd.f32 %v1357, %v1753
      %v1784 = vadd.f32 %v1358, %v1758
      %v1785 = vadd.f32 %v1359, %v1761
      %v1786 = vadd.f32 %v1360, %v1766
      %v1787 = vadd.f32 %v1361, %v1769
      %v1788 = vld [vmem:[%s1119] sm:$0xe]
      %v1789 = vld [vmem:[%s1119 + $0xc] sm:$0xe]
      %v1790 = vld [vmem:[%s1119 + $0x18] sm:$0xe]
      %v1791 = vld [vmem:[%s1119 + $0x24] sm:$0xe]
      %v1792 = vld [vmem:[%s1119 + $0x30] sm:$0xe]
      %v1793 = vld [vmem:[%s1119 + $0x3c] sm:$0xe]
      %v1794 = vld [vmem:[%s1119 + $0x48] sm:$0xe]
      %v1795 = vld [vmem:[%s1119 + $0x54] sm:$0xe]
      %v1820 = vrot.slane %v1788, 5
      %v1821 = vrot.slane %v1820, 4
      %v1822 = vrot.slane %v1363, 5
      %v1823 = vsel %vm849, %v1821, %v1822
      %v1824 = vrot.slane %v1822, 4
      %v1825 = vrot.slane %v1364, 5
      %v1826 = vsel %vm849, %v1824, %v1825
      %v1827 = vrot.slane %v1789, 5
      %v1828 = vrot.slane %v1827, 4
      %v1829 = vrot.slane %v1366, 5
      %v1830 = vsel %vm849, %v1828, %v1829
      %v1831 = vrot.slane %v1829, 4
      %v1832 = vrot.slane %v1367, 5
      %v1833 = vsel %vm849, %v1831, %v1832
      %v1834 = vrot.slane %v1790, 5
      %v1835 = vrot.slane %v1834, 4
      %v1836 = vrot.slane %v1369, 5
      %v1837 = vsel %vm849, %v1835, %v1836
      %v1838 = vrot.slane %v1836, 4
      %v1839 = vrot.slane %v1370, 5
      %v1840 = vsel %vm849, %v1838, %v1839
      %v1841 = vrot.slane %v1791, 5
      %v1842 = vrot.slane %v1841, 4
      %v1843 = vrot.slane %v1372, 5
      %v1844 = vsel %vm849, %v1842, %v1843
      %v1845 = vrot.slane %v1843, 4
      %v1846 = vrot.slane %v1373, 5
      %v1847 = vsel %vm849, %v1845, %v1846
      %v1848 = vrot.slane %v1792, 5
      %v1849 = vrot.slane %v1848, 4
      %v1850 = vrot.slane %v1375, 5
      %v1851 = vsel %vm849, %v1849, %v1850
      %v1852 = vrot.slane %v1850, 4
      %v1853 = vrot.slane %v1376, 5
      %v1854 = vsel %vm849, %v1852, %v1853
      %v1855 = vrot.slane %v1793, 5
      %v1856 = vrot.slane %v1855, 4
      %v1857 = vrot.slane %v1378, 5
      %v1858 = vsel %vm849, %v1856, %v1857
      %v1859 = vrot.slane %v1857, 4
      %v1860 = vrot.slane %v1379, 5
      %v1861 = vsel %vm849, %v1859, %v1860
      %v1862 = vrot.slane %v1794, 5
      %v1863 = vrot.slane %v1862, 4
      %v1864 = vrot.slane %v1381, 5
      %v1865 = vsel %vm849, %v1863, %v1864
      %v1866 = vrot.slane %v1864, 4
      %v1867 = vrot.slane %v1382, 5
      %v1868 = vsel %vm849, %v1866, %v1867
      %v1869 = vrot.slane %v1795, 5
      %v1870 = vrot.slane %v1869, 4
      %v1871 = vrot.slane %v1384, 5
      %v1872 = vsel %vm849, %v1870, %v1871
      %v1873 = vrot.slane %v1871, 4
      %v1874 = vrot.slane %v1385, 5
      %v1875 = vsel %vm849, %v1873, %v1874
      %s1876 = scalar_lea.vmem %s1, 320
      %v1877 = vld [vmem:[%s1876] sm:$0xf]
      %v1878 = vld [vmem:[%s1876 + $0x4] sm:$0xf]
      %v1879 = vld [vmem:[%s1876 + $0x8] sm:$0xf]
      %v1880 = vld [vmem:[%s1876 + $0xc] sm:$0xf]
      %v1881 = vld [vmem:[%s1876 + $0x10] sm:$0xf]
      %v1882 = vld [vmem:[%s1876 + $0x14] sm:$0xf]
      %v1883 = vld [vmem:[%s1876 + $0x18] sm:$0xf]
      %v1884 = vld [vmem:[%s1876 + $0x1c] sm:$0xf]
      %v1885 = vld [vmem:[%s1876 + $0x20] sm:$0xf]
      %v1886 = vld [vmem:[%s1876 + $0x24] sm:$0xf]
      %v1887 = vld [vmem:[%s1876 + $0x28] sm:$0xf]
      %v1888 = vld [vmem:[%s1876 + $0x2c] sm:$0xf]
      %v1889 = vld [vmem:[%s1876 + $0x30] sm:$0xf]
      %v1890 = vld [vmem:[%s1876 + $0x34] sm:$0xf]
      %v1891 = vld [vmem:[%s1876 + $0x38] sm:$0xf]
      %v1892 = vld [vmem:[%s1876 + $0x3c] sm:$0xf]
      %v1893 = vunpack.c.l.b16 %v1823
      %v1894 = vunpack.c.l.b16 %v1826
      %v1895 = vunpack.c.l.b16 %v1830
      %v1896 = vunpack.c.l.b16 %v1833
      %v1897 = vunpack.c.l.b16 %v1837
      %v1898 = vunpack.c.l.b16 %v1840
      %v1899 = vunpack.c.l.b16 %v1844
      %v1900 = vunpack.c.l.b16 %v1847
      %v1901 = vunpack.c.l.b16 %v1851
      %v1902 = vunpack.c.l.b16 %v1854
      %v1903 = vunpack.c.l.b16 %v1858
      %v1904 = vunpack.c.l.b16 %v1861
      %v1905 = vunpack.c.l.b16 %v1865
      %v1906 = vunpack.c.l.b16 %v1868
      %v1907 = vunpack.c.l.b16 %v1872
      %v1908 = vunpack.c.l.b16 %v1875
      %v1909 = vpack.c.b16 %v1894, %v1893
      %v1910 = vpack.c.b16 %v1896, %v1895
      %v1911 = vpack.c.b16 %v1898, %v1897
      %v1912 = vpack.c.b16 %v1900, %v1899
      %v1913 = vpack.c.b16 %v1902, %v1901
      %v1914 = vpack.c.b16 %v1904, %v1903
      %v1915 = vpack.c.b16 %v1906, %v1905
      %v1916 = vpack.c.b16 %v1908, %v1907
      %v1941 = vunpack.c.l.b16 %v1877
      %v1942 = vunpack.c.l.b16 %v1878
      %v1943 = vunpack.c.l.b16 %v1879
      %v1944 = vunpack.c.l.b16 %v1880
      %v1945 = vunpack.c.l.b16 %v1881
      %v1946 = vunpack.c.l.b16 %v1882
      %v1947 = vunpack.c.l.b16 %v1883
      %v1948 = vunpack.c.l.b16 %v1884
      %v1949 = vunpack.c.l.b16 %v1885
      %v1950 = vunpack.c.l.b16 %v1886
      %v1951 = vunpack.c.l.b16 %v1887
      %v1952 = vunpack.c.l.b16 %v1888
      %v1953 = vunpack.c.l.b16 %v1889
      %v1954 = vunpack.c.l.b16 %v1890
      %v1955 = vunpack.c.l.b16 %v1891
      %v1956 = vunpack.c.l.b16 %v1892
      %v1957 = vpack.c.b16 %v1942, %v1941
      %v1958 = vpack.c.b16 %v1944, %v1943
      %v1959 = vpack.c.b16 %v1946, %v1945
      %v1960 = vpack.c.b16 %v1948, %v1947
      %v1961 = vpack.c.b16 %v1950, %v1949
      %v1962 = vpack.c.b16 %v1952, %v1951
      %v1963 = vpack.c.b16 %v1954, %v1953
      %v1964 = vpack.c.b16 %v1956, %v1955
      %1973 = vmatprep.subr.bf16.mxu0 0
      %1974 = vmatpush1.bf16.msra.mxu0 %v1964
      %1975 = vmatprep.subr.bf16.mxu0 0
      %1976 = vmatpush1.bf16.msra.mxu0 %v1963
      %1977 = vmatprep.subr.bf16.mxu0 0
      %1978 = vmatpush1.bf16.msra.mxu0 %v1962
      %1979 = vmatprep.subr.bf16.mxu0 0
      %1980 = vmatpush1.bf16.msra.mxu0 %v1961
      %1981 = vmatprep.subr.bf16.mxu0 0
      %1982 = vmatpush1.bf16.msra.mxu0 %v1960
      %1983 = vmatprep.subr.bf16.mxu0 0
      %1984 = vmatpush1.bf16.msra.mxu0 %v1959
      %1985 = vmatprep.subr.bf16.mxu0 0
      %1986 = vmatpush1.bf16.msra.mxu0 %v1958
      %1987 = vmatprep.subr.bf16.mxu0 0
      %1988 = vmatpush1.bf16.msra.mxu0 %v1957
      %1989 = vmatprep.subr.bf16.mxu0 0
      %1990 = vmatpush2.bf16.msra.mxu0 0
      %1991 = vmatprep.subr.bf16.mxu0 0
      %1992 = vmatpush2.bf16.msra.mxu0 0
      %1993 = vmatprep.subr.bf16.mxu0 0
      %1994 = vmatpush2.bf16.msra.mxu0 0
      %1995 = vmatprep.subr.bf16.mxu0 0
      %1996 = vmatpush2.bf16.msra.mxu0 0
      %1997 = vmatprep.subr.bf16.mxu0 0
      %1998 = vmatpush2.bf16.msra.mxu0 0
      %1999 = vmatprep.subr.bf16.mxu0 0
      %2000 = vmatpush2.bf16.msra.mxu0 0
      %2001 = vmatprep.subr.bf16.mxu0 0
      %2002 = vmatpush2.bf16.msra.mxu0 0
      %2003 = vmatprep.subr.bf16.mxu0 0
      %2004 = vmatpush2.bf16.msra.mxu0 0
      %2005 = vmatprep.mubr.bf16.mxu0 0
      %2006 = vmatmul.mubr.bf16.gmra.mxu0 %v1909
      %v2007 = vpop.f32.mrf.mxu0
      %v2008 = vadd.f32 0.0, %v2007
      %v2009 = vpop.f32.mrf.mxu0
      %v2010 = vpop.f32.mrf.mxu0
      %v2011 = vadd.f32 0.0, %v2010
      %v2012 = vpop.f32.mrf.mxu0
      %2013 = vmatprep.mubr.bf16.mxu0 0
      %2014 = vmatmul.mubr.bf16.gmra.mxu0 %v1910
      %v2015 = vpop.f32.mrf.mxu0
      %v2016 = vadd.f32 0.0, %v2015
      %v2017 = vpop.f32.mrf.mxu0
      %v2018 = vpop.f32.mrf.mxu0
      %v2019 = vadd.f32 0.0, %v2018
      %v2020 = vpop.f32.mrf.mxu0
      %2021 = vmatprep.mubr.bf16.mxu0 0
      %2022 = vmatmul.mubr.bf16.gmra.mxu0 %v1911
      %v2023 = vpop.f32.mrf.mxu0
      %v2024 = vadd.f32 0.0, %v2023
      %v2025 = vpop.f32.mrf.mxu0
      %v2026 = vpop.f32.mrf.mxu0
      %v2027 = vadd.f32 0.0, %v2026
      %v2028 = vpop.f32.mrf.mxu0
      %2029 = vmatprep.mubr.bf16.mxu0 0
      %2030 = vmatmul.mubr.bf16.gmra.mxu0 %v1912
      %v2031 = vpop.f32.mrf.mxu0
      %v2032 = vadd.f32 0.0, %v2031
      %v2033 = vpop.f32.mrf.mxu0
      %v2034 = vpop.f32.mrf.mxu0
      %v2035 = vadd.f32 0.0, %v2034
      %v2036 = vpop.f32.mrf.mxu0
      %2037 = vmatprep.mubr.bf16.mxu0 0
      %2038 = vmatmul.mubr.bf16.gmra.mxu0 %v1913
      %v2039 = vpop.f32.mrf.mxu0
      %v2040 = vadd.f32 0.0, %v2039
      %v2041 = vpop.f32.mrf.mxu0
      %v2042 = vpop.f32.mrf.mxu0
      %v2043 = vadd.f32 0.0, %v2042
      %v2044 = vpop.f32.mrf.mxu0
      %2045 = vmatprep.mubr.bf16.mxu0 0
      %2046 = vmatmul.mubr.bf16.gmra.mxu0 %v1914
      %v2047 = vpop.f32.mrf.mxu0
      %v2048 = vadd.f32 0.0, %v2047
      %v2049 = vpop.f32.mrf.mxu0
      %v2050 = vpop.f32.mrf.mxu0
      %v2051 = vadd.f32 0.0, %v2050
      %v2052 = vpop.f32.mrf.mxu0
      %2053 = vmatprep.mubr.bf16.mxu0 0
      %2054 = vmatmul.mubr.bf16.gmra.mxu0 %v1915
      %v2055 = vpop.f32.mrf.mxu0
      %v2056 = vadd.f32 0.0, %v2055
      %v2057 = vpop.f32.mrf.mxu0
      %v2058 = vpop.f32.mrf.mxu0
      %v2059 = vadd.f32 0.0, %v2058
      %v2060 = vpop.f32.mrf.mxu0
      %2061 = vmatprep.mubr.bf16.mxu0 0
      %2062 = vmatmul.mubr.bf16.gmra.mxu0 %v1916
      %v2063 = vpop.f32.mrf.mxu0
      %v2064 = vadd.f32 0.0, %v2063
      %v2065 = vpop.f32.mrf.mxu0
      %v2066 = vpop.f32.mrf.mxu0
      %v2067 = vadd.f32 0.0, %v2066
      %v2068 = vpop.f32.mrf.mxu0
      %2069 = vdwg.mxu0
      %v2070 = vadd.f32 %v1772, %v2008
      %v2071 = vadd.f32 %v1773, %v2011
      %v2072 = vadd.f32 %v1774, %v2016
      %v2073 = vadd.f32 %v1775, %v2019
      %v2074 = vadd.f32 %v1776, %v2024
      %v2075 = vadd.f32 %v1777, %v2027
      %v2076 = vadd.f32 %v1778, %v2032
      %v2077 = vadd.f32 %v1779, %v2035
      %v2078 = vadd.f32 %v1780, %v2040
      %v2079 = vadd.f32 %v1781, %v2043
      %v2080 = vadd.f32 %v1782, %v2048
      %v2081 = vadd.f32 %v1783, %v2051
      %v2082 = vadd.f32 %v1784, %v2056
      %v2083 = vadd.f32 %v1785, %v2059
      %v2084 = vadd.f32 %v1786, %v2064
      %v2085 = vadd.f32 %v1787, %v2067
      %s2086 = sadd.s32 %s197, 2
      %s2087 = smul.u32 %s2086, 3
      %s2088 = smul.addr %s2087, 4
      %s2089 = scalar_lea.vmem %s184, %s2088
      %v2090 = vld [vmem:[%s2089] sm:$0xf]
      %v2091 = vld [vmem:[%s2089 + $0x4] sm:$0xf]
      %v2092 = vld [vmem:[%s2089 + $0xc] sm:$0xf]
      %v2093 = vld [vmem:[%s2089 + $0x10] sm:$0xf]
      %v2094 = vld [vmem:[%s2089 + $0x18] sm:$0xf]
      %v2095 = vld [vmem:[%s2089 + $0x1c] sm:$0xf]
      %v2096 = vld [vmem:[%s2089 + $0x24] sm:$0xf]
      %v2097 = vld [vmem:[%s2089 + $0x28] sm:$0xf]
      %v2098 = vld [vmem:[%s2089 + $0x30] sm:$0xf]
      %v2099 = vld [vmem:[%s2089 + $0x34] sm:$0xf]
      %v2100 = vld [vmem:[%s2089 + $0x3c] sm:$0xf]
      %v2101 = vld [vmem:[%s2089 + $0x40] sm:$0xf]
      %v2102 = vld [vmem:[%s2089 + $0x48] sm:$0xf]
      %v2103 = vld [vmem:[%s2089 + $0x4c] sm:$0xf]
      %v2104 = vld [vmem:[%s2089 + $0x54] sm:$0xf]
      %v2105 = vld [vmem:[%s2089 + $0x58] sm:$0xf]
      %s2106 = scalar_lea.vmem %s1, 384
      %v2107 = vld [vmem:[%s2106] sm:$0xf]
      %v2108 = vld [vmem:[%s2106 + $0x4] sm:$0xf]
      %v2109 = vld [vmem:[%s2106 + $0x8] sm:$0xf]
      %v2110 = vld [vmem:[%s2106 + $0xc] sm:$0xf]
      %v2111 = vld [vmem:[%s2106 + $0x10] sm:$0xf]
      %v2112 = vld [vmem:[%s2106 + $0x14] sm:$0xf]
      %v2113 = vld [vmem:[%s2106 + $0x18] sm:$0xf]
      %v2114 = vld [vmem:[%s2106 + $0x1c] sm:$0xf]
      %v2115 = vld [vmem:[%s2106 + $0x20] sm:$0xf]
      %v2116 = vld [vmem:[%s2106 + $0x24] sm:$0xf]
      %v2117 = vld [vmem:[%s2106 + $0x28] sm:$0xf]
      %v2118 = vld [vmem:[%s2106 + $0x2c] sm:$0xf]
      %v2119 = vld [vmem:[%s2106 + $0x30] sm:$0xf]
      %v2120 = vld [vmem:[%s2106 + $0x34] sm:$0xf]
      %v2121 = vld [vmem:[%s2106 + $0x38] sm:$0xf]
      %v2122 = vld [vmem:[%s2106 + $0x3c] sm:$0xf]
      %v2139 = vunpack.c.l.b16 %v2090
      %v2140 = vunpack.c.l.b16 %v2091
      %v2141 = vunpack.c.l.b16 %v2092
      %v2142 = vunpack.c.l.b16 %v2093
      %v2143 = vunpack.c.l.b16 %v2094
      %v2144 = vunpack.c.l.b16 %v2095
      %v2145 = vunpack.c.l.b16 %v2096
      %v2146 = vunpack.c.l.b16 %v2097
      %v2147 = vunpack.c.l.b16 %v2098
      %v2148 = vunpack.c.l.b16 %v2099
      %v2149 = vunpack.c.l.b16 %v2100
      %v2150 = vunpack.c.l.b16 %v2101
      %v2151 = vunpack.c.l.b16 %v2102
      %v2152 = vunpack.c.l.b16 %v2103
      %v2153 = vunpack.c.l.b16 %v2104
      %v2154 = vunpack.c.l.b16 %v2105
      %v2155 = vpack.c.b16 %v2140, %v2139
      %v2156 = vpack.c.b16 %v2142, %v2141
      %v2157 = vpack.c.b16 %v2144, %v2143
      %v2158 = vpack.c.b16 %v2146, %v2145
      %v2159 = vpack.c.b16 %v2148, %v2147
      %v2160 = vpack.c.b16 %v2150, %v2149
      %v2161 = vpack.c.b16 %v2152, %v2151
      %v2162 = vpack.c.b16 %v2154, %v2153
      %v2187 = vunpack.c.l.b16 %v2107
      %v2188 = vunpack.c.l.b16 %v2108
      %v2189 = vunpack.c.l.b16 %v2109
      %v2190 = vunpack.c.l.b16 %v2110
      %v2191 = vunpack.c.l.b16 %v2111
      %v2192 = vunpack.c.l.b16 %v2112
      %v2193 = vunpack.c.l.b16 %v2113
      %v2194 = vunpack.c.l.b16 %v2114
      %v2195 = vunpack.c.l.b16 %v2115
      %v2196 = vunpack.c.l.b16 %v2116
      %v2197 = vunpack.c.l.b16 %v2117
      %v2198 = vunpack.c.l.b16 %v2118
      %v2199 = vunpack.c.l.b16 %v2119
      %v2200 = vunpack.c.l.b16 %v2120
      %v2201 = vunpack.c.l.b16 %v2121
      %v2202 = vunpack.c.l.b16 %v2122
      %v2203 = vpack.c.b16 %v2188, %v2187
      %v2204 = vpack.c.b16 %v2190, %v2189
      %v2205 = vpack.c.b16 %v2192, %v2191
      %v2206 = vpack.c.b16 %v2194, %v2193
      %v2207 = vpack.c.b16 %v2196, %v2195
      %v2208 = vpack.c.b16 %v2198, %v2197
      %v2209 = vpack.c.b16 %v2200, %v2199
      %v2210 = vpack.c.b16 %v2202, %v2201
      %2219 = vmatprep.subr.bf16.mxu0 0
      %2220 = vmatpush1.bf16.msra.mxu0 %v2210
      %2221 = vmatprep.subr.bf16.mxu0 0
      %2222 = vmatpush1.bf16.msra.mxu0 %v2209
      %2223 = vmatprep.subr.bf16.mxu0 0
      %2224 = vmatpush1.bf16.msra.mxu0 %v2208
      %2225 = vmatprep.subr.bf16.mxu0 0
      %2226 = vmatpush1.bf16.msra.mxu0 %v2207
      %2227 = vmatprep.subr.bf16.mxu0 0
      %2228 = vmatpush1.bf16.msra.mxu0 %v2206
      %2229 = vmatprep.subr.bf16.mxu0 0
      %2230 = vmatpush1.bf16.msra.mxu0 %v2205
      %2231 = vmatprep.subr.bf16.mxu0 0
      %2232 = vmatpush1.bf16.msra.mxu0 %v2204
      %2233 = vmatprep.subr.bf16.mxu0 0
      %2234 = vmatpush1.bf16.msra.mxu0 %v2203
      %2235 = vmatprep.subr.bf16.mxu0 0
      %2236 = vmatpush2.bf16.msra.mxu0 0
      %2237 = vmatprep.subr.bf16.mxu0 0
      %2238 = vmatpush2.bf16.msra.mxu0 0
      %2239 = vmatprep.subr.bf16.mxu0 0
      %2240 = vmatpush2.bf16.msra.mxu0 0
      %2241 = vmatprep.subr.bf16.mxu0 0
      %2242 = vmatpush2.bf16.msra.mxu0 0
      %2243 = vmatprep.subr.bf16.mxu0 0
      %2244 = vmatpush2.bf16.msra.mxu0 0
      %2245 = vmatprep.subr.bf16.mxu0 0
      %2246 = vmatpush2.bf16.msra.mxu0 0
      %2247 = vmatprep.subr.bf16.mxu0 0
      %2248 = vmatpush2.bf16.msra.mxu0 0
      %2249 = vmatprep.subr.bf16.mxu0 0
      %2250 = vmatpush2.bf16.msra.mxu0 0
      %2251 = vmatprep.mubr.bf16.mxu0 0
      %2252 = vmatmul.mubr.bf16.gmra.mxu0 %v2155
      %v2253 = vpop.f32.mrf.mxu0
      %v2254 = vadd.f32 0.0, %v2253
      %v2255 = vpop.f32.mrf.mxu0
      %v2256 = vpop.f32.mrf.mxu0
      %v2257 = vadd.f32 0.0, %v2256
      %v2258 = vpop.f32.mrf.mxu0
      %2259 = vmatprep.mubr.bf16.mxu0 0
      %2260 = vmatmul.mubr.bf16.gmra.mxu0 %v2156
      %v2261 = vpop.f32.mrf.mxu0
      %v2262 = vadd.f32 0.0, %v2261
      %v2263 = vpop.f32.mrf.mxu0
      %v2264 = vpop.f32.mrf.mxu0
      %v2265 = vadd.f32 0.0, %v2264
      %v2266 = vpop.f32.mrf.mxu0
      %2267 = vmatprep.mubr.bf16.mxu0 0
      %2268 = vmatmul.mubr.bf16.gmra.mxu0 %v2157
      %v2269 = vpop.f32.mrf.mxu0
      %v2270 = vadd.f32 0.0, %v2269
      %v2271 = vpop.f32.mrf.mxu0
      %v2272 = vpop.f32.mrf.mxu0
      %v2273 = vadd.f32 0.0, %v2272
      %v2274 = vpop.f32.mrf.mxu0
      %2275 = vmatprep.mubr.bf16.mxu0 0
      %2276 = vmatmul.mubr.bf16.gmra.mxu0 %v2158
      %v2277 = vpop.f32.mrf.mxu0
      %v2278 = vadd.f32 0.0, %v2277
      %v2279 = vpop.f32.mrf.mxu0
      %v2280 = vpop.f32.mrf.mxu0
      %v2281 = vadd.f32 0.0, %v2280
      %v2282 = vpop.f32.mrf.mxu0
      %2283 = vmatprep.mubr.bf16.mxu0 0
      %2284 = vmatmul.mubr.bf16.gmra.mxu0 %v2159
      %v2285 = vpop.f32.mrf.mxu0
      %v2286 = vadd.f32 0.0, %v2285
      %v2287 = vpop.f32.mrf.mxu0
      %v2288 = vpop.f32.mrf.mxu0
      %v2289 = vadd.f32 0.0, %v2288
      %v2290 = vpop.f32.mrf.mxu0
      %2291 = vmatprep.mubr.bf16.mxu0 0
      %2292 = vmatmul.mubr.bf16.gmra.mxu0 %v2160
      %v2293 = vpop.f32.mrf.mxu0
      %v2294 = vadd.f32 0.0, %v2293
      %v2295 = vpop.f32.mrf.mxu0
      %v2296 = vpop.f32.mrf.mxu0
      %v2297 = vadd.f32 0.0, %v2296
      %v2298 = vpop.f32.mrf.mxu0
      %2299 = vmatprep.mubr.bf16.mxu0 0
      %2300 = vmatmul.mubr.bf16.gmra.mxu0 %v2161
      %v2301 = vpop.f32.mrf.mxu0
      %v2302 = vadd.f32 0.0, %v2301
      %v2303 = vpop.f32.mrf.mxu0
      %v2304 = vpop.f32.mrf.mxu0
      %v2305 = vadd.f32 0.0, %v2304
      %v2306 = vpop.f32.mrf.mxu0
      %2307 = vmatprep.mubr.bf16.mxu0 0
      %2308 = vmatmul.mubr.bf16.gmra.mxu0 %v2162
      %v2309 = vpop.f32.mrf.mxu0
      %v2310 = vadd.f32 0.0, %v2309
      %v2311 = vpop.f32.mrf.mxu0
      %v2312 = vpop.f32.mrf.mxu0
      %v2313 = vadd.f32 0.0, %v2312
      %v2314 = vpop.f32.mrf.mxu0
      %2315 = vdwg.mxu0
      %v2316 = vadd.f32 %v2070, %v2254
      %v2317 = vadd.f32 %v2071, %v2257
      %v2318 = vadd.f32 %v2072, %v2262
      %v2319 = vadd.f32 %v2073, %v2265
      %v2320 = vadd.f32 %v2074, %v2270
      %v2321 = vadd.f32 %v2075, %v2273
      %v2322 = vadd.f32 %v2076, %v2278
      %v2323 = vadd.f32 %v2077, %v2281
      %v2324 = vadd.f32 %v2078, %v2286
      %v2325 = vadd.f32 %v2079, %v2289
      %v2326 = vadd.f32 %v2080, %v2294
      %v2327 = vadd.f32 %v2081, %v2297
      %v2328 = vadd.f32 %v2082, %v2302
      %v2329 = vadd.f32 %v2083, %v2305
      %v2330 = vadd.f32 %v2084, %v2310
      %v2331 = vadd.f32 %v2085, %v2313
      %v2332 = vld [vmem:[%s2089] sm:$0xf]
      %v2333 = vld [vmem:[%s2089 + $0x4] sm:$0xf]
      %v2334 = vld [vmem:[%s2089 + $0x8] sm:$0x1]
      %v2335 = vld [vmem:[%s2089 + $0xc] sm:$0xf]
      %v2336 = vld [vmem:[%s2089 + $0x10] sm:$0xf]
      %v2337 = vld [vmem:[%s2089 + $0x14] sm:$0x1]
      %v2338 = vld [vmem:[%s2089 + $0x18] sm:$0xf]
      %v2339 = vld [vmem:[%s2089 + $0x1c] sm:$0xf]
      %v2340 = vld [vmem:[%s2089 + $0x20] sm:$0x1]
      %v2341 = vld [vmem:[%s2089 + $0x24] sm:$0xf]
      %v2342 = vld [vmem:[%s2089 + $0x28] sm:$0xf]
      %v2343 = vld [vmem:[%s2089 + $0x2c] sm:$0x1]
      %v2344 = vld [vmem:[%s2089 + $0x30] sm:$0xf]
      %v2345 = vld [vmem:[%s2089 + $0x34] sm:$0xf]
      %v2346 = vld [vmem:[%s2089 + $0x38] sm:$0x1]
      %v2347 = vld [vmem:[%s2089 + $0x3c] sm:$0xf]
      %v2348 = vld [vmem:[%s2089 + $0x40] sm:$0xf]
      %v2349 = vld [vmem:[%s2089 + $0x44] sm:$0x1]
      %v2350 = vld [vmem:[%s2089 + $0x48] sm:$0xf]
      %v2351 = vld [vmem:[%s2089 + $0x4c] sm:$0xf]
      %v2352 = vld [vmem:[%s2089 + $0x50] sm:$0x1]
      %v2353 = vld [vmem:[%s2089 + $0x54] sm:$0xf]
      %v2354 = vld [vmem:[%s2089 + $0x58] sm:$0xf]
      %v2355 = vld [vmem:[%s2089 + $0x5c] sm:$0x1]
      %v2357 = vshrl.u32 %v2332, 16
      %v2359 = vrot.slane %v2357, 4
      %v2360 = vshll.u32 %v2332, 16
      %v2362 = vrot.slane %v2360, 5
      %v2363 = vor.u32 %v2359, %v2362
      %v2364 = vrot.slane %v2363, 4
      %v2366 = vshll.u32 %v2333, 16
      %v2368 = vrot.slane %v2366, 5
      %v2369 = vsel %vm243, %v2364, %v2368
      %v2370 = vshrl.u32 %v2333, 16
      %v2372 = vrot.slane %v2370, 4
      %v2373 = vor.u32 %v2372, %v2368
      %v2374 = vrot.slane %v2373, 4
      %v2376 = vshll.u32 %v2334, 16
      %v2378 = vrot.slane %v2376, 5
      %v2379 = vsel %vm243, %v2374, %v2378
      %v2381 = vshrl.u32 %v2335, 16
      %v2383 = vrot.slane %v2381, 4
      %v2384 = vshll.u32 %v2335, 16
      %v2386 = vrot.slane %v2384, 5
      %v2387 = vor.u32 %v2383, %v2386
      %v2388 = vrot.slane %v2387, 4
      %v2390 = vshll.u32 %v2336, 16
      %v2392 = vrot.slane %v2390, 5
      %v2393 = vsel %vm243, %v2388, %v2392
      %v2394 = vshrl.u32 %v2336, 16
      %v2396 = vrot.slane %v2394, 4
      %v2397 = vor.u32 %v2396, %v2392
      %v2398 = vrot.slane %v2397, 4
      %v2400 = vshll.u32 %v2337, 16
      %v2402 = vrot.slane %v2400, 5
      %v2403 = vsel %vm243, %v2398, %v2402
      %v2405 = vshrl.u32 %v2338, 16
      %v2407 = vrot.slane %v2405, 4
      %v2408 = vshll.u32 %v2338, 16
      %v2410 = vrot.slane %v2408, 5
      %v2411 = vor.u32 %v2407, %v2410
      %v2412 = vrot.slane %v2411, 4
      %v2414 = vshll.u32 %v2339, 16
      %v2416 = vrot.slane %v2414, 5
      %v2417 = vsel %vm243, %v2412, %v2416
      %v2418 = vshrl.u32 %v2339, 16
      %v2420 = vrot.slane %v2418, 4
      %v2421 = vor.u32 %v2420, %v2416
      %v2422 = vrot.slane %v2421, 4
      %v2424 = vshll.u32 %v2340, 16
      %v2426 = vrot.slane %v2424, 5
      %v2427 = vsel %vm243, %v2422, %v2426
      %v2429 = vshrl.u32 %v2341, 16
      %v2431 = vrot.slane %v2429, 4
      %v2432 = vshll.u32 %v2341, 16
      %v2434 = vrot.slane %v2432, 5
      %v2435 = vor.u32 %v2431, %v2434
      %v2436 = vrot.slane %v2435, 4
      %v2438 = vshll.u32 %v2342, 16
      %v2440 = vrot.slane %v2438, 5
      %v2441 = vsel %vm243, %v2436, %v2440
      %v2442 = vshrl.u32 %v2342, 16
      %v2444 = vrot.slane %v2442, 4
      %v2445 = vor.u32 %v2444, %v2440
      %v2446 = vrot.slane %v2445, 4
      %v2448 = vshll.u32 %v2343, 16
      %v2450 = vrot.slane %v2448, 5
      %v2451 = vsel %vm243, %v2446, %v2450
      %v2453 = vshrl.u32 %v2344, 16
      %v2455 = vrot.slane %v2453, 4
      %v2456 = vshll.u32 %v2344, 16
      %v2458 = vrot.slane %v2456, 5
      %v2459 = vor.u32 %v2455, %v2458
      %v2460 = vrot.slane %v2459, 4
      %v2462 = vshll.u32 %v2345, 16
      %v2464 = vrot.slane %v2462, 5
      %v2465 = vsel %vm243, %v2460, %v2464
      %v2466 = vshrl.u32 %v2345, 16
      %v2468 = vrot.slane %v2466, 4
      %v2469 = vor.u32 %v2468, %v2464
      %v2470 = vrot.slane %v2469, 4
      %v2472 = vshll.u32 %v2346, 16
      %v2474 = vrot.slane %v2472, 5
      %v2475 = vsel %vm243, %v2470, %v2474
      %v2477 = vshrl.u32 %v2347, 16
      %v2479 = vrot.slane %v2477, 4
      %v2480 = vshll.u32 %v2347, 16
      %v2482 = vrot.slane %v2480, 5
      %v2483 = vor.u32 %v2479, %v2482
      %v2484 = vrot.slane %v2483, 4
      %v2486 = vshll.u32 %v2348, 16
      %v2488 = vrot.slane %v2486, 5
      %v2489 = vsel %vm243, %v2484, %v2488
      %v2490 = vshrl.u32 %v2348, 16
      %v2492 = vrot.slane %v2490, 4
      %v2493 = vor.u32 %v2492, %v2488
      %v2494 = vrot.slane %v2493, 4
      %v2496 = vshll.u32 %v2349, 16
      %v2498 = vrot.slane %v2496, 5
      %v2499 = vsel %vm243, %v2494, %v2498
      %v2501 = vshrl.u32 %v2350, 16
      %v2503 = vrot.slane %v2501, 4
      %v2504 = vshll.u32 %v2350, 16
      %v2506 = vrot.slane %v2504, 5
      %v2507 = vor.u32 %v2503, %v2506
      %v2508 = vrot.slane %v2507, 4
      %v2510 = vshll.u32 %v2351, 16
      %v2512 = vrot.slane %v2510, 5
      %v2513 = vsel %vm243, %v2508, %v2512
      %v2514 = vshrl.u32 %v2351, 16
      %v2516 = vrot.slane %v2514, 4
      %v2517 = vor.u32 %v2516, %v2512
      %v2518 = vrot.slane %v2517, 4
      %v2520 = vshll.u32 %v2352, 16
      %v2522 = vrot.slane %v2520, 5
      %v2523 = vsel %vm243, %v2518, %v2522
      %v2525 = vshrl.u32 %v2353, 16
      %v2527 = vrot.slane %v2525, 4
      %v2528 = vshll.u32 %v2353, 16
      %v2530 = vrot.slane %v2528, 5
      %v2531 = vor.u32 %v2527, %v2530
      %v2532 = vrot.slane %v2531, 4
      %v2534 = vshll.u32 %v2354, 16
      %v2536 = vrot.slane %v2534, 5
      %v2537 = vsel %vm243, %v2532, %v2536
      %v2538 = vshrl.u32 %v2354, 16
      %v2540 = vrot.slane %v2538, 4
      %v2541 = vor.u32 %v2540, %v2536
      %v2542 = vrot.slane %v2541, 4
      %v2544 = vshll.u32 %v2355, 16
      %v2546 = vrot.slane %v2544, 5
      %v2547 = vsel %vm243, %v2542, %v2546
      %s2548 = scalar_lea.vmem %s1, 448
      %v2549 = vld [vmem:[%s2548] sm:$0xf]
      %v2550 = vld [vmem:[%s2548 + $0x4] sm:$0xf]
      %v2551 = vld [vmem:[%s2548 + $0x8] sm:$0xf]
      %v2552 = vld [vmem:[%s2548 + $0xc] sm:$0xf]
      %v2553 = vld [vmem:[%s2548 + $0x10] sm:$0xf]
      %v2554 = vld [vmem:[%s2548 + $0x14] sm:$0xf]
      %v2555 = vld [vmem:[%s2548 + $0x18] sm:$0xf]
      %v2556 = vld [vmem:[%s2548 + $0x1c] sm:$0xf]
      %v2557 = vld [vmem:[%s2548 + $0x20] sm:$0xf]
      %v2558 = vld [vmem:[%s2548 + $0x24] sm:$0xf]
      %v2559 = vld [vmem:[%s2548 + $0x28] sm:$0xf]
      %v2560 = vld [vmem:[%s2548 + $0x2c] sm:$0xf]
      %v2561 = vld [vmem:[%s2548 + $0x30] sm:$0xf]
      %v2562 = vld [vmem:[%s2548 + $0x34] sm:$0xf]
      %v2563 = vld [vmem:[%s2548 + $0x38] sm:$0xf]
      %v2564 = vld [vmem:[%s2548 + $0x3c] sm:$0xf]
      %v2565 = vunpack.c.l.b16 %v2369
      %v2566 = vunpack.c.l.b16 %v2379
      %v2567 = vunpack.c.l.b16 %v2393
      %v2568 = vunpack.c.l.b16 %v2403
      %v2569 = vunpack.c.l.b16 %v2417
      %v2570 = vunpack.c.l.b16 %v2427
      %v2571 = vunpack.c.l.b16 %v2441
      %v2572 = vunpack.c.l.b16 %v2451
      %v2573 = vunpack.c.l.b16 %v2465
      %v2574 = vunpack.c.l.b16 %v2475
      %v2575 = vunpack.c.l.b16 %v2489
      %v2576 = vunpack.c.l.b16 %v2499
      %v2577 = vunpack.c.l.b16 %v2513
      %v2578 = vunpack.c.l.b16 %v2523
      %v2579 = vunpack.c.l.b16 %v2537
      %v2580 = vunpack.c.l.b16 %v2547
      %v2581 = vpack.c.b16 %v2566, %v2565
      %v2582 = vpack.c.b16 %v2568, %v2567
      %v2583 = vpack.c.b16 %v2570, %v2569
      %v2584 = vpack.c.b16 %v2572, %v2571
      %v2585 = vpack.c.b16 %v2574, %v2573
      %v2586 = vpack.c.b16 %v2576, %v2575
      %v2587 = vpack.c.b16 %v2578, %v2577
      %v2588 = vpack.c.b16 %v2580, %v2579
      %v2613 = vunpack.c.l.b16 %v2549
      %v2614 = vunpack.c.l.b16 %v2550
      %v2615 = vunpack.c.l.b16 %v2551
      %v2616 = vunpack.c.l.b16 %v2552
      %v2617 = vunpack.c.l.b16 %v2553
      %v2618 = vunpack.c.l.b16 %v2554
      %v2619 = vunpack.c.l.b16 %v2555
      %v2620 = vunpack.c.l.b16 %v2556
      %v2621 = vunpack.c.l.b16 %v2557
      %v2622 = vunpack.c.l.b16 %v2558
      %v2623 = vunpack.c.l.b16 %v2559
      %v2624 = vunpack.c.l.b16 %v2560
      %v2625 = vunpack.c.l.b16 %v2561
      %v2626 = vunpack.c.l.b16 %v2562
      %v2627 = vunpack.c.l.b16 %v2563
      %v2628 = vunpack.c.l.b16 %v2564
      %v2629 = vpack.c.b16 %v2614, %v2613
      %v2630 = vpack.c.b16 %v2616, %v2615
      %v2631 = vpack.c.b16 %v2618, %v2617
      %v2632 = vpack.c.b16 %v2620, %v2619
      %v2633 = vpack.c.b16 %v2622, %v2621
      %v2634 = vpack.c.b16 %v2624, %v2623
      %v2635 = vpack.c.b16 %v2626, %v2625
      %v2636 = vpack.c.b16 %v2628, %v2627
      %2645 = vmatprep.subr.bf16.mxu0 0
      %2646 = vmatpush1.bf16.msra.mxu0 %v2636
      %2647 = vmatprep.subr.bf16.mxu0 0
      %2648 = vmatpush1.bf16.msra.mxu0 %v2635
      %2649 = vmatprep.subr.bf16.mxu0 0
      %2650 = vmatpush1.bf16.msra.mxu0 %v2634
      %2651 = vmatprep.subr.bf16.mxu0 0
      %2652 = vmatpush1.bf16.msra.mxu0 %v2633
      %2653 = vmatprep.subr.bf16.mxu0 0
      %2654 = vmatpush1.bf16.msra.mxu0 %v2632
      %2655 = vmatprep.subr.bf16.mxu0 0
      %2656 = vmatpush1.bf16.msra.mxu0 %v2631
      %2657 = vmatprep.subr.bf16.mxu0 0
      %2658 = vmatpush1.bf16.msra.mxu0 %v2630
      %2659 = vmatprep.subr.bf16.mxu0 0
      %2660 = vmatpush1.bf16.msra.mxu0 %v2629
      %2661 = vmatprep.subr.bf16.mxu0 0
      %2662 = vmatpush2.bf16.msra.mxu0 0
      %2663 = vmatprep.subr.bf16.mxu0 0
      %2664 = vmatpush2.bf16.msra.mxu0 0
      %2665 = vmatprep.subr.bf16.mxu0 0
      %2666 = vmatpush2.bf16.msra.mxu0 0
      %2667 = vmatprep.subr.bf16.mxu0 0
      %2668 = vmatpush2.bf16.msra.mxu0 0
      %2669 = vmatprep.subr.bf16.mxu0 0
      %2670 = vmatpush2.bf16.msra.mxu0 0
      %2671 = vmatprep.subr.bf16.mxu0 0
      %2672 = vmatpush2.bf16.msra.mxu0 0
      %2673 = vmatprep.subr.bf16.mxu0 0
      %2674 = vmatpush2.bf16.msra.mxu0 0
      %2675 = vmatprep.subr.bf16.mxu0 0
      %2676 = vmatpush2.bf16.msra.mxu0 0
      %2677 = vmatprep.mubr.bf16.mxu0 0
      %2678 = vmatmul.mubr.bf16.gmra.mxu0 %v2581
      %v2679 = vpop.f32.mrf.mxu0
      %v2680 = vadd.f32 0.0, %v2679
      %v2681 = vpop.f32.mrf.mxu0
      %v2682 = vpop.f32.mrf.mxu0
      %v2683 = vadd.f32 0.0, %v2682
      %v2684 = vpop.f32.mrf.mxu0
      %2685 = vmatprep.mubr.bf16.mxu0 0
      %2686 = vmatmul.mubr.bf16.gmra.mxu0 %v2582
      %v2687 = vpop.f32.mrf.mxu0
      %v2688 = vadd.f32 0.0, %v2687
      %v2689 = vpop.f32.mrf.mxu0
      %v2690 = vpop.f32.mrf.mxu0
      %v2691 = vadd.f32 0.0, %v2690
      %v2692 = vpop.f32.mrf.mxu0
      %2693 = vmatprep.mubr.bf16.mxu0 0
      %2694 = vmatmul.mubr.bf16.gmra.mxu0 %v2583
      %v2695 = vpop.f32.mrf.mxu0
      %v2696 = vadd.f32 0.0, %v2695
      %v2697 = vpop.f32.mrf.mxu0
      %v2698 = vpop.f32.mrf.mxu0
      %v2699 = vadd.f32 0.0, %v2698
      %v2700 = vpop.f32.mrf.mxu0
      %2701 = vmatprep.mubr.bf16.mxu0 0
      %2702 = vmatmul.mubr.bf16.gmra.mxu0 %v2584
      %v2703 = vpop.f32.mrf.mxu0
      %v2704 = vadd.f32 0.0, %v2703
      %v2705 = vpop.f32.mrf.mxu0
      %v2706 = vpop.f32.mrf.mxu0
      %v2707 = vadd.f32 0.0, %v2706
      %v2708 = vpop.f32.mrf.mxu0
      %2709 = vmatprep.mubr.bf16.mxu0 0
      %2710 = vmatmul.mubr.bf16.gmra.mxu0 %v2585
      %v2711 = vpop.f32.mrf.mxu0
      %v2712 = vadd.f32 0.0, %v2711
      %v2713 = vpop.f32.mrf.mxu0
      %v2714 = vpop.f32.mrf.mxu0
      %v2715 = vadd.f32 0.0, %v2714
      %v2716 = vpop.f32.mrf.mxu0
      %2717 = vmatprep.mubr.bf16.mxu0 0
      %2718 = vmatmul.mubr.bf16.gmra.mxu0 %v2586
      %v2719 = vpop.f32.mrf.mxu0
      %v2720 = vadd.f32 0.0, %v2719
      %v2721 = vpop.f32.mrf.mxu0
      %v2722 = vpop.f32.mrf.mxu0
      %v2723 = vadd.f32 0.0, %v2722
      %v2724 = vpop.f32.mrf.mxu0
      %2725 = vmatprep.mubr.bf16.mxu0 0
      %2726 = vmatmul.mubr.bf16.gmra.mxu0 %v2587
      %v2727 = vpop.f32.mrf.mxu0
      %v2728 = vadd.f32 0.0, %v2727
      %v2729 = vpop.f32.mrf.mxu0
      %v2730 = vpop.f32.mrf.mxu0
      %v2731 = vadd.f32 0.0, %v2730
      %v2732 = vpop.f32.mrf.mxu0
      %2733 = vmatprep.mubr.bf16.mxu0 0
      %2734 = vmatmul.mubr.bf16.gmra.mxu0 %v2588
      %v2735 = vpop.f32.mrf.mxu0
      %v2736 = vadd.f32 0.0, %v2735
      %v2737 = vpop.f32.mrf.mxu0
      %v2738 = vpop.f32.mrf.mxu0
      %v2739 = vadd.f32 0.0, %v2738
      %v2740 = vpop.f32.mrf.mxu0
      %2741 = vdwg.mxu0
      %v2742 = vadd.f32 %v2316, %v2680
      %v2743 = vadd.f32 %v2317, %v2683
      %v2744 = vadd.f32 %v2318, %v2688
      %v2745 = vadd.f32 %v2319, %v2691
      %v2746 = vadd.f32 %v2320, %v2696
      %v2747 = vadd.f32 %v2321, %v2699
      %v2748 = vadd.f32 %v2322, %v2704
      %v2749 = vadd.f32 %v2323, %v2707
      %v2750 = vadd.f32 %v2324, %v2712
      %v2751 = vadd.f32 %v2325, %v2715
      %v2752 = vadd.f32 %v2326, %v2720
      %v2753 = vadd.f32 %v2327, %v2723
      %v2754 = vadd.f32 %v2328, %v2728
      %v2755 = vadd.f32 %v2329, %v2731
      %v2756 = vadd.f32 %v2330, %v2736
      %v2757 = vadd.f32 %v2331, %v2739
      %v2758 = vld [vmem:[%s2089] sm:$0xe]
      %v2759 = vld [vmem:[%s2089 + $0xc] sm:$0xe]
      %v2760 = vld [vmem:[%s2089 + $0x18] sm:$0xe]
      %v2761 = vld [vmem:[%s2089 + $0x24] sm:$0xe]
      %v2762 = vld [vmem:[%s2089 + $0x30] sm:$0xe]
      %v2763 = vld [vmem:[%s2089 + $0x3c] sm:$0xe]
      %v2764 = vld [vmem:[%s2089 + $0x48] sm:$0xe]
      %v2765 = vld [vmem:[%s2089 + $0x54] sm:$0xe]
      %v2790 = vrot.slane %v2758, 5
      %v2791 = vrot.slane %v2790, 4
      %v2792 = vrot.slane %v2333, 5
      %v2793 = vsel %vm849, %v2791, %v2792
      %v2794 = vrot.slane %v2792, 4
      %v2795 = vrot.slane %v2334, 5
      %v2796 = vsel %vm849, %v2794, %v2795
      %v2797 = vrot.slane %v2759, 5
      %v2798 = vrot.slane %v2797, 4
      %v2799 = vrot.slane %v2336, 5
      %v2800 = vsel %vm849, %v2798, %v2799
      %v2801 = vrot.slane %v2799, 4
      %v2802 = vrot.slane %v2337, 5
      %v2803 = vsel %vm849, %v2801, %v2802
      %v2804 = vrot.slane %v2760, 5
      %v2805 = vrot.slane %v2804, 4
      %v2806 = vrot.slane %v2339, 5
      %v2807 = vsel %vm849, %v2805, %v2806
      %v2808 = vrot.slane %v2806, 4
      %v2809 = vrot.slane %v2340, 5
      %v2810 = vsel %vm849, %v2808, %v2809
      %v2811 = vrot.slane %v2761, 5
      %v2812 = vrot.slane %v2811, 4
      %v2813 = vrot.slane %v2342, 5
      %v2814 = vsel %vm849, %v2812, %v2813
      %v2815 = vrot.slane %v2813, 4
      %v2816 = vrot.slane %v2343, 5
      %v2817 = vsel %vm849, %v2815, %v2816
      %v2818 = vrot.slane %v2762, 5
      %v2819 = vrot.slane %v2818, 4
      %v2820 = vrot.slane %v2345, 5
      %v2821 = vsel %vm849, %v2819, %v2820
      %v2822 = vrot.slane %v2820, 4
      %v2823 = vrot.slane %v2346, 5
      %v2824 = vsel %vm849, %v2822, %v2823
      %v2825 = vrot.slane %v2763, 5
      %v2826 = vrot.slane %v2825, 4
      %v2827 = vrot.slane %v2348, 5
      %v2828 = vsel %vm849, %v2826, %v2827
      %v2829 = vrot.slane %v2827, 4
      %v2830 = vrot.slane %v2349, 5
      %v2831 = vsel %vm849, %v2829, %v2830
      %v2832 = vrot.slane %v2764, 5
      %v2833 = vrot.slane %v2832, 4
      %v2834 = vrot.slane %v2351, 5
      %v2835 = vsel %vm849, %v2833, %v2834
      %v2836 = vrot.slane %v2834, 4
      %v2837 = vrot.slane %v2352, 5
      %v2838 = vsel %vm849, %v2836, %v2837
      %v2839 = vrot.slane %v2765, 5
      %v2840 = vrot.slane %v2839, 4
      %v2841 = vrot.slane %v2354, 5
      %v2842 = vsel %vm849, %v2840, %v2841
      %v2843 = vrot.slane %v2841, 4
      %v2844 = vrot.slane %v2355, 5
      %v2845 = vsel %vm849, %v2843, %v2844
      %s2846 = scalar_lea.vmem %s1, 512
      %v2847 = vld [vmem:[%s2846] sm:$0xf]
      %v2848 = vld [vmem:[%s2846 + $0x4] sm:$0xf]
      %v2849 = vld [vmem:[%s2846 + $0x8] sm:$0xf]
      %v2850 = vld [vmem:[%s2846 + $0xc] sm:$0xf]
      %v2851 = vld [vmem:[%s2846 + $0x10] sm:$0xf]
      %v2852 = vld [vmem:[%s2846 + $0x14] sm:$0xf]
      %v2853 = vld [vmem:[%s2846 + $0x18] sm:$0xf]
      %v2854 = vld [vmem:[%s2846 + $0x1c] sm:$0xf]
      %v2855 = vld [vmem:[%s2846 + $0x20] sm:$0xf]
      %v2856 = vld [vmem:[%s2846 + $0x24] sm:$0xf]
      %v2857 = vld [vmem:[%s2846 + $0x28] sm:$0xf]
      %v2858 = vld [vmem:[%s2846 + $0x2c] sm:$0xf]
      %v2859 = vld [vmem:[%s2846 + $0x30] sm:$0xf]
      %v2860 = vld [vmem:[%s2846 + $0x34] sm:$0xf]
      %v2861 = vld [vmem:[%s2846 + $0x38] sm:$0xf]
      %v2862 = vld [vmem:[%s2846 + $0x3c] sm:$0xf]
      %v2863 = vunpack.c.l.b16 %v2793
      %v2864 = vunpack.c.l.b16 %v2796
      %v2865 = vunpack.c.l.b16 %v2800
      %v2866 = vunpack.c.l.b16 %v2803
      %v2867 = vunpack.c.l.b16 %v2807
      %v2868 = vunpack.c.l.b16 %v2810
      %v2869 = vunpack.c.l.b16 %v2814
      %v2870 = vunpack.c.l.b16 %v2817
      %v2871 = vunpack.c.l.b16 %v2821
      %v2872 = vunpack.c.l.b16 %v2824
      %v2873 = vunpack.c.l.b16 %v2828
      %v2874 = vunpack.c.l.b16 %v2831
      %v2875 = vunpack.c.l.b16 %v2835
      %v2876 = vunpack.c.l.b16 %v2838
      %v2877 = vunpack.c.l.b16 %v2842
      %v2878 = vunpack.c.l.b16 %v2845
      %v2879 = vpack.c.b16 %v2864, %v2863
      %v2880 = vpack.c.b16 %v2866, %v2865
      %v2881 = vpack.c.b16 %v2868, %v2867
      %v2882 = vpack.c.b16 %v2870, %v2869
      %v2883 = vpack.c.b16 %v2872, %v2871
      %v2884 = vpack.c.b16 %v2874, %v2873
      %v2885 = vpack.c.b16 %v2876, %v2875
      %v2886 = vpack.c.b16 %v2878, %v2877
      %v2911 = vunpack.c.l.b16 %v2847
      %v2912 = vunpack.c.l.b16 %v2848
      %v2913 = vunpack.c.l.b16 %v2849
      %v2914 = vunpack.c.l.b16 %v2850
      %v2915 = vunpack.c.l.b16 %v2851
      %v2916 = vunpack.c.l.b16 %v2852
      %v2917 = vunpack.c.l.b16 %v2853
      %v2918 = vunpack.c.l.b16 %v2854
      %v2919 = vunpack.c.l.b16 %v2855
      %v2920 = vunpack.c.l.b16 %v2856
      %v2921 = vunpack.c.l.b16 %v2857
      %v2922 = vunpack.c.l.b16 %v2858
      %v2923 = vunpack.c.l.b16 %v2859
      %v2924 = vunpack.c.l.b16 %v2860
      %v2925 = vunpack.c.l.b16 %v2861
      %v2926 = vunpack.c.l.b16 %v2862
      %v2927 = vpack.c.b16 %v2912, %v2911
      %v2928 = vpack.c.b16 %v2914, %v2913
      %v2929 = vpack.c.b16 %v2916, %v2915
      %v2930 = vpack.c.b16 %v2918, %v2917
      %v2931 = vpack.c.b16 %v2920, %v2919
      %v2932 = vpack.c.b16 %v2922, %v2921
      %v2933 = vpack.c.b16 %v2924, %v2923
      %v2934 = vpack.c.b16 %v2926, %v2925
      %2943 = vmatprep.subr.bf16.mxu0 0
      %2944 = vmatpush1.bf16.msra.mxu0 %v2934
      %2945 = vmatprep.subr.bf16.mxu0 0
      %2946 = vmatpush1.bf16.msra.mxu0 %v2933
      %2947 = vmatprep.subr.bf16.mxu0 0
      %2948 = vmatpush1.bf16.msra.mxu0 %v2932
      %2949 = vmatprep.subr.bf16.mxu0 0
      %2950 = vmatpush1.bf16.msra.mxu0 %v2931
      %2951 = vmatprep.subr.bf16.mxu0 0
      %2952 = vmatpush1.bf16.msra.mxu0 %v2930
      %2953 = vmatprep.subr.bf16.mxu0 0
      %2954 = vmatpush1.bf16.msra.mxu0 %v2929
      %2955 = vmatprep.subr.bf16.mxu0 0
      %2956 = vmatpush1.bf16.msra.mxu0 %v2928
      %2957 = vmatprep.subr.bf16.mxu0 0
      %2958 = vmatpush1.bf16.msra.mxu0 %v2927
      %2959 = vmatprep.subr.bf16.mxu0 0
      %2960 = vmatpush2.bf16.msra.mxu0 0
      %2961 = vmatprep.subr.bf16.mxu0 0
      %2962 = vmatpush2.bf16.msra.mxu0 0
      %2963 = vmatprep.subr.bf16.mxu0 0
      %2964 = vmatpush2.bf16.msra.mxu0 0
      %2965 = vmatprep.subr.bf16.mxu0 0
      %2966 = vmatpush2.bf16.msra.mxu0 0
      %2967 = vmatprep.subr.bf16.mxu0 0
      %2968 = vmatpush2.bf16.msra.mxu0 0
      %2969 = vmatprep.subr.bf16.mxu0 0
      %2970 = vmatpush2.bf16.msra.mxu0 0
      %2971 = vmatprep.subr.bf16.mxu0 0
      %2972 = vmatpush2.bf16.msra.mxu0 0
      %2973 = vmatprep.subr.bf16.mxu0 0
      %2974 = vmatpush2.bf16.msra.mxu0 0
      %2975 = vmatprep.mubr.bf16.mxu0 0
      %2976 = vmatmul.mubr.bf16.gmra.mxu0 %v2879
      %v2977 = vpop.f32.mrf.mxu0
      %v2978 = vadd.f32 0.0, %v2977
      %v2979 = vpop.f32.mrf.mxu0
      %v2980 = vpop.f32.mrf.mxu0
      %v2981 = vadd.f32 0.0, %v2980
      %v2982 = vpop.f32.mrf.mxu0
      %2983 = vmatprep.mubr.bf16.mxu0 0
      %2984 = vmatmul.mubr.bf16.gmra.mxu0 %v2880
      %v2985 = vpop.f32.mrf.mxu0
      %v2986 = vadd.f32 0.0, %v2985
      %v2987 = vpop.f32.mrf.mxu0
      %v2988 = vpop.f32.mrf.mxu0
      %v2989 = vadd.f32 0.0, %v2988
      %v2990 = vpop.f32.mrf.mxu0
      %2991 = vmatprep.mubr.bf16.mxu0 0
      %2992 = vmatmul.mubr.bf16.gmra.mxu0 %v2881
      %v2993 = vpop.f32.mrf.mxu0
      %v2994 = vadd.f32 0.0, %v2993
      %v2995 = vpop.f32.mrf.mxu0
      %v2996 = vpop.f32.mrf.mxu0
      %v2997 = vadd.f32 0.0, %v2996
      %v2998 = vpop.f32.mrf.mxu0
      %2999 = vmatprep.mubr.bf16.mxu0 0
      %3000 = vmatmul.mubr.bf16.gmra.mxu0 %v2882
      %v3001 = vpop.f32.mrf.mxu0
      %v3002 = vadd.f32 0.0, %v3001
      %v3003 = vpop.f32.mrf.mxu0
      %v3004 = vpop.f32.mrf.mxu0
      %v3005 = vadd.f32 0.0, %v3004
      %v3006 = vpop.f32.mrf.mxu0
      %3007 = vmatprep.mubr.bf16.mxu0 0
      %3008 = vmatmul.mubr.bf16.gmra.mxu0 %v2883
      %v3009 = vpop.f32.mrf.mxu0
      %v3010 = vadd.f32 0.0, %v3009
      %v3011 = vpop.f32.mrf.mxu0
      %v3012 = vpop.f32.mrf.mxu0
      %v3013 = vadd.f32 0.0, %v3012
      %v3014 = vpop.f32.mrf.mxu0
      %3015 = vmatprep.mubr.bf16.mxu0 0
      %3016 = vmatmul.mubr.bf16.gmra.mxu0 %v2884
      %v3017 = vpop.f32.mrf.mxu0
      %v3018 = vadd.f32 0.0, %v3017
      %v3019 = vpop.f32.mrf.mxu0
      %v3020 = vpop.f32.mrf.mxu0
      %v3021 = vadd.f32 0.0, %v3020
      %v3022 = vpop.f32.mrf.mxu0
      %3023 = vmatprep.mubr.bf16.mxu0 0
      %3024 = vmatmul.mubr.bf16.gmra.mxu0 %v2885
      %v3025 = vpop.f32.mrf.mxu0
      %v3026 = vadd.f32 0.0, %v3025
      %v3027 = vpop.f32.mrf.mxu0
      %v3028 = vpop.f32.mrf.mxu0
      %v3029 = vadd.f32 0.0, %v3028
      %v3030 = vpop.f32.mrf.mxu0
      %3031 = vmatprep.mubr.bf16.mxu0 0
      %3032 = vmatmul.mubr.bf16.gmra.mxu0 %v2886
      %v3033 = vpop.f32.mrf.mxu0
      %v3034 = vadd.f32 0.0, %v3033
      %v3035 = vpop.f32.mrf.mxu0
      %v3036 = vpop.f32.mrf.mxu0
      %v3037 = vadd.f32 0.0, %v3036
      %v3038 = vpop.f32.mrf.mxu0
      %3039 = vdwg.mxu0
      %v3040 = vadd.f32 %v2742, %v2978
      %v3041 = vadd.f32 %v2743, %v2981
      %v3042 = vadd.f32 %v2744, %v2986
      %v3043 = vadd.f32 %v2745, %v2989
      %v3044 = vadd.f32 %v2746, %v2994
      %v3045 = vadd.f32 %v2747, %v2997
      %v3046 = vadd.f32 %v2748, %v3002
      %v3047 = vadd.f32 %v2749, %v3005
      %v3048 = vadd.f32 %v2750, %v3010
      %v3049 = vadd.f32 %v2751, %v3013
      %v3050 = vadd.f32 %v2752, %v3018
      %v3051 = vadd.f32 %v2753, %v3021
      %v3052 = vadd.f32 %v2754, %v3026
      %v3053 = vadd.f32 %v2755, %v3029
      %v3054 = vadd.f32 %v2756, %v3034
      %v3055 = vadd.f32 %v2757, %v3037
      %v3056 = vld [vmem:[%s2] sm:$0x1]
      %v3058 = vlaneseq
      %v3059 = vshrl.u32 %v3058, 7
      %v3060 = vsub.s32 0, %v3059
      %v3061 = vrot.slane %v3056, %v3060
      %v3063 = vadd.f32 %v3040, %v3061
      %v3064 = vadd.f32 %v3041, %v3061
      %v3065 = vadd.f32 %v3042, %v3061
      %v3066 = vadd.f32 %v3043, %v3061
      %v3067 = vadd.f32 %v3044, %v3061
      %v3068 = vadd.f32 %v3045, %v3061
      %v3069 = vadd.f32 %v3046, %v3061
      %v3070 = vadd.f32 %v3047, %v3061
      %v3071 = vadd.f32 %v3048, %v3061
      %v3072 = vadd.f32 %v3049, %v3061
      %v3073 = vadd.f32 %v3050, %v3061
      %v3074 = vadd.f32 %v3051, %v3061
      %v3075 = vadd.f32 %v3052, %v3061
      %v3076 = vadd.f32 %v3053, %v3061
      %v3077 = vadd.f32 %v3054, %v3061
      %v3078 = vadd.f32 %v3055, %v3061
      %v3079 = vmax.f32 %v3063, 0.0
      %v3080 = vmax.f32 %v3064, 0.0
      %v3081 = vmax.f32 %v3065, 0.0
      %v3082 = vmax.f32 %v3066, 0.0
      %v3083 = vmax.f32 %v3067, 0.0
      %v3084 = vmax.f32 %v3068, 0.0
      %v3085 = vmax.f32 %v3069, 0.0
      %v3086 = vmax.f32 %v3070, 0.0
      %v3087 = vmax.f32 %v3071, 0.0
      %v3088 = vmax.f32 %v3072, 0.0
      %v3089 = vmax.f32 %v3073, 0.0
      %v3090 = vmax.f32 %v3074, 0.0
      %v3091 = vmax.f32 %v3075, 0.0
      %v3092 = vmax.f32 %v3076, 0.0
      %v3093 = vmax.f32 %v3077, 0.0
      %v3094 = vmax.f32 %v3078, 0.0
      %v3095 = vpack.c.bf16 %v3080, %v3079
      %v3096 = vpack.c.bf16 %v3082, %v3081
      %v3097 = vpack.c.bf16 %v3084, %v3083
      %v3098 = vpack.c.bf16 %v3086, %v3085
      %v3099 = vpack.c.bf16 %v3088, %v3087
      %v3100 = vpack.c.bf16 %v3090, %v3089
      %v3101 = vpack.c.bf16 %v3092, %v3091
      %v3102 = vpack.c.bf16 %v3094, %v3093
      %v3111 = vunpack.c.l.b16 %v3095
      %v3112 = vunpack.c.h.b16 %v3095
      %v3113 = vunpack.c.l.b16 %v3096
      %v3114 = vunpack.c.h.b16 %v3096
      %v3115 = vunpack.c.l.b16 %v3097
      %v3116 = vunpack.c.h.b16 %v3097
      %v3117 = vunpack.c.l.b16 %v3098
      %v3118 = vunpack.c.h.b16 %v3098
      %v3119 = vunpack.c.l.b16 %v3099
      %v3120 = vunpack.c.h.b16 %v3099
      %v3121 = vunpack.c.l.b16 %v3100
      %v3122 = vunpack.c.h.b16 %v3100
      %v3123 = vunpack.c.l.b16 %v3101
      %v3124 = vunpack.c.h.b16 %v3101
      %v3125 = vunpack.c.l.b16 %v3102
      %v3126 = vunpack.c.h.b16 %v3102
      %v3127 = vpack.c.b16 %v3111, %v3111
      %v3128 = vpack.c.b16 %v3112, %v3112
      %v3129 = vpack.c.b16 %v3113, %v3113
      %v3130 = vpack.c.b16 %v3114, %v3114
      %v3131 = vpack.c.b16 %v3115, %v3115
      %v3132 = vpack.c.b16 %v3116, %v3116
      %v3133 = vpack.c.b16 %v3117, %v3117
      %v3134 = vpack.c.b16 %v3118, %v3118
      %v3135 = vpack.c.b16 %v3119, %v3119
      %v3136 = vpack.c.b16 %v3120, %v3120
      %v3137 = vpack.c.b16 %v3121, %v3121
      %v3138 = vpack.c.b16 %v3122, %v3122
      %v3139 = vpack.c.b16 %v3123, %v3123
      %v3140 = vpack.c.b16 %v3124, %v3124
      %v3141 = vpack.c.b16 %v3125, %v3125
      %v3142 = vpack.c.b16 %v3126, %v3126
      %3159 = vst [vmem:[%s194] sm:$0xf] %v3127
      %3160 = vst [vmem:[%s194 + $0x4] sm:$0xf] %v3128
      %3161 = vst [vmem:[%s194 + $0x8] sm:$0xf] %v3129
      %3162 = vst [vmem:[%s194 + $0xc] sm:$0xf] %v3130
      %3163 = vst [vmem:[%s194 + $0x10] sm:$0xf] %v3131
      %3164 = vst [vmem:[%s194 + $0x14] sm:$0xf] %v3132
      %3165 = vst [vmem:[%s194 + $0x18] sm:$0xf] %v3133
      %3166 = vst [vmem:[%s194 + $0x1c] sm:$0xf] %v3134
      %3167 = vst [vmem:[%s194 + $0x20] sm:$0xf] %v3135
      %3168 = vst [vmem:[%s194 + $0x24] sm:$0xf] %v3136
      %3169 = vst [vmem:[%s194 + $0x28] sm:$0xf] %v3137
      %3170 = vst [vmem:[%s194 + $0x2c] sm:$0xf] %v3138
      %3171 = vst [vmem:[%s194 + $0x30] sm:$0xf] %v3139
      %3172 = vst [vmem:[%s194 + $0x34] sm:$0xf] %v3140
      %3173 = vst [vmem:[%s194 + $0x38] sm:$0xf] %v3141
      %3174 = vst [vmem:[%s194 + $0x3c] sm:$0xf] %v3142
      %s3175 = smul.u32 8, %s19
      %p3176 = scmp.lt.s32.totalorder %s18, 1
      %s3177 = scalar_select %p3176, %s18, 1
      %p3178 = scmp.lt.s32.totalorder %s3175, 15
      %s3179 = scalar_select %p3178, %s3175, 15
      %s3180 = smul.addr %s3179, 2
      %s3181 = smul.addr %s3177, 32
      %s3182 = sadd.s32 %s3180, %s3181
      %s3183 = smul.addr %s3182, 4
      %s3184 = scalar_lea.vmem %s3, %s3183
      // Predicated region
      $region33: #{_lambda_.4} parent=31 // pred_check
        %p3185 = pneg %p114
      $region34: #{_lambda_.4} parent=31 // pred_check_branch
        %3187 = sbr.rel (%p3185) target = $region36
      $region35: #{_lambda_.4} parent=31 // pred_region
        %s3188 = smul.u32 8, %s19
      $region36: #{_lambda_.4} parent=31 // pred_fallthru
        _
    $region32: #{_lambda_.4} parent=5 // pred_fallthru
      _
    %p3189 = scmp.le.s32.totalorder 2, %s9
    // Predicated region
    $region37: #{_lambda_.4} parent=5 // pred_check
      %p3190 = pneg %p3189
    $region38: #{_lambda_.4} parent=5 // pred_check_branch
      %3192 = sbr.rel (%p3190) target = $region40
    $region39: #{_lambda_.4} parent=5 // pred_region
      %s3193 = ssub.s32 %s9, 2
      // Predicated region
      $region41: #{_lambda_.4} parent=39 // pred_check
        %p3194 = pneg %p120
      $region42: #{_lambda_.4} parent=39 // pred_check_branch
        %3196 = sbr.rel (%p3194) target = $region44
      $region43: #{_lambda_.4} parent=39 // pred_region
        %s3197 = smul.u32 8, %s21
        %p3198 = scmp.lt.s32.totalorder %s20, 1
        %s3199 = scalar_select %p3198, %s20, 1
        %p3200 = scmp.lt.s32.totalorder %s3197, 15
        %s3201 = scalar_select %p3200, %s3197, 15
        %s3202 = smul.addr %s3201, 2
        %s3203 = smul.addr %s3199, 32
        %s3204 = sadd.s32 %s3202, %s3203
        %s3205 = smul.addr %s3204, 4
        %s3206 = scalar_lea.vmem %s3, %s3205
      $region44: #{_lambda_.4} parent=39 // pred_fallthru
        _
    $region40: #{_lambda_.4} parent=5 // pred_fallthru
      _
  $region6: #{_lambda_.4} parent=0 // loop_footer
    %s13 = sadd.s32 1, %s9
  $region7: #{_lambda_.4} parent=0 // loop_footer_branch
    %8 = sbr.rel target = $region3
  $region8: #{_lambda_.4} parent=0 // loop_exit
    _

// kernel: _lambda_.5
$region0: #{_lambda_.5}
  #allocation0 [shape = 'u32[]', space=smem, size = 0x4, offset = 0x4, fixed_abs, tag = 'smem constant byte address 0x4 - core index']
  #allocation1 [shape = 'u32[144,128]{1,0:T(1,128)}', space=vmem, size = 0x12000, scoped, tag = 'internal scratch']
  %s0 = inlined_call_operand.vmem [shape: bf16[2,34,34,128], index: 0, kind: input, shape index: {}]
  %s1 = inlined_call_operand.vmem [shape: bf16[9,128,128], index: 1, kind: input, shape index: {}]
  %s2 = inlined_call_operand.vmem [shape: f32[1,128], index: 2, kind: input, shape index: {}]
  %s3 = inlined_call_operand.vmem [shape: bf16[2,32,32,128], index: 3, kind: output, shape index: {}]
  %s4 = sld [smem:[#allocation0]]
  $region45: #{_lambda_.5} parent=0
    _
  %s6 = ssub.s32 1, %s4
  %s7 = scalar_select 0, %s6, %s4
  loop: start=0, step=1, limit=10
  $region2: #{_lambda_.5} parent=0 // loop_pre_header
    _
  $region3: #{_lambda_.5} parent=0 // loop_header
    %s9 = sphi 0, %s13
    %p10 = scmp.ge.s32.totalorder %s9, 10
    %s16 = sphi 0, %s28
    %s17 = sphi 0, %s24
    %s18 = sphi 0, %s16
    %s19 = sphi 0, %s17
    %s20 = sphi 0, %s18
    %s21 = sphi 0, %s19
    %s31 = sphi 0, %s33
    %s34 = sphi 0, %s31
    %s35 = sphi 0, %s34
    %s51 = sphi 0, %s35
    %s55 = sphi 0, %s55
    %s57 = sphi 0, %s55
    %s58 = sphi 0, %s57
    %s72 = sphi 0, %s58
    %s76 = sphi 0, %s76
    %s78 = sphi 0, %s76
    %s79 = sphi 0, %s78
    %s93 = sphi 0, %s79
    %s101 = sphi 0, %s103
    %s104 = sphi 0, %s101
    %s105 = sphi 0, %s104
    %s121 = sphi 0, %s105
  $region4: #{_lambda_.5} parent=0 // loop_header_branch
    %12 = sbr.rel (%p10) target = $region8
  $region5: #{_lambda_.5} parent=0 // loop_body
    %s14 = ssub.s32 %s9, 1
    %s15 = ssub.s32 %s9, 2
    %s22 = sadd.s32 1, %s17
    %p23 = scmp.ge.s32.totalorder %s22, 4
    %s24 = scalar_select %p23, 0, %s22
    %s25 = sadd.s32 1, %s16
    %s26 = scalar_select %p23, %s25, %s16
    %p27 = scmp.ge.s32.totalorder %s26, 2
    %s28 = scalar_select %p27, 0, %s26
    %s29 = ssub.s32 %s16, %s28
    %p30 = scmp.eq.s32.totalorder %s29, 0
    %s32 = sadd.s32 %s31, 1
    %s33 = scalar_select %p30, %s31, %s32
    %p36 = pneg %p30
    %p37 = scmp.eq.s32.totalorder %s9, 7
    %p38 = por %p36, %p37
    %p39 = scmp.ne.s32.totalorder %s31, %s34
    %p40 = scmp.eq.s32.totalorder %s9, 0
    %p41 = por %p39, %p40
    %p42 = scmp.ne.s32.totalorder %s31, %s34
    %p43 = scmp.eq.s32.totalorder %s14, 7
    %p44 = por %p42, %p43
    %p45 = scmp.ne.s32.totalorder %s34, %s35
    %p46 = scmp.eq.s32.totalorder %s14, 0
    %p47 = por %p45, %p46
    %p48 = scmp.ne.s32.totalorder %s34, %s35
    %p49 = scmp.eq.s32.totalorder %s15, 7
    %p50 = por %p48, %p49
    %p52 = scmp.ne.s32.totalorder %s35, %s51
    %p53 = scmp.eq.s32.totalorder %s15, 0
    %p54 = por %p52, %p53
    %s56 = sadd.s32 %s55, 1
    %p59 = scmp.eq.s32.totalorder %s9, 7
    %p60 = scmp.ne.s32.totalorder %s55, %s57
    %p61 = scmp.eq.s32.totalorder %s9, 0
    %p62 = por %p60, %p61
    %p63 = scmp.ne.s32.totalorder %s55, %s57
    %p64 = scmp.eq.s32.totalorder %s14, 7
    %p65 = por %p63, %p64
    %p66 = scmp.ne.s32.totalorder %s57, %s58
    %p67 = scmp.eq.s32.totalorder %s14, 0
    %p68 = por %p66, %p67
    %p69 = scmp.ne.s32.totalorder %s57, %s58
    %p70 = scmp.eq.s32.totalorder %s15, 7
    %p71 = por %p69, %p70
    %p73 = scmp.ne.s32.totalorder %s58, %s72
    %p74 = scmp.eq.s32.totalorder %s15, 0
    %p75 = por %p73, %p74
    %s77 = sadd.s32 %s76, 1
    %p80 = scmp.eq.s32.totalorder %s9, 7
    %p81 = scmp.ne.s32.totalorder %s76, %s78
    %p82 = scmp.eq.s32.totalorder %s9, 0
    %p83 = por %p81, %p82
    %p84 = scmp.ne.s32.totalorder %s76, %s78
    %p85 = scmp.eq.s32.totalorder %s14, 7
    %p86 = por %p84, %p85
    %p87 = scmp.ne.s32.totalorder %s78, %s79
    %p88 = scmp.eq.s32.totalorder %s14, 0
    %p89 = por %p87, %p88
    %p90 = scmp.ne.s32.totalorder %s78, %s79
    %p91 = scmp.eq.s32.totalorder %s15, 7
    %p92 = por %p90, %p91
    %p94 = scmp.ne.s32.totalorder %s79, %s93
    %p95 = scmp.eq.s32.totalorder %s15, 0
    %p96 = por %p94, %p95
    %s97 = ssub.s32 %s16, %s28
    %s98 = ssub.s32 %s17, %s24
    %s99 = sor.u32 %s97, %s98
    %p100 = scmp.eq.s32.totalorder %s99, 0
    %s102 = sadd.s32 %s101, 1
    %s103 = scalar_select %p100, %s101, %s102
    %p106 = pneg %p100
    %p107 = scmp.eq.s32.totalorder %s9, 7
    %p108 = por %p106, %p107
    %p109 = scmp.ne.s32.totalorder %s101, %s104
    %p110 = scmp.eq.s32.totalorder %s9, 0
    %p111 = por %p109, %p110
    %p112 = scmp.ne.s32.totalorder %s101, %s104
    %p113 = scmp.eq.s32.totalorder %s14, 7
    %p114 = por %p112, %p113
    %p115 = scmp.ne.s32.totalorder %s104, %s105
    %p116 = scmp.eq.s32.totalorder %s14, 0
    %p117 = por %p115, %p116
    %p118 = scmp.ne.s32.totalorder %s104, %s105
    %p119 = scmp.eq.s32.totalorder %s15, 7
    %p120 = por %p118, %p119
    %p122 = scmp.ne.s32.totalorder %s105, %s121
    %p123 = scmp.eq.s32.totalorder %s15, 0
    %p124 = por %p122, %p123
    %p125 = scmp.le.s32.totalorder 1, %s9
    %p126 = scmp.lt.s32.totalorder %s9, 9
    %p127 = pnand %p125, %p126
    %p128 = pneg %p127
    // Predicated region
    $region9: #{_lambda_.5} parent=5 // pred_check
      _
    $region10: #{_lambda_.5} parent=5 // pred_check_branch
      %130 = sbr.rel (%p127) target = $region12
    $region11: #{_lambda_.5} parent=5 // pred_region
      %s131 = ssub.s32 %s9, 1
      // Predicated region
      $region13: #{_lambda_.5} parent=11 // pred_check
        %p132 = pneg %p68
      $region14: #{_lambda_.5} parent=11 // pred_check_branch
        %134 = sbr.rel (%p132) target = $region16
      $region15: #{_lambda_.5} parent=11 // pred_region
        _
      $region16: #{_lambda_.5} parent=11 // pred_fallthru
        _
      // Predicated region
      $region17: #{_lambda_.5} parent=11 // pred_check
        %p135 = pneg %p89
      $region18: #{_lambda_.5} parent=11 // pred_check_branch
        %137 = sbr.rel (%p135) target = $region20
      $region19: #{_lambda_.5} parent=11 // pred_region
        _
      $region20: #{_lambda_.5} parent=11 // pred_fallthru
        _
    $region12: #{_lambda_.5} parent=5 // pred_fallthru
      _
    %p138 = scmp.lt.s32.totalorder %s9, 8
    // Predicated region
    $region21: #{_lambda_.5} parent=5 // pred_check
      %p139 = pneg %p138
    $region22: #{_lambda_.5} parent=5 // pred_check_branch
      %141 = sbr.rel (%p139) target = $region24
    $region23: #{_lambda_.5} parent=5 // pred_region
      // Predicated region
      $region25: #{_lambda_.5} parent=23 // pred_check
        %p142 = pneg %p41
      $region26: #{_lambda_.5} parent=23 // pred_check_branch
        %144 = sbr.rel (%p142) target = $region28
      $region27: #{_lambda_.5} parent=23 // pred_region
        %p145 = scmp.lt.s32.totalorder %s16, 1
        %s146 = scalar_select %p145, %s16, 1
        %s147 = smul.addr %s146, 170
        %s148 = smul.addr %s147, 4
        %s149 = scalar_lea.vmem %s0, %s148
      $region28: #{_lambda_.5} parent=23 // pred_fallthru
        _
    $region24: #{_lambda_.5} parent=5 // pred_fallthru
      _
    %p150 = scmp.le.s32.totalorder 1, %s9
    %p151 = scmp.lt.s32.totalorder %s9, 9
    %p152 = pnand %p150, %p151
    %p153 = pneg %p152
    // Predicated region
    $region29: #{_lambda_.5} parent=5 // pred_check
      _
    $region30: #{_lambda_.5} parent=5 // pred_check_branch
      %155 = sbr.rel (%p152) target = $region32
    $region31: #{_lambda_.5} parent=5 // pred_region
      %s156 = ssub.s32 %s9, 1
      %p157 = scmp.lt.s32.totalorder %s18, 1
      %s158 = scalar_select %p157, %s18, 1
      %s159 = smul.addr %s158, 170
      %s160 = smul.addr %s159, 4
      %s161 = scalar_lea.vmem %s0, %s160
      %p162 = pneg %p47
      %p163 = pneg %p44
      %p164 = pneg %p68
      %p165 = pneg %p65
      %p166 = pneg %p89
      %p167 = pneg %p86
      %p168 = pneg %p117
      %p169 = pneg %p114
      %s170 = smul.u32 8, %s19
      %p171 = scmp.lt.s32.totalorder %s18, 1
      %s172 = scalar_select %p171, %s18, 1
      %p173 = scmp.lt.s32.totalorder %s170, 31
      %s174 = scalar_select %p173, %s170, 31
      %s175 = smul.addr %s174, 4
      %s176 = smul.addr %s172, 128
      %s177 = sadd.s32 %s175, %s176
      %s178 = smul.addr %s177, 4
      %s179 = scalar_lea.vmem %s3, %s178
      %p180 = scmp.lt.s32.totalorder %s18, 1
      %s181 = scalar_select %p180, %s18, 1
      %s182 = smul.addr %s181, 170
      %s183 = smul.addr %s182, 4
      %s184 = scalar_lea.vmem %s0, %s183
      %s185 = smul.u32 8, %s19
      %p186 = scmp.lt.s32.totalorder %s18, 1
      %s187 = scalar_select %p186, %s18, 1
      %p188 = scmp.lt.s32.totalorder %s185, 31
      %s189 = scalar_select %p188, %s185, 31
      %s190 = smul.addr %s189, 4
      %s191 = smul.addr %s187, 128
      %s192 = sadd.s32 %s190, %s191
      %s193 = smul.addr %s192, 4
      %s194 = scalar_lea.vmem %s3, %s193
      %s195 = smul.u32 8, %s19
      %s197 = smul.u32 %s19, 8
      %s198 = smul.u32 %s197, 5
      %s199 = smul.addr %s198, 4
      %s200 = scalar_lea.vmem %s184, %s199
      %v201 = vld [vmem:[%s200] sm:$0xf]
      %v202 = vld [vmem:[%s200 + $0x4] sm:$0xf]
      %v203 = vld [vmem:[%s200 + $0x8] sm:$0xf]
      %v204 = vld [vmem:[%s200 + $0xc] sm:$0xf]
      %v205 = vld [vmem:[%s200 + $0x14] sm:$0xf]
      %v206 = vld [vmem:[%s200 + $0x18] sm:$0xf]
      %v207 = vld [vmem:[%s200 + $0x1c] sm:$0xf]
      %v208 = vld [vmem:[%s200 + $0x20] sm:$0xf]
      %v209 = vld [vmem:[%s200 + $0x28] sm:$0xf]
      %v210 = vld [vmem:[%s200 + $0x2c] sm:$0xf]
      %v211 = vld [vmem:[%s200 + $0x30] sm:$0xf]
      %v212 = vld [vmem:[%s200 + $0x34] sm:$0xf]
      %v213 = vld [vmem:[%s200 + $0x3c] sm:$0xf]
      %v214 = vld [vmem:[%s200 + $0x40] sm:$0xf]
      %v215 = vld [vmem:[%s200 + $0x44] sm:$0xf]
      %v216 = vld [vmem:[%s200 + $0x48] sm:$0xf]
      %v217 = vld [vmem:[%s200 + $0x50] sm:$0xf]
      %v218 = vld [vmem:[%s200 + $0x54] sm:$0xf]
      %v219 = vld [vmem:[%s200 + $0x58] sm:$0xf]
      %v220 = vld [vmem:[%s200 + $0x5c] sm:$0xf]
      %v221 = vld [vmem:[%s200 + $0x64] sm:$0xf]
      %v222 = vld [vmem:[%s200 + $0x68] sm:$0xf]
      %v223 = vld [vmem:[%s200 + $0x6c] sm:$0xf]
      %v224 = vld [vmem:[%s200 + $0x70] sm:$0xf]
      %v225 = vld [vmem:[%s200 + $0x78] sm:$0xf]
      %v226 = vld [vmem:[%s200 + $0x7c] sm:$0xf]
      %v227 = vld [vmem:[%s200 + $0x80] sm:$0xf]
      %v228 = vld [vmem:[%s200 + $0x84] sm:$0xf]
      %v229 = vld [vmem:[%s200 + $0x8c] sm:$0xf]
      %v230 = vld [vmem:[%s200 + $0x90] sm:$0xf]
      %v231 = vld [vmem:[%s200 + $0x94] sm:$0xf]
      %v232 = vld [vmem:[%s200 + $0x98] sm:$0xf]
      %v233 = vld [vmem:[%s1] sm:$0xf]
      %v234 = vld [vmem:[%s1 + $0x4] sm:$0xf]
      %v235 = vld [vmem:[%s1 + $0x8] sm:$0xf]
      %v236 = vld [vmem:[%s1 + $0xc] sm:$0xf]
      %v237 = vld [vmem:[%s1 + $0x10] sm:$0xf]
      %v238 = vld [vmem:[%s1 + $0x14] sm:$0xf]
      %v239 = vld [vmem:[%s1 + $0x18] sm:$0xf]
      %v240 = vld [vmem:[%s1 + $0x1c] sm:$0xf]
      %v241 = vld [vmem:[%s1 + $0x20] sm:$0xf]
      %v242 = vld [vmem:[%s1 + $0x24] sm:$0xf]
      %v243 = vld [vmem:[%s1 + $0x28] sm:$0xf]
      %v244 = vld [vmem:[%s1 + $0x2c] sm:$0xf]
      %v245 = vld [vmem:[%s1 + $0x30] sm:$0xf]
      %v246 = vld [vmem:[%s1 + $0x34] sm:$0xf]
      %v247 = vld [vmem:[%s1 + $0x38] sm:$0xf]
      %v248 = vld [vmem:[%s1 + $0x3c] sm:$0xf]
      %v249 = vld [vmem:[%s200 + $0x10] sm:$0x1]
      %v250 = vld [vmem:[%s200 + $0x24] sm:$0x1]
      %v251 = vld [vmem:[%s200 + $0x38] sm:$0x1]
      %v252 = vld [vmem:[%s200 + $0x4c] sm:$0x1]
      %v253 = vld [vmem:[%s200 + $0x60] sm:$0x1]
      %v254 = vld [vmem:[%s200 + $0x74] sm:$0x1]
      %v255 = vld [vmem:[%s200 + $0x88] sm:$0x1]
      %v256 = vld [vmem:[%s200 + $0x9c] sm:$0x1]
      %vm257 = vsmask.f32 3328
      %vm258 = vsmask.f32 7440
      %vm259 = vmor %vm257, %vm258
      %v261 = vshrl.u32 %v201, 16
      %v263 = vrot.slane %v261, 4
      %v264 = vshll.u32 %v201, 16
      %v266 = vrot.slane %v264, 5
      %v267 = vor.u32 %v263, %v266
      %v268 = vrot.slane %v267, 4
      %v270 = vshll.u32 %v202, 16
      %v272 = vrot.slane %v270, 5
      %v273 = vsel %vm259, %v268, %v272
      %v274 = vshrl.u32 %v202, 16
      %v276 = vrot.slane %v274, 4
      %v277 = vor.u32 %v276, %v272
      %v278 = vrot.slane %v277, 4
      %v280 = vshll.u32 %v203, 16
      %v282 = vrot.slane %v280, 5
      %v283 = vsel %vm259, %v278, %v282
      %v284 = vshrl.u32 %v203, 16
      %v286 = vrot.slane %v284, 4
      %v287 = vor.u32 %v286, %v282
      %v288 = vrot.slane %v287, 4
      %v290 = vshll.u32 %v204, 16
      %v292 = vrot.slane %v290, 5
      %v293 = vsel %vm259, %v288, %v292
      %v294 = vshrl.u32 %v204, 16
      %v296 = vrot.slane %v294, 4
      %v297 = vor.u32 %v296, %v292
      %v298 = vrot.slane %v297, 4
      %v300 = vshll.u32 %v249, 16
      %v302 = vrot.slane %v300, 5
      %v303 = vsel %vm259, %v298, %v302
      %v305 = vshrl.u32 %v205, 16
      %v307 = vrot.slane %v305, 4
      %v308 = vshll.u32 %v205, 16
      %v310 = vrot.slane %v308, 5
      %v311 = vor.u32 %v307, %v310
      %v312 = vrot.slane %v311, 4
      %v314 = vshll.u32 %v206, 16
      %v316 = vrot.slane %v314, 5
      %v317 = vsel %vm259, %v312, %v316
      %v318 = vshrl.u32 %v206, 16
      %v320 = vrot.slane %v318, 4
      %v321 = vor.u32 %v320, %v316
      %v322 = vrot.slane %v321, 4
      %v324 = vshll.u32 %v207, 16
      %v326 = vrot.slane %v324, 5
      %v327 = vsel %vm259, %v322, %v326
      %v328 = vshrl.u32 %v207, 16
      %v330 = vrot.slane %v328, 4
      %v331 = vor.u32 %v330, %v326
      %v332 = vrot.slane %v331, 4
      %v334 = vshll.u32 %v208, 16
      %v336 = vrot.slane %v334, 5
      %v337 = vsel %vm259, %v332, %v336
      %v338 = vshrl.u32 %v208, 16
      %v340 = vrot.slane %v338, 4
      %v341 = vor.u32 %v340, %v336
      %v342 = vrot.slane %v341, 4
      %v344 = vshll.u32 %v250, 16
      %v346 = vrot.slane %v344, 5
      %v347 = vsel %vm259, %v342, %v346
      %v349 = vshrl.u32 %v209, 16
      %v351 = vrot.slane %v349, 4
      %v352 = vshll.u32 %v209, 16
      %v354 = vrot.slane %v352, 5
      %v355 = vor.u32 %v351, %v354
      %v356 = vrot.slane %v355, 4
      %v358 = vshll.u32 %v210, 16
      %v360 = vrot.slane %v358, 5
      %v361 = vsel %vm259, %v356, %v360
      %v362 = vshrl.u32 %v210, 16
      %v364 = vrot.slane %v362, 4
      %v365 = vor.u32 %v364, %v360
      %v366 = vrot.slane %v365, 4
      %v368 = vshll.u32 %v211, 16
      %v370 = vrot.slane %v368, 5
      %v371 = vsel %vm259, %v366, %v370
      %v372 = vshrl.u32 %v211, 16
      %v374 = vrot.slane %v372, 4
      %v375 = vor.u32 %v374, %v370
      %v376 = vrot.slane %v375, 4
      %v378 = vshll.u32 %v212, 16
      %v380 = vrot.slane %v378, 5
      %v381 = vsel %vm259, %v376, %v380
      %v382 = vshrl.u32 %v212, 16
      %v384 = vrot.slane %v382, 4
      %v385 = vor.u32 %v384, %v380
      %v386 = vrot.slane %v385, 4
      %v388 = vshll.u32 %v251, 16
      %v390 = vrot.slane %v388, 5
      %v391 = vsel %vm259, %v386, %v390
      %v393 = vshrl.u32 %v213, 16
      %v395 = vrot.slane %v393, 4
      %v396 = vshll.u32 %v213, 16
      %v398 = vrot.slane %v396, 5
      %v399 = vor.u32 %v395, %v398
      %v400 = vrot.slane %v399, 4
      %v402 = vshll.u32 %v214, 16
      %v404 = vrot.slane %v402, 5
      %v405 = vsel %vm259, %v400, %v404
      %v406 = vshrl.u32 %v214, 16
      %v408 = vrot.slane %v406, 4
      %v409 = vor.u32 %v408, %v404
      %v410 = vrot.slane %v409, 4
      %v412 = vshll.u32 %v215, 16
      %v414 = vrot.slane %v412, 5
      %v415 = vsel %vm259, %v410, %v414
      %v416 = vshrl.u32 %v215, 16
      %v418 = vrot.slane %v416, 4
      %v419 = vor.u32 %v418, %v414
      %v420 = vrot.slane %v419, 4
      %v422 = vshll.u32 %v216, 16
      %v424 = vrot.slane %v422, 5
      %v425 = vsel %vm259, %v420, %v424
      %v426 = vshrl.u32 %v216, 16
      %v428 = vrot.slane %v426, 4
      %v429 = vor.u32 %v428, %v424
      %v430 = vrot.slane %v429, 4
      %v432 = vshll.u32 %v252, 16
      %v434 = vrot.slane %v432, 5
      %v435 = vsel %vm259, %v430, %v434
      %v437 = vshrl.u32 %v217, 16
      %v439 = vrot.slane %v437, 4
      %v440 = vshll.u32 %v217, 16
      %v442 = vrot.slane %v440, 5
      %v443 = vor.u32 %v439, %v442
      %v444 = vrot.slane %v443, 4
      %v446 = vshll.u32 %v218, 16
      %v448 = vrot.slane %v446, 5
      %v449 = vsel %vm259, %v444, %v448
      %v450 = vshrl.u32 %v218, 16
      %v452 = vrot.slane %v450, 4
      %v453 = vor.u32 %v452, %v448
      %v454 = vrot.slane %v453, 4
      %v456 = vshll.u32 %v219, 16
      %v458 = vrot.slane %v456, 5
      %v459 = vsel %vm259, %v454, %v458
      %v460 = vshrl.u32 %v219, 16
      %v462 = vrot.slane %v460, 4
      %v463 = vor.u32 %v462, %v458
      %v464 = vrot.slane %v463, 4
      %v466 = vshll.u32 %v220, 16
      %v468 = vrot.slane %v466, 5
      %v469 = vsel %vm259, %v464, %v468
      %v470 = vshrl.u32 %v220, 16
      %v472 = vrot.slane %v470, 4
      %v473 = vor.u32 %v472, %v468
      %v474 = vrot.slane %v473, 4
      %v476 = vshll.u32 %v253, 16
      %v478 = vrot.slane %v476, 5
      %v479 = vsel %vm259, %v474, %v478
      %v481 = vshrl.u32 %v221, 16
      %v483 = vrot.slane %v481, 4
      %v484 = vshll.u32 %v221, 16
      %v486 = vrot.slane %v484, 5
      %v487 = vor.u32 %v483, %v486
      %v488 = vrot.slane %v487, 4
      %v490 = vshll.u32 %v222, 16
      %v492 = vrot.slane %v490, 5
      %v493 = vsel %vm259, %v488, %v492
      %v494 = vshrl.u32 %v222, 16
      %v496 = vrot.slane %v494, 4
      %v497 = vor.u32 %v496, %v492
      %v498 = vrot.slane %v497, 4
      %v500 = vshll.u32 %v223, 16
      %v502 = vrot.slane %v500, 5
      %v503 = vsel %vm259, %v498, %v502
      %v504 = vshrl.u32 %v223, 16
      %v506 = vrot.slane %v504, 4
      %v507 = vor.u32 %v506, %v502
      %v508 = vrot.slane %v507, 4
      %v510 = vshll.u32 %v224, 16
      %v512 = vrot.slane %v510, 5
      %v513 = vsel %vm259, %v508, %v512
      %v514 = vshrl.u32 %v224, 16
      %v516 = vrot.slane %v514, 4
      %v517 = vor.u32 %v516, %v512
      %v518 = vrot.slane %v517, 4
      %v520 = vshll.u32 %v254, 16
      %v522 = vrot.slane %v520, 5
      %v523 = vsel %vm259, %v518, %v522
      %v525 = vshrl.u32 %v225, 16
      %v527 = vrot.slane %v525, 4
      %v528 = vshll.u32 %v225, 16
      %v530 = vrot.slane %v528, 5
      %v531 = vor.u32 %v527, %v530
      %v532 = vrot.slane %v531, 4
      %v534 = vshll.u32 %v226, 16
      %v536 = vrot.slane %v534, 5
      %v537 = vsel %vm259, %v532, %v536
      %v538 = vshrl.u32 %v226, 16
      %v540 = vrot.slane %v538, 4
      %v541 = vor.u32 %v540, %v536
      %v542 = vrot.slane %v541, 4
      %v544 = vshll.u32 %v227, 16
      %v546 = vrot.slane %v544, 5
      %v547 = vsel %vm259, %v542, %v546
      %v548 = vshrl.u32 %v227, 16
      %v550 = vrot.slane %v548, 4
      %v551 = vor.u32 %v550, %v546
      %v552 = vrot.slane %v551, 4
      %v554 = vshll.u32 %v228, 16
      %v556 = vrot.slane %v554, 5
      %v557 = vsel %vm259, %v552, %v556
      %v558 = vshrl.u32 %v228, 16
      %v560 = vrot.slane %v558, 4
      %v561 = vor.u32 %v560, %v556
      %v562 = vrot.slane %v561, 4
      %v564 = vshll.u32 %v255, 16
      %v566 = vrot.slane %v564, 5
      %v567 = vsel %vm259, %v562, %v566
      %v569 = vshrl.u32 %v229, 16
      %v571 = vrot.slane %v569, 4
      %v572 = vshll.u32 %v229, 16
      %v574 = vrot.slane %v572, 5
      %v575 = vor.u32 %v571, %v574
      %v576 = vrot.slane %v575, 4
      %v578 = vshll.u32 %v230, 16
      %v580 = vrot.slane %v578, 5
      %v581 = vsel %vm259, %v576, %v580
      %v582 = vshrl.u32 %v230, 16
      %v584 = vrot.slane %v582, 4
      %v585 = vor.u32 %v584, %v580
      %v586 = vrot.slane %v585, 4
      %v588 = vshll.u32 %v231, 16
      %v590 = vrot.slane %v588, 5
      %v591 = vsel %vm259, %v586, %v590
      %v592 = vshrl.u32 %v231, 16
      %v594 = vrot.slane %v592, 4
      %v595 = vor.u32 %v594, %v590
      %v596 = vrot.slane %v595, 4
      %v598 = vshll.u32 %v232, 16
      %v600 = vrot.slane %v598, 5
      %v601 = vsel %vm259, %v596, %v600
      %v602 = vshrl.u32 %v232, 16
      %v604 = vrot.slane %v602, 4
      %v605 = vor.u32 %v604, %v600
      %v606 = vrot.slane %v605, 4
      %v608 = vshll.u32 %v256, 16
      %v610 = vrot.slane %v608, 5
      %v611 = vsel %vm259, %v606, %v610
      %s612 = scalar_lea.vmem %s1, 64
      %v613 = vld [vmem:[%s612] sm:$0xf]
      %v614 = vld [vmem:[%s612 + $0x4] sm:$0xf]
      %v615 = vld [vmem:[%s612 + $0x8] sm:$0xf]
      %v616 = vld [vmem:[%s612 + $0xc] sm:$0xf]
      %v617 = vld [vmem:[%s612 + $0x10] sm:$0xf]
      %v618 = vld [vmem:[%s612 + $0x14] sm:$0xf]
      %v619 = vld [vmem:[%s612 + $0x18] sm:$0xf]
      %v620 = vld [vmem:[%s612 + $0x1c] sm:$0xf]
      %v621 = vld [vmem:[%s612 + $0x20] sm:$0xf]
      %v622 = vld [vmem:[%s612 + $0x24] sm:$0xf]
      %v623 = vld [vmem:[%s612 + $0x28] sm:$0xf]
      %v624 = vld [vmem:[%s612 + $0x2c] sm:$0xf]
      %v625 = vld [vmem:[%s612 + $0x30] sm:$0xf]
      %v626 = vld [vmem:[%s612 + $0x34] sm:$0xf]
      %v627 = vld [vmem:[%s612 + $0x38] sm:$0xf]
      %v628 = vld [vmem:[%s612 + $0x3c] sm:$0xf]
      %v629 = vunpack.c.l.b16 %v273
      %v630 = vunpack.c.l.b16 %v283
      %v631 = vunpack.c.l.b16 %v293
      %v632 = vunpack.c.l.b16 %v303
      %v633 = vunpack.c.l.b16 %v317
      %v634 = vunpack.c.l.b16 %v327
      %v635 = vunpack.c.l.b16 %v337
      %v636 = vunpack.c.l.b16 %v347
      %v637 = vunpack.c.l.b16 %v361
      %v638 = vunpack.c.l.b16 %v371
      %v639 = vunpack.c.l.b16 %v381
      %v640 = vunpack.c.l.b16 %v391
      %v641 = vunpack.c.l.b16 %v405
      %v642 = vunpack.c.l.b16 %v415
      %v643 = vunpack.c.l.b16 %v425
      %v644 = vunpack.c.l.b16 %v435
      %v645 = vunpack.c.l.b16 %v449
      %v646 = vunpack.c.l.b16 %v459
      %v647 = vunpack.c.l.b16 %v469
      %v648 = vunpack.c.l.b16 %v479
      %v649 = vunpack.c.l.b16 %v493
      %v650 = vunpack.c.l.b16 %v503
      %v651 = vunpack.c.l.b16 %v513
      %v652 = vunpack.c.l.b16 %v523
      %v653 = vunpack.c.l.b16 %v537
      %v654 = vunpack.c.l.b16 %v547
      %v655 = vunpack.c.l.b16 %v557
      %v656 = vunpack.c.l.b16 %v567
      %v657 = vunpack.c.l.b16 %v581
      %v658 = vunpack.c.l.b16 %v591
      %v659 = vunpack.c.l.b16 %v601
      %v660 = vunpack.c.l.b16 %v611
      %v661 = vpack.c.b16 %v630, %v629
      %v662 = vpack.c.b16 %v632, %v631
      %v663 = vpack.c.b16 %v634, %v633
      %v664 = vpack.c.b16 %v636, %v635
      %v665 = vpack.c.b16 %v638, %v637
      %v666 = vpack.c.b16 %v640, %v639
      %v667 = vpack.c.b16 %v642, %v641
      %v668 = vpack.c.b16 %v644, %v643
      %v669 = vpack.c.b16 %v646, %v645
      %v670 = vpack.c.b16 %v648, %v647
      %v671 = vpack.c.b16 %v650, %v649
      %v672 = vpack.c.b16 %v652, %v651
      %v673 = vpack.c.b16 %v654, %v653
      %v674 = vpack.c.b16 %v656, %v655
      %v675 = vpack.c.b16 %v658, %v657
      %v676 = vpack.c.b16 %v660, %v659
      %v709 = vunpack.c.l.b16 %v613
      %v710 = vunpack.c.l.b16 %v614
      %v711 = vunpack.c.l.b16 %v615
      %v712 = vunpack.c.l.b16 %v616
      %v713 = vunpack.c.l.b16 %v617
      %v714 = vunpack.c.l.b16 %v618
      %v715 = vunpack.c.l.b16 %v619
      %v716 = vunpack.c.l.b16 %v620
      %v717 = vunpack.c.l.b16 %v621
      %v718 = vunpack.c.l.b16 %v622
      %v719 = vunpack.c.l.b16 %v623
      %v720 = vunpack.c.l.b16 %v624
      %v721 = vunpack.c.l.b16 %v625
      %v722 = vunpack.c.l.b16 %v626
      %v723 = vunpack.c.l.b16 %v627
      %v724 = vunpack.c.l.b16 %v628
      %v725 = vpack.c.b16 %v710, %v709
      %v726 = vpack.c.b16 %v712, %v711
      %v727 = vpack.c.b16 %v714, %v713
      %v728 = vpack.c.b16 %v716, %v715
      %v729 = vpack.c.b16 %v718, %v717
      %v730 = vpack.c.b16 %v720, %v719
      %v731 = vpack.c.b16 %v722, %v721
      %v732 = vpack.c.b16 %v724, %v723
      %741 = vmatprep.subr.bf16.mxu0 0
      %742 = vmatpush1.bf16.msra.mxu0 %v732
      %743 = vmatprep.subr.bf16.mxu0 0
      %744 = vmatpush1.bf16.msra.mxu0 %v731
      %745 = vmatprep.subr.bf16.mxu0 0
      %746 = vmatpush1.bf16.msra.mxu0 %v730
      %747 = vmatprep.subr.bf16.mxu0 0
      %748 = vmatpush1.bf16.msra.mxu0 %v729
      %749 = vmatprep.subr.bf16.mxu0 0
      %750 = vmatpush1.bf16.msra.mxu0 %v728
      %751 = vmatprep.subr.bf16.mxu0 0
      %752 = vmatpush1.bf16.msra.mxu0 %v727
      %753 = vmatprep.subr.bf16.mxu0 0
      %754 = vmatpush1.bf16.msra.mxu0 %v726
      %755 = vmatprep.subr.bf16.mxu0 0
      %756 = vmatpush1.bf16.msra.mxu0 %v725
      %757 = vmatprep.subr.bf16.mxu0 0
      %758 = vmatpush2.bf16.msra.mxu0 0
      %759 = vmatprep.subr.bf16.mxu0 0
      %760 = vmatpush2.bf16.msra.mxu0 0
      %761 = vmatprep.subr.bf16.mxu0 0
      %762 = vmatpush2.bf16.msra.mxu0 0
      %763 = vmatprep.subr.bf16.mxu0 0
      %764 = vmatpush2.bf16.msra.mxu0 0
      %765 = vmatprep.subr.bf16.mxu0 0
      %766 = vmatpush2.bf16.msra.mxu0 0
      %767 = vmatprep.subr.bf16.mxu0 0
      %768 = vmatpush2.bf16.msra.mxu0 0
      %769 = vmatprep.subr.bf16.mxu0 0
      %770 = vmatpush2.bf16.msra.mxu0 0
      %771 = vmatprep.subr.bf16.mxu0 0
      %772 = vmatpush2.bf16.msra.mxu0 0
      %773 = vmatprep.mubr.bf16.mxu0 0
      %774 = vmatmul.mubr.bf16.gmra.mxu0 %v661
      %v775 = vpop.f32.mrf.mxu0
      %v776 = vadd.f32 0.0, %v775
      %v777 = vpop.f32.mrf.mxu0
      %v778 = vpop.f32.mrf.mxu0
      %v779 = vadd.f32 0.0, %v778
      %v780 = vpop.f32.mrf.mxu0
      %781 = vmatprep.mubr.bf16.mxu0 0
      %782 = vmatmul.mubr.bf16.gmra.mxu0 %v662
      %v783 = vpop.f32.mrf.mxu0
      %v784 = vadd.f32 0.0, %v783
      %v785 = vpop.f32.mrf.mxu0
      %v786 = vpop.f32.mrf.mxu0
      %v787 = vadd.f32 0.0, %v786
      %v788 = vpop.f32.mrf.mxu0
      %789 = vmatprep.mubr.bf16.mxu0 0
      %790 = vmatmul.mubr.bf16.gmra.mxu0 %v663
      %v791 = vpop.f32.mrf.mxu0
      %v792 = vadd.f32 0.0, %v791
      %v793 = vpop.f32.mrf.mxu0
      %v794 = vpop.f32.mrf.mxu0
      %v795 = vadd.f32 0.0, %v794
      %v796 = vpop.f32.mrf.mxu0
      %797 = vmatprep.mubr.bf16.mxu0 0
      %798 = vmatmul.mubr.bf16.gmra.mxu0 %v664
      %v799 = vpop.f32.mrf.mxu0
      %v800 = vadd.f32 0.0, %v799
      %v801 = vpop.f32.mrf.mxu0
      %v802 = vpop.f32.mrf.mxu0
      %v803 = vadd.f32 0.0, %v802
      %v804 = vpop.f32.mrf.mxu0
      %805 = vmatprep.mubr.bf16.mxu0 0
      %806 = vmatmul.mubr.bf16.gmra.mxu0 %v665
      %v807 = vpop.f32.mrf.mxu0
      %v808 = vadd.f32 0.0, %v807
      %v809 = vpop.f32.mrf.mxu0
      %v810 = vpop.f32.mrf.mxu0
      %v811 = vadd.f32 0.0, %v810
      %v812 = vpop.f32.mrf.mxu0
      %813 = vmatprep.mubr.bf16.mxu0 0
      %814 = vmatmul.mubr.bf16.gmra.mxu0 %v666
      %v815 = vpop.f32.mrf.mxu0
      %v816 = vadd.f32 0.0, %v815
      %v817 = vpop.f32.mrf.mxu0
      %v818 = vpop.f32.mrf.mxu0
      %v819 = vadd.f32 0.0, %v818
      %v820 = vpop.f32.mrf.mxu0
      %821 = vmatprep.mubr.bf16.mxu0 0
      %822 = vmatmul.mubr.bf16.gmra.mxu0 %v667
      %v823 = vpop.f32.mrf.mxu0
      %v824 = vadd.f32 0.0, %v823
      %v825 = vpop.f32.mrf.mxu0
      %v826 = vpop.f32.mrf.mxu0
      %v827 = vadd.f32 0.0, %v826
      %v828 = vpop.f32.mrf.mxu0
      %829 = vmatprep.mubr.bf16.mxu0 0
      %830 = vmatmul.mubr.bf16.gmra.mxu0 %v668
      %v831 = vpop.f32.mrf.mxu0
      %v832 = vadd.f32 0.0, %v831
      %v833 = vpop.f32.mrf.mxu0
      %v834 = vpop.f32.mrf.mxu0
      %v835 = vadd.f32 0.0, %v834
      %v836 = vpop.f32.mrf.mxu0
      %837 = vmatprep.mubr.bf16.mxu0 0
      %838 = vmatmul.mubr.bf16.gmra.mxu0 %v669
      %v839 = vpop.f32.mrf.mxu0
      %v840 = vadd.f32 0.0, %v839
      %v841 = vpop.f32.mrf.mxu0
      %v842 = vpop.f32.mrf.mxu0
      %v843 = vadd.f32 0.0, %v842
      %v844 = vpop.f32.mrf.mxu0
      %845 = vmatprep.mubr.bf16.mxu0 0
      %846 = vmatmul.mubr.bf16.gmra.mxu0 %v670
      %v847 = vpop.f32.mrf.mxu0
      %v848 = vadd.f32 0.0, %v847
      %v849 = vpop.f32.mrf.mxu0
      %v850 = vpop.f32.mrf.mxu0
      %v851 = vadd.f32 0.0, %v850
      %v852 = vpop.f32.mrf.mxu0
      %853 = vmatprep.mubr.bf16.mxu0 0
      %854 = vmatmul.mubr.bf16.gmra.mxu0 %v671
      %v855 = vpop.f32.mrf.mxu0
      %v856 = vadd.f32 0.0, %v855
      %v857 = vpop.f32.mrf.mxu0
      %v858 = vpop.f32.mrf.mxu0
      %v859 = vadd.f32 0.0, %v858
      %v860 = vpop.f32.mrf.mxu0
      %861 = vmatprep.mubr.bf16.mxu0 0
      %862 = vmatmul.mubr.bf16.gmra.mxu0 %v672
      %v863 = vpop.f32.mrf.mxu0
      %v864 = vadd.f32 0.0, %v863
      %v865 = vpop.f32.mrf.mxu0
      %v866 = vpop.f32.mrf.mxu0
      %v867 = vadd.f32 0.0, %v866
      %v868 = vpop.f32.mrf.mxu0
      %869 = vmatprep.mubr.bf16.mxu0 0
      %870 = vmatmul.mubr.bf16.gmra.mxu0 %v673
      %v871 = vpop.f32.mrf.mxu0
      %v872 = vadd.f32 0.0, %v871
      %v873 = vpop.f32.mrf.mxu0
      %v874 = vpop.f32.mrf.mxu0
      %v875 = vadd.f32 0.0, %v874
      %v876 = vpop.f32.mrf.mxu0
      %877 = vmatprep.mubr.bf16.mxu0 0
      %878 = vmatmul.mubr.bf16.gmra.mxu0 %v674
      %v879 = vpop.f32.mrf.mxu0
      %v880 = vadd.f32 0.0, %v879
      %v881 = vpop.f32.mrf.mxu0
      %v882 = vpop.f32.mrf.mxu0
      %v883 = vadd.f32 0.0, %v882
      %v884 = vpop.f32.mrf.mxu0
      %885 = vmatprep.mubr.bf16.mxu0 0
      %886 = vmatmul.mubr.bf16.gmra.mxu0 %v675
      %v887 = vpop.f32.mrf.mxu0
      %v888 = vadd.f32 0.0, %v887
      %v889 = vpop.f32.mrf.mxu0
      %v890 = vpop.f32.mrf.mxu0
      %v891 = vadd.f32 0.0, %v890
      %v892 = vpop.f32.mrf.mxu0
      %893 = vmatprep.mubr.bf16.mxu0 0
      %894 = vmatmul.mubr.bf16.gmra.mxu0 %v676
      %v895 = vpop.f32.mrf.mxu0
      %v896 = vadd.f32 0.0, %v895
      %v897 = vpop.f32.mrf.mxu0
      %v898 = vpop.f32.mrf.mxu0
      %v899 = vadd.f32 0.0, %v898
      %v900 = vpop.f32.mrf.mxu0
      %901 = vdwg.mxu0
      %v934 = vunpack.c.l.b16 %v201
      %v935 = vunpack.c.l.b16 %v202
      %v936 = vunpack.c.l.b16 %v203
      %v937 = vunpack.c.l.b16 %v204
      %v938 = vunpack.c.l.b16 %v205
      %v939 = vunpack.c.l.b16 %v206
      %v940 = vunpack.c.l.b16 %v207
      %v941 = vunpack.c.l.b16 %v208
      %v942 = vunpack.c.l.b16 %v209
      %v943 = vunpack.c.l.b16 %v210
      %v944 = vunpack.c.l.b16 %v211
      %v945 = vunpack.c.l.b16 %v212
      %v946 = vunpack.c.l.b16 %v213
      %v947 = vunpack.c.l.b16 %v214
      %v948 = vunpack.c.l.b16 %v215
      %v949 = vunpack.c.l.b16 %v216
      %v950 = vunpack.c.l.b16 %v217
      %v951 = vunpack.c.l.b16 %v218
      %v952 = vunpack.c.l.b16 %v219
      %v953 = vunpack.c.l.b16 %v220
      %v954 = vunpack.c.l.b16 %v221
      %v955 = vunpack.c.l.b16 %v222
      %v956 = vunpack.c.l.b16 %v223
      %v957 = vunpack.c.l.b16 %v224
      %v958 = vunpack.c.l.b16 %v225
      %v959 = vunpack.c.l.b16 %v226
      %v960 = vunpack.c.l.b16 %v227
      %v961 = vunpack.c.l.b16 %v228
      %v962 = vunpack.c.l.b16 %v229
      %v963 = vunpack.c.l.b16 %v230
      %v964 = vunpack.c.l.b16 %v231
      %v965 = vunpack.c.l.b16 %v232
      %v966 = vpack.c.b16 %v935, %v934
      %v967 = vpack.c.b16 %v937, %v936
      %v968 = vpack.c.b16 %v939, %v938
      %v969 = vpack.c.b16 %v941, %v940
      %v970 = vpack.c.b16 %v943, %v942
      %v971 = vpack.c.b16 %v945, %v944
      %v972 = vpack.c.b16 %v947, %v946
      %v973 = vpack.c.b16 %v949, %v948
      %v974 = vpack.c.b16 %v951, %v950
      %v975 = vpack.c.b16 %v953, %v952
      %v976 = vpack.c.b16 %v955, %v954
      %v977 = vpack.c.b16 %v957, %v956
      %v978 = vpack.c.b16 %v959, %v958
      %v979 = vpack.c.b16 %v961, %v960
      %v980 = vpack.c.b16 %v963, %v962
      %v981 = vpack.c.b16 %v965, %v964
      %v1014 = vunpack.c.l.b16 %v233
      %v1015 = vunpack.c.l.b16 %v234
      %v1016 = vunpack.c.l.b16 %v235
      %v1017 = vunpack.c.l.b16 %v236
      %v1018 = vunpack.c.l.b16 %v237
      %v1019 = vunpack.c.l.b16 %v238
      %v1020 = vunpack.c.l.b16 %v239
      %v1021 = vunpack.c.l.b16 %v240
      %v1022 = vunpack.c.l.b16 %v241
      %v1023 = vunpack.c.l.b16 %v242
      %v1024 = vunpack.c.l.b16 %v243
      %v1025 = vunpack.c.l.b16 %v244
      %v1026 = vunpack.c.l.b16 %v245
      %v1027 = vunpack.c.l.b16 %v246
      %v1028 = vunpack.c.l.b16 %v247
      %v1029 = vunpack.c.l.b16 %v248
      %v1030 = vpack.c.b16 %v1015, %v1014
      %v1031 = vpack.c.b16 %v1017, %v1016
      %v1032 = vpack.c.b16 %v1019, %v1018
      %v1033 = vpack.c.b16 %v1021, %v1020
      %v1034 = vpack.c.b16 %v1023, %v1022
      %v1035 = vpack.c.b16 %v1025, %v1024
      %v1036 = vpack.c.b16 %v1027, %v1026
      %v1037 = vpack.c.b16 %v1029, %v1028
      %1046 = vmatprep.subr.bf16.mxu0 0
      %1047 = vmatpush1.bf16.msra.mxu0 %v1037
      %1048 = vmatprep.subr.bf16.mxu0 0
      %1049 = vmatpush1.bf16.msra.mxu0 %v1036
      %1050 = vmatprep.subr.bf16.mxu0 0
      %1051 = vmatpush1.bf16.msra.mxu0 %v1035
      %1052 = vmatprep.subr.bf16.mxu0 0
      %1053 = vmatpush1.bf16.msra.mxu0 %v1034
      %1054 = vmatprep.subr.bf16.mxu0 0
      %1055 = vmatpush1.bf16.msra.mxu0 %v1033
      %1056 = vmatprep.subr.bf16.mxu0 0
      %1057 = vmatpush1.bf16.msra.mxu0 %v1032
      %1058 = vmatprep.subr.bf16.mxu0 0
      %1059 = vmatpush1.bf16.msra.mxu0 %v1031
      %1060 = vmatprep.subr.bf16.mxu0 0
      %1061 = vmatpush1.bf16.msra.mxu0 %v1030
      %1062 = vmatprep.subr.bf16.mxu0 0
      %1063 = vmatpush2.bf16.msra.mxu0 0
      %1064 = vmatprep.subr.bf16.mxu0 0
      %1065 = vmatpush2.bf16.msra.mxu0 0
      %1066 = vmatprep.subr.bf16.mxu0 0
      %1067 = vmatpush2.bf16.msra.mxu0 0
      %1068 = vmatprep.subr.bf16.mxu0 0
      %1069 = vmatpush2.bf16.msra.mxu0 0
      %1070 = vmatprep.subr.bf16.mxu0 0
      %1071 = vmatpush2.bf16.msra.mxu0 0
      %1072 = vmatprep.subr.bf16.mxu0 0
      %1073 = vmatpush2.bf16.msra.mxu0 0
      %1074 = vmatprep.subr.bf16.mxu0 0
      %1075 = vmatpush2.bf16.msra.mxu0 0
      %1076 = vmatprep.subr.bf16.mxu0 0
      %1077 = vmatpush2.bf16.msra.mxu0 0
      %1078 = vmatprep.mubr.bf16.mxu0 0
      %1079 = vmatmul.mubr.bf16.gmra.mxu0 %v966
      %v1080 = vpop.f32.mrf.mxu0
      %v1081 = vadd.f32 %v776, %v1080
      %v1082 = vpop.f32.mrf.mxu0
      %v1083 = vpop.f32.mrf.mxu0
      %v1084 = vadd.f32 %v779, %v1083
      %v1085 = vpop.f32.mrf.mxu0
      %1086 = vmatprep.mubr.bf16.mxu0 0
      %1087 = vmatmul.mubr.bf16.gmra.mxu0 %v967
      %v1088 = vpop.f32.mrf.mxu0
      %v1089 = vadd.f32 %v784, %v1088
      %v1090 = vpop.f32.mrf.mxu0
      %v1091 = vpop.f32.mrf.mxu0
      %v1092 = vadd.f32 %v787, %v1091
      %v1093 = vpop.f32.mrf.mxu0
      %1094 = vmatprep.mubr.bf16.mxu0 0
      %1095 = vmatmul.mubr.bf16.gmra.mxu0 %v968
      %v1096 = vpop.f32.mrf.mxu0
      %v1097 = vadd.f32 %v792, %v1096
      %v1098 = vpop.f32.mrf.mxu0
      %v1099 = vpop.f32.mrf.mxu0
      %v1100 = vadd.f32 %v795, %v1099
      %v1101 = vpop.f32.mrf.mxu0
      %1102 = vmatprep.mubr.bf16.mxu0 0
      %1103 = vmatmul.mubr.bf16.gmra.mxu0 %v969
      %v1104 = vpop.f32.mrf.mxu0
      %v1105 = vadd.f32 %v800, %v1104
      %v1106 = vpop.f32.mrf.mxu0
      %v1107 = vpop.f32.mrf.mxu0
      %v1108 = vadd.f32 %v803, %v1107
      %v1109 = vpop.f32.mrf.mxu0
      %1110 = vmatprep.mubr.bf16.mxu0 0
      %1111 = vmatmul.mubr.bf16.gmra.mxu0 %v970
      %v1112 = vpop.f32.mrf.mxu0
      %v1113 = vadd.f32 %v808, %v1112
      %v1114 = vpop.f32.mrf.mxu0
      %v1115 = vpop.f32.mrf.mxu0
      %v1116 = vadd.f32 %v811, %v1115
      %v1117 = vpop.f32.mrf.mxu0
      %1118 = vmatprep.mubr.bf16.mxu0 0
      %1119 = vmatmul.mubr.bf16.gmra.mxu0 %v971
      %v1120 = vpop.f32.mrf.mxu0
      %v1121 = vadd.f32 %v816, %v1120
      %v1122 = vpop.f32.mrf.mxu0
      %v1123 = vpop.f32.mrf.mxu0
      %v1124 = vadd.f32 %v819, %v1123
      %v1125 = vpop.f32.mrf.mxu0
      %1126 = vmatprep.mubr.bf16.mxu0 0
      %1127 = vmatmul.mubr.bf16.gmra.mxu0 %v972
      %v1128 = vpop.f32.mrf.mxu0
      %v1129 = vadd.f32 %v824, %v1128
      %v1130 = vpop.f32.mrf.mxu0
      %v1131 = vpop.f32.mrf.mxu0
      %v1132 = vadd.f32 %v827, %v1131
      %v1133 = vpop.f32.mrf.mxu0
      %1134 = vmatprep.mubr.bf16.mxu0 0
      %1135 = vmatmul.mubr.bf16.gmra.mxu0 %v973
      %v1136 = vpop.f32.mrf.mxu0
      %v1137 = vadd.f32 %v832, %v1136
      %v1138 = vpop.f32.mrf.mxu0
      %v1139 = vpop.f32.mrf.mxu0
      %v1140 = vadd.f32 %v835, %v1139
      %v1141 = vpop.f32.mrf.mxu0
      %1142 = vmatprep.mubr.bf16.mxu0 0
      %1143 = vmatmul.mubr.bf16.gmra.mxu0 %v974
      %v1144 = vpop.f32.mrf.mxu0
      %v1145 = vadd.f32 %v840, %v1144
      %v1146 = vpop.f32.mrf.mxu0
      %v1147 = vpop.f32.mrf.mxu0
      %v1148 = vadd.f32 %v843, %v1147
      %v1149 = vpop.f32.mrf.mxu0
      %1150 = vmatprep.mubr.bf16.mxu0 0
      %1151 = vmatmul.mubr.bf16.gmra.mxu0 %v975
      %v1152 = vpop.f32.mrf.mxu0
      %v1153 = vadd.f32 %v848, %v1152
      %v1154 = vpop.f32.mrf.mxu0
      %v1155 = vpop.f32.mrf.mxu0
      %v1156 = vadd.f32 %v851, %v1155
      %v1157 = vpop.f32.mrf.mxu0
      %1158 = vmatprep.mubr.bf16.mxu0 0
      %1159 = vmatmul.mubr.bf16.gmra.mxu0 %v976
      %v1160 = vpop.f32.mrf.mxu0
      %v1161 = vadd.f32 %v856, %v1160
      %v1162 = vpop.f32.mrf.mxu0
      %v1163 = vpop.f32.mrf.mxu0
      %v1164 = vadd.f32 %v859, %v1163
      %v1165 = vpop.f32.mrf.mxu0
      %1166 = vmatprep.mubr.bf16.mxu0 0
      %1167 = vmatmul.mubr.bf16.gmra.mxu0 %v977
      %v1168 = vpop.f32.mrf.mxu0
      %v1169 = vadd.f32 %v864, %v1168
      %v1170 = vpop.f32.mrf.mxu0
      %v1171 = vpop.f32.mrf.mxu0
      %v1172 = vadd.f32 %v867, %v1171
      %v1173 = vpop.f32.mrf.mxu0
      %1174 = vmatprep.mubr.bf16.mxu0 0
      %1175 = vmatmul.mubr.bf16.gmra.mxu0 %v978
      %v1176 = vpop.f32.mrf.mxu0
      %v1177 = vadd.f32 %v872, %v1176
      %v1178 = vpop.f32.mrf.mxu0
      %v1179 = vpop.f32.mrf.mxu0
      %v1180 = vadd.f32 %v875, %v1179
      %v1181 = vpop.f32.mrf.mxu0
      %1182 = vmatprep.mubr.bf16.mxu0 0
      %1183 = vmatmul.mubr.bf16.gmra.mxu0 %v979
      %v1184 = vpop.f32.mrf.mxu0
      %v1185 = vadd.f32 %v880, %v1184
      %v1186 = vpop.f32.mrf.mxu0
      %v1187 = vpop.f32.mrf.mxu0
      %v1188 = vadd.f32 %v883, %v1187
      %v1189 = vpop.f32.mrf.mxu0
      %1190 = vmatprep.mubr.bf16.mxu0 0
      %1191 = vmatmul.mubr.bf16.gmra.mxu0 %v980
      %v1192 = vpop.f32.mrf.mxu0
      %v1193 = vadd.f32 %v888, %v1192
      %v1194 = vpop.f32.mrf.mxu0
      %v1195 = vpop.f32.mrf.mxu0
      %v1196 = vadd.f32 %v891, %v1195
      %v1197 = vpop.f32.mrf.mxu0
      %1198 = vmatprep.mubr.bf16.mxu0 0
      %1199 = vmatmul.mubr.bf16.gmra.mxu0 %v981
      %v1200 = vpop.f32.mrf.mxu0
      %v1201 = vadd.f32 %v896, %v1200
      %v1202 = vpop.f32.mrf.mxu0
      %v1203 = vpop.f32.mrf.mxu0
      %v1204 = vadd.f32 %v899, %v1203
      %v1205 = vpop.f32.mrf.mxu0
      %1206 = vdwg.mxu0
      %v1207 = vld [vmem:[%s200] sm:$0xe]
      %v1208 = vld [vmem:[%s200 + $0x14] sm:$0xe]
      %v1209 = vld [vmem:[%s200 + $0x28] sm:$0xe]
      %v1210 = vld [vmem:[%s200 + $0x3c] sm:$0xe]
      %v1211 = vld [vmem:[%s200 + $0x50] sm:$0xe]
      %v1212 = vld [vmem:[%s200 + $0x64] sm:$0xe]
      %v1213 = vld [vmem:[%s200 + $0x78] sm:$0xe]
      %v1214 = vld [vmem:[%s200 + $0x8c] sm:$0xe]
      %vm1231 = vcmask 1042432
      %vm1232 = vcmask 1046532
      %vm1233 = vmor %vm1231, %vm1232
      %v1234 = vrot.slane %v1207, 5
      %v1235 = vrot.slane %v1234, 4
      %v1236 = vrot.slane %v202, 5
      %v1237 = vsel %vm1233, %v1235, %v1236
      %v1238 = vrot.slane %v1236, 4
      %v1239 = vrot.slane %v203, 5
      %v1240 = vsel %vm1233, %v1238, %v1239
      %v1241 = vrot.slane %v1239, 4
      %v1242 = vrot.slane %v204, 5
      %v1243 = vsel %vm1233, %v1241, %v1242
      %v1244 = vrot.slane %v1242, 4
      %v1245 = vrot.slane %v249, 5
      %v1246 = vsel %vm1233, %v1244, %v1245
      %v1247 = vrot.slane %v1208, 5
      %v1248 = vrot.slane %v1247, 4
      %v1249 = vrot.slane %v206, 5
      %v1250 = vsel %vm1233, %v1248, %v1249
      %v1251 = vrot.slane %v1249, 4
      %v1252 = vrot.slane %v207, 5
      %v1253 = vsel %vm1233, %v1251, %v1252
      %v1254 = vrot.slane %v1252, 4
      %v1255 = vrot.slane %v208, 5
      %v1256 = vsel %vm1233, %v1254, %v1255
      %v1257 = vrot.slane %v1255, 4
      %v1258 = vrot.slane %v250, 5
      %v1259 = vsel %vm1233, %v1257, %v1258
      %v1260 = vrot.slane %v1209, 5
      %v1261 = vrot.slane %v1260, 4
      %v1262 = vrot.slane %v210, 5
      %v1263 = vsel %vm1233, %v1261, %v1262
      %v1264 = vrot.slane %v1262, 4
      %v1265 = vrot.slane %v211, 5
      %v1266 = vsel %vm1233, %v1264, %v1265
      %v1267 = vrot.slane %v1265, 4
      %v1268 = vrot.slane %v212, 5
      %v1269 = vsel %vm1233, %v1267, %v1268
      %v1270 = vrot.slane %v1268, 4
      %v1271 = vrot.slane %v251, 5
      %v1272 = vsel %vm1233, %v1270, %v1271
      %v1273 = vrot.slane %v1210, 5
      %v1274 = vrot.slane %v1273, 4
      %v1275 = vrot.slane %v214, 5
      %v1276 = vsel %vm1233, %v1274, %v1275
      %v1277 = vrot.slane %v1275, 4
      %v1278 = vrot.slane %v215, 5
      %v1279 = vsel %vm1233, %v1277, %v1278
      %v1280 = vrot.slane %v1278, 4
      %v1281 = vrot.slane %v216, 5
      %v1282 = vsel %vm1233, %v1280, %v1281
      %v1283 = vrot.slane %v1281, 4
      %v1284 = vrot.slane %v252, 5
      %v1285 = vsel %vm1233, %v1283, %v1284
      %v1286 = vrot.slane %v1211, 5
      %v1287 = vrot.slane %v1286, 4
      %v1288 = vrot.slane %v218, 5
      %v1289 = vsel %vm1233, %v1287, %v1288
      %v1290 = vrot.slane %v1288, 4
      %v1291 = vrot.slane %v219, 5
      %v1292 = vsel %vm1233, %v1290, %v1291
      %v1293 = vrot.slane %v1291, 4
      %v1294 = vrot.slane %v220, 5
      %v1295 = vsel %vm1233, %v1293, %v1294
      %v1296 = vrot.slane %v1294, 4
      %v1297 = vrot.slane %v253, 5
      %v1298 = vsel %vm1233, %v1296, %v1297
      %v1299 = vrot.slane %v1212, 5
      %v1300 = vrot.slane %v1299, 4
      %v1301 = vrot.slane %v222, 5
      %v1302 = vsel %vm1233, %v1300, %v1301
      %v1303 = vrot.slane %v1301, 4
      %v1304 = vrot.slane %v223, 5
      %v1305 = vsel %vm1233, %v1303, %v1304
      %v1306 = vrot.slane %v1304, 4
      %v1307 = vrot.slane %v224, 5
      %v1308 = vsel %vm1233, %v1306, %v1307
      %v1309 = vrot.slane %v1307, 4
      %v1310 = vrot.slane %v254, 5
      %v1311 = vsel %vm1233, %v1309, %v1310
      %v1312 = vrot.slane %v1213, 5
      %v1313 = vrot.slane %v1312, 4
      %v1314 = vrot.slane %v226, 5
      %v1315 = vsel %vm1233, %v1313, %v1314
      %v1316 = vrot.slane %v1314, 4
      %v1317 = vrot.slane %v227, 5
      %v1318 = vsel %vm1233, %v1316, %v1317
      %v1319 = vrot.slane %v1317, 4
      %v1320 = vrot.slane %v228, 5
      %v1321 = vsel %vm1233, %v1319, %v1320
      %v1322 = vrot.slane %v1320, 4
      %v1323 = vrot.slane %v255, 5
      %v1324 = vsel %vm1233, %v1322, %v1323
      %v1325 = vrot.slane %v1214, 5
      %v1326 = vrot.slane %v1325, 4
      %v1327 = vrot.slane %v230, 5
      %v1328 = vsel %vm1233, %v1326, %v1327
      %v1329 = vrot.slane %v1327, 4
      %v1330 = vrot.slane %v231, 5
      %v1331 = vsel %vm1233, %v1329, %v1330
      %v1332 = vrot.slane %v1330, 4
      %v1333 = vrot.slane %v232, 5
      %v1334 = vsel %vm1233, %v1332, %v1333
      %v1335 = vrot.slane %v1333, 4
      %v1336 = vrot.slane %v256, 5
      %v1337 = vsel %vm1233, %v1335, %v1336
      %s1338 = scalar_lea.vmem %s1, 128
      %v1339 = vld [vmem:[%s1338] sm:$0xf]
      %v1340 = vld [vmem:[%s1338 + $0x4] sm:$0xf]
      %v1341 = vld [vmem:[%s1338 + $0x8] sm:$0xf]
      %v1342 = vld [vmem:[%s1338 + $0xc] sm:$0xf]
      %v1343 = vld [vmem:[%s1338 + $0x10] sm:$0xf]
      %v1344 = vld [vmem:[%s1338 + $0x14] sm:$0xf]
      %v1345 = vld [vmem:[%s1338 + $0x18] sm:$0xf]
      %v1346 = vld [vmem:[%s1338 + $0x1c] sm:$0xf]
      %v1347 = vld [vmem:[%s1338 + $0x20] sm:$0xf]
      %v1348 = vld [vmem:[%s1338 + $0x24] sm:$0xf]
      %v1349 = vld [vmem:[%s1338 + $0x28] sm:$0xf]
      %v1350 = vld [vmem:[%s1338 + $0x2c] sm:$0xf]
      %v1351 = vld [vmem:[%s1338 + $0x30] sm:$0xf]
      %v1352 = vld [vmem:[%s1338 + $0x34] sm:$0xf]
      %v1353 = vld [vmem:[%s1338 + $0x38] sm:$0xf]
      %v1354 = vld [vmem:[%s1338 + $0x3c] sm:$0xf]
      %v1355 = vunpack.c.l.b16 %v1237
      %v1356 = vunpack.c.l.b16 %v1240
      %v1357 = vunpack.c.l.b16 %v1243
      %v1358 = vunpack.c.l.b16 %v1246
      %v1359 = vunpack.c.l.b16 %v1250
      %v1360 = vunpack.c.l.b16 %v1253
      %v1361 = vunpack.c.l.b16 %v1256
      %v1362 = vunpack.c.l.b16 %v1259
      %v1363 = vunpack.c.l.b16 %v1263
      %v1364 = vunpack.c.l.b16 %v1266
      %v1365 = vunpack.c.l.b16 %v1269
      %v1366 = vunpack.c.l.b16 %v1272
      %v1367 = vunpack.c.l.b16 %v1276
      %v1368 = vunpack.c.l.b16 %v1279
      %v1369 = vunpack.c.l.b16 %v1282
      %v1370 = vunpack.c.l.b16 %v1285
      %v1371 = vunpack.c.l.b16 %v1289
      %v1372 = vunpack.c.l.b16 %v1292
      %v1373 = vunpack.c.l.b16 %v1295
      %v1374 = vunpack.c.l.b16 %v1298
      %v1375 = vunpack.c.l.b16 %v1302
      %v1376 = vunpack.c.l.b16 %v1305
      %v1377 = vunpack.c.l.b16 %v1308
      %v1378 = vunpack.c.l.b16 %v1311
      %v1379 = vunpack.c.l.b16 %v1315
      %v1380 = vunpack.c.l.b16 %v1318
      %v1381 = vunpack.c.l.b16 %v1321
      %v1382 = vunpack.c.l.b16 %v1324
      %v1383 = vunpack.c.l.b16 %v1328
      %v1384 = vunpack.c.l.b16 %v1331
      %v1385 = vunpack.c.l.b16 %v1334
      %v1386 = vunpack.c.l.b16 %v1337
      %v1387 = vpack.c.b16 %v1356, %v1355
      %v1388 = vpack.c.b16 %v1358, %v1357
      %v1389 = vpack.c.b16 %v1360, %v1359
      %v1390 = vpack.c.b16 %v1362, %v1361
      %v1391 = vpack.c.b16 %v1364, %v1363
      %v1392 = vpack.c.b16 %v1366, %v1365
      %v1393 = vpack.c.b16 %v1368, %v1367
      %v1394 = vpack.c.b16 %v1370, %v1369
      %v1395 = vpack.c.b16 %v1372, %v1371
      %v1396 = vpack.c.b16 %v1374, %v1373
      %v1397 = vpack.c.b16 %v1376, %v1375
      %v1398 = vpack.c.b16 %v1378, %v1377
      %v1399 = vpack.c.b16 %v1380, %v1379
      %v1400 = vpack.c.b16 %v1382, %v1381
      %v1401 = vpack.c.b16 %v1384, %v1383
      %v1402 = vpack.c.b16 %v1386, %v1385
      %v1435 = vunpack.c.l.b16 %v1339
      %v1436 = vunpack.c.l.b16 %v1340
      %v1437 = vunpack.c.l.b16 %v1341
      %v1438 = vunpack.c.l.b16 %v1342
      %v1439 = vunpack.c.l.b16 %v1343
      %v1440 = vunpack.c.l.b16 %v1344
      %v1441 = vunpack.c.l.b16 %v1345
      %v1442 = vunpack.c.l.b16 %v1346
      %v1443 = vunpack.c.l.b16 %v1347
      %v1444 = vunpack.c.l.b16 %v1348
      %v1445 = vunpack.c.l.b16 %v1349
      %v1446 = vunpack.c.l.b16 %v1350
      %v1447 = vunpack.c.l.b16 %v1351
      %v1448 = vunpack.c.l.b16 %v1352
      %v1449 = vunpack.c.l.b16 %v1353
      %v1450 = vunpack.c.l.b16 %v1354
      %v1451 = vpack.c.b16 %v1436, %v1435
      %v1452 = vpack.c.b16 %v1438, %v1437
      %v1453 = vpack.c.b16 %v1440, %v1439
      %v1454 = vpack.c.b16 %v1442, %v1441
      %v1455 = vpack.c.b16 %v1444, %v1443
      %v1456 = vpack.c.b16 %v1446, %v1445
      %v1457 = vpack.c.b16 %v1448, %v1447
      %v1458 = vpack.c.b16 %v1450, %v1449
      %1467 = vmatprep.subr.bf16.mxu0 0
      %1468 = vmatpush1.bf16.msra.mxu0 %v1458
      %1469 = vmatprep.subr.bf16.mxu0 0
      %1470 = vmatpush1.bf16.msra.mxu0 %v1457
      %1471 = vmatprep.subr.bf16.mxu0 0
      %1472 = vmatpush1.bf16.msra.mxu0 %v1456
      %1473 = vmatprep.subr.bf16.mxu0 0
      %1474 = vmatpush1.bf16.msra.mxu0 %v1455
      %1475 = vmatprep.subr.bf16.mxu0 0
      %1476 = vmatpush1.bf16.msra.mxu0 %v1454
      %1477 = vmatprep.subr.bf16.mxu0 0
      %1478 = vmatpush1.bf16.msra.mxu0 %v1453
      %1479 = vmatprep.subr.bf16.mxu0 0
      %1480 = vmatpush1.bf16.msra.mxu0 %v1452
      %1481 = vmatprep.subr.bf16.mxu0 0
      %1482 = vmatpush1.bf16.msra.mxu0 %v1451
      %1483 = vmatprep.subr.bf16.mxu0 0
      %1484 = vmatpush2.bf16.msra.mxu0 0
      %1485 = vmatprep.subr.bf16.mxu0 0
      %1486 = vmatpush2.bf16.msra.mxu0 0
      %1487 = vmatprep.subr.bf16.mxu0 0
      %1488 = vmatpush2.bf16.msra.mxu0 0
      %1489 = vmatprep.subr.bf16.mxu0 0
      %1490 = vmatpush2.bf16.msra.mxu0 0
      %1491 = vmatprep.subr.bf16.mxu0 0
      %1492 = vmatpush2.bf16.msra.mxu0 0
      %1493 = vmatprep.subr.bf16.mxu0 0
      %1494 = vmatpush2.bf16.msra.mxu0 0
      %1495 = vmatprep.subr.bf16.mxu0 0
      %1496 = vmatpush2.bf16.msra.mxu0 0
      %1497 = vmatprep.subr.bf16.mxu0 0
      %1498 = vmatpush2.bf16.msra.mxu0 0
      %1499 = vmatprep.mubr.bf16.mxu0 0
      %1500 = vmatmul.mubr.bf16.gmra.mxu0 %v1387
      %v1501 = vpop.f32.mrf.mxu0
      %v1502 = vadd.f32 0.0, %v1501
      %v1503 = vpop.f32.mrf.mxu0
      %v1504 = vpop.f32.mrf.mxu0
      %v1505 = vadd.f32 0.0, %v1504
      %v1506 = vpop.f32.mrf.mxu0
      %1507 = vmatprep.mubr.bf16.mxu0 0
      %1508 = vmatmul.mubr.bf16.gmra.mxu0 %v1388
      %v1509 = vpop.f32.mrf.mxu0
      %v1510 = vadd.f32 0.0, %v1509
      %v1511 = vpop.f32.mrf.mxu0
      %v1512 = vpop.f32.mrf.mxu0
      %v1513 = vadd.f32 0.0, %v1512
      %v1514 = vpop.f32.mrf.mxu0
      %1515 = vmatprep.mubr.bf16.mxu0 0
      %1516 = vmatmul.mubr.bf16.gmra.mxu0 %v1389
      %v1517 = vpop.f32.mrf.mxu0
      %v1518 = vadd.f32 0.0, %v1517
      %v1519 = vpop.f32.mrf.mxu0
      %v1520 = vpop.f32.mrf.mxu0
      %v1521 = vadd.f32 0.0, %v1520
      %v1522 = vpop.f32.mrf.mxu0
      %1523 = vmatprep.mubr.bf16.mxu0 0
      %1524 = vmatmul.mubr.bf16.gmra.mxu0 %v1390
      %v1525 = vpop.f32.mrf.mxu0
      %v1526 = vadd.f32 0.0, %v1525
      %v1527 = vpop.f32.mrf.mxu0
      %v1528 = vpop.f32.mrf.mxu0
      %v1529 = vadd.f32 0.0, %v1528
      %v1530 = vpop.f32.mrf.mxu0
      %1531 = vmatprep.mubr.bf16.mxu0 0
      %1532 = vmatmul.mubr.bf16.gmra.mxu0 %v1391
      %v1533 = vpop.f32.mrf.mxu0
      %v1534 = vadd.f32 0.0, %v1533
      %v1535 = vpop.f32.mrf.mxu0
      %v1536 = vpop.f32.mrf.mxu0
      %v1537 = vadd.f32 0.0, %v1536
      %v1538 = vpop.f32.mrf.mxu0
      %1539 = vmatprep.mubr.bf16.mxu0 0
      %1540 = vmatmul.mubr.bf16.gmra.mxu0 %v1392
      %v1541 = vpop.f32.mrf.mxu0
      %v1542 = vadd.f32 0.0, %v1541
      %v1543 = vpop.f32.mrf.mxu0
      %v1544 = vpop.f32.mrf.mxu0
      %v1545 = vadd.f32 0.0, %v1544
      %v1546 = vpop.f32.mrf.mxu0
      %1547 = vmatprep.mubr.bf16.mxu0 0
      %1548 = vmatmul.mubr.bf16.gmra.mxu0 %v1393
      %v1549 = vpop.f32.mrf.mxu0
      %v1550 = vadd.f32 0.0, %v1549
      %v1551 = vpop.f32.mrf.mxu0
      %v1552 = vpop.f32.mrf.mxu0
      %v1553 = vadd.f32 0.0, %v1552
      %v1554 = vpop.f32.mrf.mxu0
      %1555 = vmatprep.mubr.bf16.mxu0 0
      %1556 = vmatmul.mubr.bf16.gmra.mxu0 %v1394
      %v1557 = vpop.f32.mrf.mxu0
      %v1558 = vadd.f32 0.0, %v1557
      %v1559 = vpop.f32.mrf.mxu0
      %v1560 = vpop.f32.mrf.mxu0
      %v1561 = vadd.f32 0.0, %v1560
      %v1562 = vpop.f32.mrf.mxu0
      %1563 = vmatprep.mubr.bf16.mxu0 0
      %1564 = vmatmul.mubr.bf16.gmra.mxu0 %v1395
      %v1565 = vpop.f32.mrf.mxu0
      %v1566 = vadd.f32 0.0, %v1565
      %v1567 = vpop.f32.mrf.mxu0
      %v1568 = vpop.f32.mrf.mxu0
      %v1569 = vadd.f32 0.0, %v1568
      %v1570 = vpop.f32.mrf.mxu0
      %1571 = vmatprep.mubr.bf16.mxu0 0
      %1572 = vmatmul.mubr.bf16.gmra.mxu0 %v1396
      %v1573 = vpop.f32.mrf.mxu0
      %v1574 = vadd.f32 0.0, %v1573
      %v1575 = vpop.f32.mrf.mxu0
      %v1576 = vpop.f32.mrf.mxu0
      %v1577 = vadd.f32 0.0, %v1576
      %v1578 = vpop.f32.mrf.mxu0
      %1579 = vmatprep.mubr.bf16.mxu0 0
      %1580 = vmatmul.mubr.bf16.gmra.mxu0 %v1397
      %v1581 = vpop.f32.mrf.mxu0
      %v1582 = vadd.f32 0.0, %v1581
      %v1583 = vpop.f32.mrf.mxu0
      %v1584 = vpop.f32.mrf.mxu0
      %v1585 = vadd.f32 0.0, %v1584
      %v1586 = vpop.f32.mrf.mxu0
      %1587 = vmatprep.mubr.bf16.mxu0 0
      %1588 = vmatmul.mubr.bf16.gmra.mxu0 %v1398
      %v1589 = vpop.f32.mrf.mxu0
      %v1590 = vadd.f32 0.0, %v1589
      %v1591 = vpop.f32.mrf.mxu0
      %v1592 = vpop.f32.mrf.mxu0
      %v1593 = vadd.f32 0.0, %v1592
      %v1594 = vpop.f32.mrf.mxu0
      %1595 = vmatprep.mubr.bf16.mxu0 0
      %1596 = vmatmul.mubr.bf16.gmra.mxu0 %v1399
      %v1597 = vpop.f32.mrf.mxu0
      %v1598 = vadd.f32 0.0, %v1597
      %v1599 = vpop.f32.mrf.mxu0
      %v1600 = vpop.f32.mrf.mxu0
      %v1601 = vadd.f32 0.0, %v1600
      %v1602 = vpop.f32.mrf.mxu0
      %1603 = vmatprep.mubr.bf16.mxu0 0
      %1604 = vmatmul.mubr.bf16.gmra.mxu0 %v1400
      %v1605 = vpop.f32.mrf.mxu0
      %v1606 = vadd.f32 0.0, %v1605
      %v1607 = vpop.f32.mrf.mxu0
      %v1608 = vpop.f32.mrf.mxu0
      %v1609 = vadd.f32 0.0, %v1608
      %v1610 = vpop.f32.mrf.mxu0
      %1611 = vmatprep.mubr.bf16.mxu0 0
      %1612 = vmatmul.mubr.bf16.gmra.mxu0 %v1401
      %v1613 = vpop.f32.mrf.mxu0
      %v1614 = vadd.f32 0.0, %v1613
      %v1615 = vpop.f32.mrf.mxu0
      %v1616 = vpop.f32.mrf.mxu0
      %v1617 = vadd.f32 0.0, %v1616
      %v1618 = vpop.f32.mrf.mxu0
      %1619 = vmatprep.mubr.bf16.mxu0 0
      %1620 = vmatmul.mubr.bf16.gmra.mxu0 %v1402
      %v1621 = vpop.f32.mrf.mxu0
      %v1622 = vadd.f32 0.0, %v1621
      %v1623 = vpop.f32.mrf.mxu0
      %v1624 = vpop.f32.mrf.mxu0
      %v1625 = vadd.f32 0.0, %v1624
      %v1626 = vpop.f32.mrf.mxu0
      %1627 = vdwg.mxu0
      %v1628 = vadd.f32 %v1081, %v1502
      %v1629 = vadd.f32 %v1084, %v1505
      %v1630 = vadd.f32 %v1089, %v1510
      %v1631 = vadd.f32 %v1092, %v1513
      %v1632 = vadd.f32 %v1097, %v1518
      %v1633 = vadd.f32 %v1100, %v1521
      %v1634 = vadd.f32 %v1105, %v1526
      %v1635 = vadd.f32 %v1108, %v1529
      %v1636 = vadd.f32 %v1113, %v1534
      %v1637 = vadd.f32 %v1116, %v1537
      %v1638 = vadd.f32 %v1121, %v1542
      %v1639 = vadd.f32 %v1124, %v1545
      %v1640 = vadd.f32 %v1129, %v1550
      %v1641 = vadd.f32 %v1132, %v1553
      %v1642 = vadd.f32 %v1137, %v1558
      %v1643 = vadd.f32 %v1140, %v1561
      %v1644 = vadd.f32 %v1145, %v1566
      %v1645 = vadd.f32 %v1148, %v1569
      %v1646 = vadd.f32 %v1153, %v1574
      %v1647 = vadd.f32 %v1156, %v1577
      %v1648 = vadd.f32 %v1161, %v1582
      %v1649 = vadd.f32 %v1164, %v1585
      %v1650 = vadd.f32 %v1169, %v1590
      %v1651 = vadd.f32 %v1172, %v1593
      %v1652 = vadd.f32 %v1177, %v1598
      %v1653 = vadd.f32 %v1180, %v1601
      %v1654 = vadd.f32 %v1185, %v1606
      %v1655 = vadd.f32 %v1188, %v1609
      %v1656 = vadd.f32 %v1193, %v1614
      %v1657 = vadd.f32 %v1196, %v1617
      %v1658 = vadd.f32 %v1201, %v1622
      %v1659 = vadd.f32 %v1204, %v1625
      %s1660 = sadd.s32 %s197, 1
      %s1661 = smul.u32 %s1660, 5
      %s1662 = smul.addr %s1661, 4
      %s1663 = scalar_lea.vmem %s184, %s1662
      %v1664 = vld [vmem:[%s1663] sm:$0xf]
      %v1665 = vld [vmem:[%s1663 + $0x4] sm:$0xf]
      %v1666 = vld [vmem:[%s1663 + $0x8] sm:$0xf]
      %v1667 = vld [vmem:[%s1663 + $0xc] sm:$0xf]
      %v1668 = vld [vmem:[%s1663 + $0x14] sm:$0xf]
      %v1669 = vld [vmem:[%s1663 + $0x18] sm:$0xf]
      %v1670 = vld [vmem:[%s1663 + $0x1c] sm:$0xf]
      %v1671 = vld [vmem:[%s1663 + $0x20] sm:$0xf]
      %v1672 = vld [vmem:[%s1663 + $0x28] sm:$0xf]
      %v1673 = vld [vmem:[%s1663 + $0x2c] sm:$0xf]
      %v1674 = vld [vmem:[%s1663 + $0x30] sm:$0xf]
      %v1675 = vld [vmem:[%s1663 + $0x34] sm:$0xf]
      %v1676 = vld [vmem:[%s1663 + $0x3c] sm:$0xf]
      %v1677 = vld [vmem:[%s1663 + $0x40] sm:$0xf]
      %v1678 = vld [vmem:[%s1663 + $0x44] sm:$0xf]
      %v1679 = vld [vmem:[%s1663 + $0x48] sm:$0xf]
      %v1680 = vld [vmem:[%s1663 + $0x50] sm:$0xf]
      %v1681 = vld [vmem:[%s1663 + $0x54] sm:$0xf]
      %v1682 = vld [vmem:[%s1663 + $0x58] sm:$0xf]
      %v1683 = vld [vmem:[%s1663 + $0x5c] sm:$0xf]
      %v1684 = vld [vmem:[%s1663 + $0x64] sm:$0xf]
      %v1685 = vld [vmem:[%s1663 + $0x68] sm:$0xf]
      %v1686 = vld [vmem:[%s1663 + $0x6c] sm:$0xf]
      %v1687 = vld [vmem:[%s1663 + $0x70] sm:$0xf]
      %v1688 = vld [vmem:[%s1663 + $0x78] sm:$0xf]
      %v1689 = vld [vmem:[%s1663 + $0x7c] sm:$0xf]
      %v1690 = vld [vmem:[%s1663 + $0x80] sm:$0xf]
      %v1691 = vld [vmem:[%s1663 + $0x84] sm:$0xf]
      %v1692 = vld [vmem:[%s1663 + $0x8c] sm:$0xf]
      %v1693 = vld [vmem:[%s1663 + $0x90] sm:$0xf]
      %v1694 = vld [vmem:[%s1663 + $0x94] sm:$0xf]
      %v1695 = vld [vmem:[%s1663 + $0x98] sm:$0xf]
      %s1696 = scalar_lea.vmem %s1, 192
      %v1697 = vld [vmem:[%s1696] sm:$0xf]
      %v1698 = vld [vmem:[%s1696 + $0x4] sm:$0xf]
      %v1699 = vld [vmem:[%s1696 + $0x8] sm:$0xf]
      %v1700 = vld [vmem:[%s1696 + $0xc] sm:$0xf]
      %v1701 = vld [vmem:[%s1696 + $0x10] sm:$0xf]
      %v1702 = vld [vmem:[%s1696 + $0x14] sm:$0xf]
      %v1703 = vld [vmem:[%s1696 + $0x18] sm:$0xf]
      %v1704 = vld [vmem:[%s1696 + $0x1c] sm:$0xf]
      %v1705 = vld [vmem:[%s1696 + $0x20] sm:$0xf]
      %v1706 = vld [vmem:[%s1696 + $0x24] sm:$0xf]
      %v1707 = vld [vmem:[%s1696 + $0x28] sm:$0xf]
      %v1708 = vld [vmem:[%s1696 + $0x2c] sm:$0xf]
      %v1709 = vld [vmem:[%s1696 + $0x30] sm:$0xf]
      %v1710 = vld [vmem:[%s1696 + $0x34] sm:$0xf]
      %v1711 = vld [vmem:[%s1696 + $0x38] sm:$0xf]
      %v1712 = vld [vmem:[%s1696 + $0x3c] sm:$0xf]
      %v1745 = vunpack.c.l.b16 %v1664
      %v1746 = vunpack.c.l.b16 %v1665
      %v1747 = vunpack.c.l.b16 %v1666
      %v1748 = vunpack.c.l.b16 %v1667
      %v1749 = vunpack.c.l.b16 %v1668
      %v1750 = vunpack.c.l.b16 %v1669
      %v1751 = vunpack.c.l.b16 %v1670
      %v1752 = vunpack.c.l.b16 %v1671
      %v1753 = vunpack.c.l.b16 %v1672
      %v1754 = vunpack.c.l.b16 %v1673
      %v1755 = vunpack.c.l.b16 %v1674
      %v1756 = vunpack.c.l.b16 %v1675
      %v1757 = vunpack.c.l.b16 %v1676
      %v1758 = vunpack.c.l.b16 %v1677
      %v1759 = vunpack.c.l.b16 %v1678
      %v1760 = vunpack.c.l.b16 %v1679
      %v1761 = vunpack.c.l.b16 %v1680
      %v1762 = vunpack.c.l.b16 %v1681
      %v1763 = vunpack.c.l.b16 %v1682
      %v1764 = vunpack.c.l.b16 %v1683
      %v1765 = vunpack.c.l.b16 %v1684
      %v1766 = vunpack.c.l.b16 %v1685
      %v1767 = vunpack.c.l.b16 %v1686
      %v1768 = vunpack.c.l.b16 %v1687
      %v1769 = vunpack.c.l.b16 %v1688
      %v1770 = vunpack.c.l.b16 %v1689
      %v1771 = vunpack.c.l.b16 %v1690
      %v1772 = vunpack.c.l.b16 %v1691
      %v1773 = vunpack.c.l.b16 %v1692
      %v1774 = vunpack.c.l.b16 %v1693
      %v1775 = vunpack.c.l.b16 %v1694
      %v1776 = vunpack.c.l.b16 %v1695
      %v1777 = vpack.c.b16 %v1746, %v1745
      %v1778 = vpack.c.b16 %v1748, %v1747
      %v1779 = vpack.c.b16 %v1750, %v1749
      %v1780 = vpack.c.b16 %v1752, %v1751
      %v1781 = vpack.c.b16 %v1754, %v1753
      %v1782 = vpack.c.b16 %v1756, %v1755
      %v1783 = vpack.c.b16 %v1758, %v1757
      %v1784 = vpack.c.b16 %v1760, %v1759
      %v1785 = vpack.c.b16 %v1762, %v1761
      %v1786 = vpack.c.b16 %v1764, %v1763
      %v1787 = vpack.c.b16 %v1766, %v1765
      %v1788 = vpack.c.b16 %v1768, %v1767
      %v1789 = vpack.c.b16 %v1770, %v1769
      %v1790 = vpack.c.b16 %v1772, %v1771
      %v1791 = vpack.c.b16 %v1774, %v1773
      %v1792 = vpack.c.b16 %v1776, %v1775
      %v1825 = vunpack.c.l.b16 %v1697
      %v1826 = vunpack.c.l.b16 %v1698
      %v1827 = vunpack.c.l.b16 %v1699
      %v1828 = vunpack.c.l.b16 %v1700
      %v1829 = vunpack.c.l.b16 %v1701
      %v1830 = vunpack.c.l.b16 %v1702
      %v1831 = vunpack.c.l.b16 %v1703
      %v1832 = vunpack.c.l.b16 %v1704
      %v1833 = vunpack.c.l.b16 %v1705
      %v1834 = vunpack.c.l.b16 %v1706
      %v1835 = vunpack.c.l.b16 %v1707
      %v1836 = vunpack.c.l.b16 %v1708
      %v1837 = vunpack.c.l.b16 %v1709
      %v1838 = vunpack.c.l.b16 %v1710
      %v1839 = vunpack.c.l.b16 %v1711
      %v1840 = vunpack.c.l.b16 %v1712
      %v1841 = vpack.c.b16 %v1826, %v1825
      %v1842 = vpack.c.b16 %v1828, %v1827
      %v1843 = vpack.c.b16 %v1830, %v1829
      %v1844 = vpack.c.b16 %v1832, %v1831
      %v1845 = vpack.c.b16 %v1834, %v1833
      %v1846 = vpack.c.b16 %v1836, %v1835
      %v1847 = vpack.c.b16 %v1838, %v1837
      %v1848 = vpack.c.b16 %v1840, %v1839
      %1857 = vmatprep.subr.bf16.mxu0 0
      %1858 = vmatpush1.bf16.msra.mxu0 %v1848
      %1859 = vmatprep.subr.bf16.mxu0 0
      %1860 = vmatpush1.bf16.msra.mxu0 %v1847
      %1861 = vmatprep.subr.bf16.mxu0 0
      %1862 = vmatpush1.bf16.msra.mxu0 %v1846
      %1863 = vmatprep.subr.bf16.mxu0 0
      %1864 = vmatpush1.bf16.msra.mxu0 %v1845
      %1865 = vmatprep.subr.bf16.mxu0 0
      %1866 = vmatpush1.bf16.msra.mxu0 %v1844
      %1867 = vmatprep.subr.bf16.mxu0 0
      %1868 = vmatpush1.bf16.msra.mxu0 %v1843
      %1869 = vmatprep.subr.bf16.mxu0 0
      %1870 = vmatpush1.bf16.msra.mxu0 %v1842
      %1871 = vmatprep.subr.bf16.mxu0 0
      %1872 = vmatpush1.bf16.msra.mxu0 %v1841
      %1873 = vmatprep.subr.bf16.mxu0 0
      %1874 = vmatpush2.bf16.msra.mxu0 0
      %1875 = vmatprep.subr.bf16.mxu0 0
      %1876 = vmatpush2.bf16.msra.mxu0 0
      %1877 = vmatprep.subr.bf16.mxu0 0
      %1878 = vmatpush2.bf16.msra.mxu0 0
      %1879 = vmatprep.subr.bf16.mxu0 0
      %1880 = vmatpush2.bf16.msra.mxu0 0
      %1881 = vmatprep.subr.bf16.mxu0 0
      %1882 = vmatpush2.bf16.msra.mxu0 0
      %1883 = vmatprep.subr.bf16.mxu0 0
      %1884 = vmatpush2.bf16.msra.mxu0 0
      %1885 = vmatprep.subr.bf16.mxu0 0
      %1886 = vmatpush2.bf16.msra.mxu0 0
      %1887 = vmatprep.subr.bf16.mxu0 0
      %1888 = vmatpush2.bf16.msra.mxu0 0
      %1889 = vmatprep.mubr.bf16.mxu0 0
      %1890 = vmatmul.mubr.bf16.gmra.mxu0 %v1777
      %v1891 = vpop.f32.mrf.mxu0
      %v1892 = vadd.f32 0.0, %v1891
      %v1893 = vpop.f32.mrf.mxu0
      %v1894 = vpop.f32.mrf.mxu0
      %v1895 = vadd.f32 0.0, %v1894
      %v1896 = vpop.f32.mrf.mxu0
      %1897 = vmatprep.mubr.bf16.mxu0 0
      %1898 = vmatmul.mubr.bf16.gmra.mxu0 %v1778
      %v1899 = vpop.f32.mrf.mxu0
      %v1900 = vadd.f32 0.0, %v1899
      %v1901 = vpop.f32.mrf.mxu0
      %v1902 = vpop.f32.mrf.mxu0
      %v1903 = vadd.f32 0.0, %v1902
      %v1904 = vpop.f32.mrf.mxu0
      %1905 = vmatprep.mubr.bf16.mxu0 0
      %1906 = vmatmul.mubr.bf16.gmra.mxu0 %v1779
      %v1907 = vpop.f32.mrf.mxu0
      %v1908 = vadd.f32 0.0, %v1907
      %v1909 = vpop.f32.mrf.mxu0
      %v1910 = vpop.f32.mrf.mxu0
      %v1911 = vadd.f32 0.0, %v1910
      %v1912 = vpop.f32.mrf.mxu0
      %1913 = vmatprep.mubr.bf16.mxu0 0
      %1914 = vmatmul.mubr.bf16.gmra.mxu0 %v1780
      %v1915 = vpop.f32.mrf.mxu0
      %v1916 = vadd.f32 0.0, %v1915
      %v1917 = vpop.f32.mrf.mxu0
      %v1918 = vpop.f32.mrf.mxu0
      %v1919 = vadd.f32 0.0, %v1918
      %v1920 = vpop.f32.mrf.mxu0
      %1921 = vmatprep.mubr.bf16.mxu0 0
      %1922 = vmatmul.mubr.bf16.gmra.mxu0 %v1781
      %v1923 = vpop.f32.mrf.mxu0
      %v1924 = vadd.f32 0.0, %v1923
      %v1925 = vpop.f32.mrf.mxu0
      %v1926 = vpop.f32.mrf.mxu0
      %v1927 = vadd.f32 0.0, %v1926
      %v1928 = vpop.f32.mrf.mxu0
      %1929 = vmatprep.mubr.bf16.mxu0 0
      %1930 = vmatmul.mubr.bf16.gmra.mxu0 %v1782
      %v1931 = vpop.f32.mrf.mxu0
      %v1932 = vadd.f32 0.0, %v1931
      %v1933 = vpop.f32.mrf.mxu0
      %v1934 = vpop.f32.mrf.mxu0
      %v1935 = vadd.f32 0.0, %v1934
      %v1936 = vpop.f32.mrf.mxu0
      %1937 = vmatprep.mubr.bf16.mxu0 0
      %1938 = vmatmul.mubr.bf16.gmra.mxu0 %v1783
      %v1939 = vpop.f32.mrf.mxu0
      %v1940 = vadd.f32 0.0, %v1939
      %v1941 = vpop.f32.mrf.mxu0
      %v1942 = vpop.f32.mrf.mxu0
      %v1943 = vadd.f32 0.0, %v1942
      %v1944 = vpop.f32.mrf.mxu0
      %1945 = vmatprep.mubr.bf16.mxu0 0
      %1946 = vmatmul.mubr.bf16.gmra.mxu0 %v1784
      %v1947 = vpop.f32.mrf.mxu0
      %v1948 = vadd.f32 0.0, %v1947
      %v1949 = vpop.f32.mrf.mxu0
      %v1950 = vpop.f32.mrf.mxu0
      %v1951 = vadd.f32 0.0, %v1950
      %v1952 = vpop.f32.mrf.mxu0
      %1953 = vmatprep.mubr.bf16.mxu0 0
      %1954 = vmatmul.mubr.bf16.gmra.mxu0 %v1785
      %v1955 = vpop.f32.mrf.mxu0
      %v1956 = vadd.f32 0.0, %v1955
      %v1957 = vpop.f32.mrf.mxu0
      %v1958 = vpop.f32.mrf.mxu0
      %v1959 = vadd.f32 0.0, %v1958
      %v1960 = vpop.f32.mrf.mxu0
      %1961 = vmatprep.mubr.bf16.mxu0 0
      %1962 = vmatmul.mubr.bf16.gmra.mxu0 %v1786
      %v1963 = vpop.f32.mrf.mxu0
      %v1964 = vadd.f32 0.0, %v1963
      %v1965 = vpop.f32.mrf.mxu0
      %v1966 = vpop.f32.mrf.mxu0
      %v1967 = vadd.f32 0.0, %v1966
      %v1968 = vpop.f32.mrf.mxu0
      %1969 = vmatprep.mubr.bf16.mxu0 0
      %1970 = vmatmul.mubr.bf16.gmra.mxu0 %v1787
      %v1971 = vpop.f32.mrf.mxu0
      %v1972 = vadd.f32 0.0, %v1971
      %v1973 = vpop.f32.mrf.mxu0
      %v1974 = vpop.f32.mrf.mxu0
      %v1975 = vadd.f32 0.0, %v1974
      %v1976 = vpop.f32.mrf.mxu0
      %1977 = vmatprep.mubr.bf16.mxu0 0
      %1978 = vmatmul.mubr.bf16.gmra.mxu0 %v1788
      %v1979 = vpop.f32.mrf.mxu0
      %v1980 = vadd.f32 0.0, %v1979
      %v1981 = vpop.f32.mrf.mxu0
      %v1982 = vpop.f32.mrf.mxu0
      %v1983 = vadd.f32 0.0, %v1982
      %v1984 = vpop.f32.mrf.mxu0
      %1985 = vmatprep.mubr.bf16.mxu0 0
      %1986 = vmatmul.mubr.bf16.gmra.mxu0 %v1789
      %v1987 = vpop.f32.mrf.mxu0
      %v1988 = vadd.f32 0.0, %v1987
      %v1989 = vpop.f32.mrf.mxu0
      %v1990 = vpop.f32.mrf.mxu0
      %v1991 = vadd.f32 0.0, %v1990
      %v1992 = vpop.f32.mrf.mxu0
      %1993 = vmatprep.mubr.bf16.mxu0 0
      %1994 = vmatmul.mubr.bf16.gmra.mxu0 %v1790
      %v1995 = vpop.f32.mrf.mxu0
      %v1996 = vadd.f32 0.0, %v1995
      %v1997 = vpop.f32.mrf.mxu0
      %v1998 = vpop.f32.mrf.mxu0
      %v1999 = vadd.f32 0.0, %v1998
      %v2000 = vpop.f32.mrf.mxu0
      %2001 = vmatprep.mubr.bf16.mxu0 0
      %2002 = vmatmul.mubr.bf16.gmra.mxu0 %v1791
      %v2003 = vpop.f32.mrf.mxu0
      %v2004 = vadd.f32 0.0, %v2003
      %v2005 = vpop.f32.mrf.mxu0
      %v2006 = vpop.f32.mrf.mxu0
      %v2007 = vadd.f32 0.0, %v2006
      %v2008 = vpop.f32.mrf.mxu0
      %2009 = vmatprep.mubr.bf16.mxu0 0
      %2010 = vmatmul.mubr.bf16.gmra.mxu0 %v1792
      %v2011 = vpop.f32.mrf.mxu0
      %v2012 = vadd.f32 0.0, %v2011
      %v2013 = vpop.f32.mrf.mxu0
      %v2014 = vpop.f32.mrf.mxu0
      %v2015 = vadd.f32 0.0, %v2014
      %v2016 = vpop.f32.mrf.mxu0
      %2017 = vdwg.mxu0
      %v2018 = vadd.f32 %v1628, %v1892
      %v2019 = vadd.f32 %v1629, %v1895
      %v2020 = vadd.f32 %v1630, %v1900
      %v2021 = vadd.f32 %v1631, %v1903
      %v2022 = vadd.f32 %v1632, %v1908
      %v2023 = vadd.f32 %v1633, %v1911
      %v2024 = vadd.f32 %v1634, %v1916
      %v2025 = vadd.f32 %v1635, %v1919
      %v2026 = vadd.f32 %v1636, %v1924
      %v2027 = vadd.f32 %v1637, %v1927
      %v2028 = vadd.f32 %v1638, %v1932
      %v2029 = vadd.f32 %v1639, %v1935
      %v2030 = vadd.f32 %v1640, %v1940
      %v2031 = vadd.f32 %v1641, %v1943
      %v2032 = vadd.f32 %v1642, %v1948
      %v2033 = vadd.f32 %v1643, %v1951
      %v2034 = vadd.f32 %v1644, %v1956
      %v2035 = vadd.f32 %v1645, %v1959
      %v2036 = vadd.f32 %v1646, %v1964
      %v2037 = vadd.f32 %v1647, %v1967
      %v2038 = vadd.f32 %v1648, %v1972
      %v2039 = vadd.f32 %v1649, %v1975
      %v2040 = vadd.f32 %v1650, %v1980
      %v2041 = vadd.f32 %v1651, %v1983
      %v2042 = vadd.f32 %v1652, %v1988
      %v2043 = vadd.f32 %v1653, %v1991
      %v2044 = vadd.f32 %v1654, %v1996
      %v2045 = vadd.f32 %v1655, %v1999
      %v2046 = vadd.f32 %v1656, %v2004
      %v2047 = vadd.f32 %v1657, %v2007
      %v2048 = vadd.f32 %v1658, %v2012
      %v2049 = vadd.f32 %v1659, %v2015
      %v2050 = vld [vmem:[%s1663] sm:$0xf]
      %v2051 = vld [vmem:[%s1663 + $0x4] sm:$0xf]
      %v2052 = vld [vmem:[%s1663 + $0x8] sm:$0xf]
      %v2053 = vld [vmem:[%s1663 + $0xc] sm:$0xf]
      %v2054 = vld [vmem:[%s1663 + $0x10] sm:$0x1]
      %v2055 = vld [vmem:[%s1663 + $0x14] sm:$0xf]
      %v2056 = vld [vmem:[%s1663 + $0x18] sm:$0xf]
      %v2057 = vld [vmem:[%s1663 + $0x1c] sm:$0xf]
      %v2058 = vld [vmem:[%s1663 + $0x20] sm:$0xf]
      %v2059 = vld [vmem:[%s1663 + $0x24] sm:$0x1]
      %v2060 = vld [vmem:[%s1663 + $0x28] sm:$0xf]
      %v2061 = vld [vmem:[%s1663 + $0x2c] sm:$0xf]
      %v2062 = vld [vmem:[%s1663 + $0x30] sm:$0xf]
      %v2063 = vld [vmem:[%s1663 + $0x34] sm:$0xf]
      %v2064 = vld [vmem:[%s1663 + $0x38] sm:$0x1]
      %v2065 = vld [vmem:[%s1663 + $0x3c] sm:$0xf]
      %v2066 = vld [vmem:[%s1663 + $0x40] sm:$0xf]
      %v2067 = vld [vmem:[%s1663 + $0x44] sm:$0xf]
      %v2068 = vld [vmem:[%s1663 + $0x48] sm:$0xf]
      %v2069 = vld [vmem:[%s1663 + $0x4c] sm:$0x1]
      %v2070 = vld [vmem:[%s1663 + $0x50] sm:$0xf]
      %v2071 = vld [vmem:[%s1663 + $0x54] sm:$0xf]
      %v2072 = vld [vmem:[%s1663 + $0x58] sm:$0xf]
      %v2073 = vld [vmem:[%s1663 + $0x5c] sm:$0xf]
      %v2074 = vld [vmem:[%s1663 + $0x60] sm:$0x1]
      %v2075 = vld [vmem:[%s1663 + $0x64] sm:$0xf]
      %v2076 = vld [vmem:[%s1663 + $0x68] sm:$0xf]
      %v2077 = vld [vmem:[%s1663 + $0x6c] sm:$0xf]
      %v2078 = vld [vmem:[%s1663 + $0x70] sm:$0xf]
      %v2079 = vld [vmem:[%s1663 + $0x74] sm:$0x1]
      %v2080 = vld [vmem:[%s1663 + $0x78] sm:$0xf]
      %v2081 = vld [vmem:[%s1663 + $0x7c] sm:$0xf]
      %v2082 = vld [vmem:[%s1663 + $0x80] sm:$0xf]
      %v2083 = vld [vmem:[%s1663 + $0x84] sm:$0xf]
      %v2084 = vld [vmem:[%s1663 + $0x88] sm:$0x1]
      %v2085 = vld [vmem:[%s1663 + $0x8c] sm:$0xf]
      %v2086 = vld [vmem:[%s1663 + $0x90] sm:$0xf]
      %v2087 = vld [vmem:[%s1663 + $0x94] sm:$0xf]
      %v2088 = vld [vmem:[%s1663 + $0x98] sm:$0xf]
      %v2089 = vld [vmem:[%s1663 + $0x9c] sm:$0x1]
      %v2091 = vshrl.u32 %v2050, 16
      %v2093 = vrot.slane %v2091, 4
      %v2094 = vshll.u32 %v2050, 16
      %v2096 = vrot.slane %v2094, 5
      %v2097 = vor.u32 %v2093, %v2096
      %v2098 = vrot.slane %v2097, 4
      %v2100 = vshll.u32 %v2051, 16
      %v2102 = vrot.slane %v2100, 5
      %v2103 = vsel %vm259, %v2098, %v2102
      %v2104 = vshrl.u32 %v2051, 16
      %v2106 = vrot.slane %v2104, 4
      %v2107 = vor.u32 %v2106, %v2102
      %v2108 = vrot.slane %v2107, 4
      %v2110 = vshll.u32 %v2052, 16
      %v2112 = vrot.slane %v2110, 5
      %v2113 = vsel %vm259, %v2108, %v2112
      %v2114 = vshrl.u32 %v2052, 16
      %v2116 = vrot.slane %v2114, 4
      %v2117 = vor.u32 %v2116, %v2112
      %v2118 = vrot.slane %v2117, 4
      %v2120 = vshll.u32 %v2053, 16
      %v2122 = vrot.slane %v2120, 5
      %v2123 = vsel %vm259, %v2118, %v2122
      %v2124 = vshrl.u32 %v2053, 16
      %v2126 = vrot.slane %v2124, 4
      %v2127 = vor.u32 %v2126, %v2122
      %v2128 = vrot.slane %v2127, 4
      %v2130 = vshll.u32 %v2054, 16
      %v2132 = vrot.slane %v2130, 5
      %v2133 = vsel %vm259, %v2128, %v2132
      %v2135 = vshrl.u32 %v2055, 16
      %v2137 = vrot.slane %v2135, 4
      %v2138 = vshll.u32 %v2055, 16
      %v2140 = vrot.slane %v2138, 5
      %v2141 = vor.u32 %v2137, %v2140
      %v2142 = vrot.slane %v2141, 4
      %v2144 = vshll.u32 %v2056, 16
      %v2146 = vrot.slane %v2144, 5
      %v2147 = vsel %vm259, %v2142, %v2146
      %v2148 = vshrl.u32 %v2056, 16
      %v2150 = vrot.slane %v2148, 4
      %v2151 = vor.u32 %v2150, %v2146
      %v2152 = vrot.slane %v2151, 4
      %v2154 = vshll.u32 %v2057, 16
      %v2156 = vrot.slane %v2154, 5
      %v2157 = vsel %vm259, %v2152, %v2156
      %v2158 = vshrl.u32 %v2057, 16
      %v2160 = vrot.slane %v2158, 4
      %v2161 = vor.u32 %v2160, %v2156
      %v2162 = vrot.slane %v2161, 4
      %v2164 = vshll.u32 %v2058, 16
      %v2166 = vrot.slane %v2164, 5
      %v2167 = vsel %vm259, %v2162, %v2166
      %v2168 = vshrl.u32 %v2058, 16
      %v2170 = vrot.slane %v2168, 4
      %v2171 = vor.u32 %v2170, %v2166
      %v2172 = vrot.slane %v2171, 4
      %v2174 = vshll.u32 %v2059, 16
      %v2176 = vrot.slane %v2174, 5
      %v2177 = vsel %vm259, %v2172, %v2176
      %v2179 = vshrl.u32 %v2060, 16
      %v2181 = vrot.slane %v2179, 4
      %v2182 = vshll.u32 %v2060, 16
      %v2184 = vrot.slane %v2182, 5
      %v2185 = vor.u32 %v2181, %v2184
      %v2186 = vrot.slane %v2185, 4
      %v2188 = vshll.u32 %v2061, 16
      %v2190 = vrot.slane %v2188, 5
      %v2191 = vsel %vm259, %v2186, %v2190
      %v2192 = vshrl.u32 %v2061, 16
      %v2194 = vrot.slane %v2192, 4
      %v2195 = vor.u32 %v2194, %v2190
      %v2196 = vrot.slane %v2195, 4
      %v2198 = vshll.u32 %v2062, 16
      %v2200 = vrot.slane %v2198, 5
      %v2201 = vsel %vm259, %v2196, %v2200
      %v2202 = vshrl.u32 %v2062, 16
      %v2204 = vrot.slane %v2202, 4
      %v2205 = vor.u32 %v2204, %v2200
      %v2206 = vrot.slane %v2205, 4
      %v2208 = vshll.u32 %v2063, 16
      %v2210 = vrot.slane %v2208, 5
      %v2211 = vsel %vm259, %v2206, %v2210
      %v2212 = vshrl.u32 %v2063, 16
      %v2214 = vrot.slane %v2212, 4
      %v2215 = vor.u32 %v2214, %v2210
      %v2216 = vrot.slane %v2215, 4
      %v2218 = vshll.u32 %v2064, 16
      %v2220 = vrot.slane %v2218, 5
      %v2221 = vsel %vm259, %v2216, %v2220
      %v2223 = vshrl.u32 %v2065, 16
      %v2225 = vrot.slane %v2223, 4
      %v2226 = vshll.u32 %v2065, 16
      %v2228 = vrot.slane %v2226, 5
      %v2229 = vor.u32 %v2225, %v2228
      %v2230 = vrot.slane %v2229, 4
      %v2232 = vshll.u32 %v2066, 16
      %v2234 = vrot.slane %v2232, 5
      %v2235 = vsel %vm259, %v2230, %v2234
      %v2236 = vshrl.u32 %v2066, 16
      %v2238 = vrot.slane %v2236, 4
      %v2239 = vor.u32 %v2238, %v2234
      %v2240 = vrot.slane %v2239, 4
      %v2242 = vshll.u32 %v2067, 16
      %v2244 = vrot.slane %v2242, 5
      %v2245 = vsel %vm259, %v2240, %v2244
      %v2246 = vshrl.u32 %v2067, 16
      %v2248 = vrot.slane %v2246, 4
      %v2249 = vor.u32 %v2248, %v2244
      %v2250 = vrot.slane %v2249, 4
      %v2252 = vshll.u32 %v2068, 16
      %v2254 = vrot.slane %v2252, 5
      %v2255 = vsel %vm259, %v2250, %v2254
      %v2256 = vshrl.u32 %v2068, 16
      %v2258 = vrot.slane %v2256, 4
      %v2259 = vor.u32 %v2258, %v2254
      %v2260 = vrot.slane %v2259, 4
      %v2262 = vshll.u32 %v2069, 16
      %v2264 = vrot.slane %v2262, 5
      %v2265 = vsel %vm259, %v2260, %v2264
      %v2267 = vshrl.u32 %v2070, 16
      %v2269 = vrot.slane %v2267, 4
      %v2270 = vshll.u32 %v2070, 16
      %v2272 = vrot.slane %v2270, 5
      %v2273 = vor.u32 %v2269, %v2272
      %v2274 = vrot.slane %v2273, 4
      %v2276 = vshll.u32 %v2071, 16
      %v2278 = vrot.slane %v2276, 5
      %v2279 = vsel %vm259, %v2274, %v2278
      %v2280 = vshrl.u32 %v2071, 16
      %v2282 = vrot.slane %v2280, 4
      %v2283 = vor.u32 %v2282, %v2278
      %v2284 = vrot.slane %v2283, 4
      %v2286 = vshll.u32 %v2072, 16
      %v2288 = vrot.slane %v2286, 5
      %v2289 = vsel %vm259, %v2284, %v2288
      %v2290 = vshrl.u32 %v2072, 16
      %v2292 = vrot.slane %v2290, 4
      %v2293 = vor.u32 %v2292, %v2288
      %v2294 = vrot.slane %v2293, 4
      %v2296 = vshll.u32 %v2073, 16
      %v2298 = vrot.slane %v2296, 5
      %v2299 = vsel %vm259, %v2294, %v2298
      %v2300 = vshrl.u32 %v2073, 16
      %v2302 = vrot.slane %v2300, 4
      %v2303 = vor.u32 %v2302, %v2298
      %v2304 = vrot.slane %v2303, 4
      %v2306 = vshll.u32 %v2074, 16
      %v2308 = vrot.slane %v2306, 5
      %v2309 = vsel %vm259, %v2304, %v2308
      %v2311 = vshrl.u32 %v2075, 16
      %v2313 = vrot.slane %v2311, 4
      %v2314 = vshll.u32 %v2075, 16
      %v2316 = vrot.slane %v2314, 5
      %v2317 = vor.u32 %v2313, %v2316
      %v2318 = vrot.slane %v2317, 4
      %v2320 = vshll.u32 %v2076, 16
      %v2322 = vrot.slane %v2320, 5
      %v2323 = vsel %vm259, %v2318, %v2322
      %v2324 = vshrl.u32 %v2076, 16
      %v2326 = vrot.slane %v2324, 4
      %v2327 = vor.u32 %v2326, %v2322
      %v2328 = vrot.slane %v2327, 4
      %v2330 = vshll.u32 %v2077, 16
      %v2332 = vrot.slane %v2330, 5
      %v2333 = vsel %vm259, %v2328, %v2332
      %v2334 = vshrl.u32 %v2077, 16
      %v2336 = vrot.slane %v2334, 4
      %v2337 = vor.u32 %v2336, %v2332
      %v2338 = vrot.slane %v2337, 4
      %v2340 = vshll.u32 %v2078, 16
      %v2342 = vrot.slane %v2340, 5
      %v2343 = vsel %vm259, %v2338, %v2342
      %v2344 = vshrl.u32 %v2078, 16
      %v2346 = vrot.slane %v2344, 4
      %v2347 = vor.u32 %v2346, %v2342
      %v2348 = vrot.slane %v2347, 4
      %v2350 = vshll.u32 %v2079, 16
      %v2352 = vrot.slane %v2350, 5
      %v2353 = vsel %vm259, %v2348, %v2352
      %v2355 = vshrl.u32 %v2080, 16
      %v2357 = vrot.slane %v2355, 4
      %v2358 = vshll.u32 %v2080, 16
      %v2360 = vrot.slane %v2358, 5
      %v2361 = vor.u32 %v2357, %v2360
      %v2362 = vrot.slane %v2361, 4
      %v2364 = vshll.u32 %v2081, 16
      %v2366 = vrot.slane %v2364, 5
      %v2367 = vsel %vm259, %v2362, %v2366
      %v2368 = vshrl.u32 %v2081, 16
      %v2370 = vrot.slane %v2368, 4
      %v2371 = vor.u32 %v2370, %v2366
      %v2372 = vrot.slane %v2371, 4
      %v2374 = vshll.u32 %v2082, 16
      %v2376 = vrot.slane %v2374, 5
      %v2377 = vsel %vm259, %v2372, %v2376
      %v2378 = vshrl.u32 %v2082, 16
      %v2380 = vrot.slane %v2378, 4
      %v2381 = vor.u32 %v2380, %v2376
      %v2382 = vrot.slane %v2381, 4
      %v2384 = vshll.u32 %v2083, 16
      %v2386 = vrot.slane %v2384, 5
      %v2387 = vsel %vm259, %v2382, %v2386
      %v2388 = vshrl.u32 %v2083, 16
      %v2390 = vrot.slane %v2388, 4
      %v2391 = vor.u32 %v2390, %v2386
      %v2392 = vrot.slane %v2391, 4
      %v2394 = vshll.u32 %v2084, 16
      %v2396 = vrot.slane %v2394, 5
      %v2397 = vsel %vm259, %v2392, %v2396
      %v2399 = vshrl.u32 %v2085, 16
      %v2401 = vrot.slane %v2399, 4
      %v2402 = vshll.u32 %v2085, 16
      %v2404 = vrot.slane %v2402, 5
      %v2405 = vor.u32 %v2401, %v2404
      %v2406 = vrot.slane %v2405, 4
      %v2408 = vshll.u32 %v2086, 16
      %v2410 = vrot.slane %v2408, 5
      %v2411 = vsel %vm259, %v2406, %v2410
      %v2412 = vshrl.u32 %v2086, 16
      %v2414 = vrot.slane %v2412, 4
      %v2415 = vor.u32 %v2414, %v2410
      %v2416 = vrot.slane %v2415, 4
      %v2418 = vshll.u32 %v2087, 16
      %v2420 = vrot.slane %v2418, 5
      %v2421 = vsel %vm259, %v2416, %v2420
      %v2422 = vshrl.u32 %v2087, 16
      %v2424 = vrot.slane %v2422, 4
      %v2425 = vor.u32 %v2424, %v2420
      %v2426 = vrot.slane %v2425, 4
      %v2428 = vshll.u32 %v2088, 16
      %v2430 = vrot.slane %v2428, 5
      %v2431 = vsel %vm259, %v2426, %v2430
      %v2432 = vshrl.u32 %v2088, 16
      %v2434 = vrot.slane %v2432, 4
      %v2435 = vor.u32 %v2434, %v2430
      %v2436 = vrot.slane %v2435, 4
      %v2438 = vshll.u32 %v2089, 16
      %v2440 = vrot.slane %v2438, 5
      %v2441 = vsel %vm259, %v2436, %v2440
      %s2442 = scalar_lea.vmem %s1, 256
      %v2443 = vld [vmem:[%s2442] sm:$0xf]
      %v2444 = vld [vmem:[%s2442 + $0x4] sm:$0xf]
      %v2445 = vld [vmem:[%s2442 + $0x8] sm:$0xf]
      %v2446 = vld [vmem:[%s2442 + $0xc] sm:$0xf]
      %v2447 = vld [vmem:[%s2442 + $0x10] sm:$0xf]
      %v2448 = vld [vmem:[%s2442 + $0x14] sm:$0xf]
      %v2449 = vld [vmem:[%s2442 + $0x18] sm:$0xf]
      %v2450 = vld [vmem:[%s2442 + $0x1c] sm:$0xf]
      %v2451 = vld [vmem:[%s2442 + $0x20] sm:$0xf]
      %v2452 = vld [vmem:[%s2442 + $0x24] sm:$0xf]
      %v2453 = vld [vmem:[%s2442 + $0x28] sm:$0xf]
      %v2454 = vld [vmem:[%s2442 + $0x2c] sm:$0xf]
      %v2455 = vld [vmem:[%s2442 + $0x30] sm:$0xf]
      %v2456 = vld [vmem:[%s2442 + $0x34] sm:$0xf]
      %v2457 = vld [vmem:[%s2442 + $0x38] sm:$0xf]
      %v2458 = vld [vmem:[%s2442 + $0x3c] sm:$0xf]
      %v2459 = vunpack.c.l.b16 %v2103
      %v2460 = vunpack.c.l.b16 %v2113
      %v2461 = vunpack.c.l.b16 %v2123
      %v2462 = vunpack.c.l.b16 %v2133
      %v2463 = vunpack.c.l.b16 %v2147
      %v2464 = vunpack.c.l.b16 %v2157
      %v2465 = vunpack.c.l.b16 %v2167
      %v2466 = vunpack.c.l.b16 %v2177
      %v2467 = vunpack.c.l.b16 %v2191
      %v2468 = vunpack.c.l.b16 %v2201
      %v2469 = vunpack.c.l.b16 %v2211
      %v2470 = vunpack.c.l.b16 %v2221
      %v2471 = vunpack.c.l.b16 %v2235
      %v2472 = vunpack.c.l.b16 %v2245
      %v2473 = vunpack.c.l.b16 %v2255
      %v2474 = vunpack.c.l.b16 %v2265
      %v2475 = vunpack.c.l.b16 %v2279
      %v2476 = vunpack.c.l.b16 %v2289
      %v2477 = vunpack.c.l.b16 %v2299
      %v2478 = vunpack.c.l.b16 %v2309
      %v2479 = vunpack.c.l.b16 %v2323
      %v2480 = vunpack.c.l.b16 %v2333
      %v2481 = vunpack.c.l.b16 %v2343
      %v2482 = vunpack.c.l.b16 %v2353
      %v2483 = vunpack.c.l.b16 %v2367
      %v2484 = vunpack.c.l.b16 %v2377
      %v2485 = vunpack.c.l.b16 %v2387
      %v2486 = vunpack.c.l.b16 %v2397
      %v2487 = vunpack.c.l.b16 %v2411
      %v2488 = vunpack.c.l.b16 %v2421
      %v2489 = vunpack.c.l.b16 %v2431
      %v2490 = vunpack.c.l.b16 %v2441
      %v2491 = vpack.c.b16 %v2460, %v2459
      %v2492 = vpack.c.b16 %v2462, %v2461
      %v2493 = vpack.c.b16 %v2464, %v2463
      %v2494 = vpack.c.b16 %v2466, %v2465
      %v2495 = vpack.c.b16 %v2468, %v2467
      %v2496 = vpack.c.b16 %v2470, %v2469
      %v2497 = vpack.c.b16 %v2472, %v2471
      %v2498 = vpack.c.b16 %v2474, %v2473
      %v2499 = vpack.c.b16 %v2476, %v2475
      %v2500 = vpack.c.b16 %v2478, %v2477
      %v2501 = vpack.c.b16 %v2480, %v2479
      %v2502 = vpack.c.b16 %v2482, %v2481
      %v2503 = vpack.c.b16 %v2484, %v2483
      %v2504 = vpack.c.b16 %v2486, %v2485
      %v2505 = vpack.c.b16 %v2488, %v2487
      %v2506 = vpack.c.b16 %v2490, %v2489
      %v2539 = vunpack.c.l.b16 %v2443
      %v2540 = vunpack.c.l.b16 %v2444
      %v2541 = vunpack.c.l.b16 %v2445
      %v2542 = vunpack.c.l.b16 %v2446
      %v2543 = vunpack.c.l.b16 %v2447
      %v2544 = vunpack.c.l.b16 %v2448
      %v2545 = vunpack.c.l.b16 %v2449
      %v2546 = vunpack.c.l.b16 %v2450
      %v2547 = vunpack.c.l.b16 %v2451
      %v2548 = vunpack.c.l.b16 %v2452
      %v2549 = vunpack.c.l.b16 %v2453
      %v2550 = vunpack.c.l.b16 %v2454
      %v2551 = vunpack.c.l.b16 %v2455
      %v2552 = vunpack.c.l.b16 %v2456
      %v2553 = vunpack.c.l.b16 %v2457
      %v2554 = vunpack.c.l.b16 %v2458
      %v2555 = vpack.c.b16 %v2540, %v2539
      %v2556 = vpack.c.b16 %v2542, %v2541
      %v2557 = vpack.c.b16 %v2544, %v2543
      %v2558 = vpack.c.b16 %v2546, %v2545
      %v2559 = vpack.c.b16 %v2548, %v2547
      %v2560 = vpack.c.b16 %v2550, %v2549
      %v2561 = vpack.c.b16 %v2552, %v2551
      %v2562 = vpack.c.b16 %v2554, %v2553
      %2571 = vmatprep.subr.bf16.mxu0 0
      %2572 = vmatpush1.bf16.msra.mxu0 %v2562
      %2573 = vmatprep.subr.bf16.mxu0 0
      %2574 = vmatpush1.bf16.msra.mxu0 %v2561
      %2575 = vmatprep.subr.bf16.mxu0 0
      %2576 = vmatpush1.bf16.msra.mxu0 %v2560
      %2577 = vmatprep.subr.bf16.mxu0 0
      %2578 = vmatpush1.bf16.msra.mxu0 %v2559
      %2579 = vmatprep.subr.bf16.mxu0 0
      %2580 = vmatpush1.bf16.msra.mxu0 %v2558
      %2581 = vmatprep.subr.bf16.mxu0 0
      %2582 = vmatpush1.bf16.msra.mxu0 %v2557
      %2583 = vmatprep.subr.bf16.mxu0 0
      %2584 = vmatpush1.bf16.msra.mxu0 %v2556
      %2585 = vmatprep.subr.bf16.mxu0 0
      %2586 = vmatpush1.bf16.msra.mxu0 %v2555
      %2587 = vmatprep.subr.bf16.mxu0 0
      %2588 = vmatpush2.bf16.msra.mxu0 0
      %2589 = vmatprep.subr.bf16.mxu0 0
      %2590 = vmatpush2.bf16.msra.mxu0 0
      %2591 = vmatprep.subr.bf16.mxu0 0
      %2592 = vmatpush2.bf16.msra.mxu0 0
      %2593 = vmatprep.subr.bf16.mxu0 0
      %2594 = vmatpush2.bf16.msra.mxu0 0
      %2595 = vmatprep.subr.bf16.mxu0 0
      %2596 = vmatpush2.bf16.msra.mxu0 0
      %2597 = vmatprep.subr.bf16.mxu0 0
      %2598 = vmatpush2.bf16.msra.mxu0 0
      %2599 = vmatprep.subr.bf16.mxu0 0
      %2600 = vmatpush2.bf16.msra.mxu0 0
      %2601 = vmatprep.subr.bf16.mxu0 0
      %2602 = vmatpush2.bf16.msra.mxu0 0
      %2603 = vmatprep.mubr.bf16.mxu0 0
      %2604 = vmatmul.mubr.bf16.gmra.mxu0 %v2491
      %v2605 = vpop.f32.mrf.mxu0
      %v2606 = vadd.f32 0.0, %v2605
      %v2607 = vpop.f32.mrf.mxu0
      %v2608 = vpop.f32.mrf.mxu0
      %v2609 = vadd.f32 0.0, %v2608
      %v2610 = vpop.f32.mrf.mxu0
      %2611 = vmatprep.mubr.bf16.mxu0 0
      %2612 = vmatmul.mubr.bf16.gmra.mxu0 %v2492
      %v2613 = vpop.f32.mrf.mxu0
      %v2614 = vadd.f32 0.0, %v2613
      %v2615 = vpop.f32.mrf.mxu0
      %v2616 = vpop.f32.mrf.mxu0
      %v2617 = vadd.f32 0.0, %v2616
      %v2618 = vpop.f32.mrf.mxu0
      %2619 = vmatprep.mubr.bf16.mxu0 0
      %2620 = vmatmul.mubr.bf16.gmra.mxu0 %v2493
      %v2621 = vpop.f32.mrf.mxu0
      %v2622 = vadd.f32 0.0, %v2621
      %v2623 = vpop.f32.mrf.mxu0
      %v2624 = vpop.f32.mrf.mxu0
      %v2625 = vadd.f32 0.0, %v2624
      %v2626 = vpop.f32.mrf.mxu0
      %2627 = vmatprep.mubr.bf16.mxu0 0
      %2628 = vmatmul.mubr.bf16.gmra.mxu0 %v2494
      %v2629 = vpop.f32.mrf.mxu0
      %v2630 = vadd.f32 0.0, %v2629
      %v2631 = vpop.f32.mrf.mxu0
      %v2632 = vpop.f32.mrf.mxu0
      %v2633 = vadd.f32 0.0, %v2632
      %v2634 = vpop.f32.mrf.mxu0
      %2635 = vmatprep.mubr.bf16.mxu0 0
      %2636 = vmatmul.mubr.bf16.gmra.mxu0 %v2495
      %v2637 = vpop.f32.mrf.mxu0
      %v2638 = vadd.f32 0.0, %v2637
      %v2639 = vpop.f32.mrf.mxu0
      %v2640 = vpop.f32.mrf.mxu0
      %v2641 = vadd.f32 0.0, %v2640
      %v2642 = vpop.f32.mrf.mxu0
      %2643 = vmatprep.mubr.bf16.mxu0 0
      %2644 = vmatmul.mubr.bf16.gmra.mxu0 %v2496
      %v2645 = vpop.f32.mrf.mxu0
      %v2646 = vadd.f32 0.0, %v2645
      %v2647 = vpop.f32.mrf.mxu0
      %v2648 = vpop.f32.mrf.mxu0
      %v2649 = vadd.f32 0.0, %v2648
      %v2650 = vpop.f32.mrf.mxu0
      %2651 = vmatprep.mubr.bf16.mxu0 0
      %2652 = vmatmul.mubr.bf16.gmra.mxu0 %v2497
      %v2653 = vpop.f32.mrf.mxu0
      %v2654 = vadd.f32 0.0, %v2653
      %v2655 = vpop.f32.mrf.mxu0
      %v2656 = vpop.f32.mrf.mxu0
      %v2657 = vadd.f32 0.0, %v2656
      %v2658 = vpop.f32.mrf.mxu0
      %2659 = vmatprep.mubr.bf16.mxu0 0
      %2660 = vmatmul.mubr.bf16.gmra.mxu0 %v2498
      %v2661 = vpop.f32.mrf.mxu0
      %v2662 = vadd.f32 0.0, %v2661
      %v2663 = vpop.f32.mrf.mxu0
      %v2664 = vpop.f32.mrf.mxu0
      %v2665 = vadd.f32 0.0, %v2664
      %v2666 = vpop.f32.mrf.mxu0
      %2667 = vmatprep.mubr.bf16.mxu0 0
      %2668 = vmatmul.mubr.bf16.gmra.mxu0 %v2499
      %v2669 = vpop.f32.mrf.mxu0
      %v2670 = vadd.f32 0.0, %v2669
      %v2671 = vpop.f32.mrf.mxu0
      %v2672 = vpop.f32.mrf.mxu0
      %v2673 = vadd.f32 0.0, %v2672
      %v2674 = vpop.f32.mrf.mxu0
      %2675 = vmatprep.mubr.bf16.mxu0 0
      %2676 = vmatmul.mubr.bf16.gmra.mxu0 %v2500
      %v2677 = vpop.f32.mrf.mxu0
      %v2678 = vadd.f32 0.0, %v2677
      %v2679 = vpop.f32.mrf.mxu0
      %v2680 = vpop.f32.mrf.mxu0
      %v2681 = vadd.f32 0.0, %v2680
      %v2682 = vpop.f32.mrf.mxu0
      %2683 = vmatprep.mubr.bf16.mxu0 0
      %2684 = vmatmul.mubr.bf16.gmra.mxu0 %v2501
      %v2685 = vpop.f32.mrf.mxu0
      %v2686 = vadd.f32 0.0, %v2685
      %v2687 = vpop.f32.mrf.mxu0
      %v2688 = vpop.f32.mrf.mxu0
      %v2689 = vadd.f32 0.0, %v2688
      %v2690 = vpop.f32.mrf.mxu0
      %2691 = vmatprep.mubr.bf16.mxu0 0
      %2692 = vmatmul.mubr.bf16.gmra.mxu0 %v2502
      %v2693 = vpop.f32.mrf.mxu0
      %v2694 = vadd.f32 0.0, %v2693
      %v2695 = vpop.f32.mrf.mxu0
      %v2696 = vpop.f32.mrf.mxu0
      %v2697 = vadd.f32 0.0, %v2696
      %v2698 = vpop.f32.mrf.mxu0
      %2699 = vmatprep.mubr.bf16.mxu0 0
      %2700 = vmatmul.mubr.bf16.gmra.mxu0 %v2503
      %v2701 = vpop.f32.mrf.mxu0
      %v2702 = vadd.f32 0.0, %v2701
      %v2703 = vpop.f32.mrf.mxu0
      %v2704 = vpop.f32.mrf.mxu0
      %v2705 = vadd.f32 0.0, %v2704
      %v2706 = vpop.f32.mrf.mxu0
      %2707 = vmatprep.mubr.bf16.mxu0 0
      %2708 = vmatmul.mubr.bf16.gmra.mxu0 %v2504
      %v2709 = vpop.f32.mrf.mxu0
      %v2710 = vadd.f32 0.0, %v2709
      %v2711 = vpop.f32.mrf.mxu0
      %v2712 = vpop.f32.mrf.mxu0
      %v2713 = vadd.f32 0.0, %v2712
      %v2714 = vpop.f32.mrf.mxu0
      %2715 = vmatprep.mubr.bf16.mxu0 0
      %2716 = vmatmul.mubr.bf16.gmra.mxu0 %v2505
      %v2717 = vpop.f32.mrf.mxu0
      %v2718 = vadd.f32 0.0, %v2717
      %v2719 = vpop.f32.mrf.mxu0
      %v2720 = vpop.f32.mrf.mxu0
      %v2721 = vadd.f32 0.0, %v2720
      %v2722 = vpop.f32.mrf.mxu0
      %2723 = vmatprep.mubr.bf16.mxu0 0
      %2724 = vmatmul.mubr.bf16.gmra.mxu0 %v2506
      %v2725 = vpop.f32.mrf.mxu0
      %v2726 = vadd.f32 0.0, %v2725
      %v2727 = vpop.f32.mrf.mxu0
      %v2728 = vpop.f32.mrf.mxu0
      %v2729 = vadd.f32 0.0, %v2728
      %v2730 = vpop.f32.mrf.mxu0
      %2731 = vdwg.mxu0
      %v2732 = vadd.f32 %v2018, %v2606
      %v2733 = vadd.f32 %v2019, %v2609
      %v2734 = vadd.f32 %v2020, %v2614
      %v2735 = vadd.f32 %v2021, %v2617
      %v2736 = vadd.f32 %v2022, %v2622
      %v2737 = vadd.f32 %v2023, %v2625
      %v2738 = vadd.f32 %v2024, %v2630
      %v2739 = vadd.f32 %v2025, %v2633
      %v2740 = vadd.f32 %v2026, %v2638
      %v2741 = vadd.f32 %v2027, %v2641
      %v2742 = vadd.f32 %v2028, %v2646
      %v2743 = vadd.f32 %v2029, %v2649
      %v2744 = vadd.f32 %v2030, %v2654
      %v2745 = vadd.f32 %v2031, %v2657
      %v2746 = vadd.f32 %v2032, %v2662
      %v2747 = vadd.f32 %v2033, %v2665
      %v2748 = vadd.f32 %v2034, %v2670
      %v2749 = vadd.f32 %v2035, %v2673
      %v2750 = vadd.f32 %v2036, %v2678
      %v2751 = vadd.f32 %v2037, %v2681
      %v2752 = vadd.f32 %v2038, %v2686
      %v2753 = vadd.f32 %v2039, %v2689
      %v2754 = vadd.f32 %v2040, %v2694
      %v2755 = vadd.f32 %v2041, %v2697
      %v2756 = vadd.f32 %v2042, %v2702
      %v2757 = vadd.f32 %v2043, %v2705
      %v2758 = vadd.f32 %v2044, %v2710
      %v2759 = vadd.f32 %v2045, %v2713
      %v2760 = vadd.f32 %v2046, %v2718
      %v2761 = vadd.f32 %v2047, %v2721
      %v2762 = vadd.f32 %v2048, %v2726
      %v2763 = vadd.f32 %v2049, %v2729
      %v2764 = vld [vmem:[%s1663] sm:$0xe]
      %v2765 = vld [vmem:[%s1663 + $0x14] sm:$0xe]
      %v2766 = vld [vmem:[%s1663 + $0x28] sm:$0xe]
      %v2767 = vld [vmem:[%s1663 + $0x3c] sm:$0xe]
      %v2768 = vld [vmem:[%s1663 + $0x50] sm:$0xe]
      %v2769 = vld [vmem:[%s1663 + $0x64] sm:$0xe]
      %v2770 = vld [vmem:[%s1663 + $0x78] sm:$0xe]
      %v2771 = vld [vmem:[%s1663 + $0x8c] sm:$0xe]
      %v2812 = vrot.slane %v2764, 5
      %v2813 = vrot.slane %v2812, 4
      %v2814 = vrot.slane %v2051, 5
      %v2815 = vsel %vm1233, %v2813, %v2814
      %v2816 = vrot.slane %v2814, 4
      %v2817 = vrot.slane %v2052, 5
      %v2818 = vsel %vm1233, %v2816, %v2817
      %v2819 = vrot.slane %v2817, 4
      %v2820 = vrot.slane %v2053, 5
      %v2821 = vsel %vm1233, %v2819, %v2820
      %v2822 = vrot.slane %v2820, 4
      %v2823 = vrot.slane %v2054, 5
      %v2824 = vsel %vm1233, %v2822, %v2823
      %v2825 = vrot.slane %v2765, 5
      %v2826 = vrot.slane %v2825, 4
      %v2827 = vrot.slane %v2056, 5
      %v2828 = vsel %vm1233, %v2826, %v2827
      %v2829 = vrot.slane %v2827, 4
      %v2830 = vrot.slane %v2057, 5
      %v2831 = vsel %vm1233, %v2829, %v2830
      %v2832 = vrot.slane %v2830, 4
      %v2833 = vrot.slane %v2058, 5
      %v2834 = vsel %vm1233, %v2832, %v2833
      %v2835 = vrot.slane %v2833, 4
      %v2836 = vrot.slane %v2059, 5
      %v2837 = vsel %vm1233, %v2835, %v2836
      %v2838 = vrot.slane %v2766, 5
      %v2839 = vrot.slane %v2838, 4
      %v2840 = vrot.slane %v2061, 5
      %v2841 = vsel %vm1233, %v2839, %v2840
      %v2842 = vrot.slane %v2840, 4
      %v2843 = vrot.slane %v2062, 5
      %v2844 = vsel %vm1233, %v2842, %v2843
      %v2845 = vrot.slane %v2843, 4
      %v2846 = vrot.slane %v2063, 5
      %v2847 = vsel %vm1233, %v2845, %v2846
      %v2848 = vrot.slane %v2846, 4
      %v2849 = vrot.slane %v2064, 5
      %v2850 = vsel %vm1233, %v2848, %v2849
      %v2851 = vrot.slane %v2767, 5
      %v2852 = vrot.slane %v2851, 4
      %v2853 = vrot.slane %v2066, 5
      %v2854 = vsel %vm1233, %v2852, %v2853
      %v2855 = vrot.slane %v2853, 4
      %v2856 = vrot.slane %v2067, 5
      %v2857 = vsel %vm1233, %v2855, %v2856
      %v2858 = vrot.slane %v2856, 4
      %v2859 = vrot.slane %v2068, 5
      %v2860 = vsel %vm1233, %v2858, %v2859
      %v2861 = vrot.slane %v2859, 4
      %v2862 = vrot.slane %v2069, 5
      %v2863 = vsel %vm1233, %v2861, %v2862
      %v2864 = vrot.slane %v2768, 5
      %v2865 = vrot.slane %v2864, 4
      %v2866 = vrot.slane %v2071, 5
      %v2867 = vsel %vm1233, %v2865, %v2866
      %v2868 = vrot.slane %v2866, 4
      %v2869 = vrot.slane %v2072, 5
      %v2870 = vsel %vm1233, %v2868, %v2869
      %v2871 = vrot.slane %v2869, 4
      %v2872 = vrot.slane %v2073, 5
      %v2873 = vsel %vm1233, %v2871, %v2872
      %v2874 = vrot.slane %v2872, 4
      %v2875 = vrot.slane %v2074, 5
      %v2876 = vsel %vm1233, %v2874, %v2875
      %v2877 = vrot.slane %v2769, 5
      %v2878 = vrot.slane %v2877, 4
      %v2879 = vrot.slane %v2076, 5
      %v2880 = vsel %vm1233, %v2878, %v2879
      %v2881 = vrot.slane %v2879, 4
      %v2882 = vrot.slane %v2077, 5
      %v2883 = vsel %vm1233, %v2881, %v2882
      %v2884 = vrot.slane %v2882, 4
      %v2885 = vrot.slane %v2078, 5
      %v2886 = vsel %vm1233, %v2884, %v2885
      %v2887 = vrot.slane %v2885, 4
      %v2888 = vrot.slane %v2079, 5
      %v2889 = vsel %vm1233, %v2887, %v2888
      %v2890 = vrot.slane %v2770, 5
      %v2891 = vrot.slane %v2890, 4
      %v2892 = vrot.slane %v2081, 5
      %v2893 = vsel %vm1233, %v2891, %v2892
      %v2894 = vrot.slane %v2892, 4
      %v2895 = vrot.slane %v2082, 5
      %v2896 = vsel %vm1233, %v2894, %v2895
      %v2897 = vrot.slane %v2895, 4
      %v2898 = vrot.slane %v2083, 5
      %v2899 = vsel %vm1233, %v2897, %v2898
      %v2900 = vrot.slane %v2898, 4
      %v2901 = vrot.slane %v2084, 5
      %v2902 = vsel %vm1233, %v2900, %v2901
      %v2903 = vrot.slane %v2771, 5
      %v2904 = vrot.slane %v2903, 4
      %v2905 = vrot.slane %v2086, 5
      %v2906 = vsel %vm1233, %v2904, %v2905
      %v2907 = vrot.slane %v2905, 4
      %v2908 = vrot.slane %v2087, 5
      %v2909 = vsel %vm1233, %v2907, %v2908
      %v2910 = vrot.slane %v2908, 4
      %v2911 = vrot.slane %v2088, 5
      %v2912 = vsel %vm1233, %v2910, %v2911
      %v2913 = vrot.slane %v2911, 4
      %v2914 = vrot.slane %v2089, 5
      %v2915 = vsel %vm1233, %v2913, %v2914
      %s2916 = scalar_lea.vmem %s1, 320
      %v2917 = vld [vmem:[%s2916] sm:$0xf]
      %v2918 = vld [vmem:[%s2916 + $0x4] sm:$0xf]
      %v2919 = vld [vmem:[%s2916 + $0x8] sm:$0xf]
      %v2920 = vld [vmem:[%s2916 + $0xc] sm:$0xf]
      %v2921 = vld [vmem:[%s2916 + $0x10] sm:$0xf]
      %v2922 = vld [vmem:[%s2916 + $0x14] sm:$0xf]
      %v2923 = vld [vmem:[%s2916 + $0x18] sm:$0xf]
      %v2924 = vld [vmem:[%s2916 + $0x1c] sm:$0xf]
      %v2925 = vld [vmem:[%s2916 + $0x20] sm:$0xf]
      %v2926 = vld [vmem:[%s2916 + $0x24] sm:$0xf]
      %v2927 = vld [vmem:[%s2916 + $0x28] sm:$0xf]
      %v2928 = vld [vmem:[%s2916 + $0x2c] sm:$0xf]
      %v2929 = vld [vmem:[%s2916 + $0x30] sm:$0xf]
      %v2930 = vld [vmem:[%s2916 + $0x34] sm:$0xf]
      %v2931 = vld [vmem:[%s2916 + $0x38] sm:$0xf]
      %v2932 = vld [vmem:[%s2916 + $0x3c] sm:$0xf]
      %v2933 = vunpack.c.l.b16 %v2815
      %v2934 = vunpack.c.l.b16 %v2818
      %v2935 = vunpack.c.l.b16 %v2821
      %v2936 = vunpack.c.l.b16 %v2824
      %v2937 = vunpack.c.l.b16 %v2828
      %v2938 = vunpack.c.l.b16 %v2831
      %v2939 = vunpack.c.l.b16 %v2834
      %v2940 = vunpack.c.l.b16 %v2837
      %v2941 = vunpack.c.l.b16 %v2841
      %v2942 = vunpack.c.l.b16 %v2844
      %v2943 = vunpack.c.l.b16 %v2847
      %v2944 = vunpack.c.l.b16 %v2850
      %v2945 = vunpack.c.l.b16 %v2854
      %v2946 = vunpack.c.l.b16 %v2857
      %v2947 = vunpack.c.l.b16 %v2860
      %v2948 = vunpack.c.l.b16 %v2863
      %v2949 = vunpack.c.l.b16 %v2867
      %v2950 = vunpack.c.l.b16 %v2870
      %v2951 = vunpack.c.l.b16 %v2873
      %v2952 = vunpack.c.l.b16 %v2876
      %v2953 = vunpack.c.l.b16 %v2880
      %v2954 = vunpack.c.l.b16 %v2883
      %v2955 = vunpack.c.l.b16 %v2886
      %v2956 = vunpack.c.l.b16 %v2889
      %v2957 = vunpack.c.l.b16 %v2893
      %v2958 = vunpack.c.l.b16 %v2896
      %v2959 = vunpack.c.l.b16 %v2899
      %v2960 = vunpack.c.l.b16 %v2902
      %v2961 = vunpack.c.l.b16 %v2906
      %v2962 = vunpack.c.l.b16 %v2909
      %v2963 = vunpack.c.l.b16 %v2912
      %v2964 = vunpack.c.l.b16 %v2915
      %v2965 = vpack.c.b16 %v2934, %v2933
      %v2966 = vpack.c.b16 %v2936, %v2935
      %v2967 = vpack.c.b16 %v2938, %v2937
      %v2968 = vpack.c.b16 %v2940, %v2939
      %v2969 = vpack.c.b16 %v2942, %v2941
      %v2970 = vpack.c.b16 %v2944, %v2943
      %v2971 = vpack.c.b16 %v2946, %v2945
      %v2972 = vpack.c.b16 %v2948, %v2947
      %v2973 = vpack.c.b16 %v2950, %v2949
      %v2974 = vpack.c.b16 %v2952, %v2951
      %v2975 = vpack.c.b16 %v2954, %v2953
      %v2976 = vpack.c.b16 %v2956, %v2955
      %v2977 = vpack.c.b16 %v2958, %v2957
      %v2978 = vpack.c.b16 %v2960, %v2959
      %v2979 = vpack.c.b16 %v2962, %v2961
      %v2980 = vpack.c.b16 %v2964, %v2963
      %v3013 = vunpack.c.l.b16 %v2917
      %v3014 = vunpack.c.l.b16 %v2918
      %v3015 = vunpack.c.l.b16 %v2919
      %v3016 = vunpack.c.l.b16 %v2920
      %v3017 = vunpack.c.l.b16 %v2921
      %v3018 = vunpack.c.l.b16 %v2922
      %v3019 = vunpack.c.l.b16 %v2923
      %v3020 = vunpack.c.l.b16 %v2924
      %v3021 = vunpack.c.l.b16 %v2925
      %v3022 = vunpack.c.l.b16 %v2926
      %v3023 = vunpack.c.l.b16 %v2927
      %v3024 = vunpack.c.l.b16 %v2928
      %v3025 = vunpack.c.l.b16 %v2929
      %v3026 = vunpack.c.l.b16 %v2930
      %v3027 = vunpack.c.l.b16 %v2931
      %v3028 = vunpack.c.l.b16 %v2932
      %v3029 = vpack.c.b16 %v3014, %v3013
      %v3030 = vpack.c.b16 %v3016, %v3015
      %v3031 = vpack.c.b16 %v3018, %v3017
      %v3032 = vpack.c.b16 %v3020, %v3019
      %v3033 = vpack.c.b16 %v3022, %v3021
      %v3034 = vpack.c.b16 %v3024, %v3023
      %v3035 = vpack.c.b16 %v3026, %v3025
      %v3036 = vpack.c.b16 %v3028, %v3027
      %3045 = vmatprep.subr.bf16.mxu0 0
      %3046 = vmatpush1.bf16.msra.mxu0 %v3036
      %3047 = vmatprep.subr.bf16.mxu0 0
      %3048 = vmatpush1.bf16.msra.mxu0 %v3035
      %3049 = vmatprep.subr.bf16.mxu0 0
      %3050 = vmatpush1.bf16.msra.mxu0 %v3034
      %3051 = vmatprep.subr.bf16.mxu0 0
      %3052 = vmatpush1.bf16.msra.mxu0 %v3033
      %3053 = vmatprep.subr.bf16.mxu0 0
      %3054 = vmatpush1.bf16.msra.mxu0 %v3032
      %3055 = vmatprep.subr.bf16.mxu0 0
      %3056 = vmatpush1.bf16.msra.mxu0 %v3031
      %3057 = vmatprep.subr.bf16.mxu0 0
      %3058 = vmatpush1.bf16.msra.mxu0 %v3030
      %3059 = vmatprep.subr.bf16.mxu0 0
      %3060 = vmatpush1.bf16.msra.mxu0 %v3029
      %3061 = vmatprep.subr.bf16.mxu0 0
      %3062 = vmatpush2.bf16.msra.mxu0 0
      %3063 = vmatprep.subr.bf16.mxu0 0
      %3064 = vmatpush2.bf16.msra.mxu0 0
      %3065 = vmatprep.subr.bf16.mxu0 0
      %3066 = vmatpush2.bf16.msra.mxu0 0
      %3067 = vmatprep.subr.bf16.mxu0 0
      %3068 = vmatpush2.bf16.msra.mxu0 0
      %3069 = vmatprep.subr.bf16.mxu0 0
      %3070 = vmatpush2.bf16.msra.mxu0 0
      %3071 = vmatprep.subr.bf16.mxu0 0
      %3072 = vmatpush2.bf16.msra.mxu0 0
      %3073 = vmatprep.subr.bf16.mxu0 0
      %3074 = vmatpush2.bf16.msra.mxu0 0
      %3075 = vmatprep.subr.bf16.mxu0 0
      %3076 = vmatpush2.bf16.msra.mxu0 0
      %3077 = vmatprep.mubr.bf16.mxu0 0
      %3078 = vmatmul.mubr.bf16.gmra.mxu0 %v2965
      %v3079 = vpop.f32.mrf.mxu0
      %v3080 = vadd.f32 0.0, %v3079
      %v3081 = vpop.f32.mrf.mxu0
      %v3082 = vpop.f32.mrf.mxu0
      %v3083 = vadd.f32 0.0, %v3082
      %v3084 = vpop.f32.mrf.mxu0
      %3085 = vmatprep.mubr.bf16.mxu0 0
      %3086 = vmatmul.mubr.bf16.gmra.mxu0 %v2966
      %v3087 = vpop.f32.mrf.mxu0
      %v3088 = vadd.f32 0.0, %v3087
      %v3089 = vpop.f32.mrf.mxu0
      %v3090 = vpop.f32.mrf.mxu0
      %v3091 = vadd.f32 0.0, %v3090
      %v3092 = vpop.f32.mrf.mxu0
      %3093 = vmatprep.mubr.bf16.mxu0 0
      %3094 = vmatmul.mubr.bf16.gmra.mxu0 %v2967
      %v3095 = vpop.f32.mrf.mxu0
      %v3096 = vadd.f32 0.0, %v3095
      %v3097 = vpop.f32.mrf.mxu0
      %v3098 = vpop.f32.mrf.mxu0
      %v3099 = vadd.f32 0.0, %v3098
      %v3100 = vpop.f32.mrf.mxu0
      %3101 = vmatprep.mubr.bf16.mxu0 0
      %3102 = vmatmul.mubr.bf16.gmra.mxu0 %v2968
      %v3103 = vpop.f32.mrf.mxu0
      %v3104 = vadd.f32 0.0, %v3103
      %v3105 = vpop.f32.mrf.mxu0
      %v3106 = vpop.f32.mrf.mxu0
      %v3107 = vadd.f32 0.0, %v3106
      %v3108 = vpop.f32.mrf.mxu0
      %3109 = vmatprep.mubr.bf16.mxu0 0
      %3110 = vmatmul.mubr.bf16.gmra.mxu0 %v2969
      %v3111 = vpop.f32.mrf.mxu0
      %v3112 = vadd.f32 0.0, %v3111
      %v3113 = vpop.f32.mrf.mxu0
      %v3114 = vpop.f32.mrf.mxu0
      %v3115 = vadd.f32 0.0, %v3114
      %v3116 = vpop.f32.mrf.mxu0
      %3117 = vmatprep.mubr.bf16.mxu0 0
      %3118 = vmatmul.mubr.bf16.gmra.mxu0 %v2970
      %v3119 = vpop.f32.mrf.mxu0
      %v3120 = vadd.f32 0.0, %v3119
      %v3121 = vpop.f32.mrf.mxu0
      %v3122 = vpop.f32.mrf.mxu0
      %v3123 = vadd.f32 0.0, %v3122
      %v3124 = vpop.f32.mrf.mxu0
      %3125 = vmatprep.mubr.bf16.mxu0 0
      %3126 = vmatmul.mubr.bf16.gmra.mxu0 %v2971
      %v3127 = vpop.f32.mrf.mxu0
      %v3128 = vadd.f32 0.0, %v3127
      %v3129 = vpop.f32.mrf.mxu0
      %v3130 = vpop.f32.mrf.mxu0
      %v3131 = vadd.f32 0.0, %v3130
      %v3132 = vpop.f32.mrf.mxu0
      %3133 = vmatprep.mubr.bf16.mxu0 0
      %3134 = vmatmul.mubr.bf16.gmra.mxu0 %v2972
      %v3135 = vpop.f32.mrf.mxu0
      %v3136 = vadd.f32 0.0, %v3135
      %v3137 = vpop.f32.mrf.mxu0
      %v3138 = vpop.f32.mrf.mxu0
      %v3139 = vadd.f32 0.0, %v3138
      %v3140 = vpop.f32.mrf.mxu0
      %3141 = vmatprep.mubr.bf16.mxu0 0
      %3142 = vmatmul.mubr.bf16.gmra.mxu0 %v2973
      %v3143 = vpop.f32.mrf.mxu0
      %v3144 = vadd.f32 0.0, %v3143
      %v3145 = vpop.f32.mrf.mxu0
      %v3146 = vpop.f32.mrf.mxu0
      %v3147 = vadd.f32 0.0, %v3146
      %v3148 = vpop.f32.mrf.mxu0
      %3149 = vmatprep.mubr.bf16.mxu0 0
      %3150 = vmatmul.mubr.bf16.gmra.mxu0 %v2974
      %v3151 = vpop.f32.mrf.mxu0
      %v3152 = vadd.f32 0.0, %v3151
      %v3153 = vpop.f32.mrf.mxu0
      %v3154 = vpop.f32.mrf.mxu0
      %v3155 = vadd.f32 0.0, %v3154
      %v3156 = vpop.f32.mrf.mxu0
      %3157 = vmatprep.mubr.bf16.mxu0 0
      %3158 = vmatmul.mubr.bf16.gmra.mxu0 %v2975
      %v3159 = vpop.f32.mrf.mxu0
      %v3160 = vadd.f32 0.0, %v3159
      %v3161 = vpop.f32.mrf.mxu0
      %v3162 = vpop.f32.mrf.mxu0
      %v3163 = vadd.f32 0.0, %v3162
      %v3164 = vpop.f32.mrf.mxu0
      %3165 = vmatprep.mubr.bf16.mxu0 0
      %3166 = vmatmul.mubr.bf16.gmra.mxu0 %v2976
      %v3167 = vpop.f32.mrf.mxu0
      %v3168 = vadd.f32 0.0, %v3167
      %v3169 = vpop.f32.mrf.mxu0
      %v3170 = vpop.f32.mrf.mxu0
      %v3171 = vadd.f32 0.0, %v3170
      %v3172 = vpop.f32.mrf.mxu0
      %3173 = vmatprep.mubr.bf16.mxu0 0
      %3174 = vmatmul.mubr.bf16.gmra.mxu0 %v2977
      %v3175 = vpop.f32.mrf.mxu0
      %v3176 = vadd.f32 0.0, %v3175
      %v3177 = vpop.f32.mrf.mxu0
      %v3178 = vpop.f32.mrf.mxu0
      %v3179 = vadd.f32 0.0, %v3178
      %v3180 = vpop.f32.mrf.mxu0
      %3181 = vmatprep.mubr.bf16.mxu0 0
      %3182 = vmatmul.mubr.bf16.gmra.mxu0 %v2978
      %v3183 = vpop.f32.mrf.mxu0
      %v3184 = vadd.f32 0.0, %v3183
      %v3185 = vpop.f32.mrf.mxu0
      %v3186 = vpop.f32.mrf.mxu0
      %v3187 = vadd.f32 0.0, %v3186
      %v3188 = vpop.f32.mrf.mxu0
      %3189 = vmatprep.mubr.bf16.mxu0 0
      %3190 = vmatmul.mubr.bf16.gmra.mxu0 %v2979
      %v3191 = vpop.f32.mrf.mxu0
      %v3192 = vadd.f32 0.0, %v3191
      %v3193 = vpop.f32.mrf.mxu0
      %v3194 = vpop.f32.mrf.mxu0
      %v3195 = vadd.f32 0.0, %v3194
      %v3196 = vpop.f32.mrf.mxu0
      %3197 = vmatprep.mubr.bf16.mxu0 0
      %3198 = vmatmul.mubr.bf16.gmra.mxu0 %v2980
      %v3199 = vpop.f32.mrf.mxu0
      %v3200 = vadd.f32 0.0, %v3199
      %v3201 = vpop.f32.mrf.mxu0
      %v3202 = vpop.f32.mrf.mxu0
      %v3203 = vadd.f32 0.0, %v3202
      %v3204 = vpop.f32.mrf.mxu0
      %3205 = vdwg.mxu0
      %v3206 = vadd.f32 %v2732, %v3080
      %v3207 = vadd.f32 %v2733, %v3083
      %v3208 = vadd.f32 %v2734, %v3088
      %v3209 = vadd.f32 %v2735, %v3091
      %v3210 = vadd.f32 %v2736, %v3096
      %v3211 = vadd.f32 %v2737, %v3099
      %v3212 = vadd.f32 %v2738, %v3104
      %v3213 = vadd.f32 %v2739, %v3107
      %v3214 = vadd.f32 %v2740, %v3112
      %v3215 = vadd.f32 %v2741, %v3115
      %v3216 = vadd.f32 %v2742, %v3120
      %v3217 = vadd.f32 %v2743, %v3123
      %v3218 = vadd.f32 %v2744, %v3128
      %v3219 = vadd.f32 %v2745, %v3131
      %v3220 = vadd.f32 %v2746, %v3136
      %v3221 = vadd.f32 %v2747, %v3139
      %v3222 = vadd.f32 %v2748, %v3144
      %v3223 = vadd.f32 %v2749, %v3147
      %v3224 = vadd.f32 %v2750, %v3152
      %v3225 = vadd.f32 %v2751, %v3155
      %v3226 = vadd.f32 %v2752, %v3160
      %v3227 = vadd.f32 %v2753, %v3163
      %v3228 = vadd.f32 %v2754, %v3168
      %v3229 = vadd.f32 %v2755, %v3171
      %v3230 = vadd.f32 %v2756, %v3176
      %v3231 = vadd.f32 %v2757, %v3179
      %v3232 = vadd.f32 %v2758, %v3184
      %v3233 = vadd.f32 %v2759, %v3187
      %v3234 = vadd.f32 %v2760, %v3192
      %v3235 = vadd.f32 %v2761, %v3195
      %v3236 = vadd.f32 %v2762, %v3200
      %v3237 = vadd.f32 %v2763, %v3203
      %s3238 = sadd.s32 %s197, 2
      %s3239 = smul.u32 %s3238, 5
      %s3240 = smul.addr %s3239, 4
      %s3241 = scalar_lea.vmem %s184, %s3240
      %v3242 = vld [vmem:[%s3241] sm:$0xf]
      %v3243 = vld [vmem:[%s3241 + $0x4] sm:$0xf]
      %v3244 = vld [vmem:[%s3241 + $0x8] sm:$0xf]
      %v3245 = vld [vmem:[%s3241 + $0xc] sm:$0xf]
      %v3246 = vld [vmem:[%s3241 + $0x14] sm:$0xf]
      %v3247 = vld [vmem:[%s3241 + $0x18] sm:$0xf]
      %v3248 = vld [vmem:[%s3241 + $0x1c] sm:$0xf]
      %v3249 = vld [vmem:[%s3241 + $0x20] sm:$0xf]
      %v3250 = vld [vmem:[%s3241 + $0x28] sm:$0xf]
      %v3251 = vld [vmem:[%s3241 + $0x2c] sm:$0xf]
      %v3252 = vld [vmem:[%s3241 + $0x30] sm:$0xf]
      %v3253 = vld [vmem:[%s3241 + $0x34] sm:$0xf]
      %v3254 = vld [vmem:[%s3241 + $0x3c] sm:$0xf]
      %v3255 = vld [vmem:[%s3241 + $0x40] sm:$0xf]
      %v3256 = vld [vmem:[%s3241 + $0x44] sm:$0xf]
      %v3257 = vld [vmem:[%s3241 + $0x48] sm:$0xf]
      %v3258 = vld [vmem:[%s3241 + $0x50] sm:$0xf]
      %v3259 = vld [vmem:[%s3241 + $0x54] sm:$0xf]
      %v3260 = vld [vmem:[%s3241 + $0x58] sm:$0xf]
      %v3261 = vld [vmem:[%s3241 + $0x5c] sm:$0xf]
      %v3262 = vld [vmem:[%s3241 + $0x64] sm:$0xf]
      %v3263 = vld [vmem:[%s3241 + $0x68] sm:$0xf]
      %v3264 = vld [vmem:[%s3241 + $0x6c] sm:$0xf]
      %v3265 = vld [vmem:[%s3241 + $0x70] sm:$0xf]
      %v3266 = vld [vmem:[%s3241 + $0x78] sm:$0xf]
      %v3267 = vld [vmem:[%s3241 + $0x7c] sm:$0xf]
      %v3268 = vld [vmem:[%s3241 + $0x80] sm:$0xf]
      %v3269 = vld [vmem:[%s3241 + $0x84] sm:$0xf]
      %v3270 = vld [vmem:[%s3241 + $0x8c] sm:$0xf]
      %v3271 = vld [vmem:[%s3241 + $0x90] sm:$0xf]
      %v3272 = vld [vmem:[%s3241 + $0x94] sm:$0xf]
      %v3273 = vld [vmem:[%s3241 + $0x98] sm:$0xf]
      %s3274 = scalar_lea.vmem %s1, 384
      %v3275 = vld [vmem:[%s3274] sm:$0xf]
      %v3276 = vld [vmem:[%s3274 + $0x4] sm:$0xf]
      %v3277 = vld [vmem:[%s3274 + $0x8] sm:$0xf]
      %v3278 = vld [vmem:[%s3274 + $0xc] sm:$0xf]
      %v3279 = vld [vmem:[%s3274 + $0x10] sm:$0xf]
      %v3280 = vld [vmem:[%s3274 + $0x14] sm:$0xf]
      %v3281 = vld [vmem:[%s3274 + $0x18] sm:$0xf]
      %v3282 = vld [vmem:[%s3274 + $0x1c] sm:$0xf]
      %v3283 = vld [vmem:[%s3274 + $0x20] sm:$0xf]
      %v3284 = vld [vmem:[%s3274 + $0x24] sm:$0xf]
      %v3285 = vld [vmem:[%s3274 + $0x28] sm:$0xf]
      %v3286 = vld [vmem:[%s3274 + $0x2c] sm:$0xf]
      %v3287 = vld [vmem:[%s3274 + $0x30] sm:$0xf]
      %v3288 = vld [vmem:[%s3274 + $0x34] sm:$0xf]
      %v3289 = vld [vmem:[%s3274 + $0x38] sm:$0xf]
      %v3290 = vld [vmem:[%s3274 + $0x3c] sm:$0xf]
      %v3323 = vunpack.c.l.b16 %v3242
      %v3324 = vunpack.c.l.b16 %v3243
      %v3325 = vunpack.c.l.b16 %v3244
      %v3326 = vunpack.c.l.b16 %v3245
      %v3327 = vunpack.c.l.b16 %v3246
      %v3328 = vunpack.c.l.b16 %v3247
      %v3329 = vunpack.c.l.b16 %v3248
      %v3330 = vunpack.c.l.b16 %v3249
      %v3331 = vunpack.c.l.b16 %v3250
      %v3332 = vunpack.c.l.b16 %v3251
      %v3333 = vunpack.c.l.b16 %v3252
      %v3334 = vunpack.c.l.b16 %v3253
      %v3335 = vunpack.c.l.b16 %v3254
      %v3336 = vunpack.c.l.b16 %v3255
      %v3337 = vunpack.c.l.b16 %v3256
      %v3338 = vunpack.c.l.b16 %v3257
      %v3339 = vunpack.c.l.b16 %v3258
      %v3340 = vunpack.c.l.b16 %v3259
      %v3341 = vunpack.c.l.b16 %v3260
      %v3342 = vunpack.c.l.b16 %v3261
      %v3343 = vunpack.c.l.b16 %v3262
      %v3344 = vunpack.c.l.b16 %v3263
      %v3345 = vunpack.c.l.b16 %v3264
      %v3346 = vunpack.c.l.b16 %v3265
      %v3347 = vunpack.c.l.b16 %v3266
      %v3348 = vunpack.c.l.b16 %v3267
      %v3349 = vunpack.c.l.b16 %v3268
      %v3350 = vunpack.c.l.b16 %v3269
      %v3351 = vunpack.c.l.b16 %v3270
      %v3352 = vunpack.c.l.b16 %v3271
      %v3353 = vunpack.c.l.b16 %v3272
      %v3354 = vunpack.c.l.b16 %v3273
      %v3355 = vpack.c.b16 %v3324, %v3323
      %v3356 = vpack.c.b16 %v3326, %v3325
      %v3357 = vpack.c.b16 %v3328, %v3327
      %v3358 = vpack.c.b16 %v3330, %v3329
      %v3359 = vpack.c.b16 %v3332, %v3331
      %v3360 = vpack.c.b16 %v3334, %v3333
      %v3361 = vpack.c.b16 %v3336, %v3335
      %v3362 = vpack.c.b16 %v3338, %v3337
      %v3363 = vpack.c.b16 %v3340, %v3339
      %v3364 = vpack.c.b16 %v3342, %v3341
      %v3365 = vpack.c.b16 %v3344, %v3343
      %v3366 = vpack.c.b16 %v3346, %v3345
      %v3367 = vpack.c.b16 %v3348, %v3347
      %v3368 = vpack.c.b16 %v3350, %v3349
      %v3369 = vpack.c.b16 %v3352, %v3351
      %v3370 = vpack.c.b16 %v3354, %v3353
      %v3403 = vunpack.c.l.b16 %v3275
      %v3404 = vunpack.c.l.b16 %v3276
      %v3405 = vunpack.c.l.b16 %v3277
      %v3406 = vunpack.c.l.b16 %v3278
      %v3407 = vunpack.c.l.b16 %v3279
      %v3408 = vunpack.c.l.b16 %v3280
      %v3409 = vunpack.c.l.b16 %v3281
      %v3410 = vunpack.c.l.b16 %v3282
      %v3411 = vunpack.c.l.b16 %v3283
      %v3412 = vunpack.c.l.b16 %v3284
      %v3413 = vunpack.c.l.b16 %v3285
      %v3414 = vunpack.c.l.b16 %v3286
      %v3415 = vunpack.c.l.b16 %v3287
      %v3416 = vunpack.c.l.b16 %v3288
      %v3417 = vunpack.c.l.b16 %v3289
      %v3418 = vunpack.c.l.b16 %v3290
      %v3419 = vpack.c.b16 %v3404, %v3403
      %v3420 = vpack.c.b16 %v3406, %v3405
      %v3421 = vpack.c.b16 %v3408, %v3407
      %v3422 = vpack.c.b16 %v3410, %v3409
      %v3423 = vpack.c.b16 %v3412, %v3411
      %v3424 = vpack.c.b16 %v3414, %v3413
      %v3425 = vpack.c.b16 %v3416, %v3415
      %v3426 = vpack.c.b16 %v3418, %v3417
      %3435 = vmatprep.subr.bf16.mxu0 0
      %3436 = vmatpush1.bf16.msra.mxu0 %v3426
      %3437 = vmatprep.subr.bf16.mxu0 0
      %3438 = vmatpush1.bf16.msra.mxu0 %v3425
      %3439 = vmatprep.subr.bf16.mxu0 0
      %3440 = vmatpush1.bf16.msra.mxu0 %v3424
      %3441 = vmatprep.subr.bf16.mxu0 0
      %3442 = vmatpush1.bf16.msra.mxu0 %v3423
      %3443 = vmatprep.subr.bf16.mxu0 0
      %3444 = vmatpush1.bf16.msra.mxu0 %v3422
      %3445 = vmatprep.subr.bf16.mxu0 0
      %3446 = vmatpush1.bf16.msra.mxu0 %v3421
      %3447 = vmatprep.subr.bf16.mxu0 0
      %3448 = vmatpush1.bf16.msra.mxu0 %v3420
      %3449 = vmatprep.subr.bf16.mxu0 0
      %3450 = vmatpush1.bf16.msra.mxu0 %v3419
      %3451 = vmatprep.subr.bf16.mxu0 0
      %3452 = vmatpush2.bf16.msra.mxu0 0
      %3453 = vmatprep.subr.bf16.mxu0 0
      %3454 = vmatpush2.bf16.msra.mxu0 0
      %3455 = vmatprep.subr.bf16.mxu0 0
      %3456 = vmatpush2.bf16.msra.mxu0 0
      %3457 = vmatprep.subr.bf16.mxu0 0
      %3458 = vmatpush2.bf16.msra.mxu0 0
      %3459 = vmatprep.subr.bf16.mxu0 0
      %3460 = vmatpush2.bf16.msra.mxu0 0
      %3461 = vmatprep.subr.bf16.mxu0 0
      %3462 = vmatpush2.bf16.msra.mxu0 0
      %3463 = vmatprep.subr.bf16.mxu0 0
      %3464 = vmatpush2.bf16.msra.mxu0 0
      %3465 = vmatprep.subr.bf16.mxu0 0
      %3466 = vmatpush2.bf16.msra.mxu0 0
      %3467 = vmatprep.mubr.bf16.mxu0 0
      %3468 = vmatmul.mubr.bf16.gmra.mxu0 %v3355
      %v3469 = vpop.f32.mrf.mxu0
      %v3470 = vadd.f32 0.0, %v3469
      %v3471 = vpop.f32.mrf.mxu0
      %v3472 = vpop.f32.mrf.mxu0
      %v3473 = vadd.f32 0.0, %v3472
      %v3474 = vpop.f32.mrf.mxu0
      %3475 = vmatprep.mubr.bf16.mxu0 0
      %3476 = vmatmul.mubr.bf16.gmra.mxu0 %v3356
      %v3477 = vpop.f32.mrf.mxu0
      %v3478 = vadd.f32 0.0, %v3477
      %v3479 = vpop.f32.mrf.mxu0
      %v3480 = vpop.f32.mrf.mxu0
      %v3481 = vadd.f32 0.0, %v3480
      %v3482 = vpop.f32.mrf.mxu0
      %3483 = vmatprep.mubr.bf16.mxu0 0
      %3484 = vmatmul.mubr.bf16.gmra.mxu0 %v3357
      %v3485 = vpop.f32.mrf.mxu0
      %v3486 = vadd.f32 0.0, %v3485
      %v3487 = vpop.f32.mrf.mxu0
      %v3488 = vpop.f32.mrf.mxu0
      %v3489 = vadd.f32 0.0, %v3488
      %v3490 = vpop.f32.mrf.mxu0
      %3491 = vmatprep.mubr.bf16.mxu0 0
      %3492 = vmatmul.mubr.bf16.gmra.mxu0 %v3358
      %v3493 = vpop.f32.mrf.mxu0
      %v3494 = vadd.f32 0.0, %v3493
      %v3495 = vpop.f32.mrf.mxu0
      %v3496 = vpop.f32.mrf.mxu0
      %v3497 = vadd.f32 0.0, %v3496
      %v3498 = vpop.f32.mrf.mxu0
      %3499 = vmatprep.mubr.bf16.mxu0 0
      %3500 = vmatmul.mubr.bf16.gmra.mxu0 %v3359
      %v3501 = vpop.f32.mrf.mxu0
      %v3502 = vadd.f32 0.0, %v3501
      %v3503 = vpop.f32.mrf.mxu0
      %v3504 = vpop.f32.mrf.mxu0
      %v3505 = vadd.f32 0.0, %v3504
      %v3506 = vpop.f32.mrf.mxu0
      %3507 = vmatprep.mubr.bf16.mxu0 0
      %3508 = vmatmul.mubr.bf16.gmra.mxu0 %v3360
      %v3509 = vpop.f32.mrf.mxu0
      %v3510 = vadd.f32 0.0, %v3509
      %v3511 = vpop.f32.mrf.mxu0
      %v3512 = vpop.f32.mrf.mxu0
      %v3513 = vadd.f32 0.0, %v3512
      %v3514 = vpop.f32.mrf.mxu0
      %3515 = vmatprep.mubr.bf16.mxu0 0
      %3516 = vmatmul.mubr.bf16.gmra.mxu0 %v3361
      %v3517 = vpop.f32.mrf.mxu0
      %v3518 = vadd.f32 0.0, %v3517
      %v3519 = vpop.f32.mrf.mxu0
      %v3520 = vpop.f32.mrf.mxu0
      %v3521 = vadd.f32 0.0, %v3520
      %v3522 = vpop.f32.mrf.mxu0
      %3523 = vmatprep.mubr.bf16.mxu0 0
      %3524 = vmatmul.mubr.bf16.gmra.mxu0 %v3362
      %v3525 = vpop.f32.mrf.mxu0
      %v3526 = vadd.f32 0.0, %v3525
      %v3527 = vpop.f32.mrf.mxu0
      %v3528 = vpop.f32.mrf.mxu0
      %v3529 = vadd.f32 0.0, %v3528
      %v3530 = vpop.f32.mrf.mxu0
      %3531 = vmatprep.mubr.bf16.mxu0 0
      %3532 = vmatmul.mubr.bf16.gmra.mxu0 %v3363
      %v3533 = vpop.f32.mrf.mxu0
      %v3534 = vadd.f32 0.0, %v3533
      %v3535 = vpop.f32.mrf.mxu0
      %v3536 = vpop.f32.mrf.mxu0
      %v3537 = vadd.f32 0.0, %v3536
      %v3538 = vpop.f32.mrf.mxu0
      %3539 = vmatprep.mubr.bf16.mxu0 0
      %3540 = vmatmul.mubr.bf16.gmra.mxu0 %v3364
      %v3541 = vpop.f32.mrf.mxu0
      %v3542 = vadd.f32 0.0, %v3541
      %v3543 = vpop.f32.mrf.mxu0
      %v3544 = vpop.f32.mrf.mxu0
      %v3545 = vadd.f32 0.0, %v3544
      %v3546 = vpop.f32.mrf.mxu0
      %3547 = vmatprep.mubr.bf16.mxu0 0
      %3548 = vmatmul.mubr.bf16.gmra.mxu0 %v3365
      %v3549 = vpop.f32.mrf.mxu0
      %v3550 = vadd.f32 0.0, %v3549
      %v3551 = vpop.f32.mrf.mxu0
      %v3552 = vpop.f32.mrf.mxu0
      %v3553 = vadd.f32 0.0, %v3552
      %v3554 = vpop.f32.mrf.mxu0
      %3555 = vmatprep.mubr.bf16.mxu0 0
      %3556 = vmatmul.mubr.bf16.gmra.mxu0 %v3366
      %v3557 = vpop.f32.mrf.mxu0
      %v3558 = vadd.f32 0.0, %v3557
      %v3559 = vpop.f32.mrf.mxu0
      %v3560 = vpop.f32.mrf.mxu0
      %v3561 = vadd.f32 0.0, %v3560
      %v3562 = vpop.f32.mrf.mxu0
      %3563 = vmatprep.mubr.bf16.mxu0 0
      %3564 = vmatmul.mubr.bf16.gmra.mxu0 %v3367
      %v3565 = vpop.f32.mrf.mxu0
      %v3566 = vadd.f32 0.0, %v3565
      %v3567 = vpop.f32.mrf.mxu0
      %v3568 = vpop.f32.mrf.mxu0
      %v3569 = vadd.f32 0.0, %v3568
      %v3570 = vpop.f32.mrf.mxu0
      %3571 = vmatprep.mubr.bf16.mxu0 0
      %3572 = vmatmul.mubr.bf16.gmra.mxu0 %v3368
      %v3573 = vpop.f32.mrf.mxu0
      %v3574 = vadd.f32 0.0, %v3573
      %v3575 = vpop.f32.mrf.mxu0
      %v3576 = vpop.f32.mrf.mxu0
      %v3577 = vadd.f32 0.0, %v3576
      %v3578 = vpop.f32.mrf.mxu0
      %3579 = vmatprep.mubr.bf16.mxu0 0
      %3580 = vmatmul.mubr.bf16.gmra.mxu0 %v3369
      %v3581 = vpop.f32.mrf.mxu0
      %v3582 = vadd.f32 0.0, %v3581
      %v3583 = vpop.f32.mrf.mxu0
      %v3584 = vpop.f32.mrf.mxu0
      %v3585 = vadd.f32 0.0, %v3584
      %v3586 = vpop.f32.mrf.mxu0
      %3587 = vmatprep.mubr.bf16.mxu0 0
      %3588 = vmatmul.mubr.bf16.gmra.mxu0 %v3370
      %v3589 = vpop.f32.mrf.mxu0
      %v3590 = vadd.f32 0.0, %v3589
      %v3591 = vpop.f32.mrf.mxu0
      %v3592 = vpop.f32.mrf.mxu0
      %v3593 = vadd.f32 0.0, %v3592
      %v3594 = vpop.f32.mrf.mxu0
      %3595 = vdwg.mxu0
      %v3596 = vadd.f32 %v3206, %v3470
      %v3597 = vadd.f32 %v3207, %v3473
      %v3598 = vadd.f32 %v3208, %v3478
      %v3599 = vadd.f32 %v3209, %v3481
      %v3600 = vadd.f32 %v3210, %v3486
      %v3601 = vadd.f32 %v3211, %v3489
      %v3602 = vadd.f32 %v3212, %v3494
      %v3603 = vadd.f32 %v3213, %v3497
      %v3604 = vadd.f32 %v3214, %v3502
      %v3605 = vadd.f32 %v3215, %v3505
      %v3606 = vadd.f32 %v3216, %v3510
      %v3607 = vadd.f32 %v3217, %v3513
      %v3608 = vadd.f32 %v3218, %v3518
      %v3609 = vadd.f32 %v3219, %v3521
      %v3610 = vadd.f32 %v3220, %v3526
      %v3611 = vadd.f32 %v3221, %v3529
      %v3612 = vadd.f32 %v3222, %v3534
      %v3613 = vadd.f32 %v3223, %v3537
      %v3614 = vadd.f32 %v3224, %v3542
      %v3615 = vadd.f32 %v3225, %v3545
      %v3616 = vadd.f32 %v3226, %v3550
      %v3617 = vadd.f32 %v3227, %v3553
      %v3618 = vadd.f32 %v3228, %v3558
      %v3619 = vadd.f32 %v3229, %v3561
      %v3620 = vadd.f32 %v3230, %v3566
      %v3621 = vadd.f32 %v3231, %v3569
      %v3622 = vadd.f32 %v3232, %v3574
      %v3623 = vadd.f32 %v3233, %v3577
      %v3624 = vadd.f32 %v3234, %v3582
      %v3625 = vadd.f32 %v3235, %v3585
      %v3626 = vadd.f32 %v3236, %v3590
      %v3627 = vadd.f32 %v3237, %v3593
      %v3628 = vld [vmem:[%s3241] sm:$0xf]
      %v3629 = vld [vmem:[%s3241 + $0x4] sm:$0xf]
      %v3630 = vld [vmem:[%s3241 + $0x8] sm:$0xf]
      %v3631 = vld [vmem:[%s3241 + $0xc] sm:$0xf]
      %v3632 = vld [vmem:[%s3241 + $0x10] sm:$0x1]
      %v3633 = vld [vmem:[%s3241 + $0x14] sm:$0xf]
      %v3634 = vld [vmem:[%s3241 + $0x18] sm:$0xf]
      %v3635 = vld [vmem:[%s3241 + $0x1c] sm:$0xf]
      %v3636 = vld [vmem:[%s3241 + $0x20] sm:$0xf]
      %v3637 = vld [vmem:[%s3241 + $0x24] sm:$0x1]
      %v3638 = vld [vmem:[%s3241 + $0x28] sm:$0xf]
      %v3639 = vld [vmem:[%s3241 + $0x2c] sm:$0xf]
      %v3640 = vld [vmem:[%s3241 + $0x30] sm:$0xf]
      %v3641 = vld [vmem:[%s3241 + $0x34] sm:$0xf]
      %v3642 = vld [vmem:[%s3241 + $0x38] sm:$0x1]
      %v3643 = vld [vmem:[%s3241 + $0x3c] sm:$0xf]
      %v3644 = vld [vmem:[%s3241 + $0x40] sm:$0xf]
      %v3645 = vld [vmem:[%s3241 + $0x44] sm:$0xf]
      %v3646 = vld [vmem:[%s3241 + $0x48] sm:$0xf]
      %v3647 = vld [vmem:[%s3241 + $0x4c] sm:$0x1]
      %v3648 = vld [vmem:[%s3241 + $0x50] sm:$0xf]
      %v3649 = vld [vmem:[%s3241 + $0x54] sm:$0xf]
      %v3650 = vld [vmem:[%s3241 + $0x58] sm:$0xf]
      %v3651 = vld [vmem:[%s3241 + $0x5c] sm:$0xf]
      %v3652 = vld [vmem:[%s3241 + $0x60] sm:$0x1]
      %v3653 = vld [vmem:[%s3241 + $0x64] sm:$0xf]
      %v3654 = vld [vmem:[%s3241 + $0x68] sm:$0xf]
      %v3655 = vld [vmem:[%s3241 + $0x6c] sm:$0xf]
      %v3656 = vld [vmem:[%s3241 + $0x70] sm:$0xf]
      %v3657 = vld [vmem:[%s3241 + $0x74] sm:$0x1]
      %v3658 = vld [vmem:[%s3241 + $0x78] sm:$0xf]
      %v3659 = vld [vmem:[%s3241 + $0x7c] sm:$0xf]
      %v3660 = vld [vmem:[%s3241 + $0x80] sm:$0xf]
      %v3661 = vld [vmem:[%s3241 + $0x84] sm:$0xf]
      %v3662 = vld [vmem:[%s3241 + $0x88] sm:$0x1]
      %v3663 = vld [vmem:[%s3241 + $0x8c] sm:$0xf]
      %v3664 = vld [vmem:[%s3241 + $0x90] sm:$0xf]
      %v3665 = vld [vmem:[%s3241 + $0x94] sm:$0xf]
      %v3666 = vld [vmem:[%s3241 + $0x98] sm:$0xf]
      %v3667 = vld [vmem:[%s3241 + $0x9c] sm:$0x1]
      %v3669 = vshrl.u32 %v3628, 16
      %v3671 = vrot.slane %v3669, 4
      %v3672 = vshll.u32 %v3628, 16
      %v3674 = vrot.slane %v3672, 5
      %v3675 = vor.u32 %v3671, %v3674
      %v3676 = vrot.slane %v3675, 4
      %v3678 = vshll.u32 %v3629, 16
      %v3680 = vrot.slane %v3678, 5
      %v3681 = vsel %vm259, %v3676, %v3680
      %v3682 = vshrl.u32 %v3629, 16
      %v3684 = vrot.slane %v3682, 4
      %v3685 = vor.u32 %v3684, %v3680
      %v3686 = vrot.slane %v3685, 4
      %v3688 = vshll.u32 %v3630, 16
      %v3690 = vrot.slane %v3688, 5
      %v3691 = vsel %vm259, %v3686, %v3690
      %v3692 = vshrl.u32 %v3630, 16
      %v3694 = vrot.slane %v3692, 4
      %v3695 = vor.u32 %v3694, %v3690
      %v3696 = vrot.slane %v3695, 4
      %v3698 = vshll.u32 %v3631, 16
      %v3700 = vrot.slane %v3698, 5
      %v3701 = vsel %vm259, %v3696, %v3700
      %v3702 = vshrl.u32 %v3631, 16
      %v3704 = vrot.slane %v3702, 4
      %v3705 = vor.u32 %v3704, %v3700
      %v3706 = vrot.slane %v3705, 4
      %v3708 = vshll.u32 %v3632, 16
      %v3710 = vrot.slane %v3708, 5
      %v3711 = vsel %vm259, %v3706, %v3710
      %v3713 = vshrl.u32 %v3633, 16
      %v3715 = vrot.slane %v3713, 4
      %v3716 = vshll.u32 %v3633, 16
      %v3718 = vrot.slane %v3716, 5
      %v3719 = vor.u32 %v3715, %v3718
      %v3720 = vrot.slane %v3719, 4
      %v3722 = vshll.u32 %v3634, 16
      %v3724 = vrot.slane %v3722, 5
      %v3725 = vsel %vm259, %v3720, %v3724
      %v3726 = vshrl.u32 %v3634, 16
      %v3728 = vrot.slane %v3726, 4
      %v3729 = vor.u32 %v3728, %v3724
      %v3730 = vrot.slane %v3729, 4
      %v3732 = vshll.u32 %v3635, 16
      %v3734 = vrot.slane %v3732, 5
      %v3735 = vsel %vm259, %v3730, %v3734
      %v3736 = vshrl.u32 %v3635, 16
      %v3738 = vrot.slane %v3736, 4
      %v3739 = vor.u32 %v3738, %v3734
      %v3740 = vrot.slane %v3739, 4
      %v3742 = vshll.u32 %v3636, 16
      %v3744 = vrot.slane %v3742, 5
      %v3745 = vsel %vm259, %v3740, %v3744
      %v3746 = vshrl.u32 %v3636, 16
      %v3748 = vrot.slane %v3746, 4
      %v3749 = vor.u32 %v3748, %v3744
      %v3750 = vrot.slane %v3749, 4
      %v3752 = vshll.u32 %v3637, 16
      %v3754 = vrot.slane %v3752, 5
      %v3755 = vsel %vm259, %v3750, %v3754
      %v3757 = vshrl.u32 %v3638, 16
      %v3759 = vrot.slane %v3757, 4
      %v3760 = vshll.u32 %v3638, 16
      %v3762 = vrot.slane %v3760, 5
      %v3763 = vor.u32 %v3759, %v3762
      %v3764 = vrot.slane %v3763, 4
      %v3766 = vshll.u32 %v3639, 16
      %v3768 = vrot.slane %v3766, 5
      %v3769 = vsel %vm259, %v3764, %v3768
      %v3770 = vshrl.u32 %v3639, 16
      %v3772 = vrot.slane %v3770, 4
      %v3773 = vor.u32 %v3772, %v3768
      %v3774 = vrot.slane %v3773, 4
      %v3776 = vshll.u32 %v3640, 16
      %v3778 = vrot.slane %v3776, 5
      %v3779 = vsel %vm259, %v3774, %v3778
      %v3780 = vshrl.u32 %v3640, 16
      %v3782 = vrot.slane %v3780, 4
      %v3783 = vor.u32 %v3782, %v3778
      %v3784 = vrot.slane %v3783, 4
      %v3786 = vshll.u32 %v3641, 16
      %v3788 = vrot.slane %v3786, 5
      %v3789 = vsel %vm259, %v3784, %v3788
      %v3790 = vshrl.u32 %v3641, 16
      %v3792 = vrot.slane %v3790, 4
      %v3793 = vor.u32 %v3792, %v3788
      %v3794 = vrot.slane %v3793, 4
      %v3796 = vshll.u32 %v3642, 16
      %v3798 = vrot.slane %v3796, 5
      %v3799 = vsel %vm259, %v3794, %v3798
      %v3801 = vshrl.u32 %v3643, 16
      %v3803 = vrot.slane %v3801, 4
      %v3804 = vshll.u32 %v3643, 16
      %v3806 = vrot.slane %v3804, 5
      %v3807 = vor.u32 %v3803, %v3806
      %v3808 = vrot.slane %v3807, 4
      %v3810 = vshll.u32 %v3644, 16
      %v3812 = vrot.slane %v3810, 5
      %v3813 = vsel %vm259, %v3808, %v3812
      %v3814 = vshrl.u32 %v3644, 16
      %v3816 = vrot.slane %v3814, 4
      %v3817 = vor.u32 %v3816, %v3812
      %v3818 = vrot.slane %v3817, 4
      %v3820 = vshll.u32 %v3645, 16
      %v3822 = vrot.slane %v3820, 5
      %v3823 = vsel %vm259, %v3818, %v3822
      %v3824 = vshrl.u32 %v3645, 16
      %v3826 = vrot.slane %v3824, 4
      %v3827 = vor.u32 %v3826, %v3822
      %v3828 = vrot.slane %v3827, 4
      %v3830 = vshll.u32 %v3646, 16
      %v3832 = vrot.slane %v3830, 5
      %v3833 = vsel %vm259, %v3828, %v3832
      %v3834 = vshrl.u32 %v3646, 16
      %v3836 = vrot.slane %v3834, 4
      %v3837 = vor.u32 %v3836, %v3832
      %v3838 = vrot.slane %v3837, 4
      %v3840 = vshll.u32 %v3647, 16
      %v3842 = vrot.slane %v3840, 5
      %v3843 = vsel %vm259, %v3838, %v3842
      %v3845 = vshrl.u32 %v3648, 16
      %v3847 = vrot.slane %v3845, 4
      %v3848 = vshll.u32 %v3648, 16
      %v3850 = vrot.slane %v3848, 5
      %v3851 = vor.u32 %v3847, %v3850
      %v3852 = vrot.slane %v3851, 4
      %v3854 = vshll.u32 %v3649, 16
      %v3856 = vrot.slane %v3854, 5
      %v3857 = vsel %vm259, %v3852, %v3856
      %v3858 = vshrl.u32 %v3649, 16
      %v3860 = vrot.slane %v3858, 4
      %v3861 = vor.u32 %v3860, %v3856
      %v3862 = vrot.slane %v3861, 4
      %v3864 = vshll.u32 %v3650, 16
      %v3866 = vrot.slane %v3864, 5
      %v3867 = vsel %vm259, %v3862, %v3866
      %v3868 = vshrl.u32 %v3650, 16
      %v3870 = vrot.slane %v3868, 4
      %v3871 = vor.u32 %v3870, %v3866
      %v3872 = vrot.slane %v3871, 4
      %v3874 = vshll.u32 %v3651, 16
      %v3876 = vrot.slane %v3874, 5
      %v3877 = vsel %vm259, %v3872, %v3876
      %v3878 = vshrl.u32 %v3651, 16
      %v3880 = vrot.slane %v3878, 4
      %v3881 = vor.u32 %v3880, %v3876
      %v3882 = vrot.slane %v3881, 4
      %v3884 = vshll.u32 %v3652, 16
      %v3886 = vrot.slane %v3884, 5
      %v3887 = vsel %vm259, %v3882, %v3886
      %v3889 = vshrl.u32 %v3653, 16
      %v3891 = vrot.slane %v3889, 4
      %v3892 = vshll.u32 %v3653, 16
      %v3894 = vrot.slane %v3892, 5
      %v3895 = vor.u32 %v3891, %v3894
      %v3896 = vrot.slane %v3895, 4
      %v3898 = vshll.u32 %v3654, 16
      %v3900 = vrot.slane %v3898, 5
      %v3901 = vsel %vm259, %v3896, %v3900
      %v3902 = vshrl.u32 %v3654, 16
      %v3904 = vrot.slane %v3902, 4
      %v3905 = vor.u32 %v3904, %v3900
      %v3906 = vrot.slane %v3905, 4
      %v3908 = vshll.u32 %v3655, 16
      %v3910 = vrot.slane %v3908, 5
      %v3911 = vsel %vm259, %v3906, %v3910
      %v3912 = vshrl.u32 %v3655, 16
      %v3914 = vrot.slane %v3912, 4
      %v3915 = vor.u32 %v3914, %v3910
      %v3916 = vrot.slane %v3915, 4
      %v3918 = vshll.u32 %v3656, 16
      %v3920 = vrot.slane %v3918, 5
      %v3921 = vsel %vm259, %v3916, %v3920
      %v3922 = vshrl.u32 %v3656, 16
      %v3924 = vrot.slane %v3922, 4
      %v3925 = vor.u32 %v3924, %v3920
      %v3926 = vrot.slane %v3925, 4
      %v3928 = vshll.u32 %v3657, 16
      %v3930 = vrot.slane %v3928, 5
      %v3931 = vsel %vm259, %v3926, %v3930
      %v3933 = vshrl.u32 %v3658, 16
      %v3935 = vrot.slane %v3933, 4
      %v3936 = vshll.u32 %v3658, 16
      %v3938 = vrot.slane %v3936, 5
      %v3939 = vor.u32 %v3935, %v3938
      %v3940 = vrot.slane %v3939, 4
      %v3942 = vshll.u32 %v3659, 16
      %v3944 = vrot.slane %v3942, 5
      %v3945 = vsel %vm259, %v3940, %v3944
      %v3946 = vshrl.u32 %v3659, 16
      %v3948 = vrot.slane %v3946, 4
      %v3949 = vor.u32 %v3948, %v3944
      %v3950 = vrot.slane %v3949, 4
      %v3952 = vshll.u32 %v3660, 16
      %v3954 = vrot.slane %v3952, 5
      %v3955 = vsel %vm259, %v3950, %v3954
      %v3956 = vshrl.u32 %v3660, 16
      %v3958 = vrot.slane %v3956, 4
      %v3959 = vor.u32 %v3958, %v3954
      %v3960 = vrot.slane %v3959, 4
      %v3962 = vshll.u32 %v3661, 16
      %v3964 = vrot.slane %v3962, 5
      %v3965 = vsel %vm259, %v3960, %v3964
      %v3966 = vshrl.u32 %v3661, 16
      %v3968 = vrot.slane %v3966, 4
      %v3969 = vor.u32 %v3968, %v3964
      %v3970 = vrot.slane %v3969, 4
      %v3972 = vshll.u32 %v3662, 16
      %v3974 = vrot.slane %v3972, 5
      %v3975 = vsel %vm259, %v3970, %v3974
      %v3977 = vshrl.u32 %v3663, 16
      %v3979 = vrot.slane %v3977, 4
      %v3980 = vshll.u32 %v3663, 16
      %v3982 = vrot.slane %v3980, 5
      %v3983 = vor.u32 %v3979, %v3982
      %v3984 = vrot.slane %v3983, 4
      %v3986 = vshll.u32 %v3664, 16
      %v3988 = vrot.slane %v3986, 5
      %v3989 = vsel %vm259, %v3984, %v3988
      %v3990 = vshrl.u32 %v3664, 16
      %v3992 = vrot.slane %v3990, 4
      %v3993 = vor.u32 %v3992, %v3988
      %v3994 = vrot.slane %v3993, 4
      %v3996 = vshll.u32 %v3665, 16
      %v3998 = vrot.slane %v3996, 5
      %v3999 = vsel %vm259, %v3994, %v3998
      %v4000 = vshrl.u32 %v3665, 16
      %v4002 = vrot.slane %v4000, 4
      %v4003 = vor.u32 %v4002, %v3998
      %v4004 = vrot.slane %v4003, 4
      %v4006 = vshll.u32 %v3666, 16
      %v4008 = vrot.slane %v4006, 5
      %v4009 = vsel %vm259, %v4004, %v4008
      %v4010 = vshrl.u32 %v3666, 16
      %v4012 = vrot.slane %v4010, 4
      %v4013 = vor.u32 %v4012, %v4008
      %v4014 = vrot.slane %v4013, 4
      %v4016 = vshll.u32 %v3667, 16
      %v4018 = vrot.slane %v4016, 5
      %v4019 = vsel %vm259, %v4014, %v4018
      %s4020 = scalar_lea.vmem %s1, 448
      %v4021 = vld [vmem:[%s4020] sm:$0xf]
      %v4022 = vld [vmem:[%s4020 + $0x4] sm:$0xf]
      %v4023 = vld [vmem:[%s4020 + $0x8] sm:$0xf]
      %v4024 = vld [vmem:[%s4020 + $0xc] sm:$0xf]
      %v4025 = vld [vmem:[%s4020 + $0x10] sm:$0xf]
      %v4026 = vld [vmem:[%s4020 + $0x14] sm:$0xf]
      %v4027 = vld [vmem:[%s4020 + $0x18] sm:$0xf]
      %v4028 = vld [vmem:[%s4020 + $0x1c] sm:$0xf]
      %v4029 = vld [vmem:[%s4020 + $0x20] sm:$0xf]
      %v4030 = vld [vmem:[%s4020 + $0x24] sm:$0xf]
      %v4031 = vld [vmem:[%s4020 + $0x28] sm:$0xf]
      %v4032 = vld [vmem:[%s4020 + $0x2c] sm:$0xf]
      %v4033 = vld [vmem:[%s4020 + $0x30] sm:$0xf]
      %v4034 = vld [vmem:[%s4020 + $0x34] sm:$0xf]
      %v4035 = vld [vmem:[%s4020 + $0x38] sm:$0xf]
      %v4036 = vld [vmem:[%s4020 + $0x3c] sm:$0xf]
      %v4037 = vunpack.c.l.b16 %v3681
      %v4038 = vunpack.c.l.b16 %v3691
      %v4039 = vunpack.c.l.b16 %v3701
      %v4040 = vunpack.c.l.b16 %v3711
      %v4041 = vunpack.c.l.b16 %v3725
      %v4042 = vunpack.c.l.b16 %v3735
      %v4043 = vunpack.c.l.b16 %v3745
      %v4044 = vunpack.c.l.b16 %v3755
      %v4045 = vunpack.c.l.b16 %v3769
      %v4046 = vunpack.c.l.b16 %v3779
      %v4047 = vunpack.c.l.b16 %v3789
      %v4048 = vunpack.c.l.b16 %v3799
      %v4049 = vunpack.c.l.b16 %v3813
      %v4050 = vunpack.c.l.b16 %v3823
      %v4051 = vunpack.c.l.b16 %v3833
      %v4052 = vunpack.c.l.b16 %v3843
      %v4053 = vunpack.c.l.b16 %v3857
      %v4054 = vunpack.c.l.b16 %v3867
      %v4055 = vunpack.c.l.b16 %v3877
      %v4056 = vunpack.c.l.b16 %v3887
      %v4057 = vunpack.c.l.b16 %v3901
      %v4058 = vunpack.c.l.b16 %v3911
      %v4059 = vunpack.c.l.b16 %v3921
      %v4060 = vunpack.c.l.b16 %v3931
      %v4061 = vunpack.c.l.b16 %v3945
      %v4062 = vunpack.c.l.b16 %v3955
      %v4063 = vunpack.c.l.b16 %v3965
      %v4064 = vunpack.c.l.b16 %v3975
      %v4065 = vunpack.c.l.b16 %v3989
      %v4066 = vunpack.c.l.b16 %v3999
      %v4067 = vunpack.c.l.b16 %v4009
      %v4068 = vunpack.c.l.b16 %v4019
      %v4069 = vpack.c.b16 %v4038, %v4037
      %v4070 = vpack.c.b16 %v4040, %v4039
      %v4071 = vpack.c.b16 %v4042, %v4041
      %v4072 = vpack.c.b16 %v4044, %v4043
      %v4073 = vpack.c.b16 %v4046, %v4045
      %v4074 = vpack.c.b16 %v4048, %v4047
      %v4075 = vpack.c.b16 %v4050, %v4049
      %v4076 = vpack.c.b16 %v4052, %v4051
      %v4077 = vpack.c.b16 %v4054, %v4053
      %v4078 = vpack.c.b16 %v4056, %v4055
      %v4079 = vpack.c.b16 %v4058, %v4057
      %v4080 = vpack.c.b16 %v4060, %v4059
      %v4081 = vpack.c.b16 %v4062, %v4061
      %v4082 = vpack.c.b16 %v4064, %v4063
      %v4083 = vpack.c.b16 %v4066, %v4065
      %v4084 = vpack.c.b16 %v4068, %v4067
      %v4117 = vunpack.c.l.b16 %v4021
      %v4118 = vunpack.c.l.b16 %v4022
      %v4119 = vunpack.c.l.b16 %v4023
      %v4120 = vunpack.c.l.b16 %v4024
      %v4121 = vunpack.c.l.b16 %v4025
      %v4122 = vunpack.c.l.b16 %v4026
      %v4123 = vunpack.c.l.b16 %v4027
      %v4124 = vunpack.c.l.b16 %v4028
      %v4125 = vunpack.c.l.b16 %v4029
      %v4126 = vunpack.c.l.b16 %v4030
      %v4127 = vunpack.c.l.b16 %v4031
      %v4128 = vunpack.c.l.b16 %v4032
      %v4129 = vunpack.c.l.b16 %v4033
      %v4130 = vunpack.c.l.b16 %v4034
      %v4131 = vunpack.c.l.b16 %v4035
      %v4132 = vunpack.c.l.b16 %v4036
      %v4133 = vpack.c.b16 %v4118, %v4117
      %v4134 = vpack.c.b16 %v4120, %v4119
      %v4135 = vpack.c.b16 %v4122, %v4121
      %v4136 = vpack.c.b16 %v4124, %v4123
      %v4137 = vpack.c.b16 %v4126, %v4125
      %v4138 = vpack.c.b16 %v4128, %v4127
      %v4139 = vpack.c.b16 %v4130, %v4129
      %v4140 = vpack.c.b16 %v4132, %v4131
      %4149 = vmatprep.subr.bf16.mxu0 0
      %4150 = vmatpush1.bf16.msra.mxu0 %v4140
      %4151 = vmatprep.subr.bf16.mxu0 0
      %4152 = vmatpush1.bf16.msra.mxu0 %v4139
      %4153 = vmatprep.subr.bf16.mxu0 0
      %4154 = vmatpush1.bf16.msra.mxu0 %v4138
      %4155 = vmatprep.subr.bf16.mxu0 0
      %4156 = vmatpush1.bf16.msra.mxu0 %v4137
      %4157 = vmatprep.subr.bf16.mxu0 0
      %4158 = vmatpush1.bf16.msra.mxu0 %v4136
      %4159 = vmatprep.subr.bf16.mxu0 0
      %4160 = vmatpush1.bf16.msra.mxu0 %v4135
      %4161 = vmatprep.subr.bf16.mxu0 0
      %4162 = vmatpush1.bf16.msra.mxu0 %v4134
      %4163 = vmatprep.subr.bf16.mxu0 0
      %4164 = vmatpush1.bf16.msra.mxu0 %v4133
      %4165 = vmatprep.subr.bf16.mxu0 0
      %4166 = vmatpush2.bf16.msra.mxu0 0
      %4167 = vmatprep.subr.bf16.mxu0 0
      %4168 = vmatpush2.bf16.msra.mxu0 0
      %4169 = vmatprep.subr.bf16.mxu0 0
      %4170 = vmatpush2.bf16.msra.mxu0 0
      %4171 = vmatprep.subr.bf16.mxu0 0
      %4172 = vmatpush2.bf16.msra.mxu0 0
      %4173 = vmatprep.subr.bf16.mxu0 0
      %4174 = vmatpush2.bf16.msra.mxu0 0
      %4175 = vmatprep.subr.bf16.mxu0 0
      %4176 = vmatpush2.bf16.msra.mxu0 0
      %4177 = vmatprep.subr.bf16.mxu0 0
      %4178 = vmatpush2.bf16.msra.mxu0 0
      %4179 = vmatprep.subr.bf16.mxu0 0
      %4180 = vmatpush2.bf16.msra.mxu0 0
      %4181 = vmatprep.mubr.bf16.mxu0 0
      %4182 = vmatmul.mubr.bf16.gmra.mxu0 %v4069
      %v4183 = vpop.f32.mrf.mxu0
      %v4184 = vadd.f32 0.0, %v4183
      %v4185 = vpop.f32.mrf.mxu0
      %v4186 = vpop.f32.mrf.mxu0
      %v4187 = vadd.f32 0.0, %v4186
      %v4188 = vpop.f32.mrf.mxu0
      %4189 = vmatprep.mubr.bf16.mxu0 0
      %4190 = vmatmul.mubr.bf16.gmra.mxu0 %v4070
      %v4191 = vpop.f32.mrf.mxu0
      %v4192 = vadd.f32 0.0, %v4191
      %v4193 = vpop.f32.mrf.mxu0
      %v4194 = vpop.f32.mrf.mxu0
      %v4195 = vadd.f32 0.0, %v4194
      %v4196 = vpop.f32.mrf.mxu0
      %4197 = vmatprep.mubr.bf16.mxu0 0
      %4198 = vmatmul.mubr.bf16.gmra.mxu0 %v4071
      %v4199 = vpop.f32.mrf.mxu0
      %v4200 = vadd.f32 0.0, %v4199
      %v4201 = vpop.f32.mrf.mxu0
      %v4202 = vpop.f32.mrf.mxu0
      %v4203 = vadd.f32 0.0, %v4202
      %v4204 = vpop.f32.mrf.mxu0
      %4205 = vmatprep.mubr.bf16.mxu0 0
      %4206 = vmatmul.mubr.bf16.gmra.mxu0 %v4072
      %v4207 = vpop.f32.mrf.mxu0
      %v4208 = vadd.f32 0.0, %v4207
      %v4209 = vpop.f32.mrf.mxu0
      %v4210 = vpop.f32.mrf.mxu0
      %v4211 = vadd.f32 0.0, %v4210
      %v4212 = vpop.f32.mrf.mxu0
      %4213 = vmatprep.mubr.bf16.mxu0 0
      %4214 = vmatmul.mubr.bf16.gmra.mxu0 %v4073
      %v4215 = vpop.f32.mrf.mxu0
      %v4216 = vadd.f32 0.0, %v4215
      %v4217 = vpop.f32.mrf.mxu0
      %v4218 = vpop.f32.mrf.mxu0
      %v4219 = vadd.f32 0.0, %v4218
      %v4220 = vpop.f32.mrf.mxu0
      %4221 = vmatprep.mubr.bf16.mxu0 0
      %4222 = vmatmul.mubr.bf16.gmra.mxu0 %v4074
      %v4223 = vpop.f32.mrf.mxu0
      %v4224 = vadd.f32 0.0, %v4223
      %v4225 = vpop.f32.mrf.mxu0
      %v4226 = vpop.f32.mrf.mxu0
      %v4227 = vadd.f32 0.0, %v4226
      %v4228 = vpop.f32.mrf.mxu0
      %4229 = vmatprep.mubr.bf16.mxu0 0
      %4230 = vmatmul.mubr.bf16.gmra.mxu0 %v4075
      %v4231 = vpop.f32.mrf.mxu0
      %v4232 = vadd.f32 0.0, %v4231
      %v4233 = vpop.f32.mrf.mxu0
      %v4234 = vpop.f32.mrf.mxu0
      %v4235 = vadd.f32 0.0, %v4234
      %v4236 = vpop.f32.mrf.mxu0
      %4237 = vmatprep.mubr.bf16.mxu0 0
      %4238 = vmatmul.mubr.bf16.gmra.mxu0 %v4076
      %v4239 = vpop.f32.mrf.mxu0
      %v4240 = vadd.f32 0.0, %v4239
      %v4241 = vpop.f32.mrf.mxu0
      %v4242 = vpop.f32.mrf.mxu0
      %v4243 = vadd.f32 0.0, %v4242
      %v4244 = vpop.f32.mrf.mxu0
      %4245 = vmatprep.mubr.bf16.mxu0 0
      %4246 = vmatmul.mubr.bf16.gmra.mxu0 %v4077
      %v4247 = vpop.f32.mrf.mxu0
      %v4248 = vadd.f32 0.0, %v4247
      %v4249 = vpop.f32.mrf.mxu0
      %v4250 = vpop.f32.mrf.mxu0
      %v4251 = vadd.f32 0.0, %v4250
      %v4252 = vpop.f32.mrf.mxu0
      %4253 = vmatprep.mubr.bf16.mxu0 0
      %4254 = vmatmul.mubr.bf16.gmra.mxu0 %v4078
      %v4255 = vpop.f32.mrf.mxu0
      %v4256 = vadd.f32 0.0, %v4255
      %v4257 = vpop.f32.mrf.mxu0
      %v4258 = vpop.f32.mrf.mxu0
      %v4259 = vadd.f32 0.0, %v4258
      %v4260 = vpop.f32.mrf.mxu0
      %4261 = vmatprep.mubr.bf16.mxu0 0
      %4262 = vmatmul.mubr.bf16.gmra.mxu0 %v4079
      %v4263 = vpop.f32.mrf.mxu0
      %v4264 = vadd.f32 0.0, %v4263
      %v4265 = vpop.f32.mrf.mxu0
      %v4266 = vpop.f32.mrf.mxu0
      %v4267 = vadd.f32 0.0, %v4266
      %v4268 = vpop.f32.mrf.mxu0
      %4269 = vmatprep.mubr.bf16.mxu0 0
      %4270 = vmatmul.mubr.bf16.gmra.mxu0 %v4080
      %v4271 = vpop.f32.mrf.mxu0
      %v4272 = vadd.f32 0.0, %v4271
      %v4273 = vpop.f32.mrf.mxu0
      %v4274 = vpop.f32.mrf.mxu0
      %v4275 = vadd.f32 0.0, %v4274
      %v4276 = vpop.f32.mrf.mxu0
      %4277 = vmatprep.mubr.bf16.mxu0 0
      %4278 = vmatmul.mubr.bf16.gmra.mxu0 %v4081
      %v4279 = vpop.f32.mrf.mxu0
      %v4280 = vadd.f32 0.0, %v4279
      %v4281 = vpop.f32.mrf.mxu0
      %v4282 = vpop.f32.mrf.mxu0
      %v4283 = vadd.f32 0.0, %v4282
      %v4284 = vpop.f32.mrf.mxu0
      %4285 = vmatprep.mubr.bf16.mxu0 0
      %4286 = vmatmul.mubr.bf16.gmra.mxu0 %v4082
      %v4287 = vpop.f32.mrf.mxu0
      %v4288 = vadd.f32 0.0, %v4287
      %v4289 = vpop.f32.mrf.mxu0
      %v4290 = vpop.f32.mrf.mxu0
      %v4291 = vadd.f32 0.0, %v4290
      %v4292 = vpop.f32.mrf.mxu0
      %4293 = vmatprep.mubr.bf16.mxu0 0
      %4294 = vmatmul.mubr.bf16.gmra.mxu0 %v4083
      %v4295 = vpop.f32.mrf.mxu0
      %v4296 = vadd.f32 0.0, %v4295
      %v4297 = vpop.f32.mrf.mxu0
      %v4298 = vpop.f32.mrf.mxu0
      %v4299 = vadd.f32 0.0, %v4298
      %v4300 = vpop.f32.mrf.mxu0
      %4301 = vmatprep.mubr.bf16.mxu0 0
      %4302 = vmatmul.mubr.bf16.gmra.mxu0 %v4084
      %v4303 = vpop.f32.mrf.mxu0
      %v4304 = vadd.f32 0.0, %v4303
      %v4305 = vpop.f32.mrf.mxu0
      %v4306 = vpop.f32.mrf.mxu0
      %v4307 = vadd.f32 0.0, %v4306
      %v4308 = vpop.f32.mrf.mxu0
      %4309 = vdwg.mxu0
      %v4310 = vadd.f32 %v3596, %v4184
      %v4311 = vadd.f32 %v3597, %v4187
      %v4312 = vadd.f32 %v3598, %v4192
      %v4313 = vadd.f32 %v3599, %v4195
      %v4314 = vadd.f32 %v3600, %v4200
      %v4315 = vadd.f32 %v3601, %v4203
      %v4316 = vadd.f32 %v3602, %v4208
      %v4317 = vadd.f32 %v3603, %v4211
      %v4318 = vadd.f32 %v3604, %v4216
      %v4319 = vadd.f32 %v3605, %v4219
      %v4320 = vadd.f32 %v3606, %v4224
      %v4321 = vadd.f32 %v3607, %v4227
      %v4322 = vadd.f32 %v3608, %v4232
      %v4323 = vadd.f32 %v3609, %v4235
      %v4324 = vadd.f32 %v3610, %v4240
      %v4325 = vadd.f32 %v3611, %v4243
      %v4326 = vadd.f32 %v3612, %v4248
      %v4327 = vadd.f32 %v3613, %v4251
      %v4328 = vadd.f32 %v3614, %v4256
      %v4329 = vadd.f32 %v3615, %v4259
      %v4330 = vadd.f32 %v3616, %v4264
      %v4331 = vadd.f32 %v3617, %v4267
      %v4332 = vadd.f32 %v3618, %v4272
      %v4333 = vadd.f32 %v3619, %v4275
      %v4334 = vadd.f32 %v3620, %v4280
      %v4335 = vadd.f32 %v3621, %v4283
      %v4336 = vadd.f32 %v3622, %v4288
      %v4337 = vadd.f32 %v3623, %v4291
      %v4338 = vadd.f32 %v3624, %v4296
      %v4339 = vadd.f32 %v3625, %v4299
      %v4340 = vadd.f32 %v3626, %v4304
      %v4341 = vadd.f32 %v3627, %v4307
      %v4342 = vld [vmem:[%s3241] sm:$0xe]
      %v4343 = vld [vmem:[%s3241 + $0x14] sm:$0xe]
      %v4344 = vld [vmem:[%s3241 + $0x28] sm:$0xe]
      %v4345 = vld [vmem:[%s3241 + $0x3c] sm:$0xe]
      %v4346 = vld [vmem:[%s3241 + $0x50] sm:$0xe]
      %v4347 = vld [vmem:[%s3241 + $0x64] sm:$0xe]
      %v4348 = vld [vmem:[%s3241 + $0x78] sm:$0xe]
      %v4349 = vld [vmem:[%s3241 + $0x8c] sm:$0xe]
      %v4390 = vrot.slane %v4342, 5
      %v4391 = vrot.slane %v4390, 4
      %v4392 = vrot.slane %v3629, 5
      %v4393 = vsel %vm1233, %v4391, %v4392
      %v4394 = vrot.slane %v4392, 4
      %v4395 = vrot.slane %v3630, 5
      %v4396 = vsel %vm1233, %v4394, %v4395
      %v4397 = vrot.slane %v4395, 4
      %v4398 = vrot.slane %v3631, 5
      %v4399 = vsel %vm1233, %v4397, %v4398
      %v4400 = vrot.slane %v4398, 4
      %v4401 = vrot.slane %v3632, 5
      %v4402 = vsel %vm1233, %v4400, %v4401
      %v4403 = vrot.slane %v4343, 5
      %v4404 = vrot.slane %v4403, 4
      %v4405 = vrot.slane %v3634, 5
      %v4406 = vsel %vm1233, %v4404, %v4405
      %v4407 = vrot.slane %v4405, 4
      %v4408 = vrot.slane %v3635, 5
      %v4409 = vsel %vm1233, %v4407, %v4408
      %v4410 = vrot.slane %v4408, 4
      %v4411 = vrot.slane %v3636, 5
      %v4412 = vsel %vm1233, %v4410, %v4411
      %v4413 = vrot.slane %v4411, 4
      %v4414 = vrot.slane %v3637, 5
      %v4415 = vsel %vm1233, %v4413, %v4414
      %v4416 = vrot.slane %v4344, 5
      %v4417 = vrot.slane %v4416, 4
      %v4418 = vrot.slane %v3639, 5
      %v4419 = vsel %vm1233, %v4417, %v4418
      %v4420 = vrot.slane %v4418, 4
      %v4421 = vrot.slane %v3640, 5
      %v4422 = vsel %vm1233, %v4420, %v4421
      %v4423 = vrot.slane %v4421, 4
      %v4424 = vrot.slane %v3641, 5
      %v4425 = vsel %vm1233, %v4423, %v4424
      %v4426 = vrot.slane %v4424, 4
      %v4427 = vrot.slane %v3642, 5
      %v4428 = vsel %vm1233, %v4426, %v4427
      %v4429 = vrot.slane %v4345, 5
      %v4430 = vrot.slane %v4429, 4
      %v4431 = vrot.slane %v3644, 5
      %v4432 = vsel %vm1233, %v4430, %v4431
      %v4433 = vrot.slane %v4431, 4
      %v4434 = vrot.slane %v3645, 5
      %v4435 = vsel %vm1233, %v4433, %v4434
      %v4436 = vrot.slane %v4434, 4
      %v4437 = vrot.slane %v3646, 5
      %v4438 = vsel %vm1233, %v4436, %v4437
      %v4439 = vrot.slane %v4437, 4
      %v4440 = vrot.slane %v3647, 5
      %v4441 = vsel %vm1233, %v4439, %v4440
      %v4442 = vrot.slane %v4346, 5
      %v4443 = vrot.slane %v4442, 4
      %v4444 = vrot.slane %v3649, 5
      %v4445 = vsel %vm1233, %v4443, %v4444
      %v4446 = vrot.slane %v4444, 4
      %v4447 = vrot.slane %v3650, 5
      %v4448 = vsel %vm1233, %v4446, %v4447
      %v4449 = vrot.slane %v4447, 4
      %v4450 = vrot.slane %v3651, 5
      %v4451 = vsel %vm1233, %v4449, %v4450
      %v4452 = vrot.slane %v4450, 4
      %v4453 = vrot.slane %v3652, 5
      %v4454 = vsel %vm1233, %v4452, %v4453
      %v4455 = vrot.slane %v4347, 5
      %v4456 = vrot.slane %v4455, 4
      %v4457 = vrot.slane %v3654, 5
      %v4458 = vsel %vm1233, %v4456, %v4457
      %v4459 = vrot.slane %v4457, 4
      %v4460 = vrot.slane %v3655, 5
      %v4461 = vsel %vm1233, %v4459, %v4460
      %v4462 = vrot.slane %v4460, 4
      %v4463 = vrot.slane %v3656, 5
      %v4464 = vsel %vm1233, %v4462, %v4463
      %v4465 = vrot.slane %v4463, 4
      %v4466 = vrot.slane %v3657, 5
      %v4467 = vsel %vm1233, %v4465, %v4466
      %v4468 = vrot.slane %v4348, 5
      %v4469 = vrot.slane %v4468, 4
      %v4470 = vrot.slane %v3659, 5
      %v4471 = vsel %vm1233, %v4469, %v4470
      %v4472 = vrot.slane %v4470, 4
      %v4473 = vrot.slane %v3660, 5
      %v4474 = vsel %vm1233, %v4472, %v4473
      %v4475 = vrot.slane %v4473, 4
      %v4476 = vrot.slane %v3661, 5
      %v4477 = vsel %vm1233, %v4475, %v4476
      %v4478 = vrot.slane %v4476, 4
      %v4479 = vrot.slane %v3662, 5
      %v4480 = vsel %vm1233, %v4478, %v4479
      %v4481 = vrot.slane %v4349, 5
      %v4482 = vrot.slane %v4481, 4
      %v4483 = vrot.slane %v3664, 5
      %v4484 = vsel %vm1233, %v4482, %v4483
      %v4485 = vrot.slane %v4483, 4
      %v4486 = vrot.slane %v3665, 5
      %v4487 = vsel %vm1233, %v4485, %v4486
      %v4488 = vrot.slane %v4486, 4
      %v4489 = vrot.slane %v3666, 5
      %v4490 = vsel %vm1233, %v4488, %v4489
      %v4491 = vrot.slane %v4489, 4
      %v4492 = vrot.slane %v3667, 5
      %v4493 = vsel %vm1233, %v4491, %v4492
      %s4494 = scalar_lea.vmem %s1, 512
      %v4495 = vld [vmem:[%s4494] sm:$0xf]
      %v4496 = vld [vmem:[%s4494 + $0x4] sm:$0xf]
      %v4497 = vld [vmem:[%s4494 + $0x8] sm:$0xf]
      %v4498 = vld [vmem:[%s4494 + $0xc] sm:$0xf]
      %v4499 = vld [vmem:[%s4494 + $0x10] sm:$0xf]
      %v4500 = vld [vmem:[%s4494 + $0x14] sm:$0xf]
      %v4501 = vld [vmem:[%s4494 + $0x18] sm:$0xf]
      %v4502 = vld [vmem:[%s4494 + $0x1c] sm:$0xf]
      %v4503 = vld [vmem:[%s4494 + $0x20] sm:$0xf]
      %v4504 = vld [vmem:[%s4494 + $0x24] sm:$0xf]
      %v4505 = vld [vmem:[%s4494 + $0x28] sm:$0xf]
      %v4506 = vld [vmem:[%s4494 + $0x2c] sm:$0xf]
      %v4507 = vld [vmem:[%s4494 + $0x30] sm:$0xf]
      %v4508 = vld [vmem:[%s4494 + $0x34] sm:$0xf]
      %v4509 = vld [vmem:[%s4494 + $0x38] sm:$0xf]
      %v4510 = vld [vmem:[%s4494 + $0x3c] sm:$0xf]
      %v4511 = vunpack.c.l.b16 %v4393
      %v4512 = vunpack.c.l.b16 %v4396
      %v4513 = vunpack.c.l.b16 %v4399
      %v4514 = vunpack.c.l.b16 %v4402
      %v4515 = vunpack.c.l.b16 %v4406
      %v4516 = vunpack.c.l.b16 %v4409
      %v4517 = vunpack.c.l.b16 %v4412
      %v4518 = vunpack.c.l.b16 %v4415
      %v4519 = vunpack.c.l.b16 %v4419
      %v4520 = vunpack.c.l.b16 %v4422
      %v4521 = vunpack.c.l.b16 %v4425
      %v4522 = vunpack.c.l.b16 %v4428
      %v4523 = vunpack.c.l.b16 %v4432
      %v4524 = vunpack.c.l.b16 %v4435
      %v4525 = vunpack.c.l.b16 %v4438
      %v4526 = vunpack.c.l.b16 %v4441
      %v4527 = vunpack.c.l.b16 %v4445
      %v4528 = vunpack.c.l.b16 %v4448
      %v4529 = vunpack.c.l.b16 %v4451
      %v4530 = vunpack.c.l.b16 %v4454
      %v4531 = vunpack.c.l.b16 %v4458
      %v4532 = vunpack.c.l.b16 %v4461
      %v4533 = vunpack.c.l.b16 %v4464
      %v4534 = vunpack.c.l.b16 %v4467
      %v4535 = vunpack.c.l.b16 %v4471
      %v4536 = vunpack.c.l.b16 %v4474
      %v4537 = vunpack.c.l.b16 %v4477
      %v4538 = vunpack.c.l.b16 %v4480
      %v4539 = vunpack.c.l.b16 %v4484
      %v4540 = vunpack.c.l.b16 %v4487
      %v4541 = vunpack.c.l.b16 %v4490
      %v4542 = vunpack.c.l.b16 %v4493
      %v4543 = vpack.c.b16 %v4512, %v4511
      %v4544 = vpack.c.b16 %v4514, %v4513
      %v4545 = vpack.c.b16 %v4516, %v4515
      %v4546 = vpack.c.b16 %v4518, %v4517
      %v4547 = vpack.c.b16 %v4520, %v4519
      %v4548 = vpack.c.b16 %v4522, %v4521
      %v4549 = vpack.c.b16 %v4524, %v4523
      %v4550 = vpack.c.b16 %v4526, %v4525
      %v4551 = vpack.c.b16 %v4528, %v4527
      %v4552 = vpack.c.b16 %v4530, %v4529
      %v4553 = vpack.c.b16 %v4532, %v4531
      %v4554 = vpack.c.b16 %v4534, %v4533
      %v4555 = vpack.c.b16 %v4536, %v4535
      %v4556 = vpack.c.b16 %v4538, %v4537
      %v4557 = vpack.c.b16 %v4540, %v4539
      %v4558 = vpack.c.b16 %v4542, %v4541
      %v4591 = vunpack.c.l.b16 %v4495
      %v4592 = vunpack.c.l.b16 %v4496
      %v4593 = vunpack.c.l.b16 %v4497
      %v4594 = vunpack.c.l.b16 %v4498
      %v4595 = vunpack.c.l.b16 %v4499
      %v4596 = vunpack.c.l.b16 %v4500
      %v4597 = vunpack.c.l.b16 %v4501
      %v4598 = vunpack.c.l.b16 %v4502
      %v4599 = vunpack.c.l.b16 %v4503
      %v4600 = vunpack.c.l.b16 %v4504
      %v4601 = vunpack.c.l.b16 %v4505
      %v4602 = vunpack.c.l.b16 %v4506
      %v4603 = vunpack.c.l.b16 %v4507
      %v4604 = vunpack.c.l.b16 %v4508
      %v4605 = vunpack.c.l.b16 %v4509
      %v4606 = vunpack.c.l.b16 %v4510
      %v4607 = vpack.c.b16 %v4592, %v4591
      %v4608 = vpack.c.b16 %v4594, %v4593
      %v4609 = vpack.c.b16 %v4596, %v4595
      %v4610 = vpack.c.b16 %v4598, %v4597
      %v4611 = vpack.c.b16 %v4600, %v4599
      %v4612 = vpack.c.b16 %v4602, %v4601
      %v4613 = vpack.c.b16 %v4604, %v4603
      %v4614 = vpack.c.b16 %v4606, %v4605
      %4623 = vmatprep.subr.bf16.mxu0 0
      %4624 = vmatpush1.bf16.msra.mxu0 %v4614
      %4625 = vmatprep.subr.bf16.mxu0 0
      %4626 = vmatpush1.bf16.msra.mxu0 %v4613
      %4627 = vmatprep.subr.bf16.mxu0 0
      %4628 = vmatpush1.bf16.msra.mxu0 %v4612
      %4629 = vmatprep.subr.bf16.mxu0 0
      %4630 = vmatpush1.bf16.msra.mxu0 %v4611
      %4631 = vmatprep.subr.bf16.mxu0 0
      %4632 = vmatpush1.bf16.msra.mxu0 %v4610
      %4633 = vmatprep.subr.bf16.mxu0 0
      %4634 = vmatpush1.bf16.msra.mxu0 %v4609
      %4635 = vmatprep.subr.bf16.mxu0 0
      %4636 = vmatpush1.bf16.msra.mxu0 %v4608
      %4637 = vmatprep.subr.bf16.mxu0 0
      %4638 = vmatpush1.bf16.msra.mxu0 %v4607
      %4639 = vmatprep.subr.bf16.mxu0 0
      %4640 = vmatpush2.bf16.msra.mxu0 0
      %4641 = vmatprep.subr.bf16.mxu0 0
      %4642 = vmatpush2.bf16.msra.mxu0 0
      %4643 = vmatprep.subr.bf16.mxu0 0
      %4644 = vmatpush2.bf16.msra.mxu0 0
      %4645 = vmatprep.subr.bf16.mxu0 0
      %4646 = vmatpush2.bf16.msra.mxu0 0
      %4647 = vmatprep.subr.bf16.mxu0 0
      %4648 = vmatpush2.bf16.msra.mxu0 0
      %4649 = vmatprep.subr.bf16.mxu0 0
      %4650 = vmatpush2.bf16.msra.mxu0 0
      %4651 = vmatprep.subr.bf16.mxu0 0
      %4652 = vmatpush2.bf16.msra.mxu0 0
      %4653 = vmatprep.subr.bf16.mxu0 0
      %4654 = vmatpush2.bf16.msra.mxu0 0
      %4655 = vmatprep.mubr.bf16.mxu0 0
      %4656 = vmatmul.mubr.bf16.gmra.mxu0 %v4543
      %v4657 = vpop.f32.mrf.mxu0
      %v4658 = vadd.f32 0.0, %v4657
      %v4659 = vpop.f32.mrf.mxu0
      %v4660 = vpop.f32.mrf.mxu0
      %v4661 = vadd.f32 0.0, %v4660
      %v4662 = vpop.f32.mrf.mxu0
      %4663 = vmatprep.mubr.bf16.mxu0 0
      %4664 = vmatmul.mubr.bf16.gmra.mxu0 %v4544
      %v4665 = vpop.f32.mrf.mxu0
      %v4666 = vadd.f32 0.0, %v4665
      %v4667 = vpop.f32.mrf.mxu0
      %v4668 = vpop.f32.mrf.mxu0
      %v4669 = vadd.f32 0.0, %v4668
      %v4670 = vpop.f32.mrf.mxu0
      %4671 = vmatprep.mubr.bf16.mxu0 0
      %4672 = vmatmul.mubr.bf16.gmra.mxu0 %v4545
      %v4673 = vpop.f32.mrf.mxu0
      %v4674 = vadd.f32 0.0, %v4673
      %v4675 = vpop.f32.mrf.mxu0
      %v4676 = vpop.f32.mrf.mxu0
      %v4677 = vadd.f32 0.0, %v4676
      %v4678 = vpop.f32.mrf.mxu0
      %4679 = vmatprep.mubr.bf16.mxu0 0
      %4680 = vmatmul.mubr.bf16.gmra.mxu0 %v4546
      %v4681 = vpop.f32.mrf.mxu0
      %v4682 = vadd.f32 0.0, %v4681
      %v4683 = vpop.f32.mrf.mxu0
      %v4684 = vpop.f32.mrf.mxu0
      %v4685 = vadd.f32 0.0, %v4684
      %v4686 = vpop.f32.mrf.mxu0
      %4687 = vmatprep.mubr.bf16.mxu0 0
      %4688 = vmatmul.mubr.bf16.gmra.mxu0 %v4547
      %v4689 = vpop.f32.mrf.mxu0
      %v4690 = vadd.f32 0.0, %v4689
      %v4691 = vpop.f32.mrf.mxu0
      %v4692 = vpop.f32.mrf.mxu0
      %v4693 = vadd.f32 0.0, %v4692
      %v4694 = vpop.f32.mrf.mxu0
      %4695 = vmatprep.mubr.bf16.mxu0 0
      %4696 = vmatmul.mubr.bf16.gmra.mxu0 %v4548
      %v4697 = vpop.f32.mrf.mxu0
      %v4698 = vadd.f32 0.0, %v4697
      %v4699 = vpop.f32.mrf.mxu0
      %v4700 = vpop.f32.mrf.mxu0
      %v4701 = vadd.f32 0.0, %v4700
      %v4702 = vpop.f32.mrf.mxu0
      %4703 = vmatprep.mubr.bf16.mxu0 0
      %4704 = vmatmul.mubr.bf16.gmra.mxu0 %v4549
      %v4705 = vpop.f32.mrf.mxu0
      %v4706 = vadd.f32 0.0, %v4705
      %v4707 = vpop.f32.mrf.mxu0
      %v4708 = vpop.f32.mrf.mxu0
      %v4709 = vadd.f32 0.0, %v4708
      %v4710 = vpop.f32.mrf.mxu0
      %4711 = vmatprep.mubr.bf16.mxu0 0
      %4712 = vmatmul.mubr.bf16.gmra.mxu0 %v4550
      %v4713 = vpop.f32.mrf.mxu0
      %v4714 = vadd.f32 0.0, %v4713
      %v4715 = vpop.f32.mrf.mxu0
      %v4716 = vpop.f32.mrf.mxu0
      %v4717 = vadd.f32 0.0, %v4716
      %v4718 = vpop.f32.mrf.mxu0
      %4719 = vmatprep.mubr.bf16.mxu0 0
      %4720 = vmatmul.mubr.bf16.gmra.mxu0 %v4551
      %v4721 = vpop.f32.mrf.mxu0
      %v4722 = vadd.f32 0.0, %v4721
      %v4723 = vpop.f32.mrf.mxu0
      %v4724 = vpop.f32.mrf.mxu0
      %v4725 = vadd.f32 0.0, %v4724
      %v4726 = vpop.f32.mrf.mxu0
      %4727 = vmatprep.mubr.bf16.mxu0 0
      %4728 = vmatmul.mubr.bf16.gmra.mxu0 %v4552
      %v4729 = vpop.f32.mrf.mxu0
      %v4730 = vadd.f32 0.0, %v4729
      %v4731 = vpop.f32.mrf.mxu0
      %v4732 = vpop.f32.mrf.mxu0
      %v4733 = vadd.f32 0.0, %v4732
      %v4734 = vpop.f32.mrf.mxu0
      %4735 = vmatprep.mubr.bf16.mxu0 0
      %4736 = vmatmul.mubr.bf16.gmra.mxu0 %v4553
      %v4737 = vpop.f32.mrf.mxu0
      %v4738 = vadd.f32 0.0, %v4737
      %v4739 = vpop.f32.mrf.mxu0
      %v4740 = vpop.f32.mrf.mxu0
      %v4741 = vadd.f32 0.0, %v4740
      %v4742 = vpop.f32.mrf.mxu0
      %4743 = vmatprep.mubr.bf16.mxu0 0
      %4744 = vmatmul.mubr.bf16.gmra.mxu0 %v4554
      %v4745 = vpop.f32.mrf.mxu0
      %v4746 = vadd.f32 0.0, %v4745
      %v4747 = vpop.f32.mrf.mxu0
      %v4748 = vpop.f32.mrf.mxu0
      %v4749 = vadd.f32 0.0, %v4748
      %v4750 = vpop.f32.mrf.mxu0
      %4751 = vmatprep.mubr.bf16.mxu0 0
      %4752 = vmatmul.mubr.bf16.gmra.mxu0 %v4555
      %v4753 = vpop.f32.mrf.mxu0
      %v4754 = vadd.f32 0.0, %v4753
      %v4755 = vpop.f32.mrf.mxu0
      %v4756 = vpop.f32.mrf.mxu0
      %v4757 = vadd.f32 0.0, %v4756
      %v4758 = vpop.f32.mrf.mxu0
      %4759 = vmatprep.mubr.bf16.mxu0 0
      %4760 = vmatmul.mubr.bf16.gmra.mxu0 %v4556
      %v4761 = vpop.f32.mrf.mxu0
      %v4762 = vadd.f32 0.0, %v4761
      %v4763 = vpop.f32.mrf.mxu0
      %v4764 = vpop.f32.mrf.mxu0
      %v4765 = vadd.f32 0.0, %v4764
      %v4766 = vpop.f32.mrf.mxu0
      %4767 = vmatprep.mubr.bf16.mxu0 0
      %4768 = vmatmul.mubr.bf16.gmra.mxu0 %v4557
      %v4769 = vpop.f32.mrf.mxu0
      %v4770 = vadd.f32 0.0, %v4769
      %v4771 = vpop.f32.mrf.mxu0
      %v4772 = vpop.f32.mrf.mxu0
      %v4773 = vadd.f32 0.0, %v4772
      %v4774 = vpop.f32.mrf.mxu0
      %4775 = vmatprep.mubr.bf16.mxu0 0
      %4776 = vmatmul.mubr.bf16.gmra.mxu0 %v4558
      %v4777 = vpop.f32.mrf.mxu0
      %v4778 = vadd.f32 0.0, %v4777
      %v4779 = vpop.f32.mrf.mxu0
      %v4780 = vpop.f32.mrf.mxu0
      %v4781 = vadd.f32 0.0, %v4780
      %v4782 = vpop.f32.mrf.mxu0
      %4783 = vdwg.mxu0
      %v4784 = vadd.f32 %v4310, %v4658
      %v4785 = vadd.f32 %v4311, %v4661
      %v4786 = vadd.f32 %v4312, %v4666
      %v4787 = vadd.f32 %v4313, %v4669
      %v4788 = vadd.f32 %v4314, %v4674
      %v4789 = vadd.f32 %v4315, %v4677
      %v4790 = vadd.f32 %v4316, %v4682
      %v4791 = vadd.f32 %v4317, %v4685
      %v4792 = vadd.f32 %v4318, %v4690
      %v4793 = vadd.f32 %v4319, %v4693
      %v4794 = vadd.f32 %v4320, %v4698
      %v4795 = vadd.f32 %v4321, %v4701
      %v4796 = vadd.f32 %v4322, %v4706
      %v4797 = vadd.f32 %v4323, %v4709
      %v4798 = vadd.f32 %v4324, %v4714
      %v4799 = vadd.f32 %v4325, %v4717
      %v4800 = vadd.f32 %v4326, %v4722
      %v4801 = vadd.f32 %v4327, %v4725
      %v4802 = vadd.f32 %v4328, %v4730
      %v4803 = vadd.f32 %v4329, %v4733
      %v4804 = vadd.f32 %v4330, %v4738
      %v4805 = vadd.f32 %v4331, %v4741
      %v4806 = vadd.f32 %v4332, %v4746
      %v4807 = vadd.f32 %v4333, %v4749
      %v4808 = vadd.f32 %v4334, %v4754
      %v4809 = vadd.f32 %v4335, %v4757
      %v4810 = vadd.f32 %v4336, %v4762
      %v4811 = vadd.f32 %v4337, %v4765
      %v4812 = vadd.f32 %v4338, %v4770
      %v4813 = vadd.f32 %v4339, %v4773
      %v4814 = vadd.f32 %v4340, %v4778
      %v4815 = vadd.f32 %v4341, %v4781
      %v4816 = vld [vmem:[%s2] sm:$0x1]
      %v4818 = vlaneseq
      %v4819 = vshrl.u32 %v4818, 7
      %v4820 = vsub.s32 0, %v4819
      %v4821 = vrot.slane %v4816, %v4820
      %v4823 = vadd.f32 %v4784, %v4821
      %v4824 = vadd.f32 %v4785, %v4821
      %v4825 = vadd.f32 %v4786, %v4821
      %v4826 = vadd.f32 %v4787, %v4821
      %v4827 = vadd.f32 %v4788, %v4821
      %v4828 = vadd.f32 %v4789, %v4821
      %v4829 = vadd.f32 %v4790, %v4821
      %v4830 = vadd.f32 %v4791, %v4821
      %v4831 = vadd.f32 %v4792, %v4821
      %v4832 = vadd.f32 %v4793, %v4821
      %v4833 = vadd.f32 %v4794, %v4821
      %v4834 = vadd.f32 %v4795, %v4821
      %v4835 = vadd.f32 %v4796, %v4821
      %v4836 = vadd.f32 %v4797, %v4821
      %v4837 = vadd.f32 %v4798, %v4821
      %v4838 = vadd.f32 %v4799, %v4821
      %v4839 = vadd.f32 %v4800, %v4821
      %v4840 = vadd.f32 %v4801, %v4821
      %v4841 = vadd.f32 %v4802, %v4821
      %v4842 = vadd.f32 %v4803, %v4821
      %v4843 = vadd.f32 %v4804, %v4821
      %v4844 = vadd.f32 %v4805, %v4821
      %v4845 = vadd.f32 %v4806, %v4821
      %v4846 = vadd.f32 %v4807, %v4821
      %v4847 = vadd.f32 %v4808, %v4821
      %v4848 = vadd.f32 %v4809, %v4821
      %v4849 = vadd.f32 %v4810, %v4821
      %v4850 = vadd.f32 %v4811, %v4821
      %v4851 = vadd.f32 %v4812, %v4821
      %v4852 = vadd.f32 %v4813, %v4821
      %v4853 = vadd.f32 %v4814, %v4821
      %v4854 = vadd.f32 %v4815, %v4821
      %v4855 = vmax.f32 %v4823, 0.0
      %v4856 = vmax.f32 %v4824, 0.0
      %v4857 = vmax.f32 %v4825, 0.0
      %v4858 = vmax.f32 %v4826, 0.0
      %v4859 = vmax.f32 %v4827, 0.0
      %v4860 = vmax.f32 %v4828, 0.0
      %v4861 = vmax.f32 %v4829, 0.0
      %v4862 = vmax.f32 %v4830, 0.0
      %v4863 = vmax.f32 %v4831, 0.0
      %v4864 = vmax.f32 %v4832, 0.0
      %v4865 = vmax.f32 %v4833, 0.0
      %v4866 = vmax.f32 %v4834, 0.0
      %v4867 = vmax.f32 %v4835, 0.0
      %v4868 = vmax.f32 %v4836, 0.0
      %v4869 = vmax.f32 %v4837, 0.0
      %v4870 = vmax.f32 %v4838, 0.0
      %v4871 = vmax.f32 %v4839, 0.0
      %v4872 = vmax.f32 %v4840, 0.0
      %v4873 = vmax.f32 %v4841, 0.0
      %v4874 = vmax.f32 %v4842, 0.0
      %v4875 = vmax.f32 %v4843, 0.0
      %v4876 = vmax.f32 %v4844, 0.0
      %v4877 = vmax.f32 %v4845, 0.0
      %v4878 = vmax.f32 %v4846, 0.0
      %v4879 = vmax.f32 %v4847, 0.0
      %v4880 = vmax.f32 %v4848, 0.0
      %v4881 = vmax.f32 %v4849, 0.0
      %v4882 = vmax.f32 %v4850, 0.0
      %v4883 = vmax.f32 %v4851, 0.0
      %v4884 = vmax.f32 %v4852, 0.0
      %v4885 = vmax.f32 %v4853, 0.0
      %v4886 = vmax.f32 %v4854, 0.0
      %v4887 = vpack.c.bf16 %v4856, %v4855
      %v4888 = vpack.c.bf16 %v4858, %v4857
      %v4889 = vpack.c.bf16 %v4860, %v4859
      %v4890 = vpack.c.bf16 %v4862, %v4861
      %v4891 = vpack.c.bf16 %v4864, %v4863
      %v4892 = vpack.c.bf16 %v4866, %v4865
      %v4893 = vpack.c.bf16 %v4868, %v4867
      %v4894 = vpack.c.bf16 %v4870, %v4869
      %v4895 = vpack.c.bf16 %v4872, %v4871
      %v4896 = vpack.c.bf16 %v4874, %v4873
      %v4897 = vpack.c.bf16 %v4876, %v4875
      %v4898 = vpack.c.bf16 %v4878, %v4877
      %v4899 = vpack.c.bf16 %v4880, %v4879
      %v4900 = vpack.c.bf16 %v4882, %v4881
      %v4901 = vpack.c.bf16 %v4884, %v4883
      %v4902 = vpack.c.bf16 %v4886, %v4885
      %v4919 = vunpack.c.l.b16 %v4887
      %v4920 = vunpack.c.h.b16 %v4887
      %v4921 = vunpack.c.l.b16 %v4888
      %v4922 = vunpack.c.h.b16 %v4888
      %v4923 = vunpack.c.l.b16 %v4889
      %v4924 = vunpack.c.h.b16 %v4889
      %v4925 = vunpack.c.l.b16 %v4890
      %v4926 = vunpack.c.h.b16 %v4890
      %v4927 = vunpack.c.l.b16 %v4891
      %v4928 = vunpack.c.h.b16 %v4891
      %v4929 = vunpack.c.l.b16 %v4892
      %v4930 = vunpack.c.h.b16 %v4892
      %v4931 = vunpack.c.l.b16 %v4893
      %v4932 = vunpack.c.h.b16 %v4893
      %v4933 = vunpack.c.l.b16 %v4894
      %v4934 = vunpack.c.h.b16 %v4894
      %v4935 = vunpack.c.l.b16 %v4895
      %v4936 = vunpack.c.h.b16 %v4895
      %v4937 = vunpack.c.l.b16 %v4896
      %v4938 = vunpack.c.h.b16 %v4896
      %v4939 = vunpack.c.l.b16 %v4897
      %v4940 = vunpack.c.h.b16 %v4897
      %v4941 = vunpack.c.l.b16 %v4898
      %v4942 = vunpack.c.h.b16 %v4898
      %v4943 = vunpack.c.l.b16 %v4899
      %v4944 = vunpack.c.h.b16 %v4899
      %v4945 = vunpack.c.l.b16 %v4900
      %v4946 = vunpack.c.h.b16 %v4900
      %v4947 = vunpack.c.l.b16 %v4901
      %v4948 = vunpack.c.h.b16 %v4901
      %v4949 = vunpack.c.l.b16 %v4902
      %v4950 = vunpack.c.h.b16 %v4902
      %v4951 = vpack.c.b16 %v4919, %v4919
      %v4952 = vpack.c.b16 %v4920, %v4920
      %v4953 = vpack.c.b16 %v4921, %v4921
      %v4954 = vpack.c.b16 %v4922, %v4922
      %v4955 = vpack.c.b16 %v4923, %v4923
      %v4956 = vpack.c.b16 %v4924, %v4924
      %v4957 = vpack.c.b16 %v4925, %v4925
      %v4958 = vpack.c.b16 %v4926, %v4926
      %v4959 = vpack.c.b16 %v4927, %v4927
      %v4960 = vpack.c.b16 %v4928, %v4928
      %v4961 = vpack.c.b16 %v4929, %v4929
      %v4962 = vpack.c.b16 %v4930, %v4930
      %v4963 = vpack.c.b16 %v4931, %v4931
      %v4964 = vpack.c.b16 %v4932, %v4932
      %v4965 = vpack.c.b16 %v4933, %v4933
      %v4966 = vpack.c.b16 %v4934, %v4934
      %v4967 = vpack.c.b16 %v4935, %v4935
      %v4968 = vpack.c.b16 %v4936, %v4936
      %v4969 = vpack.c.b16 %v4937, %v4937
      %v4970 = vpack.c.b16 %v4938, %v4938
      %v4971 = vpack.c.b16 %v4939, %v4939
      %v4972 = vpack.c.b16 %v4940, %v4940
      %v4973 = vpack.c.b16 %v4941, %v4941
      %v4974 = vpack.c.b16 %v4942, %v4942
      %v4975 = vpack.c.b16 %v4943, %v4943
      %v4976 = vpack.c.b16 %v4944, %v4944
      %v4977 = vpack.c.b16 %v4945, %v4945
      %v4978 = vpack.c.b16 %v4946, %v4946
      %v4979 = vpack.c.b16 %v4947, %v4947
      %v4980 = vpack.c.b16 %v4948, %v4948
      %v4981 = vpack.c.b16 %v4949, %v4949
      %v4982 = vpack.c.b16 %v4950, %v4950
      %5015 = vst [vmem:[%s194] sm:$0xf] %v4951
      %5016 = vst [vmem:[%s194 + $0x4] sm:$0xf] %v4952
      %5017 = vst [vmem:[%s194 + $0x8] sm:$0xf] %v4953
      %5018 = vst [vmem:[%s194 + $0xc] sm:$0xf] %v4954
      %5019 = vst [vmem:[%s194 + $0x10] sm:$0xf] %v4955
      %5020 = vst [vmem:[%s194 + $0x14] sm:$0xf] %v4956
      %5021 = vst [vmem:[%s194 + $0x18] sm:$0xf] %v4957
      %5022 = vst [vmem:[%s194 + $0x1c] sm:$0xf] %v4958
      %5023 = vst [vmem:[%s194 + $0x20] sm:$0xf] %v4959
      %5024 = vst [vmem:[%s194 + $0x24] sm:$0xf] %v4960
      %5025 = vst [vmem:[%s194 + $0x28] sm:$0xf] %v4961
      %5026 = vst [vmem:[%s194 + $0x2c] sm:$0xf] %v4962
      %5027 = vst [vmem:[%s194 + $0x30] sm:$0xf] %v4963
      %5028 = vst [vmem:[%s194 + $0x34] sm:$0xf] %v4964
      %5029 = vst [vmem:[%s194 + $0x38] sm:$0xf] %v4965
      %5030 = vst [vmem:[%s194 + $0x3c] sm:$0xf] %v4966
      %5031 = vst [vmem:[%s194 + $0x40] sm:$0xf] %v4967
      %5032 = vst [vmem:[%s194 + $0x44] sm:$0xf] %v4968
      %5033 = vst [vmem:[%s194 + $0x48] sm:$0xf] %v4969
      %5034 = vst [vmem:[%s194 + $0x4c] sm:$0xf] %v4970
      %5035 = vst [vmem:[%s194 + $0x50] sm:$0xf] %v4971
      %5036 = vst [vmem:[%s194 + $0x54] sm:$0xf] %v4972
      %5037 = vst [vmem:[%s194 + $0x58] sm:$0xf] %v4973
      %5038 = vst [vmem:[%s194 + $0x5c] sm:$0xf] %v4974
      %5039 = vst [vmem:[%s194 + $0x60] sm:$0xf] %v4975
      %5040 = vst [vmem:[%s194 + $0x64] sm:$0xf] %v4976
      %5041 = vst [vmem:[%s194 + $0x68] sm:$0xf] %v4977
      %5042 = vst [vmem:[%s194 + $0x6c] sm:$0xf] %v4978
      %5043 = vst [vmem:[%s194 + $0x70] sm:$0xf] %v4979
      %5044 = vst [vmem:[%s194 + $0x74] sm:$0xf] %v4980
      %5045 = vst [vmem:[%s194 + $0x78] sm:$0xf] %v4981
      %5046 = vst [vmem:[%s194 + $0x7c] sm:$0xf] %v4982
      %s5047 = smul.u32 8, %s19
      %p5048 = scmp.lt.s32.totalorder %s18, 1
      %s5049 = scalar_select %p5048, %s18, 1
      %p5050 = scmp.lt.s32.totalorder %s5047, 31
      %s5051 = scalar_select %p5050, %s5047, 31
      %s5052 = smul.addr %s5051, 4
      %s5053 = smul.addr %s5049, 128
      %s5054 = sadd.s32 %s5052, %s5053
      %s5055 = smul.addr %s5054, 4
      %s5056 = scalar_lea.vmem %s3, %s5055
      // Predicated region
      $region33: #{_lambda_.5} parent=31 // pred_check
        %p5057 = pneg %p114
      $region34: #{_lambda_.5} parent=31 // pred_check_branch
        %5059 = sbr.rel (%p5057) target = $region36
      $region35: #{_lambda_.5} parent=31 // pred_region
        %s5060 = smul.u32 8, %s19
      $region36: #{_lambda_.5} parent=31 // pred_fallthru
        _
    $region32: #{_lambda_.5} parent=5 // pred_fallthru
      _
    %p5061 = scmp.le.s32.totalorder 2, %s9
    // Predicated region
    $region37: #{_lambda_.5} parent=5 // pred_check
      %p5062 = pneg %p5061
    $region38: #{_lambda_.5} parent=5 // pred_check_branch
      %5064 = sbr.rel (%p5062) target = $region40
    $region39: #{_lambda_.5} parent=5 // pred_region
      %s5065 = ssub.s32 %s9, 2
      // Predicated region
      $region41: #{_lambda_.5} parent=39 // pred_check
        %p5066 = pneg %p120
      $region42: #{_lambda_.5} parent=39 // pred_check_branch
        %5068 = sbr.rel (%p5066) target = $region44
      $region43: #{_lambda_.5} parent=39 // pred_region
        %s5069 = smul.u32 8, %s21
        %p5070 = scmp.lt.s32.totalorder %s20, 1
        %s5071 = scalar_select %p5070, %s20, 1
        %p5072 = scmp.lt.s32.totalorder %s5069, 31
        %s5073 = scalar_select %p5072, %s5069, 31
        %s5074 = smul.addr %s5073, 4
        %s5075 = smul.addr %s5071, 128
        %s5076 = sadd.s32 %s5074, %s5075
        %s5077 = smul.addr %s5076, 4
        %s5078 = scalar_lea.vmem %s3, %s5077
      $region44: #{_lambda_.5} parent=39 // pred_fallthru
        _
    $region40: #{_lambda_.5} parent=5 // pred_fallthru
      _
  $region6: #{_lambda_.5} parent=0 // loop_footer
    %s13 = sadd.s32 1, %s9
  $region7: #{_lambda_.5} parent=0 // loop_footer_branch
    %8 = sbr.rel target = $region3
  $region8: #{_lambda_.5} parent=0 // loop_exit
    _

</llo_original>
